<compile_context>
chip_gen: v7x
topology: tpu7x:2x2x1
jax: 0.10.0
libtpu: 0.0.40
codegen_flags: <defaults>
</compile_context>

<pallas_src>
import jax
import jax.numpy as jnp
from jax.experimental import pallas as pl
from jax.experimental.pallas import tpu as pltpu

DROPOUT_P = 0.2


def _ffn_body(x_ref, w1_ref, b1_ref, w2_ref, b2_ref):
    """relu(x @ W1 + b1) @ W2 + b2 with bf16 MXU inputs / f32 accumulation."""
    h = jnp.dot(x_ref[...], w1_ref[...], preferred_element_type=jnp.float32)
    h = jnp.maximum(h + b1_ref[...], 0.0)                    # bias + ReLU in f32
    y = jnp.dot(h.astype(w2_ref.dtype), w2_ref[...],
                preferred_element_type=jnp.float32)
    return y + b2_ref[...]


def _ffn_kernel_eval(x_ref, w1_ref, b1_ref, w2_ref, b2_ref, o_ref):
    o_ref[...] = _ffn_body(x_ref, w1_ref, b1_ref, w2_ref, b2_ref).astype(o_ref.dtype)


def _ffn_kernel_train(x_ref, w1_ref, b1_ref, w2_ref, b2_ref, mask_ref, o_ref):
    y = _ffn_body(x_ref, w1_ref, b1_ref, w2_ref, b2_ref)
    # mask is pre-scaled by 1/(1-p): single fused f32 multiply.
    o_ref[...] = (y * mask_ref[...].astype(jnp.float32)).astype(o_ref.dtype)


def feedforward(x, w1, b1, w2, b2, *, train=False, rng=None, tm=256,
                compute_dtype=jnp.bfloat16):
    """x: (B, T, C) -> (B, T, C). Matches Linear(C,4C) -> ReLU -> Linear(4C,C) -> Dropout."""
    B, T, C = x.shape
    H = w1.shape[1]
    M = B * T
    tm = min(tm, M)
    assert M % tm == 0 and tm % 8 == 0, "row tile must divide M and be a multiple of 8"

    x2 = x.reshape(M, C).astype(compute_dtype)
    w1c = w1.astype(compute_dtype)
    w2c = w2.astype(compute_dtype)
    b1_2 = b1.reshape(1, H).astype(jnp.float32)
    b2_2 = b2.reshape(1, C).astype(jnp.float32)

    grid = (M // tm,)
    x_spec = pl.BlockSpec((tm, C), lambda i: (i, 0))
    out_spec = pl.BlockSpec((tm, C), lambda i: (i, 0))
    # Constant index_maps -> weights/biases stay VMEM-resident across the grid.
    w1_spec = pl.BlockSpec((C, H), lambda i: (0, 0))
    b1_spec = pl.BlockSpec((1, H), lambda i: (0, 0))
    w2_spec = pl.BlockSpec((H, C), lambda i: (0, 0))
    b2_spec = pl.BlockSpec((1, C), lambda i: (0, 0))

    compiler_params = pltpu.CompilerParams(
        dimension_semantics=("parallel",),      # independent row tiles (megacore)
        vmem_limit_bytes=40 * 1024 * 1024,      # explicit, with headroom for v7x
    )

    if train:
        assert rng is not None, "training-mode dropout needs a JAX PRNG key"
        keep = jax.random.bernoulli(rng, 1.0 - DROPOUT_P, (M, C))
        mask = (keep.astype(jnp.float32) / (1.0 - DROPOUT_P)).astype(compute_dtype)
        kernel = _ffn_kernel_train
        in_specs = [x_spec, w1_spec, b1_spec, w2_spec, b2_spec,
                    pl.BlockSpec((tm, C), lambda i: (i, 0))]
        args = (x2, w1c, b1_2, w2c, b2_2, mask)
    else:
        kernel = _ffn_kernel_eval
        in_specs = [x_spec, w1_spec, b1_spec, w2_spec, b2_spec]
        args = (x2, w1c, b1_2, w2c, b2_2)

    out2 = pl.pallas_call(
        kernel,
        out_shape=jax.ShapeDtypeStruct((M, C), x.dtype),
        grid_spec=pltpu.PrefetchScalarGridSpec(
            num_scalar_prefetch=0,
            grid=grid,
            in_specs=in_specs,
            out_specs=out_spec,
        ),
        compiler_params=compiler_params,
    )(*args)

    return out2.reshape(B, T, C)


def init_params(key, n_embd):
    """PyTorch-Linear-style init; weights stored transposed as (in, out)."""
    h = 4 * n_embd
    k1, k2, k3, k4 = jax.random.split(key, 4)
    bound1 = 1.0 / (n_embd ** 0.5)
    bound2 = 1.0 / (h ** 0.5)
    w1 = jax.random.uniform(k1, (n_embd, h), jnp.float32, -bound1, bound1)
    b1 = jax.random.uniform(k2, (h,), jnp.float32, -bound1, bound1)
    w2 = jax.random.uniform(k3, (h, n_embd), jnp.float32, -bound2, bound2)
    b2 = jax.random.uniform(k4, (n_embd,), jnp.float32, -bound2, bound2)
    return w1, b1, w2, b2


if __name__ == "__main__":
    # babyGPT hyper-params: n_embd=384, block_size=256; batch=2 keeps it small
    # while giving M=512 rows -> grid of 2 tiles of tm=256.
    B, T, C = 2, 256, 384
    key = jax.random.PRNGKey(0)
    kx, kp, kd = jax.random.split(key, 3)
    x = jax.random.normal(kx, (B, T, C), dtype=jnp.float32)
    w1, b1, w2, b2 = init_params(kp, C)

    # Eval-mode forward (dropout is identity).
    out = jax.block_until_ready(feedforward(x, w1, b1, w2, b2, train=False))

    # Pure-JAX reference using the same bf16-matmul / f32-accumulate recipe.
    xc = x.reshape(-1, C).astype(jnp.bfloat16)
    h = jnp.maximum(
        jnp.dot(xc, w1.astype(jnp.bfloat16),
                preferred_element_type=jnp.float32) + b1, 0.0)
    ref = jnp.dot(h.astype(jnp.bfloat16), w2.astype(jnp.bfloat16),
                  preferred_element_type=jnp.float32) + b2
    ref = ref.reshape(B, T, C)
    assert out.shape == (B, T, C)
    assert jnp.allclose(out, ref, atol=1e-2, rtol=1e-2), \
        float(jnp.max(jnp.abs(out - ref)))

    # Training path: inverted dropout via host-generated, pre-scaled keep-mask.
    out_train = jax.block_until_ready(
        feedforward(x, w1, b1, w2, b2, train=True, rng=kd))
    assert out_train.shape == (B, T, C)
    zero_frac = float(jnp.mean(out_train == 0.0))
    assert 0.1 < zero_frac < 0.3, zero_frac

    print("KERNEL_OK")
</pallas_src>

<mosaic_0001>
module attributes {stable_mosaic.version = 11 : i64} {
  func.func @_ffn_kernel_eval(%arg0: i32, %arg1: memref<256x384xbf16, #tpu.memory_space<vmem>>, %arg2: memref<384x1536xbf16, #tpu.memory_space<vmem>>, %arg3: memref<1x1536xf32, #tpu.memory_space<vmem>>, %arg4: memref<1536x384xbf16, #tpu.memory_space<vmem>>, %arg5: memref<1x384xf32, #tpu.memory_space<vmem>>, %arg6: memref<256x384xf32, #tpu.memory_space<vmem>>) attributes {dimension_semantics = [#tpu.dimension_semantics<parallel>], iteration_bounds = array<i64: 2>, scalar_prefetch = 0 : i64, scratch_operands = 0 : i64, tpu.core_type = #tpu.core_type<tc>, window_params = [{transform_indices = @transform_0, window_bounds = array<i64: 256, 384>}, {pipeline_mode = #tpu.pipeline_mode<synchronous>, transform_indices = @transform_1, window_bounds = array<i64: 384, 1536>}, {pipeline_mode = #tpu.pipeline_mode<synchronous>, transform_indices = @transform_2, window_bounds = array<i64: 1, 1536>}, {pipeline_mode = #tpu.pipeline_mode<synchronous>, transform_indices = @transform_3, window_bounds = array<i64: 1536, 384>}, {pipeline_mode = #tpu.pipeline_mode<synchronous>, transform_indices = @transform_4, window_bounds = array<i64: 1, 384>}, {transform_indices = @transform_5, window_bounds = array<i64: 256, 384>}]} {
    %c0 = arith.constant 0 : index
    %c0_0 = arith.constant 0 : index
    %0 = vector.load %arg1[%c0, %c0_0] : memref<256x384xbf16, #tpu.memory_space<vmem>>, vector<256x384xbf16>
    %c0_1 = arith.constant 0 : index
    %c0_2 = arith.constant 0 : index
    %1 = vector.load %arg2[%c0_1, %c0_2] : memref<384x1536xbf16, #tpu.memory_space<vmem>>, vector<384x1536xbf16>
    %cst = arith.constant dense<0.000000e+00> : vector<256x1536xf32>
    %2 = tpu.matmul %0, %1, %cst {dimension_numbers = #tpu.dot_dimension_numbers<[1], [0], [0], [1], [0, 0, 1, 1], [], []>} : vector<256x384xbf16>, vector<384x1536xbf16>, vector<256x1536xf32> -> vector<256x1536xf32>
    %c0_3 = arith.constant 0 : index
    %c0_4 = arith.constant 0 : index
    %3 = vector.load %arg3[%c0_3, %c0_4] : memref<1x1536xf32, #tpu.memory_space<vmem>>, vector<1x1536xf32>
    %4 = vector.broadcast %3 : vector<1x1536xf32> to vector<256x1536xf32>
    %5 = arith.addf %2, %4 : vector<256x1536xf32>
    %cst_5 = arith.constant 0.000000e+00 : f32
    %6 = vector.broadcast %cst_5 : f32 to vector<256x1536xf32>
    %7 = arith.maximumf %5, %6 : vector<256x1536xf32>
    %8 = arith.truncf %7 : vector<256x1536xf32> to vector<256x1536xbf16>
    %c0_6 = arith.constant 0 : index
    %c0_7 = arith.constant 0 : index
    %9 = vector.load %arg4[%c0_6, %c0_7] : memref<1536x384xbf16, #tpu.memory_space<vmem>>, vector<1536x384xbf16>
    %cst_8 = arith.constant dense<0.000000e+00> : vector<256x384xf32>
    %10 = tpu.matmul %8, %9, %cst_8 {dimension_numbers = #tpu.dot_dimension_numbers<[1], [0], [0], [1], [0, 0, 1, 1], [], []>} : vector<256x1536xbf16>, vector<1536x384xbf16>, vector<256x384xf32> -> vector<256x384xf32>
    %c0_9 = arith.constant 0 : index
    %c0_10 = arith.constant 0 : index
    %11 = vector.load %arg5[%c0_9, %c0_10] : memref<1x384xf32, #tpu.memory_space<vmem>>, vector<1x384xf32>
    %12 = vector.broadcast %11 : vector<1x384xf32> to vector<256x384xf32>
    %13 = arith.addf %10, %12 : vector<256x384xf32>
    %c0_11 = arith.constant 0 : index
    %c0_12 = arith.constant 0 : index
    %14 = vector.load %arg6[%c0_11, %c0_12] : memref<256x384xf32, #tpu.memory_space<vmem>>, vector<256x384xf32>
    tpu.vector_store %arg6[%c0_11, %c0_12], %13 {strides = array<i32>} : memref<256x384xf32, #tpu.memory_space<vmem>>, vector<256x384xf32>,
    return
  }
  func.func @transform_0(%arg0: i32) -> (i32, i32) {
    %c0_i32 = arith.constant 0 : i32
    %c0_i32_0 = arith.constant 0 : i32
    return %arg0, %c0_i32 : i32, i32
  }
  func.func @transform_1(%arg0: i32) -> (i32, i32) {
    %c0_i32 = arith.constant 0 : i32
    %c0_i32_0 = arith.constant 0 : i32
    %c0_i32_1 = arith.constant 0 : i32
    return %c0_i32, %c0_i32_0 : i32, i32
  }
  func.func @transform_2(%arg0: i32) -> (i32, i32) {
    %c0_i32 = arith.constant 0 : i32
    %c0_i32_0 = arith.constant 0 : i32
    %c0_i32_1 = arith.constant 0 : i32
    return %c0_i32, %c0_i32_0 : i32, i32
  }
  func.func @transform_3(%arg0: i32) -> (i32, i32) {
    %c0_i32 = arith.constant 0 : i32
    %c0_i32_0 = arith.constant 0 : i32
    %c0_i32_1 = arith.constant 0 : i32
    return %c0_i32, %c0_i32_0 : i32, i32
  }
  func.func @transform_4(%arg0: i32) -> (i32, i32) {
    %c0_i32 = arith.constant 0 : i32
    %c0_i32_0 = arith.constant 0 : i32
    %c0_i32_1 = arith.constant 0 : i32
    return %c0_i32, %c0_i32_0 : i32, i32
  }
  func.func @transform_5(%arg0: i32) -> (i32, i32) {
    %c0_i32 = arith.constant 0 : i32
    %c0_i32_0 = arith.constant 0 : i32
    return %arg0, %c0_i32 : i32, i32
  }
}

</mosaic_0001>

<llo_original>
// kernel: tpu_custom_call.1
$region0: #{tpu_custom_call.1}
  #allocation0 [shape = 'u32[]', space=smem, size = 0x4, offset = 0x4, fixed_abs, tag = 'smem constant byte address 0x4 - core index']
  #allocation1 [shape = 'u32[144,128]{1,0:T(1,128)}', space=vmem, size = 0x12000, scoped, tag = 'internal scratch']
  %s0 = inlined_call_operand.hbm [shape: bf16[512,384], index: 0, kind: input, shape index: {}]
  %s1 = inlined_call_operand.hbm [shape: bf16[384,1536], index: 1, kind: input, shape index: {}]
  %s2 = inlined_call_operand.hbm [shape: f32[1,1536], index: 2, kind: input, shape index: {}]
  %s3 = inlined_call_operand.hbm [shape: bf16[1536,384], index: 3, kind: input, shape index: {}]
  %s4 = inlined_call_operand.hbm [shape: f32[1,384], index: 4, kind: input, shape index: {}]
  %s5 = inlined_call_operand.hbm [shape: f32[512,384], index: 5, kind: output, shape index: {}]
  %s6 = sld [smem:[#allocation0]]
  $region73: #{tpu_custom_call.1} parent=0
    _
  %s8 = ssub.s32 1, %s6
  %s9 = scalar_select 0, %s8, %s6
  $region1: #{tpu_custom_call.1} parent=0
    #allocation2 [shape = 'u8[393216]{0}', space=vmem, size = 0x60000, scoped, tag = 'input window, operand 0']
    #allocation3 [shape = 's32[2]{0}', space=sflag, size = 0x8, scoped, tag = 'scoped memory for tpu_custom_call.1']
    #allocation4 [shape = 's32[2]{0}', space=sflag, size = 0x8, scoped, tag = 'scoped memory for tpu_custom_call.1']
    #allocation5 [shape = 'u8[1179648]{0}', space=vmem, size = 0x120000, scoped, tag = 'input window, operand 1, single buffered']
    #allocation6 [shape = 's32[1]{0}', space=sflag, size = 0x4, scoped, tag = 'scoped memory for tpu_custom_call.1']
    #allocation7 [shape = 'u8[6144]{0}', space=vmem, size = 0x1800, scoped, tag = 'input window, operand 2, single buffered']
    #allocation8 [shape = 'u8[1179648]{0}', space=vmem, size = 0x120000, scoped, tag = 'input window, operand 3, single buffered']
    #allocation9 [shape = 's32[1]{0}', space=sflag, size = 0x4, scoped, tag = 'scoped memory for tpu_custom_call.1']
    #allocation10 [shape = 'u8[1536]{0}', space=vmem, size = 0x800, scoped, tag = 'input window, operand 4, single buffered']
    #allocation11 [shape = 'u8[786432]{0}', space=vmem, size = 0xc0000, scoped, tag = 'output window, operand 0']
    %10 = vsyncpa [#allocation3], 0
    %s11 = scalar_lea.sflag [#allocation3], 1
    %12 = vsyncpa %s11, 0
    %13 = vsyncpa [#allocation6], 0
    %14 = vsyncpa [#allocation9], 0
    %15 = vsyncpa [#allocation4], 0
    %s16 = scalar_lea.sflag [#allocation4], 1
    %17 = vsyncpa %s16, 0
    loop: start=0, step=1, limit=4
    $region2: #{tpu_custom_call.1} parent=1 // loop_pre_header
      _
    $region3: #{tpu_custom_call.1} parent=1 // loop_header
      %s19 = sphi 0, %s23
      %p20 = scmp.ge.s32.totalorder %s19, 4
      %s29 = sphi 0, %s31
      %s32 = sphi 0, %s29
      %s33 = sphi 0, %s32
      %s49 = sphi 0, %s33
      %s53 = sphi 0, %s53
      %s55 = sphi 0, %s53
      %s56 = sphi 0, %s55
      %s70 = sphi 0, %s56
      %s74 = sphi 0, %s74
      %s76 = sphi 0, %s74
      %s77 = sphi 0, %s76
      %s91 = sphi 0, %s77
      %s95 = sphi 0, %s95
      %s97 = sphi 0, %s95
      %s98 = sphi 0, %s97
      %s112 = sphi 0, %s98
      %s116 = sphi 0, %s116
      %s118 = sphi 0, %s116
      %s119 = sphi 0, %s118
      %s133 = sphi 0, %s119
      %s139 = sphi 0, %s141
      %s142 = sphi 0, %s139
      %s143 = sphi 0, %s142
      %s159 = sphi 0, %s143
    $region4: #{tpu_custom_call.1} parent=1 // loop_header_branch
      %22 = sbr.rel (%p20) target = $region8
    $region5: #{tpu_custom_call.1} parent=1 // loop_body
      %s24 = ssub.s32 %s19, 1
      %s25 = ssub.s32 %s19, 2
      %s26 = sadd.s32 %s19, 1
      %s27 = ssub.s32 %s19, %s26
      %p28 = scmp.eq.s32.totalorder %s27, 0
      %s30 = sadd.s32 %s29, 1
      %s31 = scalar_select %p28, %s29, %s30
      %p34 = pneg %p28
      %p35 = scmp.eq.s32.totalorder %s19, 1
      %p36 = por %p34, %p35
      %p37 = scmp.ne.s32.totalorder %s29, %s32
      %p38 = scmp.eq.s32.totalorder %s19, 0
      %p39 = por %p37, %p38
      %p40 = scmp.ne.s32.totalorder %s29, %s32
      %p41 = scmp.eq.s32.totalorder %s24, 1
      %p42 = por %p40, %p41
      %p43 = scmp.ne.s32.totalorder %s32, %s33
      %p44 = scmp.eq.s32.totalorder %s24, 0
      %p45 = por %p43, %p44
      %p46 = scmp.ne.s32.totalorder %s32, %s33
      %p47 = scmp.eq.s32.totalorder %s25, 1
      %p48 = por %p46, %p47
      %p50 = scmp.ne.s32.totalorder %s33, %s49
      %p51 = scmp.eq.s32.totalorder %s25, 0
      %p52 = por %p50, %p51
      %s54 = sadd.s32 %s53, 1
      %p57 = scmp.eq.s32.totalorder %s19, 1
      %p58 = scmp.ne.s32.totalorder %s53, %s55
      %p59 = scmp.eq.s32.totalorder %s19, 0
      %p60 = por %p58, %p59
      %p61 = scmp.ne.s32.totalorder %s53, %s55
      %p62 = scmp.eq.s32.totalorder %s24, 1
      %p63 = por %p61, %p62
      %p64 = scmp.ne.s32.totalorder %s55, %s56
      %p65 = scmp.eq.s32.totalorder %s24, 0
      %p66 = por %p64, %p65
      %p67 = scmp.ne.s32.totalorder %s55, %s56
      %p68 = scmp.eq.s32.totalorder %s25, 1
      %p69 = por %p67, %p68
      %p71 = scmp.ne.s32.totalorder %s56, %s70
      %p72 = scmp.eq.s32.totalorder %s25, 0
      %p73 = por %p71, %p72
      %s75 = sadd.s32 %s74, 1
      %p78 = scmp.eq.s32.totalorder %s19, 1
      %p79 = scmp.ne.s32.totalorder %s74, %s76
      %p80 = scmp.eq.s32.totalorder %s19, 0
      %p81 = por %p79, %p80
      %p82 = scmp.ne.s32.totalorder %s74, %s76
      %p83 = scmp.eq.s32.totalorder %s24, 1
      %p84 = por %p82, %p83
      %p85 = scmp.ne.s32.totalorder %s76, %s77
      %p86 = scmp.eq.s32.totalorder %s24, 0
      %p87 = por %p85, %p86
      %p88 = scmp.ne.s32.totalorder %s76, %s77
      %p89 = scmp.eq.s32.totalorder %s25, 1
      %p90 = por %p88, %p89
      %p92 = scmp.ne.s32.totalorder %s77, %s91
      %p93 = scmp.eq.s32.totalorder %s25, 0
      %p94 = por %p92, %p93
      %s96 = sadd.s32 %s95, 1
      %p99 = scmp.eq.s32.totalorder %s19, 1
      %p100 = scmp.ne.s32.totalorder %s95, %s97
      %p101 = scmp.eq.s32.totalorder %s19, 0
      %p102 = por %p100, %p101
      %p103 = scmp.ne.s32.totalorder %s95, %s97
      %p104 = scmp.eq.s32.totalorder %s24, 1
      %p105 = por %p103, %p104
      %p106 = scmp.ne.s32.totalorder %s97, %s98
      %p107 = scmp.eq.s32.totalorder %s24, 0
      %p108 = por %p106, %p107
      %p109 = scmp.ne.s32.totalorder %s97, %s98
      %p110 = scmp.eq.s32.totalorder %s25, 1
      %p111 = por %p109, %p110
      %p113 = scmp.ne.s32.totalorder %s98, %s112
      %p114 = scmp.eq.s32.totalorder %s25, 0
      %p115 = por %p113, %p114
      %s117 = sadd.s32 %s116, 1
      %p120 = scmp.eq.s32.totalorder %s19, 1
      %p121 = scmp.ne.s32.totalorder %s116, %s118
      %p122 = scmp.eq.s32.totalorder %s19, 0
      %p123 = por %p121, %p122
      %p124 = scmp.ne.s32.totalorder %s116, %s118
      %p125 = scmp.eq.s32.totalorder %s24, 1
      %p126 = por %p124, %p125
      %p127 = scmp.ne.s32.totalorder %s118, %s119
      %p128 = scmp.eq.s32.totalorder %s24, 0
      %p129 = por %p127, %p128
      %p130 = scmp.ne.s32.totalorder %s118, %s119
      %p131 = scmp.eq.s32.totalorder %s25, 1
      %p132 = por %p130, %p131
      %p134 = scmp.ne.s32.totalorder %s119, %s133
      %p135 = scmp.eq.s32.totalorder %s25, 0
      %p136 = por %p134, %p135
      %s137 = ssub.s32 %s19, %s26
      %p138 = scmp.eq.s32.totalorder %s137, 0
      %s140 = sadd.s32 %s139, 1
      %s141 = scalar_select %p138, %s139, %s140
      %p144 = pneg %p138
      %p145 = scmp.eq.s32.totalorder %s19, 1
      %p146 = por %p144, %p145
      %p147 = scmp.ne.s32.totalorder %s139, %s142
      %p148 = scmp.eq.s32.totalorder %s19, 0
      %p149 = por %p147, %p148
      %p150 = scmp.ne.s32.totalorder %s139, %s142
      %p151 = scmp.eq.s32.totalorder %s24, 1
      %p152 = por %p150, %p151
      %p153 = scmp.ne.s32.totalorder %s142, %s143
      %p154 = scmp.eq.s32.totalorder %s24, 0
      %p155 = por %p153, %p154
      %p156 = scmp.ne.s32.totalorder %s142, %s143
      %p157 = scmp.eq.s32.totalorder %s25, 1
      %p158 = por %p156, %p157
      %p160 = scmp.ne.s32.totalorder %s143, %s159
      %p161 = scmp.eq.s32.totalorder %s25, 0
      %p162 = por %p160, %p161
      %p163 = scmp.le.s32.totalorder 1, %s19
      %p164 = scmp.lt.s32.totalorder %s19, 3
      %p165 = pnand %p163, %p164
      %p166 = pneg %p165
      // Predicated region
      $region9: #{tpu_custom_call.1} parent=5 // pred_check
        _
      $region10: #{tpu_custom_call.1} parent=5 // pred_check_branch
        %168 = sbr.rel (%p165) target = $region12
      $region11: #{tpu_custom_call.1} parent=5 // pred_region
        %s169 = ssub.s32 %s19, 1
        // Predicated region
        $region13: #{tpu_custom_call.1} parent=11 // pred_check
          %p170 = pneg %p66
        $region14: #{tpu_custom_call.1} parent=11 // pred_check_branch
          %172 = sbr.rel (%p170) target = $region16
        $region15: #{tpu_custom_call.1} parent=11 // pred_region
          %s174 = ssub.s32 36864, 36864
          %175 = vsyncadd [#allocation6], %s174
          %s176 = sshll.u32 [#allocation5], 4
          %s177 = int_to_ptr.vmem [resolvable:$true] %s176
          %182 = dma.hbm_to_vmem [thread:$0]  %s1, 36864, %s177, [#allocation6], 768, 768, 48
        $region16: #{tpu_custom_call.1} parent=11 // pred_fallthru
          _
        // Predicated region
        $region17: #{tpu_custom_call.1} parent=11 // pred_check
          %p183 = pneg %p87
        $region18: #{tpu_custom_call.1} parent=11 // pred_check_branch
          %185 = sbr.rel (%p183) target = $region20
        $region19: #{tpu_custom_call.1} parent=11 // pred_region
          %s187 = ssub.s32 192, 192
          %188 = vsyncadd [#allocation6], %s187
          %s190 = sshll.u32 [#allocation7], 4
          %s191 = int_to_ptr.vmem [resolvable:$true] %s190
          %193 = dma.hbm_to_vmem [thread:$0]  %s2, 192, %s191, [#allocation6]
        $region20: #{tpu_custom_call.1} parent=11 // pred_fallthru
          _
        // Predicated region
        $region21: #{tpu_custom_call.1} parent=11 // pred_check
          %p194 = pneg %p108
        $region22: #{tpu_custom_call.1} parent=11 // pred_check_branch
          %196 = sbr.rel (%p194) target = $region24
        $region23: #{tpu_custom_call.1} parent=11 // pred_region
          %s198 = ssub.s32 36864, 36864
          %199 = vsyncadd [#allocation9], %s198
          %s200 = sshll.u32 [#allocation8], 4
          %s201 = int_to_ptr.vmem [resolvable:$true] %s200
          %206 = dma.hbm_to_vmem [thread:$0]  %s3, 36864, %s201, [#allocation9], 192, 192, 12
        $region24: #{tpu_custom_call.1} parent=11 // pred_fallthru
          _
        // Predicated region
        $region25: #{tpu_custom_call.1} parent=11 // pred_check
          %p207 = pneg %p129
        $region26: #{tpu_custom_call.1} parent=11 // pred_check_branch
          %209 = sbr.rel (%p207) target = $region28
        $region27: #{tpu_custom_call.1} parent=11 // pred_region
          %s211 = ssub.s32 48, 48
          %212 = vsyncadd [#allocation9], %s211
          %s214 = sshll.u32 [#allocation10], 4
          %s215 = int_to_ptr.vmem [resolvable:$true] %s214
          %217 = dma.hbm_to_vmem [thread:$0]  %s4, 48, %s215, [#allocation9]
        $region28: #{tpu_custom_call.1} parent=11 // pred_fallthru
          _
      $region12: #{tpu_custom_call.1} parent=5 // pred_fallthru
        _
      %p218 = scmp.lt.s32.totalorder %s19, 2
      // Predicated region
      $region29: #{tpu_custom_call.1} parent=5 // pred_check
        %p219 = pneg %p218
      $region30: #{tpu_custom_call.1} parent=5 // pred_check_branch
        %221 = sbr.rel (%p219) target = $region32
      $region31: #{tpu_custom_call.1} parent=5 // pred_region
        // Predicated region
        $region33: #{tpu_custom_call.1} parent=31 // pred_check
          %p222 = pneg %p39
        $region34: #{tpu_custom_call.1} parent=31 // pred_check_branch
          %224 = sbr.rel (%p222) target = $region36
        $region35: #{tpu_custom_call.1} parent=31 // pred_region
          %s225 = sand.u32 %s29, 1
          %s226 = scalar_lea.sflag [#allocation3], %s225
          %s227 = sand.u32 %s29, 1
          %s228 = smul.addr %s227, 384
          %s229 = scalar_lea.vmem [#allocation2], %s228
          %s230 = smul.u32 32, %s19
          %s232 = ssub.s32 6144, 6144
          %233 = vsyncadd %s226, %s232
          %s234 = smul.addr %s230, 3
          %s235 = smul.addr %s234, 64
          %s236 = scalar_lea.hbm %s0, %s235
          %s237 = sshll.u32 %s229, 4
          %s238 = int_to_ptr.vmem [resolvable:$true] %s237
          %243 = dma.hbm_to_vmem [thread:$0]  %s236, 6144, %s238, %s226, 192, 192, 12
        $region36: #{tpu_custom_call.1} parent=31 // pred_fallthru
          _
      $region32: #{tpu_custom_call.1} parent=5 // pred_fallthru
        _
      %p244 = scmp.le.s32.totalorder 1, %s19
      %p245 = scmp.lt.s32.totalorder %s19, 3
      %p246 = pnand %p244, %p245
      %p247 = pneg %p246
      // Predicated region
      $region37: #{tpu_custom_call.1} parent=5 // pred_check
        _
      $region38: #{tpu_custom_call.1} parent=5 // pred_check_branch
        %249 = sbr.rel (%p246) target = $region40
      $region39: #{tpu_custom_call.1} parent=5 // pred_region
        %s250 = ssub.s32 %s19, 1
        %s251 = sand.u32 %s32, 1
        %s252 = scalar_lea.sflag [#allocation3], %s251
        %s253 = sand.u32 %s32, 1
        %s254 = smul.addr %s253, 384
        %s255 = scalar_lea.vmem [#allocation2], %s254
        // Predicated region
        $region41: #{tpu_custom_call.1} parent=39 // pred_check
          %p256 = pneg %p45
        $region42: #{tpu_custom_call.1} parent=39 // pred_check_branch
          %258 = sbr.rel (%p256) target = $region44
        $region43: #{tpu_custom_call.1} parent=39 // pred_region
          %259 = dma.done %s252, 6144
        $region44: #{tpu_custom_call.1} parent=39 // pred_fallthru
          _
        // Predicated region
        $region45: #{tpu_custom_call.1} parent=39 // pred_check
          %p260 = pneg %p66
        $region46: #{tpu_custom_call.1} parent=39 // pred_check_branch
          %262 = sbr.rel (%p260) target = $region48
        $region47: #{tpu_custom_call.1} parent=39 // pred_region
          %263 = dma.done [#allocation6], 36864
        $region48: #{tpu_custom_call.1} parent=39 // pred_fallthru
          _
        // Predicated region
        $region49: #{tpu_custom_call.1} parent=39 // pred_check
          %p264 = pneg %p87
        $region50: #{tpu_custom_call.1} parent=39 // pred_check_branch
          %266 = sbr.rel (%p264) target = $region52
        $region51: #{tpu_custom_call.1} parent=39 // pred_region
          %267 = dma.done [#allocation6], 192
        $region52: #{tpu_custom_call.1} parent=39 // pred_fallthru
          _
        // Predicated region
        $region53: #{tpu_custom_call.1} parent=39 // pred_check
          %p268 = pneg %p108
        $region54: #{tpu_custom_call.1} parent=39 // pred_check_branch
          %270 = sbr.rel (%p268) target = $region56
        $region55: #{tpu_custom_call.1} parent=39 // pred_region
          %271 = dma.done [#allocation9], 36864
        $region56: #{tpu_custom_call.1} parent=39 // pred_fallthru
          _
        // Predicated region
        $region57: #{tpu_custom_call.1} parent=39 // pred_check
          %p272 = pneg %p129
        $region58: #{tpu_custom_call.1} parent=39 // pred_check_branch
          %274 = sbr.rel (%p272) target = $region60
        $region59: #{tpu_custom_call.1} parent=39 // pred_region
          %275 = dma.done [#allocation9], 48
        $region60: #{tpu_custom_call.1} parent=39 // pred_fallthru
          _
        %s276 = sand.u32 %s32, 1
        %s277 = scalar_lea.sflag [#allocation3], %s276
        %s278 = sand.u32 %s32, 1
        %s279 = smul.addr %s278, 384
        %s280 = scalar_lea.vmem [#allocation2], %s279
        %p281 = pneg %p45
        %p282 = pneg %p42
        %p283 = pneg %p66
        %p284 = pneg %p63
        %p285 = pneg %p87
        %p286 = pneg %p84
        %p287 = pneg %p108
        %p288 = pneg %p105
        %p289 = pneg %p129
        %p290 = pneg %p126
        %p291 = pneg %p155
        %p292 = pneg %p152
        %s293 = sand.u32 %s142, 1
        %s294 = scalar_lea.sflag [#allocation4], %s293
        %s295 = sand.u32 %s142, 1
        %s296 = smul.addr %s295, 768
        %s297 = scalar_lea.vmem [#allocation11], %s296
        %s298 = smul.u32 32, %s24
        %s299 = smul.u32 32, %s24
        %v301 = vld [vmem:[%s255] sm:$0xff]
        %v302 = vld [vmem:[%s255 + $0x8] sm:$0xf]
        %v303 = vld [vmem:[%s255 + $0xc] sm:$0xff]
        %v304 = vld [vmem:[%s255 + $0x14] sm:$0xf]
        %v305 = vld [vmem:[%s255 + $0x18] sm:$0xff]
        %v306 = vld [vmem:[%s255 + $0x20] sm:$0xf]
        %v307 = vld [vmem:[%s255 + $0x24] sm:$0xff]
        %v308 = vld [vmem:[%s255 + $0x2c] sm:$0xf]
        %v309 = vld [vmem:[%s255 + $0x30] sm:$0xff]
        %v310 = vld [vmem:[%s255 + $0x38] sm:$0xf]
        %v311 = vld [vmem:[%s255 + $0x3c] sm:$0xff]
        %v312 = vld [vmem:[%s255 + $0x44] sm:$0xf]
        %v313 = vld [vmem:[%s255 + $0x48] sm:$0xff]
        %v314 = vld [vmem:[%s255 + $0x50] sm:$0xf]
        %v315 = vld [vmem:[%s255 + $0x54] sm:$0xff]
        %v316 = vld [vmem:[%s255 + $0x5c] sm:$0xf]
        %v317 = vld [vmem:[%s255 + $0x60] sm:$0xff]
        %v318 = vld [vmem:[%s255 + $0x68] sm:$0xf]
        %v319 = vld [vmem:[%s255 + $0x6c] sm:$0xff]
        %v320 = vld [vmem:[%s255 + $0x74] sm:$0xf]
        %v321 = vld [vmem:[%s255 + $0x78] sm:$0xff]
        %v322 = vld [vmem:[%s255 + $0x80] sm:$0xf]
        %v323 = vld [vmem:[%s255 + $0x84] sm:$0xff]
        %v324 = vld [vmem:[%s255 + $0x8c] sm:$0xf]
        %v325 = vld [vmem:[%s255 + $0x90] sm:$0xff]
        %v326 = vld [vmem:[%s255 + $0x98] sm:$0xf]
        %v327 = vld [vmem:[%s255 + $0x9c] sm:$0xff]
        %v328 = vld [vmem:[%s255 + $0xa4] sm:$0xf]
        %v329 = vld [vmem:[%s255 + $0xa8] sm:$0xff]
        %v330 = vld [vmem:[%s255 + $0xb0] sm:$0xf]
        %v331 = vld [vmem:[%s255 + $0xb4] sm:$0xff]
        %v332 = vld [vmem:[%s255 + $0xbc] sm:$0xf]
        %v333 = vld [vmem:[%s255 + $0xc0] sm:$0xff]
        %v334 = vld [vmem:[%s255 + $0xc8] sm:$0xf]
        %v335 = vld [vmem:[%s255 + $0xcc] sm:$0xff]
        %v336 = vld [vmem:[%s255 + $0xd4] sm:$0xf]
        %v337 = vld [vmem:[%s255 + $0xd8] sm:$0xff]
        %v338 = vld [vmem:[%s255 + $0xe0] sm:$0xf]
        %v339 = vld [vmem:[%s255 + $0xe4] sm:$0xff]
        %v340 = vld [vmem:[%s255 + $0xec] sm:$0xf]
        %v341 = vld [vmem:[%s255 + $0xf0] sm:$0xff]
        %v342 = vld [vmem:[%s255 + $0xf8] sm:$0xf]
        %v343 = vld [vmem:[%s255 + $0xfc] sm:$0xff]
        %v344 = vld [vmem:[%s255 + $0x104] sm:$0xf]
        %v345 = vld [vmem:[%s255 + $0x108] sm:$0xff]
        %v346 = vld [vmem:[%s255 + $0x110] sm:$0xf]
        %v347 = vld [vmem:[%s255 + $0x114] sm:$0xff]
        %v348 = vld [vmem:[%s255 + $0x11c] sm:$0xf]
        %v349 = vld [vmem:[%s255 + $0x120] sm:$0xff]
        %v350 = vld [vmem:[%s255 + $0x128] sm:$0xf]
        %v351 = vld [vmem:[%s255 + $0x12c] sm:$0xff]
        %v352 = vld [vmem:[%s255 + $0x134] sm:$0xf]
        %v353 = vld [vmem:[%s255 + $0x138] sm:$0xff]
        %v354 = vld [vmem:[%s255 + $0x140] sm:$0xf]
        %v355 = vld [vmem:[%s255 + $0x144] sm:$0xff]
        %v356 = vld [vmem:[%s255 + $0x14c] sm:$0xf]
        %v357 = vld [vmem:[%s255 + $0x150] sm:$0xff]
        %v358 = vld [vmem:[%s255 + $0x158] sm:$0xf]
        %v359 = vld [vmem:[%s255 + $0x15c] sm:$0xff]
        %v360 = vld [vmem:[%s255 + $0x164] sm:$0xf]
        %v361 = vld [vmem:[%s255 + $0x168] sm:$0xff]
        %v362 = vld [vmem:[%s255 + $0x170] sm:$0xf]
        %v363 = vld [vmem:[%s255 + $0x174] sm:$0xff]
        %v364 = vld [vmem:[%s255 + $0x17c] sm:$0xf]
        %v365 = vld [vmem:[#allocation5] sm:$0xff]
        %v366 = vld [vmem:[#allocation5 + $0x8] sm:$0xff]
        %v367 = vld [vmem:[#allocation5 + $0x10] sm:$0xff]
        %v368 = vld [vmem:[#allocation5 + $0x18] sm:$0xff]
        %v369 = vld [vmem:[#allocation5 + $0x20] sm:$0xff]
        %v370 = vld [vmem:[#allocation5 + $0x28] sm:$0xff]
        %v371 = vld [vmem:[#allocation5 + $0x30] sm:$0xff]
        %v372 = vld [vmem:[#allocation5 + $0x38] sm:$0xff]
        %v373 = vld [vmem:[#allocation5 + $0x40] sm:$0xff]
        %v374 = vld [vmem:[#allocation5 + $0x48] sm:$0xff]
        %v375 = vld [vmem:[#allocation5 + $0x50] sm:$0xff]
        %v376 = vld [vmem:[#allocation5 + $0x58] sm:$0xff]
        %v377 = vld [vmem:[#allocation5 + $0x60] sm:$0xff]
        %v378 = vld [vmem:[#allocation5 + $0x68] sm:$0xff]
        %v379 = vld [vmem:[#allocation5 + $0x70] sm:$0xff]
        %v380 = vld [vmem:[#allocation5 + $0x78] sm:$0xff]
        %v381 = vld [vmem:[#allocation5 + $0x80] sm:$0xff]
        %v382 = vld [vmem:[#allocation5 + $0x88] sm:$0xff]
        %v383 = vld [vmem:[#allocation5 + $0x90] sm:$0xff]
        %v384 = vld [vmem:[#allocation5 + $0x98] sm:$0xff]
        %v385 = vld [vmem:[#allocation5 + $0xa0] sm:$0xff]
        %v386 = vld [vmem:[#allocation5 + $0xa8] sm:$0xff]
        %v387 = vld [vmem:[#allocation5 + $0xb0] sm:$0xff]
        %v388 = vld [vmem:[#allocation5 + $0xb8] sm:$0xff]
        %v389 = vld [vmem:[#allocation5 + $0xc0] sm:$0xff]
        %v390 = vld [vmem:[#allocation5 + $0xc8] sm:$0xff]
        %v391 = vld [vmem:[#allocation5 + $0xd0] sm:$0xff]
        %v392 = vld [vmem:[#allocation5 + $0xd8] sm:$0xff]
        %v393 = vld [vmem:[#allocation5 + $0xe0] sm:$0xff]
        %v394 = vld [vmem:[#allocation5 + $0xe8] sm:$0xff]
        %v395 = vld [vmem:[#allocation5 + $0xf0] sm:$0xff]
        %v396 = vld [vmem:[#allocation5 + $0xf8] sm:$0xff]
        %v397 = vld [vmem:[#allocation5 + $0x100] sm:$0xff]
        %v398 = vld [vmem:[#allocation5 + $0x108] sm:$0xff]
        %v399 = vld [vmem:[#allocation5 + $0x110] sm:$0xff]
        %v400 = vld [vmem:[#allocation5 + $0x118] sm:$0xff]
        %v401 = vld [vmem:[#allocation5 + $0x120] sm:$0xff]
        %v402 = vld [vmem:[#allocation5 + $0x128] sm:$0xff]
        %v403 = vld [vmem:[#allocation5 + $0x130] sm:$0xff]
        %v404 = vld [vmem:[#allocation5 + $0x138] sm:$0xff]
        %v405 = vld [vmem:[#allocation5 + $0x140] sm:$0xff]
        %v406 = vld [vmem:[#allocation5 + $0x148] sm:$0xff]
        %v407 = vld [vmem:[#allocation5 + $0x150] sm:$0xff]
        %v408 = vld [vmem:[#allocation5 + $0x158] sm:$0xff]
        %v409 = vld [vmem:[#allocation5 + $0x160] sm:$0xff]
        %v410 = vld [vmem:[#allocation5 + $0x168] sm:$0xff]
        %v411 = vld [vmem:[#allocation5 + $0x170] sm:$0xff]
        %v412 = vld [vmem:[#allocation5 + $0x178] sm:$0xff]
        %v413 = vld [vmem:[#allocation5 + $0x180] sm:$0xff]
        %v414 = vld [vmem:[#allocation5 + $0x188] sm:$0xff]
        %v415 = vld [vmem:[#allocation5 + $0x190] sm:$0xff]
        %v416 = vld [vmem:[#allocation5 + $0x198] sm:$0xff]
        %v417 = vld [vmem:[#allocation5 + $0x1a0] sm:$0xff]
        %v418 = vld [vmem:[#allocation5 + $0x1a8] sm:$0xff]
        %v419 = vld [vmem:[#allocation5 + $0x1b0] sm:$0xff]
        %v420 = vld [vmem:[#allocation5 + $0x1b8] sm:$0xff]
        %v421 = vld [vmem:[#allocation5 + $0x1c0] sm:$0xff]
        %v422 = vld [vmem:[#allocation5 + $0x1c8] sm:$0xff]
        %v423 = vld [vmem:[#allocation5 + $0x1d0] sm:$0xff]
        %v424 = vld [vmem:[#allocation5 + $0x1d8] sm:$0xff]
        %v425 = vld [vmem:[#allocation5 + $0x1e0] sm:$0xff]
        %v426 = vld [vmem:[#allocation5 + $0x1e8] sm:$0xff]
        %v427 = vld [vmem:[#allocation5 + $0x1f0] sm:$0xff]
        %v428 = vld [vmem:[#allocation5 + $0x1f8] sm:$0xff]
        %v429 = vld [vmem:[#allocation5 + $0x200] sm:$0xff]
        %v430 = vld [vmem:[#allocation5 + $0x208] sm:$0xff]
        %v431 = vld [vmem:[#allocation5 + $0x210] sm:$0xff]
        %v432 = vld [vmem:[#allocation5 + $0x218] sm:$0xff]
        %v433 = vld [vmem:[#allocation5 + $0x220] sm:$0xff]
        %v434 = vld [vmem:[#allocation5 + $0x228] sm:$0xff]
        %v435 = vld [vmem:[#allocation5 + $0x230] sm:$0xff]
        %v436 = vld [vmem:[#allocation5 + $0x238] sm:$0xff]
        %v437 = vld [vmem:[#allocation5 + $0x240] sm:$0xff]
        %v438 = vld [vmem:[#allocation5 + $0x248] sm:$0xff]
        %v439 = vld [vmem:[#allocation5 + $0x250] sm:$0xff]
        %v440 = vld [vmem:[#allocation5 + $0x258] sm:$0xff]
        %v441 = vld [vmem:[#allocation5 + $0x260] sm:$0xff]
        %v442 = vld [vmem:[#allocation5 + $0x268] sm:$0xff]
        %v443 = vld [vmem:[#allocation5 + $0x270] sm:$0xff]
        %v444 = vld [vmem:[#allocation5 + $0x278] sm:$0xff]
        %v445 = vld [vmem:[#allocation5 + $0x280] sm:$0xff]
        %v446 = vld [vmem:[#allocation5 + $0x288] sm:$0xff]
        %v447 = vld [vmem:[#allocation5 + $0x290] sm:$0xff]
        %v448 = vld [vmem:[#allocation5 + $0x298] sm:$0xff]
        %v449 = vld [vmem:[#allocation5 + $0x2a0] sm:$0xff]
        %v450 = vld [vmem:[#allocation5 + $0x2a8] sm:$0xff]
        %v451 = vld [vmem:[#allocation5 + $0x2b0] sm:$0xff]
        %v452 = vld [vmem:[#allocation5 + $0x2b8] sm:$0xff]
        %v453 = vld [vmem:[#allocation5 + $0x2c0] sm:$0xff]
        %v454 = vld [vmem:[#allocation5 + $0x2c8] sm:$0xff]
        %v455 = vld [vmem:[#allocation5 + $0x2d0] sm:$0xff]
        %v456 = vld [vmem:[#allocation5 + $0x2d8] sm:$0xff]
        %v457 = vld [vmem:[#allocation5 + $0x2e0] sm:$0xff]
        %v458 = vld [vmem:[#allocation5 + $0x2e8] sm:$0xff]
        %v459 = vld [vmem:[#allocation5 + $0x2f0] sm:$0xff]
        %v460 = vld [vmem:[#allocation5 + $0x2f8] sm:$0xff]
        %v461 = vld [vmem:[#allocation5 + $0x300] sm:$0xff]
        %v462 = vld [vmem:[#allocation5 + $0x308] sm:$0xff]
        %v463 = vld [vmem:[#allocation5 + $0x310] sm:$0xff]
        %v464 = vld [vmem:[#allocation5 + $0x318] sm:$0xff]
        %v465 = vld [vmem:[#allocation5 + $0x320] sm:$0xff]
        %v466 = vld [vmem:[#allocation5 + $0x328] sm:$0xff]
        %v467 = vld [vmem:[#allocation5 + $0x330] sm:$0xff]
        %v468 = vld [vmem:[#allocation5 + $0x338] sm:$0xff]
        %v469 = vld [vmem:[#allocation5 + $0x340] sm:$0xff]
        %v470 = vld [vmem:[#allocation5 + $0x348] sm:$0xff]
        %v471 = vld [vmem:[#allocation5 + $0x350] sm:$0xff]
        %v472 = vld [vmem:[#allocation5 + $0x358] sm:$0xff]
        %v473 = vld [vmem:[#allocation5 + $0x360] sm:$0xff]
        %v474 = vld [vmem:[#allocation5 + $0x368] sm:$0xff]
        %v475 = vld [vmem:[#allocation5 + $0x370] sm:$0xff]
        %v476 = vld [vmem:[#allocation5 + $0x378] sm:$0xff]
        %v477 = vld [vmem:[#allocation5 + $0x380] sm:$0xff]
        %v478 = vld [vmem:[#allocation5 + $0x388] sm:$0xff]
        %v479 = vld [vmem:[#allocation5 + $0x390] sm:$0xff]
        %v480 = vld [vmem:[#allocation5 + $0x398] sm:$0xff]
        %v481 = vld [vmem:[#allocation5 + $0x3a0] sm:$0xff]
        %v482 = vld [vmem:[#allocation5 + $0x3a8] sm:$0xff]
        %v483 = vld [vmem:[#allocation5 + $0x3b0] sm:$0xff]
        %v484 = vld [vmem:[#allocation5 + $0x3b8] sm:$0xff]
        %v485 = vld [vmem:[#allocation5 + $0x3c0] sm:$0xff]
        %v486 = vld [vmem:[#allocation5 + $0x3c8] sm:$0xff]
        %v487 = vld [vmem:[#allocation5 + $0x3d0] sm:$0xff]
        %v488 = vld [vmem:[#allocation5 + $0x3d8] sm:$0xff]
        %v489 = vld [vmem:[#allocation5 + $0x3e0] sm:$0xff]
        %v490 = vld [vmem:[#allocation5 + $0x3e8] sm:$0xff]
        %v491 = vld [vmem:[#allocation5 + $0x3f0] sm:$0xff]
        %v492 = vld [vmem:[#allocation5 + $0x3f8] sm:$0xff]
        %v493 = vld [vmem:[#allocation5 + $0x400] sm:$0xff]
        %v494 = vld [vmem:[#allocation5 + $0x408] sm:$0xff]
        %v495 = vld [vmem:[#allocation5 + $0x410] sm:$0xff]
        %v496 = vld [vmem:[#allocation5 + $0x418] sm:$0xff]
        %v497 = vld [vmem:[#allocation5 + $0x420] sm:$0xff]
        %v498 = vld [vmem:[#allocation5 + $0x428] sm:$0xff]
        %v499 = vld [vmem:[#allocation5 + $0x430] sm:$0xff]
        %v500 = vld [vmem:[#allocation5 + $0x438] sm:$0xff]
        %v501 = vld [vmem:[#allocation5 + $0x440] sm:$0xff]
        %v502 = vld [vmem:[#allocation5 + $0x448] sm:$0xff]
        %v503 = vld [vmem:[#allocation5 + $0x450] sm:$0xff]
        %v504 = vld [vmem:[#allocation5 + $0x458] sm:$0xff]
        %v505 = vld [vmem:[#allocation5 + $0x460] sm:$0xff]
        %v506 = vld [vmem:[#allocation5 + $0x468] sm:$0xff]
        %v507 = vld [vmem:[#allocation5 + $0x470] sm:$0xff]
        %v508 = vld [vmem:[#allocation5 + $0x478] sm:$0xff]
        %v509 = vld [vmem:[#allocation5 + $0x480] sm:$0xff]
        %v510 = vld [vmem:[#allocation5 + $0x488] sm:$0xff]
        %v511 = vld [vmem:[#allocation5 + $0x490] sm:$0xff]
        %v512 = vld [vmem:[#allocation5 + $0x498] sm:$0xff]
        %v513 = vld [vmem:[#allocation5 + $0x4a0] sm:$0xff]
        %v514 = vld [vmem:[#allocation5 + $0x4a8] sm:$0xff]
        %v515 = vld [vmem:[#allocation5 + $0x4b0] sm:$0xff]
        %v516 = vld [vmem:[#allocation5 + $0x4b8] sm:$0xff]
        %v517 = vld [vmem:[#allocation5 + $0x4c0] sm:$0xff]
        %v518 = vld [vmem:[#allocation5 + $0x4c8] sm:$0xff]
        %v519 = vld [vmem:[#allocation5 + $0x4d0] sm:$0xff]
        %v520 = vld [vmem:[#allocation5 + $0x4d8] sm:$0xff]
        %v521 = vld [vmem:[#allocation5 + $0x4e0] sm:$0xff]
        %v522 = vld [vmem:[#allocation5 + $0x4e8] sm:$0xff]
        %v523 = vld [vmem:[#allocation5 + $0x4f0] sm:$0xff]
        %v524 = vld [vmem:[#allocation5 + $0x4f8] sm:$0xff]
        %v525 = vld [vmem:[#allocation5 + $0x500] sm:$0xff]
        %v526 = vld [vmem:[#allocation5 + $0x508] sm:$0xff]
        %v527 = vld [vmem:[#allocation5 + $0x510] sm:$0xff]
        %v528 = vld [vmem:[#allocation5 + $0x518] sm:$0xff]
        %v529 = vld [vmem:[#allocation5 + $0x520] sm:$0xff]
        %v530 = vld [vmem:[#allocation5 + $0x528] sm:$0xff]
        %v531 = vld [vmem:[#allocation5 + $0x530] sm:$0xff]
        %v532 = vld [vmem:[#allocation5 + $0x538] sm:$0xff]
        %v533 = vld [vmem:[#allocation5 + $0x540] sm:$0xff]
        %v534 = vld [vmem:[#allocation5 + $0x548] sm:$0xff]
        %v535 = vld [vmem:[#allocation5 + $0x550] sm:$0xff]
        %v536 = vld [vmem:[#allocation5 + $0x558] sm:$0xff]
        %v537 = vld [vmem:[#allocation5 + $0x560] sm:$0xff]
        %v538 = vld [vmem:[#allocation5 + $0x568] sm:$0xff]
        %v539 = vld [vmem:[#allocation5 + $0x570] sm:$0xff]
        %v540 = vld [vmem:[#allocation5 + $0x578] sm:$0xff]
        %v541 = vld [vmem:[#allocation5 + $0x580] sm:$0xff]
        %v542 = vld [vmem:[#allocation5 + $0x588] sm:$0xff]
        %v543 = vld [vmem:[#allocation5 + $0x590] sm:$0xff]
        %v544 = vld [vmem:[#allocation5 + $0x598] sm:$0xff]
        %v545 = vld [vmem:[#allocation5 + $0x5a0] sm:$0xff]
        %v546 = vld [vmem:[#allocation5 + $0x5a8] sm:$0xff]
        %v547 = vld [vmem:[#allocation5 + $0x5b0] sm:$0xff]
        %v548 = vld [vmem:[#allocation5 + $0x5b8] sm:$0xff]
        %v549 = vld [vmem:[#allocation5 + $0x5c0] sm:$0xff]
        %v550 = vld [vmem:[#allocation5 + $0x5c8] sm:$0xff]
        %v551 = vld [vmem:[#allocation5 + $0x5d0] sm:$0xff]
        %v552 = vld [vmem:[#allocation5 + $0x5d8] sm:$0xff]
        %v553 = vld [vmem:[#allocation5 + $0x5e0] sm:$0xff]
        %v554 = vld [vmem:[#allocation5 + $0x5e8] sm:$0xff]
        %v555 = vld [vmem:[#allocation5 + $0x5f0] sm:$0xff]
        %v556 = vld [vmem:[#allocation5 + $0x5f8] sm:$0xff]
        %v557 = vld [vmem:[#allocation5 + $0x600] sm:$0xff]
        %v558 = vld [vmem:[#allocation5 + $0x608] sm:$0xff]
        %v559 = vld [vmem:[#allocation5 + $0x610] sm:$0xff]
        %v560 = vld [vmem:[#allocation5 + $0x618] sm:$0xff]
        %v561 = vld [vmem:[#allocation5 + $0x620] sm:$0xff]
        %v562 = vld [vmem:[#allocation5 + $0x628] sm:$0xff]
        %v563 = vld [vmem:[#allocation5 + $0x630] sm:$0xff]
        %v564 = vld [vmem:[#allocation5 + $0x638] sm:$0xff]
        %v565 = vld [vmem:[#allocation5 + $0x640] sm:$0xff]
        %v566 = vld [vmem:[#allocation5 + $0x648] sm:$0xff]
        %v567 = vld [vmem:[#allocation5 + $0x650] sm:$0xff]
        %v568 = vld [vmem:[#allocation5 + $0x658] sm:$0xff]
        %v569 = vld [vmem:[#allocation5 + $0x660] sm:$0xff]
        %v570 = vld [vmem:[#allocation5 + $0x668] sm:$0xff]
        %v571 = vld [vmem:[#allocation5 + $0x670] sm:$0xff]
        %v572 = vld [vmem:[#allocation5 + $0x678] sm:$0xff]
        %v573 = vld [vmem:[#allocation5 + $0x680] sm:$0xff]
        %v574 = vld [vmem:[#allocation5 + $0x688] sm:$0xff]
        %v575 = vld [vmem:[#allocation5 + $0x690] sm:$0xff]
        %v576 = vld [vmem:[#allocation5 + $0x698] sm:$0xff]
        %v577 = vld [vmem:[#allocation5 + $0x6a0] sm:$0xff]
        %v578 = vld [vmem:[#allocation5 + $0x6a8] sm:$0xff]
        %v579 = vld [vmem:[#allocation5 + $0x6b0] sm:$0xff]
        %v580 = vld [vmem:[#allocation5 + $0x6b8] sm:$0xff]
        %v581 = vld [vmem:[#allocation5 + $0x6c0] sm:$0xff]
        %v582 = vld [vmem:[#allocation5 + $0x6c8] sm:$0xff]
        %v583 = vld [vmem:[#allocation5 + $0x6d0] sm:$0xff]
        %v584 = vld [vmem:[#allocation5 + $0x6d8] sm:$0xff]
        %v585 = vld [vmem:[#allocation5 + $0x6e0] sm:$0xff]
        %v586 = vld [vmem:[#allocation5 + $0x6e8] sm:$0xff]
        %v587 = vld [vmem:[#allocation5 + $0x6f0] sm:$0xff]
        %v588 = vld [vmem:[#allocation5 + $0x6f8] sm:$0xff]
        %v589 = vld [vmem:[#allocation5 + $0x700] sm:$0xff]
        %v590 = vld [vmem:[#allocation5 + $0x708] sm:$0xff]
        %v591 = vld [vmem:[#allocation5 + $0x710] sm:$0xff]
        %v592 = vld [vmem:[#allocation5 + $0x718] sm:$0xff]
        %v593 = vld [vmem:[#allocation5 + $0x720] sm:$0xff]
        %v594 = vld [vmem:[#allocation5 + $0x728] sm:$0xff]
        %v595 = vld [vmem:[#allocation5 + $0x730] sm:$0xff]
        %v596 = vld [vmem:[#allocation5 + $0x738] sm:$0xff]
        %v597 = vld [vmem:[#allocation5 + $0x740] sm:$0xff]
        %v598 = vld [vmem:[#allocation5 + $0x748] sm:$0xff]
        %v599 = vld [vmem:[#allocation5 + $0x750] sm:$0xff]
        %v600 = vld [vmem:[#allocation5 + $0x758] sm:$0xff]
        %v601 = vld [vmem:[#allocation5 + $0x760] sm:$0xff]
        %v602 = vld [vmem:[#allocation5 + $0x768] sm:$0xff]
        %v603 = vld [vmem:[#allocation5 + $0x770] sm:$0xff]
        %v604 = vld [vmem:[#allocation5 + $0x778] sm:$0xff]
        %v605 = vld [vmem:[#allocation5 + $0x780] sm:$0xff]
        %v606 = vld [vmem:[#allocation5 + $0x788] sm:$0xff]
        %v607 = vld [vmem:[#allocation5 + $0x790] sm:$0xff]
        %v608 = vld [vmem:[#allocation5 + $0x798] sm:$0xff]
        %v609 = vld [vmem:[#allocation5 + $0x7a0] sm:$0xff]
        %v610 = vld [vmem:[#allocation5 + $0x7a8] sm:$0xff]
        %v611 = vld [vmem:[#allocation5 + $0x7b0] sm:$0xff]
        %v612 = vld [vmem:[#allocation5 + $0x7b8] sm:$0xff]
        %v613 = vld [vmem:[#allocation5 + $0x7c0] sm:$0xff]
        %v614 = vld [vmem:[#allocation5 + $0x7c8] sm:$0xff]
        %v615 = vld [vmem:[#allocation5 + $0x7d0] sm:$0xff]
        %v616 = vld [vmem:[#allocation5 + $0x7d8] sm:$0xff]
        %v617 = vld [vmem:[#allocation5 + $0x7e0] sm:$0xff]
        %v618 = vld [vmem:[#allocation5 + $0x7e8] sm:$0xff]
        %v619 = vld [vmem:[#allocation5 + $0x7f0] sm:$0xff]
        %v620 = vld [vmem:[#allocation5 + $0x7f8] sm:$0xff]
        %v621 = vld [vmem:[#allocation5 + $0x800] sm:$0xff]
        %v622 = vld [vmem:[#allocation5 + $0x808] sm:$0xff]
        %v623 = vld [vmem:[#allocation5 + $0x810] sm:$0xff]
        %v624 = vld [vmem:[#allocation5 + $0x818] sm:$0xff]
        %v625 = vld [vmem:[#allocation5 + $0x820] sm:$0xff]
        %v626 = vld [vmem:[#allocation5 + $0x828] sm:$0xff]
        %v627 = vld [vmem:[#allocation5 + $0x830] sm:$0xff]
        %v628 = vld [vmem:[#allocation5 + $0x838] sm:$0xff]
        %v629 = vld [vmem:[#allocation5 + $0x840] sm:$0xff]
        %v630 = vld [vmem:[#allocation5 + $0x848] sm:$0xff]
        %v631 = vld [vmem:[#allocation5 + $0x850] sm:$0xff]
        %v632 = vld [vmem:[#allocation5 + $0x858] sm:$0xff]
        %v633 = vld [vmem:[#allocation5 + $0x860] sm:$0xff]
        %v634 = vld [vmem:[#allocation5 + $0x868] sm:$0xff]
        %v635 = vld [vmem:[#allocation5 + $0x870] sm:$0xff]
        %v636 = vld [vmem:[#allocation5 + $0x878] sm:$0xff]
        %v637 = vld [vmem:[#allocation5 + $0x880] sm:$0xff]
        %v638 = vld [vmem:[#allocation5 + $0x888] sm:$0xff]
        %v639 = vld [vmem:[#allocation5 + $0x890] sm:$0xff]
        %v640 = vld [vmem:[#allocation5 + $0x898] sm:$0xff]
        %v641 = vld [vmem:[#allocation5 + $0x8a0] sm:$0xff]
        %v642 = vld [vmem:[#allocation5 + $0x8a8] sm:$0xff]
        %v643 = vld [vmem:[#allocation5 + $0x8b0] sm:$0xff]
        %v644 = vld [vmem:[#allocation5 + $0x8b8] sm:$0xff]
        %v645 = vld [vmem:[#allocation5 + $0x8c0] sm:$0xff]
        %v646 = vld [vmem:[#allocation5 + $0x8c8] sm:$0xff]
        %v647 = vld [vmem:[#allocation5 + $0x8d0] sm:$0xff]
        %v648 = vld [vmem:[#allocation5 + $0x8d8] sm:$0xff]
        %v649 = vld [vmem:[#allocation5 + $0x8e0] sm:$0xff]
        %v650 = vld [vmem:[#allocation5 + $0x8e8] sm:$0xff]
        %v651 = vld [vmem:[#allocation5 + $0x8f0] sm:$0xff]
        %v652 = vld [vmem:[#allocation5 + $0x8f8] sm:$0xff]
        %v653 = vld [vmem:[#allocation7] sm:$0xff]
        %v654 = vld [vmem:[#allocation7 + $0x8] sm:$0xf]
        %v657 = vlaneseq
        %v658 = vshrl.u32 %v657, 7
        %v659 = vsub.s32 0, %v658
        %v660 = vrot.slane %v653, %v659
        %v661 = vlaneseq
        %v662 = vshrl.u32 %v661, 7
        %v663 = vsub.s32 1, %v662
        %v664 = vrot.slane %v653, %v663
        %v665 = vlaneseq
        %v666 = vshrl.u32 %v665, 7
        %v667 = vsub.s32 2, %v666
        %v668 = vrot.slane %v653, %v667
        %v669 = vlaneseq
        %v670 = vshrl.u32 %v669, 7
        %v671 = vsub.s32 3, %v670
        %v672 = vrot.slane %v653, %v671
        %v673 = vlaneseq
        %v674 = vshrl.u32 %v673, 7
        %v675 = vsub.s32 4, %v674
        %v676 = vrot.slane %v653, %v675
        %v677 = vlaneseq
        %v678 = vshrl.u32 %v677, 7
        %v679 = vsub.s32 5, %v678
        %v680 = vrot.slane %v653, %v679
        %v681 = vlaneseq
        %v682 = vshrl.u32 %v681, 7
        %v683 = vsub.s32 6, %v682
        %v684 = vrot.slane %v653, %v683
        %v685 = vlaneseq
        %v686 = vshrl.u32 %v685, 7
        %v687 = vsub.s32 7, %v686
        %v688 = vrot.slane %v653, %v687
        %v689 = vlaneseq
        %v690 = vshrl.u32 %v689, 7
        %v691 = vsub.s32 0, %v690
        %v692 = vrot.slane %v654, %v691
        %v693 = vlaneseq
        %v694 = vshrl.u32 %v693, 7
        %v695 = vsub.s32 1, %v694
        %v696 = vrot.slane %v654, %v695
        %v697 = vlaneseq
        %v698 = vshrl.u32 %v697, 7
        %v699 = vsub.s32 2, %v698
        %v700 = vrot.slane %v654, %v699
        %v701 = vlaneseq
        %v702 = vshrl.u32 %v701, 7
        %v703 = vsub.s32 3, %v702
        %v704 = vrot.slane %v654, %v703
        %v781 = vunpack.c.l.b16 %v301
        %v782 = vunpack.c.h.b16 %v301
        %v783 = vunpack.c.l.b16 %v302
        %v784 = vunpack.c.l.b16 %v303
        %v785 = vunpack.c.h.b16 %v303
        %v786 = vunpack.c.l.b16 %v304
        %v787 = vunpack.c.l.b16 %v305
        %v788 = vunpack.c.h.b16 %v305
        %v789 = vunpack.c.l.b16 %v306
        %v790 = vunpack.c.l.b16 %v307
        %v791 = vunpack.c.h.b16 %v307
        %v792 = vunpack.c.l.b16 %v308
        %v793 = vunpack.c.l.b16 %v309
        %v794 = vunpack.c.h.b16 %v309
        %v795 = vunpack.c.l.b16 %v310
        %v796 = vunpack.c.l.b16 %v311
        %v797 = vunpack.c.h.b16 %v311
        %v798 = vunpack.c.l.b16 %v312
        %v799 = vunpack.c.l.b16 %v313
        %v800 = vunpack.c.h.b16 %v313
        %v801 = vunpack.c.l.b16 %v314
        %v802 = vunpack.c.l.b16 %v315
        %v803 = vunpack.c.h.b16 %v315
        %v804 = vunpack.c.l.b16 %v316
        %v805 = vunpack.c.l.b16 %v317
        %v806 = vunpack.c.h.b16 %v317
        %v807 = vunpack.c.l.b16 %v318
        %v808 = vunpack.c.l.b16 %v319
        %v809 = vunpack.c.h.b16 %v319
        %v810 = vunpack.c.l.b16 %v320
        %v811 = vunpack.c.l.b16 %v321
        %v812 = vunpack.c.h.b16 %v321
        %v813 = vunpack.c.l.b16 %v322
        %v814 = vunpack.c.l.b16 %v323
        %v815 = vunpack.c.h.b16 %v323
        %v816 = vunpack.c.l.b16 %v324
        %v817 = vunpack.c.l.b16 %v325
        %v818 = vunpack.c.h.b16 %v325
        %v819 = vunpack.c.l.b16 %v326
        %v820 = vunpack.c.l.b16 %v327
        %v821 = vunpack.c.h.b16 %v327
        %v822 = vunpack.c.l.b16 %v328
        %v823 = vunpack.c.l.b16 %v329
        %v824 = vunpack.c.h.b16 %v329
        %v825 = vunpack.c.l.b16 %v330
        %v826 = vunpack.c.l.b16 %v331
        %v827 = vunpack.c.h.b16 %v331
        %v828 = vunpack.c.l.b16 %v332
        %v829 = vunpack.c.l.b16 %v333
        %v830 = vunpack.c.h.b16 %v333
        %v831 = vunpack.c.l.b16 %v334
        %v832 = vunpack.c.l.b16 %v335
        %v833 = vunpack.c.h.b16 %v335
        %v834 = vunpack.c.l.b16 %v336
        %v835 = vunpack.c.l.b16 %v337
        %v836 = vunpack.c.h.b16 %v337
        %v837 = vunpack.c.l.b16 %v338
        %v838 = vunpack.c.l.b16 %v339
        %v839 = vunpack.c.h.b16 %v339
        %v840 = vunpack.c.l.b16 %v340
        %v841 = vunpack.c.l.b16 %v341
        %v842 = vunpack.c.h.b16 %v341
        %v843 = vunpack.c.l.b16 %v342
        %v844 = vunpack.c.l.b16 %v343
        %v845 = vunpack.c.h.b16 %v343
        %v846 = vunpack.c.l.b16 %v344
        %v847 = vunpack.c.l.b16 %v345
        %v848 = vunpack.c.h.b16 %v345
        %v849 = vunpack.c.l.b16 %v346
        %v850 = vunpack.c.l.b16 %v347
        %v851 = vunpack.c.h.b16 %v347
        %v852 = vunpack.c.l.b16 %v348
        %v853 = vunpack.c.l.b16 %v349
        %v854 = vunpack.c.h.b16 %v349
        %v855 = vunpack.c.l.b16 %v350
        %v856 = vunpack.c.l.b16 %v351
        %v857 = vunpack.c.h.b16 %v351
        %v858 = vunpack.c.l.b16 %v352
        %v859 = vunpack.c.l.b16 %v353
        %v860 = vunpack.c.h.b16 %v353
        %v861 = vunpack.c.l.b16 %v354
        %v862 = vunpack.c.l.b16 %v355
        %v863 = vunpack.c.h.b16 %v355
        %v864 = vunpack.c.l.b16 %v356
        %v865 = vunpack.c.l.b16 %v357
        %v866 = vunpack.c.h.b16 %v357
        %v867 = vunpack.c.l.b16 %v358
        %v868 = vunpack.c.l.b16 %v359
        %v869 = vunpack.c.h.b16 %v359
        %v870 = vunpack.c.l.b16 %v360
        %v871 = vunpack.c.l.b16 %v361
        %v872 = vunpack.c.h.b16 %v361
        %v873 = vunpack.c.l.b16 %v362
        %v874 = vunpack.c.l.b16 %v363
        %v875 = vunpack.c.h.b16 %v363
        %v876 = vunpack.c.l.b16 %v364
        %v877 = vpack.c.b16 %v784, %v781
        %v878 = vpack.c.b16 %v785, %v782
        %v879 = vpack.c.b16 %v786, %v783
        %v880 = vpack.c.b16 %v790, %v787
        %v881 = vpack.c.b16 %v791, %v788
        %v882 = vpack.c.b16 %v792, %v789
        %v883 = vpack.c.b16 %v796, %v793
        %v884 = vpack.c.b16 %v797, %v794
        %v885 = vpack.c.b16 %v798, %v795
        %v886 = vpack.c.b16 %v802, %v799
        %v887 = vpack.c.b16 %v803, %v800
        %v888 = vpack.c.b16 %v804, %v801
        %v889 = vpack.c.b16 %v808, %v805
        %v890 = vpack.c.b16 %v809, %v806
        %v891 = vpack.c.b16 %v810, %v807
        %v892 = vpack.c.b16 %v814, %v811
        %v893 = vpack.c.b16 %v815, %v812
        %v894 = vpack.c.b16 %v816, %v813
        %v895 = vpack.c.b16 %v820, %v817
        %v896 = vpack.c.b16 %v821, %v818
        %v897 = vpack.c.b16 %v822, %v819
        %v898 = vpack.c.b16 %v826, %v823
        %v899 = vpack.c.b16 %v827, %v824
        %v900 = vpack.c.b16 %v828, %v825
        %v901 = vpack.c.b16 %v832, %v829
        %v902 = vpack.c.b16 %v833, %v830
        %v903 = vpack.c.b16 %v834, %v831
        %v904 = vpack.c.b16 %v838, %v835
        %v905 = vpack.c.b16 %v839, %v836
        %v906 = vpack.c.b16 %v840, %v837
        %v907 = vpack.c.b16 %v844, %v841
        %v908 = vpack.c.b16 %v845, %v842
        %v909 = vpack.c.b16 %v846, %v843
        %v910 = vpack.c.b16 %v850, %v847
        %v911 = vpack.c.b16 %v851, %v848
        %v912 = vpack.c.b16 %v852, %v849
        %v913 = vpack.c.b16 %v856, %v853
        %v914 = vpack.c.b16 %v857, %v854
        %v915 = vpack.c.b16 %v858, %v855
        %v916 = vpack.c.b16 %v862, %v859
        %v917 = vpack.c.b16 %v863, %v860
        %v918 = vpack.c.b16 %v864, %v861
        %v919 = vpack.c.b16 %v868, %v865
        %v920 = vpack.c.b16 %v869, %v866
        %v921 = vpack.c.b16 %v870, %v867
        %v922 = vpack.c.b16 %v874, %v871
        %v923 = vpack.c.b16 %v875, %v872
        %v924 = vpack.c.b16 %v876, %v873
        %v1261 = vunpack.c.l.b16 %v365
        %v1262 = vunpack.c.h.b16 %v365
        %v1263 = vunpack.c.l.b16 %v366
        %v1264 = vunpack.c.h.b16 %v366
        %v1265 = vunpack.c.l.b16 %v367
        %v1266 = vunpack.c.h.b16 %v367
        %v1267 = vunpack.c.l.b16 %v368
        %v1268 = vunpack.c.h.b16 %v368
        %v1269 = vunpack.c.l.b16 %v369
        %v1270 = vunpack.c.h.b16 %v369
        %v1271 = vunpack.c.l.b16 %v370
        %v1272 = vunpack.c.h.b16 %v370
        %v1273 = vunpack.c.l.b16 %v371
        %v1274 = vunpack.c.h.b16 %v371
        %v1275 = vunpack.c.l.b16 %v372
        %v1276 = vunpack.c.h.b16 %v372
        %v1277 = vunpack.c.l.b16 %v373
        %v1278 = vunpack.c.h.b16 %v373
        %v1279 = vunpack.c.l.b16 %v374
        %v1280 = vunpack.c.h.b16 %v374
        %v1281 = vunpack.c.l.b16 %v375
        %v1282 = vunpack.c.h.b16 %v375
        %v1283 = vunpack.c.l.b16 %v376
        %v1284 = vunpack.c.h.b16 %v376
        %v1285 = vunpack.c.l.b16 %v377
        %v1286 = vunpack.c.h.b16 %v377
        %v1287 = vunpack.c.l.b16 %v378
        %v1288 = vunpack.c.h.b16 %v378
        %v1289 = vunpack.c.l.b16 %v379
        %v1290 = vunpack.c.h.b16 %v379
        %v1291 = vunpack.c.l.b16 %v380
        %v1292 = vunpack.c.h.b16 %v380
        %v1293 = vunpack.c.l.b16 %v381
        %v1294 = vunpack.c.h.b16 %v381
        %v1295 = vunpack.c.l.b16 %v382
        %v1296 = vunpack.c.h.b16 %v382
        %v1297 = vunpack.c.l.b16 %v383
        %v1298 = vunpack.c.h.b16 %v383
        %v1299 = vunpack.c.l.b16 %v384
        %v1300 = vunpack.c.h.b16 %v384
        %v1301 = vunpack.c.l.b16 %v385
        %v1302 = vunpack.c.h.b16 %v385
        %v1303 = vunpack.c.l.b16 %v386
        %v1304 = vunpack.c.h.b16 %v386
        %v1305 = vunpack.c.l.b16 %v387
        %v1306 = vunpack.c.h.b16 %v387
        %v1307 = vunpack.c.l.b16 %v388
        %v1308 = vunpack.c.h.b16 %v388
        %v1309 = vunpack.c.l.b16 %v389
        %v1310 = vunpack.c.h.b16 %v389
        %v1311 = vunpack.c.l.b16 %v390
        %v1312 = vunpack.c.h.b16 %v390
        %v1313 = vunpack.c.l.b16 %v391
        %v1314 = vunpack.c.h.b16 %v391
        %v1315 = vunpack.c.l.b16 %v392
        %v1316 = vunpack.c.h.b16 %v392
        %v1317 = vunpack.c.l.b16 %v393
        %v1318 = vunpack.c.h.b16 %v393
        %v1319 = vunpack.c.l.b16 %v394
        %v1320 = vunpack.c.h.b16 %v394
        %v1321 = vunpack.c.l.b16 %v395
        %v1322 = vunpack.c.h.b16 %v395
        %v1323 = vunpack.c.l.b16 %v396
        %v1324 = vunpack.c.h.b16 %v396
        %v1325 = vunpack.c.l.b16 %v397
        %v1326 = vunpack.c.h.b16 %v397
        %v1327 = vunpack.c.l.b16 %v398
        %v1328 = vunpack.c.h.b16 %v398
        %v1329 = vunpack.c.l.b16 %v399
        %v1330 = vunpack.c.h.b16 %v399
        %v1331 = vunpack.c.l.b16 %v400
        %v1332 = vunpack.c.h.b16 %v400
        %v1333 = vunpack.c.l.b16 %v401
        %v1334 = vunpack.c.h.b16 %v401
        %v1335 = vunpack.c.l.b16 %v402
        %v1336 = vunpack.c.h.b16 %v402
        %v1337 = vunpack.c.l.b16 %v403
        %v1338 = vunpack.c.h.b16 %v403
        %v1339 = vunpack.c.l.b16 %v404
        %v1340 = vunpack.c.h.b16 %v404
        %v1341 = vunpack.c.l.b16 %v405
        %v1342 = vunpack.c.h.b16 %v405
        %v1343 = vunpack.c.l.b16 %v406
        %v1344 = vunpack.c.h.b16 %v406
        %v1345 = vunpack.c.l.b16 %v407
        %v1346 = vunpack.c.h.b16 %v407
        %v1347 = vunpack.c.l.b16 %v408
        %v1348 = vunpack.c.h.b16 %v408
        %v1349 = vunpack.c.l.b16 %v409
        %v1350 = vunpack.c.h.b16 %v409
        %v1351 = vunpack.c.l.b16 %v410
        %v1352 = vunpack.c.h.b16 %v410
        %v1353 = vunpack.c.l.b16 %v411
        %v1354 = vunpack.c.h.b16 %v411
        %v1355 = vunpack.c.l.b16 %v412
        %v1356 = vunpack.c.h.b16 %v412
        %v1357 = vunpack.c.l.b16 %v413
        %v1358 = vunpack.c.h.b16 %v413
        %v1359 = vunpack.c.l.b16 %v414
        %v1360 = vunpack.c.h.b16 %v414
        %v1361 = vunpack.c.l.b16 %v415
        %v1362 = vunpack.c.h.b16 %v415
        %v1363 = vunpack.c.l.b16 %v416
        %v1364 = vunpack.c.h.b16 %v416
        %v1365 = vunpack.c.l.b16 %v417
        %v1366 = vunpack.c.h.b16 %v417
        %v1367 = vunpack.c.l.b16 %v418
        %v1368 = vunpack.c.h.b16 %v418
        %v1369 = vunpack.c.l.b16 %v419
        %v1370 = vunpack.c.h.b16 %v419
        %v1371 = vunpack.c.l.b16 %v420
        %v1372 = vunpack.c.h.b16 %v420
        %v1373 = vunpack.c.l.b16 %v421
        %v1374 = vunpack.c.h.b16 %v421
        %v1375 = vunpack.c.l.b16 %v422
        %v1376 = vunpack.c.h.b16 %v422
        %v1377 = vunpack.c.l.b16 %v423
        %v1378 = vunpack.c.h.b16 %v423
        %v1379 = vunpack.c.l.b16 %v424
        %v1380 = vunpack.c.h.b16 %v424
        %v1381 = vunpack.c.l.b16 %v425
        %v1382 = vunpack.c.h.b16 %v425
        %v1383 = vunpack.c.l.b16 %v426
        %v1384 = vunpack.c.h.b16 %v426
        %v1385 = vunpack.c.l.b16 %v427
        %v1386 = vunpack.c.h.b16 %v427
        %v1387 = vunpack.c.l.b16 %v428
        %v1388 = vunpack.c.h.b16 %v428
        %v1389 = vunpack.c.l.b16 %v429
        %v1390 = vunpack.c.h.b16 %v429
        %v1391 = vunpack.c.l.b16 %v430
        %v1392 = vunpack.c.h.b16 %v430
        %v1393 = vunpack.c.l.b16 %v431
        %v1394 = vunpack.c.h.b16 %v431
        %v1395 = vunpack.c.l.b16 %v432
        %v1396 = vunpack.c.h.b16 %v432
        %v1397 = vunpack.c.l.b16 %v433
        %v1398 = vunpack.c.h.b16 %v433
        %v1399 = vunpack.c.l.b16 %v434
        %v1400 = vunpack.c.h.b16 %v434
        %v1401 = vunpack.c.l.b16 %v435
        %v1402 = vunpack.c.h.b16 %v435
        %v1403 = vunpack.c.l.b16 %v436
        %v1404 = vunpack.c.h.b16 %v436
        %v1405 = vunpack.c.l.b16 %v437
        %v1406 = vunpack.c.h.b16 %v437
        %v1407 = vunpack.c.l.b16 %v438
        %v1408 = vunpack.c.h.b16 %v438
        %v1409 = vunpack.c.l.b16 %v439
        %v1410 = vunpack.c.h.b16 %v439
        %v1411 = vunpack.c.l.b16 %v440
        %v1412 = vunpack.c.h.b16 %v440
        %v1413 = vunpack.c.l.b16 %v441
        %v1414 = vunpack.c.h.b16 %v441
        %v1415 = vunpack.c.l.b16 %v442
        %v1416 = vunpack.c.h.b16 %v442
        %v1417 = vunpack.c.l.b16 %v443
        %v1418 = vunpack.c.h.b16 %v443
        %v1419 = vunpack.c.l.b16 %v444
        %v1420 = vunpack.c.h.b16 %v444
        %v1421 = vunpack.c.l.b16 %v445
        %v1422 = vunpack.c.h.b16 %v445
        %v1423 = vunpack.c.l.b16 %v446
        %v1424 = vunpack.c.h.b16 %v446
        %v1425 = vunpack.c.l.b16 %v447
        %v1426 = vunpack.c.h.b16 %v447
        %v1427 = vunpack.c.l.b16 %v448
        %v1428 = vunpack.c.h.b16 %v448
        %v1429 = vunpack.c.l.b16 %v449
        %v1430 = vunpack.c.h.b16 %v449
        %v1431 = vunpack.c.l.b16 %v450
        %v1432 = vunpack.c.h.b16 %v450
        %v1433 = vunpack.c.l.b16 %v451
        %v1434 = vunpack.c.h.b16 %v451
        %v1435 = vunpack.c.l.b16 %v452
        %v1436 = vunpack.c.h.b16 %v452
        %v1437 = vunpack.c.l.b16 %v453
        %v1438 = vunpack.c.h.b16 %v453
        %v1439 = vunpack.c.l.b16 %v454
        %v1440 = vunpack.c.h.b16 %v454
        %v1441 = vunpack.c.l.b16 %v455
        %v1442 = vunpack.c.h.b16 %v455
        %v1443 = vunpack.c.l.b16 %v456
        %v1444 = vunpack.c.h.b16 %v456
        %v1445 = vunpack.c.l.b16 %v457
        %v1446 = vunpack.c.h.b16 %v457
        %v1447 = vunpack.c.l.b16 %v458
        %v1448 = vunpack.c.h.b16 %v458
        %v1449 = vunpack.c.l.b16 %v459
        %v1450 = vunpack.c.h.b16 %v459
        %v1451 = vunpack.c.l.b16 %v460
        %v1452 = vunpack.c.h.b16 %v460
        %v1453 = vunpack.c.l.b16 %v461
        %v1454 = vunpack.c.h.b16 %v461
        %v1455 = vunpack.c.l.b16 %v462
        %v1456 = vunpack.c.h.b16 %v462
        %v1457 = vunpack.c.l.b16 %v463
        %v1458 = vunpack.c.h.b16 %v463
        %v1459 = vunpack.c.l.b16 %v464
        %v1460 = vunpack.c.h.b16 %v464
        %v1461 = vunpack.c.l.b16 %v465
        %v1462 = vunpack.c.h.b16 %v465
        %v1463 = vunpack.c.l.b16 %v466
        %v1464 = vunpack.c.h.b16 %v466
        %v1465 = vunpack.c.l.b16 %v467
        %v1466 = vunpack.c.h.b16 %v467
        %v1467 = vunpack.c.l.b16 %v468
        %v1468 = vunpack.c.h.b16 %v468
        %v1469 = vunpack.c.l.b16 %v469
        %v1470 = vunpack.c.h.b16 %v469
        %v1471 = vunpack.c.l.b16 %v470
        %v1472 = vunpack.c.h.b16 %v470
        %v1473 = vunpack.c.l.b16 %v471
        %v1474 = vunpack.c.h.b16 %v471
        %v1475 = vunpack.c.l.b16 %v472
        %v1476 = vunpack.c.h.b16 %v472
        %v1477 = vunpack.c.l.b16 %v473
        %v1478 = vunpack.c.h.b16 %v473
        %v1479 = vunpack.c.l.b16 %v474
        %v1480 = vunpack.c.h.b16 %v474
        %v1481 = vunpack.c.l.b16 %v475
        %v1482 = vunpack.c.h.b16 %v475
        %v1483 = vunpack.c.l.b16 %v476
        %v1484 = vunpack.c.h.b16 %v476
        %v1485 = vunpack.c.l.b16 %v477
        %v1486 = vunpack.c.h.b16 %v477
        %v1487 = vunpack.c.l.b16 %v478
        %v1488 = vunpack.c.h.b16 %v478
        %v1489 = vunpack.c.l.b16 %v479
        %v1490 = vunpack.c.h.b16 %v479
        %v1491 = vunpack.c.l.b16 %v480
        %v1492 = vunpack.c.h.b16 %v480
        %v1493 = vunpack.c.l.b16 %v481
        %v1494 = vunpack.c.h.b16 %v481
        %v1495 = vunpack.c.l.b16 %v482
        %v1496 = vunpack.c.h.b16 %v482
        %v1497 = vunpack.c.l.b16 %v483
        %v1498 = vunpack.c.h.b16 %v483
        %v1499 = vunpack.c.l.b16 %v484
        %v1500 = vunpack.c.h.b16 %v484
        %v1501 = vunpack.c.l.b16 %v485
        %v1502 = vunpack.c.h.b16 %v485
        %v1503 = vunpack.c.l.b16 %v486
        %v1504 = vunpack.c.h.b16 %v486
        %v1505 = vunpack.c.l.b16 %v487
        %v1506 = vunpack.c.h.b16 %v487
        %v1507 = vunpack.c.l.b16 %v488
        %v1508 = vunpack.c.h.b16 %v488
        %v1509 = vunpack.c.l.b16 %v489
        %v1510 = vunpack.c.h.b16 %v489
        %v1511 = vunpack.c.l.b16 %v490
        %v1512 = vunpack.c.h.b16 %v490
        %v1513 = vunpack.c.l.b16 %v491
        %v1514 = vunpack.c.h.b16 %v491
        %v1515 = vunpack.c.l.b16 %v492
        %v1516 = vunpack.c.h.b16 %v492
        %v1517 = vunpack.c.l.b16 %v493
        %v1518 = vunpack.c.h.b16 %v493
        %v1519 = vunpack.c.l.b16 %v494
        %v1520 = vunpack.c.h.b16 %v494
        %v1521 = vunpack.c.l.b16 %v495
        %v1522 = vunpack.c.h.b16 %v495
        %v1523 = vunpack.c.l.b16 %v496
        %v1524 = vunpack.c.h.b16 %v496
        %v1525 = vunpack.c.l.b16 %v497
        %v1526 = vunpack.c.h.b16 %v497
        %v1527 = vunpack.c.l.b16 %v498
        %v1528 = vunpack.c.h.b16 %v498
        %v1529 = vunpack.c.l.b16 %v499
        %v1530 = vunpack.c.h.b16 %v499
        %v1531 = vunpack.c.l.b16 %v500
        %v1532 = vunpack.c.h.b16 %v500
        %v1533 = vunpack.c.l.b16 %v501
        %v1534 = vunpack.c.h.b16 %v501
        %v1535 = vunpack.c.l.b16 %v502
        %v1536 = vunpack.c.h.b16 %v502
        %v1537 = vunpack.c.l.b16 %v503
        %v1538 = vunpack.c.h.b16 %v503
        %v1539 = vunpack.c.l.b16 %v504
        %v1540 = vunpack.c.h.b16 %v504
        %v1541 = vunpack.c.l.b16 %v505
        %v1542 = vunpack.c.h.b16 %v505
        %v1543 = vunpack.c.l.b16 %v506
        %v1544 = vunpack.c.h.b16 %v506
        %v1545 = vunpack.c.l.b16 %v507
        %v1546 = vunpack.c.h.b16 %v507
        %v1547 = vunpack.c.l.b16 %v508
        %v1548 = vunpack.c.h.b16 %v508
        %v1549 = vunpack.c.l.b16 %v509
        %v1550 = vunpack.c.h.b16 %v509
        %v1551 = vunpack.c.l.b16 %v510
        %v1552 = vunpack.c.h.b16 %v510
        %v1553 = vunpack.c.l.b16 %v511
        %v1554 = vunpack.c.h.b16 %v511
        %v1555 = vunpack.c.l.b16 %v512
        %v1556 = vunpack.c.h.b16 %v512
        %v1557 = vunpack.c.l.b16 %v513
        %v1558 = vunpack.c.h.b16 %v513
        %v1559 = vunpack.c.l.b16 %v514
        %v1560 = vunpack.c.h.b16 %v514
        %v1561 = vunpack.c.l.b16 %v515
        %v1562 = vunpack.c.h.b16 %v515
        %v1563 = vunpack.c.l.b16 %v516
        %v1564 = vunpack.c.h.b16 %v516
        %v1565 = vunpack.c.l.b16 %v517
        %v1566 = vunpack.c.h.b16 %v517
        %v1567 = vunpack.c.l.b16 %v518
        %v1568 = vunpack.c.h.b16 %v518
        %v1569 = vunpack.c.l.b16 %v519
        %v1570 = vunpack.c.h.b16 %v519
        %v1571 = vunpack.c.l.b16 %v520
        %v1572 = vunpack.c.h.b16 %v520
        %v1573 = vunpack.c.l.b16 %v521
        %v1574 = vunpack.c.h.b16 %v521
        %v1575 = vunpack.c.l.b16 %v522
        %v1576 = vunpack.c.h.b16 %v522
        %v1577 = vunpack.c.l.b16 %v523
        %v1578 = vunpack.c.h.b16 %v523
        %v1579 = vunpack.c.l.b16 %v524
        %v1580 = vunpack.c.h.b16 %v524
        %v1581 = vunpack.c.l.b16 %v525
        %v1582 = vunpack.c.h.b16 %v525
        %v1583 = vunpack.c.l.b16 %v526
        %v1584 = vunpack.c.h.b16 %v526
        %v1585 = vunpack.c.l.b16 %v527
        %v1586 = vunpack.c.h.b16 %v527
        %v1587 = vunpack.c.l.b16 %v528
        %v1588 = vunpack.c.h.b16 %v528
        %v1589 = vunpack.c.l.b16 %v529
        %v1590 = vunpack.c.h.b16 %v529
        %v1591 = vunpack.c.l.b16 %v530
        %v1592 = vunpack.c.h.b16 %v530
        %v1593 = vunpack.c.l.b16 %v531
        %v1594 = vunpack.c.h.b16 %v531
        %v1595 = vunpack.c.l.b16 %v532
        %v1596 = vunpack.c.h.b16 %v532
        %v1597 = vunpack.c.l.b16 %v533
        %v1598 = vunpack.c.h.b16 %v533
        %v1599 = vunpack.c.l.b16 %v534
        %v1600 = vunpack.c.h.b16 %v534
        %v1601 = vunpack.c.l.b16 %v535
        %v1602 = vunpack.c.h.b16 %v535
        %v1603 = vunpack.c.l.b16 %v536
        %v1604 = vunpack.c.h.b16 %v536
        %v1605 = vunpack.c.l.b16 %v537
        %v1606 = vunpack.c.h.b16 %v537
        %v1607 = vunpack.c.l.b16 %v538
        %v1608 = vunpack.c.h.b16 %v538
        %v1609 = vunpack.c.l.b16 %v539
        %v1610 = vunpack.c.h.b16 %v539
        %v1611 = vunpack.c.l.b16 %v540
        %v1612 = vunpack.c.h.b16 %v540
        %v1613 = vunpack.c.l.b16 %v541
        %v1614 = vunpack.c.h.b16 %v541
        %v1615 = vunpack.c.l.b16 %v542
        %v1616 = vunpack.c.h.b16 %v542
        %v1617 = vunpack.c.l.b16 %v543
        %v1618 = vunpack.c.h.b16 %v543
        %v1619 = vunpack.c.l.b16 %v544
        %v1620 = vunpack.c.h.b16 %v544
        %v1621 = vunpack.c.l.b16 %v545
        %v1622 = vunpack.c.h.b16 %v545
        %v1623 = vunpack.c.l.b16 %v546
        %v1624 = vunpack.c.h.b16 %v546
        %v1625 = vunpack.c.l.b16 %v547
        %v1626 = vunpack.c.h.b16 %v547
        %v1627 = vunpack.c.l.b16 %v548
        %v1628 = vunpack.c.h.b16 %v548
        %v1629 = vunpack.c.l.b16 %v549
        %v1630 = vunpack.c.h.b16 %v549
        %v1631 = vunpack.c.l.b16 %v550
        %v1632 = vunpack.c.h.b16 %v550
        %v1633 = vunpack.c.l.b16 %v551
        %v1634 = vunpack.c.h.b16 %v551
        %v1635 = vunpack.c.l.b16 %v552
        %v1636 = vunpack.c.h.b16 %v552
        %v1637 = vunpack.c.l.b16 %v553
        %v1638 = vunpack.c.h.b16 %v553
        %v1639 = vunpack.c.l.b16 %v554
        %v1640 = vunpack.c.h.b16 %v554
        %v1641 = vunpack.c.l.b16 %v555
        %v1642 = vunpack.c.h.b16 %v555
        %v1643 = vunpack.c.l.b16 %v556
        %v1644 = vunpack.c.h.b16 %v556
        %v1645 = vunpack.c.l.b16 %v557
        %v1646 = vunpack.c.h.b16 %v557
        %v1647 = vunpack.c.l.b16 %v558
        %v1648 = vunpack.c.h.b16 %v558
        %v1649 = vunpack.c.l.b16 %v559
        %v1650 = vunpack.c.h.b16 %v559
        %v1651 = vunpack.c.l.b16 %v560
        %v1652 = vunpack.c.h.b16 %v560
        %v1653 = vunpack.c.l.b16 %v561
        %v1654 = vunpack.c.h.b16 %v561
        %v1655 = vunpack.c.l.b16 %v562
        %v1656 = vunpack.c.h.b16 %v562
        %v1657 = vunpack.c.l.b16 %v563
        %v1658 = vunpack.c.h.b16 %v563
        %v1659 = vunpack.c.l.b16 %v564
        %v1660 = vunpack.c.h.b16 %v564
        %v1661 = vunpack.c.l.b16 %v565
        %v1662 = vunpack.c.h.b16 %v565
        %v1663 = vunpack.c.l.b16 %v566
        %v1664 = vunpack.c.h.b16 %v566
        %v1665 = vunpack.c.l.b16 %v567
        %v1666 = vunpack.c.h.b16 %v567
        %v1667 = vunpack.c.l.b16 %v568
        %v1668 = vunpack.c.h.b16 %v568
        %v1669 = vunpack.c.l.b16 %v569
        %v1670 = vunpack.c.h.b16 %v569
        %v1671 = vunpack.c.l.b16 %v570
        %v1672 = vunpack.c.h.b16 %v570
        %v1673 = vunpack.c.l.b16 %v571
        %v1674 = vunpack.c.h.b16 %v571
        %v1675 = vunpack.c.l.b16 %v572
        %v1676 = vunpack.c.h.b16 %v572
        %v1677 = vunpack.c.l.b16 %v573
        %v1678 = vunpack.c.h.b16 %v573
        %v1679 = vunpack.c.l.b16 %v574
        %v1680 = vunpack.c.h.b16 %v574
        %v1681 = vunpack.c.l.b16 %v575
        %v1682 = vunpack.c.h.b16 %v575
        %v1683 = vunpack.c.l.b16 %v576
        %v1684 = vunpack.c.h.b16 %v576
        %v1685 = vunpack.c.l.b16 %v577
        %v1686 = vunpack.c.h.b16 %v577
        %v1687 = vunpack.c.l.b16 %v578
        %v1688 = vunpack.c.h.b16 %v578
        %v1689 = vunpack.c.l.b16 %v579
        %v1690 = vunpack.c.h.b16 %v579
        %v1691 = vunpack.c.l.b16 %v580
        %v1692 = vunpack.c.h.b16 %v580
        %v1693 = vunpack.c.l.b16 %v581
        %v1694 = vunpack.c.h.b16 %v581
        %v1695 = vunpack.c.l.b16 %v582
        %v1696 = vunpack.c.h.b16 %v582
        %v1697 = vunpack.c.l.b16 %v583
        %v1698 = vunpack.c.h.b16 %v583
        %v1699 = vunpack.c.l.b16 %v584
        %v1700 = vunpack.c.h.b16 %v584
        %v1701 = vunpack.c.l.b16 %v585
        %v1702 = vunpack.c.h.b16 %v585
        %v1703 = vunpack.c.l.b16 %v586
        %v1704 = vunpack.c.h.b16 %v586
        %v1705 = vunpack.c.l.b16 %v587
        %v1706 = vunpack.c.h.b16 %v587
        %v1707 = vunpack.c.l.b16 %v588
        %v1708 = vunpack.c.h.b16 %v588
        %v1709 = vunpack.c.l.b16 %v589
        %v1710 = vunpack.c.h.b16 %v589
        %v1711 = vunpack.c.l.b16 %v590
        %v1712 = vunpack.c.h.b16 %v590
        %v1713 = vunpack.c.l.b16 %v591
        %v1714 = vunpack.c.h.b16 %v591
        %v1715 = vunpack.c.l.b16 %v592
        %v1716 = vunpack.c.h.b16 %v592
        %v1717 = vunpack.c.l.b16 %v593
        %v1718 = vunpack.c.h.b16 %v593
        %v1719 = vunpack.c.l.b16 %v594
        %v1720 = vunpack.c.h.b16 %v594
        %v1721 = vunpack.c.l.b16 %v595
        %v1722 = vunpack.c.h.b16 %v595
        %v1723 = vunpack.c.l.b16 %v596
        %v1724 = vunpack.c.h.b16 %v596
        %v1725 = vunpack.c.l.b16 %v597
        %v1726 = vunpack.c.h.b16 %v597
        %v1727 = vunpack.c.l.b16 %v598
        %v1728 = vunpack.c.h.b16 %v598
        %v1729 = vunpack.c.l.b16 %v599
        %v1730 = vunpack.c.h.b16 %v599
        %v1731 = vunpack.c.l.b16 %v600
        %v1732 = vunpack.c.h.b16 %v600
        %v1733 = vunpack.c.l.b16 %v601
        %v1734 = vunpack.c.h.b16 %v601
        %v1735 = vunpack.c.l.b16 %v602
        %v1736 = vunpack.c.h.b16 %v602
        %v1737 = vunpack.c.l.b16 %v603
        %v1738 = vunpack.c.h.b16 %v603
        %v1739 = vunpack.c.l.b16 %v604
        %v1740 = vunpack.c.h.b16 %v604
        %v1741 = vunpack.c.l.b16 %v605
        %v1742 = vunpack.c.h.b16 %v605
        %v1743 = vunpack.c.l.b16 %v606
        %v1744 = vunpack.c.h.b16 %v606
        %v1745 = vunpack.c.l.b16 %v607
        %v1746 = vunpack.c.h.b16 %v607
        %v1747 = vunpack.c.l.b16 %v608
        %v1748 = vunpack.c.h.b16 %v608
        %v1749 = vunpack.c.l.b16 %v609
        %v1750 = vunpack.c.h.b16 %v609
        %v1751 = vunpack.c.l.b16 %v610
        %v1752 = vunpack.c.h.b16 %v610
        %v1753 = vunpack.c.l.b16 %v611
        %v1754 = vunpack.c.h.b16 %v611
        %v1755 = vunpack.c.l.b16 %v612
        %v1756 = vunpack.c.h.b16 %v612
        %v1757 = vunpack.c.l.b16 %v613
        %v1758 = vunpack.c.h.b16 %v613
        %v1759 = vunpack.c.l.b16 %v614
        %v1760 = vunpack.c.h.b16 %v614
        %v1761 = vunpack.c.l.b16 %v615
        %v1762 = vunpack.c.h.b16 %v615
        %v1763 = vunpack.c.l.b16 %v616
        %v1764 = vunpack.c.h.b16 %v616
        %v1765 = vunpack.c.l.b16 %v617
        %v1766 = vunpack.c.h.b16 %v617
        %v1767 = vunpack.c.l.b16 %v618
        %v1768 = vunpack.c.h.b16 %v618
        %v1769 = vunpack.c.l.b16 %v619
        %v1770 = vunpack.c.h.b16 %v619
        %v1771 = vunpack.c.l.b16 %v620
        %v1772 = vunpack.c.h.b16 %v620
        %v1773 = vunpack.c.l.b16 %v621
        %v1774 = vunpack.c.h.b16 %v621
        %v1775 = vunpack.c.l.b16 %v622
        %v1776 = vunpack.c.h.b16 %v622
        %v1777 = vunpack.c.l.b16 %v623
        %v1778 = vunpack.c.h.b16 %v623
        %v1779 = vunpack.c.l.b16 %v624
        %v1780 = vunpack.c.h.b16 %v624
        %v1781 = vunpack.c.l.b16 %v625
        %v1782 = vunpack.c.h.b16 %v625
        %v1783 = vunpack.c.l.b16 %v626
        %v1784 = vunpack.c.h.b16 %v626
        %v1785 = vunpack.c.l.b16 %v627
        %v1786 = vunpack.c.h.b16 %v627
        %v1787 = vunpack.c.l.b16 %v628
        %v1788 = vunpack.c.h.b16 %v628
        %v1789 = vunpack.c.l.b16 %v629
        %v1790 = vunpack.c.h.b16 %v629
        %v1791 = vunpack.c.l.b16 %v630
        %v1792 = vunpack.c.h.b16 %v630
        %v1793 = vunpack.c.l.b16 %v631
        %v1794 = vunpack.c.h.b16 %v631
        %v1795 = vunpack.c.l.b16 %v632
        %v1796 = vunpack.c.h.b16 %v632
        %v1797 = vunpack.c.l.b16 %v633
        %v1798 = vunpack.c.h.b16 %v633
        %v1799 = vunpack.c.l.b16 %v634
        %v1800 = vunpack.c.h.b16 %v634
        %v1801 = vunpack.c.l.b16 %v635
        %v1802 = vunpack.c.h.b16 %v635
        %v1803 = vunpack.c.l.b16 %v636
        %v1804 = vunpack.c.h.b16 %v636
        %v1805 = vunpack.c.l.b16 %v637
        %v1806 = vunpack.c.h.b16 %v637
        %v1807 = vunpack.c.l.b16 %v638
        %v1808 = vunpack.c.h.b16 %v638
        %v1809 = vunpack.c.l.b16 %v639
        %v1810 = vunpack.c.h.b16 %v639
        %v1811 = vunpack.c.l.b16 %v640
        %v1812 = vunpack.c.h.b16 %v640
        %v1813 = vunpack.c.l.b16 %v641
        %v1814 = vunpack.c.h.b16 %v641
        %v1815 = vunpack.c.l.b16 %v642
        %v1816 = vunpack.c.h.b16 %v642
        %v1817 = vunpack.c.l.b16 %v643
        %v1818 = vunpack.c.h.b16 %v643
        %v1819 = vunpack.c.l.b16 %v644
        %v1820 = vunpack.c.h.b16 %v644
        %v1821 = vunpack.c.l.b16 %v645
        %v1822 = vunpack.c.h.b16 %v645
        %v1823 = vunpack.c.l.b16 %v646
        %v1824 = vunpack.c.h.b16 %v646
        %v1825 = vunpack.c.l.b16 %v647
        %v1826 = vunpack.c.h.b16 %v647
        %v1827 = vunpack.c.l.b16 %v648
        %v1828 = vunpack.c.h.b16 %v648
        %v1829 = vunpack.c.l.b16 %v649
        %v1830 = vunpack.c.h.b16 %v649
        %v1831 = vunpack.c.l.b16 %v650
        %v1832 = vunpack.c.h.b16 %v650
        %v1833 = vunpack.c.l.b16 %v651
        %v1834 = vunpack.c.h.b16 %v651
        %v1835 = vunpack.c.l.b16 %v652
        %v1836 = vunpack.c.h.b16 %v652
        %v1837 = vpack.c.b16 %v1273, %v1261
        %v1838 = vpack.c.b16 %v1274, %v1262
        %v1839 = vpack.c.b16 %v1275, %v1263
        %v1840 = vpack.c.b16 %v1276, %v1264
        %v1841 = vpack.c.b16 %v1277, %v1265
        %v1842 = vpack.c.b16 %v1278, %v1266
        %v1843 = vpack.c.b16 %v1279, %v1267
        %v1844 = vpack.c.b16 %v1280, %v1268
        %v1845 = vpack.c.b16 %v1281, %v1269
        %v1846 = vpack.c.b16 %v1282, %v1270
        %v1847 = vpack.c.b16 %v1283, %v1271
        %v1848 = vpack.c.b16 %v1284, %v1272
        %v1849 = vpack.c.b16 %v1297, %v1285
        %v1850 = vpack.c.b16 %v1298, %v1286
        %v1851 = vpack.c.b16 %v1299, %v1287
        %v1852 = vpack.c.b16 %v1300, %v1288
        %v1853 = vpack.c.b16 %v1301, %v1289
        %v1854 = vpack.c.b16 %v1302, %v1290
        %v1855 = vpack.c.b16 %v1303, %v1291
        %v1856 = vpack.c.b16 %v1304, %v1292
        %v1857 = vpack.c.b16 %v1305, %v1293
        %v1858 = vpack.c.b16 %v1306, %v1294
        %v1859 = vpack.c.b16 %v1307, %v1295
        %v1860 = vpack.c.b16 %v1308, %v1296
        %v1861 = vpack.c.b16 %v1321, %v1309
        %v1862 = vpack.c.b16 %v1322, %v1310
        %v1863 = vpack.c.b16 %v1323, %v1311
        %v1864 = vpack.c.b16 %v1324, %v1312
        %v1865 = vpack.c.b16 %v1325, %v1313
        %v1866 = vpack.c.b16 %v1326, %v1314
        %v1867 = vpack.c.b16 %v1327, %v1315
        %v1868 = vpack.c.b16 %v1328, %v1316
        %v1869 = vpack.c.b16 %v1329, %v1317
        %v1870 = vpack.c.b16 %v1330, %v1318
        %v1871 = vpack.c.b16 %v1331, %v1319
        %v1872 = vpack.c.b16 %v1332, %v1320
        %v1873 = vpack.c.b16 %v1345, %v1333
        %v1874 = vpack.c.b16 %v1346, %v1334
        %v1875 = vpack.c.b16 %v1347, %v1335
        %v1876 = vpack.c.b16 %v1348, %v1336
        %v1877 = vpack.c.b16 %v1349, %v1337
        %v1878 = vpack.c.b16 %v1350, %v1338
        %v1879 = vpack.c.b16 %v1351, %v1339
        %v1880 = vpack.c.b16 %v1352, %v1340
        %v1881 = vpack.c.b16 %v1353, %v1341
        %v1882 = vpack.c.b16 %v1354, %v1342
        %v1883 = vpack.c.b16 %v1355, %v1343
        %v1884 = vpack.c.b16 %v1356, %v1344
        %v1885 = vpack.c.b16 %v1369, %v1357
        %v1886 = vpack.c.b16 %v1370, %v1358
        %v1887 = vpack.c.b16 %v1371, %v1359
        %v1888 = vpack.c.b16 %v1372, %v1360
        %v1889 = vpack.c.b16 %v1373, %v1361
        %v1890 = vpack.c.b16 %v1374, %v1362
        %v1891 = vpack.c.b16 %v1375, %v1363
        %v1892 = vpack.c.b16 %v1376, %v1364
        %v1893 = vpack.c.b16 %v1377, %v1365
        %v1894 = vpack.c.b16 %v1378, %v1366
        %v1895 = vpack.c.b16 %v1379, %v1367
        %v1896 = vpack.c.b16 %v1380, %v1368
        %v1897 = vpack.c.b16 %v1393, %v1381
        %v1898 = vpack.c.b16 %v1394, %v1382
        %v1899 = vpack.c.b16 %v1395, %v1383
        %v1900 = vpack.c.b16 %v1396, %v1384
        %v1901 = vpack.c.b16 %v1397, %v1385
        %v1902 = vpack.c.b16 %v1398, %v1386
        %v1903 = vpack.c.b16 %v1399, %v1387
        %v1904 = vpack.c.b16 %v1400, %v1388
        %v1905 = vpack.c.b16 %v1401, %v1389
        %v1906 = vpack.c.b16 %v1402, %v1390
        %v1907 = vpack.c.b16 %v1403, %v1391
        %v1908 = vpack.c.b16 %v1404, %v1392
        %v1909 = vpack.c.b16 %v1417, %v1405
        %v1910 = vpack.c.b16 %v1418, %v1406
        %v1911 = vpack.c.b16 %v1419, %v1407
        %v1912 = vpack.c.b16 %v1420, %v1408
        %v1913 = vpack.c.b16 %v1421, %v1409
        %v1914 = vpack.c.b16 %v1422, %v1410
        %v1915 = vpack.c.b16 %v1423, %v1411
        %v1916 = vpack.c.b16 %v1424, %v1412
        %v1917 = vpack.c.b16 %v1425, %v1413
        %v1918 = vpack.c.b16 %v1426, %v1414
        %v1919 = vpack.c.b16 %v1427, %v1415
        %v1920 = vpack.c.b16 %v1428, %v1416
        %v1921 = vpack.c.b16 %v1441, %v1429
        %v1922 = vpack.c.b16 %v1442, %v1430
        %v1923 = vpack.c.b16 %v1443, %v1431
        %v1924 = vpack.c.b16 %v1444, %v1432
        %v1925 = vpack.c.b16 %v1445, %v1433
        %v1926 = vpack.c.b16 %v1446, %v1434
        %v1927 = vpack.c.b16 %v1447, %v1435
        %v1928 = vpack.c.b16 %v1448, %v1436
        %v1929 = vpack.c.b16 %v1449, %v1437
        %v1930 = vpack.c.b16 %v1450, %v1438
        %v1931 = vpack.c.b16 %v1451, %v1439
        %v1932 = vpack.c.b16 %v1452, %v1440
        %v1933 = vpack.c.b16 %v1465, %v1453
        %v1934 = vpack.c.b16 %v1466, %v1454
        %v1935 = vpack.c.b16 %v1467, %v1455
        %v1936 = vpack.c.b16 %v1468, %v1456
        %v1937 = vpack.c.b16 %v1469, %v1457
        %v1938 = vpack.c.b16 %v1470, %v1458
        %v1939 = vpack.c.b16 %v1471, %v1459
        %v1940 = vpack.c.b16 %v1472, %v1460
        %v1941 = vpack.c.b16 %v1473, %v1461
        %v1942 = vpack.c.b16 %v1474, %v1462
        %v1943 = vpack.c.b16 %v1475, %v1463
        %v1944 = vpack.c.b16 %v1476, %v1464
        %v1945 = vpack.c.b16 %v1489, %v1477
        %v1946 = vpack.c.b16 %v1490, %v1478
        %v1947 = vpack.c.b16 %v1491, %v1479
        %v1948 = vpack.c.b16 %v1492, %v1480
        %v1949 = vpack.c.b16 %v1493, %v1481
        %v1950 = vpack.c.b16 %v1494, %v1482
        %v1951 = vpack.c.b16 %v1495, %v1483
        %v1952 = vpack.c.b16 %v1496, %v1484
        %v1953 = vpack.c.b16 %v1497, %v1485
        %v1954 = vpack.c.b16 %v1498, %v1486
        %v1955 = vpack.c.b16 %v1499, %v1487
        %v1956 = vpack.c.b16 %v1500, %v1488
        %v1957 = vpack.c.b16 %v1513, %v1501
        %v1958 = vpack.c.b16 %v1514, %v1502
        %v1959 = vpack.c.b16 %v1515, %v1503
        %v1960 = vpack.c.b16 %v1516, %v1504
        %v1961 = vpack.c.b16 %v1517, %v1505
        %v1962 = vpack.c.b16 %v1518, %v1506
        %v1963 = vpack.c.b16 %v1519, %v1507
        %v1964 = vpack.c.b16 %v1520, %v1508
        %v1965 = vpack.c.b16 %v1521, %v1509
        %v1966 = vpack.c.b16 %v1522, %v1510
        %v1967 = vpack.c.b16 %v1523, %v1511
        %v1968 = vpack.c.b16 %v1524, %v1512
        %v1969 = vpack.c.b16 %v1537, %v1525
        %v1970 = vpack.c.b16 %v1538, %v1526
        %v1971 = vpack.c.b16 %v1539, %v1527
        %v1972 = vpack.c.b16 %v1540, %v1528
        %v1973 = vpack.c.b16 %v1541, %v1529
        %v1974 = vpack.c.b16 %v1542, %v1530
        %v1975 = vpack.c.b16 %v1543, %v1531
        %v1976 = vpack.c.b16 %v1544, %v1532
        %v1977 = vpack.c.b16 %v1545, %v1533
        %v1978 = vpack.c.b16 %v1546, %v1534
        %v1979 = vpack.c.b16 %v1547, %v1535
        %v1980 = vpack.c.b16 %v1548, %v1536
        %v1981 = vpack.c.b16 %v1561, %v1549
        %v1982 = vpack.c.b16 %v1562, %v1550
        %v1983 = vpack.c.b16 %v1563, %v1551
        %v1984 = vpack.c.b16 %v1564, %v1552
        %v1985 = vpack.c.b16 %v1565, %v1553
        %v1986 = vpack.c.b16 %v1566, %v1554
        %v1987 = vpack.c.b16 %v1567, %v1555
        %v1988 = vpack.c.b16 %v1568, %v1556
        %v1989 = vpack.c.b16 %v1569, %v1557
        %v1990 = vpack.c.b16 %v1570, %v1558
        %v1991 = vpack.c.b16 %v1571, %v1559
        %v1992 = vpack.c.b16 %v1572, %v1560
        %v1993 = vpack.c.b16 %v1585, %v1573
        %v1994 = vpack.c.b16 %v1586, %v1574
        %v1995 = vpack.c.b16 %v1587, %v1575
        %v1996 = vpack.c.b16 %v1588, %v1576
        %v1997 = vpack.c.b16 %v1589, %v1577
        %v1998 = vpack.c.b16 %v1590, %v1578
        %v1999 = vpack.c.b16 %v1591, %v1579
        %v2000 = vpack.c.b16 %v1592, %v1580
        %v2001 = vpack.c.b16 %v1593, %v1581
        %v2002 = vpack.c.b16 %v1594, %v1582
        %v2003 = vpack.c.b16 %v1595, %v1583
        %v2004 = vpack.c.b16 %v1596, %v1584
        %v2005 = vpack.c.b16 %v1609, %v1597
        %v2006 = vpack.c.b16 %v1610, %v1598
        %v2007 = vpack.c.b16 %v1611, %v1599
        %v2008 = vpack.c.b16 %v1612, %v1600
        %v2009 = vpack.c.b16 %v1613, %v1601
        %v2010 = vpack.c.b16 %v1614, %v1602
        %v2011 = vpack.c.b16 %v1615, %v1603
        %v2012 = vpack.c.b16 %v1616, %v1604
        %v2013 = vpack.c.b16 %v1617, %v1605
        %v2014 = vpack.c.b16 %v1618, %v1606
        %v2015 = vpack.c.b16 %v1619, %v1607
        %v2016 = vpack.c.b16 %v1620, %v1608
        %v2017 = vpack.c.b16 %v1633, %v1621
        %v2018 = vpack.c.b16 %v1634, %v1622
        %v2019 = vpack.c.b16 %v1635, %v1623
        %v2020 = vpack.c.b16 %v1636, %v1624
        %v2021 = vpack.c.b16 %v1637, %v1625
        %v2022 = vpack.c.b16 %v1638, %v1626
        %v2023 = vpack.c.b16 %v1639, %v1627
        %v2024 = vpack.c.b16 %v1640, %v1628
        %v2025 = vpack.c.b16 %v1641, %v1629
        %v2026 = vpack.c.b16 %v1642, %v1630
        %v2027 = vpack.c.b16 %v1643, %v1631
        %v2028 = vpack.c.b16 %v1644, %v1632
        %v2029 = vpack.c.b16 %v1657, %v1645
        %v2030 = vpack.c.b16 %v1658, %v1646
        %v2031 = vpack.c.b16 %v1659, %v1647
        %v2032 = vpack.c.b16 %v1660, %v1648
        %v2033 = vpack.c.b16 %v1661, %v1649
        %v2034 = vpack.c.b16 %v1662, %v1650
        %v2035 = vpack.c.b16 %v1663, %v1651
        %v2036 = vpack.c.b16 %v1664, %v1652
        %v2037 = vpack.c.b16 %v1665, %v1653
        %v2038 = vpack.c.b16 %v1666, %v1654
        %v2039 = vpack.c.b16 %v1667, %v1655
        %v2040 = vpack.c.b16 %v1668, %v1656
        %v2041 = vpack.c.b16 %v1681, %v1669
        %v2042 = vpack.c.b16 %v1682, %v1670
        %v2043 = vpack.c.b16 %v1683, %v1671
        %v2044 = vpack.c.b16 %v1684, %v1672
        %v2045 = vpack.c.b16 %v1685, %v1673
        %v2046 = vpack.c.b16 %v1686, %v1674
        %v2047 = vpack.c.b16 %v1687, %v1675
        %v2048 = vpack.c.b16 %v1688, %v1676
        %v2049 = vpack.c.b16 %v1689, %v1677
        %v2050 = vpack.c.b16 %v1690, %v1678
        %v2051 = vpack.c.b16 %v1691, %v1679
        %v2052 = vpack.c.b16 %v1692, %v1680
        %v2053 = vpack.c.b16 %v1705, %v1693
        %v2054 = vpack.c.b16 %v1706, %v1694
        %v2055 = vpack.c.b16 %v1707, %v1695
        %v2056 = vpack.c.b16 %v1708, %v1696
        %v2057 = vpack.c.b16 %v1709, %v1697
        %v2058 = vpack.c.b16 %v1710, %v1698
        %v2059 = vpack.c.b16 %v1711, %v1699
        %v2060 = vpack.c.b16 %v1712, %v1700
        %v2061 = vpack.c.b16 %v1713, %v1701
        %v2062 = vpack.c.b16 %v1714, %v1702
        %v2063 = vpack.c.b16 %v1715, %v1703
        %v2064 = vpack.c.b16 %v1716, %v1704
        %v2065 = vpack.c.b16 %v1729, %v1717
        %v2066 = vpack.c.b16 %v1730, %v1718
        %v2067 = vpack.c.b16 %v1731, %v1719
        %v2068 = vpack.c.b16 %v1732, %v1720
        %v2069 = vpack.c.b16 %v1733, %v1721
        %v2070 = vpack.c.b16 %v1734, %v1722
        %v2071 = vpack.c.b16 %v1735, %v1723
        %v2072 = vpack.c.b16 %v1736, %v1724
        %v2073 = vpack.c.b16 %v1737, %v1725
        %v2074 = vpack.c.b16 %v1738, %v1726
        %v2075 = vpack.c.b16 %v1739, %v1727
        %v2076 = vpack.c.b16 %v1740, %v1728
        %v2077 = vpack.c.b16 %v1753, %v1741
        %v2078 = vpack.c.b16 %v1754, %v1742
        %v2079 = vpack.c.b16 %v1755, %v1743
        %v2080 = vpack.c.b16 %v1756, %v1744
        %v2081 = vpack.c.b16 %v1757, %v1745
        %v2082 = vpack.c.b16 %v1758, %v1746
        %v2083 = vpack.c.b16 %v1759, %v1747
        %v2084 = vpack.c.b16 %v1760, %v1748
        %v2085 = vpack.c.b16 %v1761, %v1749
        %v2086 = vpack.c.b16 %v1762, %v1750
        %v2087 = vpack.c.b16 %v1763, %v1751
        %v2088 = vpack.c.b16 %v1764, %v1752
        %v2089 = vpack.c.b16 %v1777, %v1765
        %v2090 = vpack.c.b16 %v1778, %v1766
        %v2091 = vpack.c.b16 %v1779, %v1767
        %v2092 = vpack.c.b16 %v1780, %v1768
        %v2093 = vpack.c.b16 %v1781, %v1769
        %v2094 = vpack.c.b16 %v1782, %v1770
        %v2095 = vpack.c.b16 %v1783, %v1771
        %v2096 = vpack.c.b16 %v1784, %v1772
        %v2097 = vpack.c.b16 %v1785, %v1773
        %v2098 = vpack.c.b16 %v1786, %v1774
        %v2099 = vpack.c.b16 %v1787, %v1775
        %v2100 = vpack.c.b16 %v1788, %v1776
        %v2101 = vpack.c.b16 %v1801, %v1789
        %v2102 = vpack.c.b16 %v1802, %v1790
        %v2103 = vpack.c.b16 %v1803, %v1791
        %v2104 = vpack.c.b16 %v1804, %v1792
        %v2105 = vpack.c.b16 %v1805, %v1793
        %v2106 = vpack.c.b16 %v1806, %v1794
        %v2107 = vpack.c.b16 %v1807, %v1795
        %v2108 = vpack.c.b16 %v1808, %v1796
        %v2109 = vpack.c.b16 %v1809, %v1797
        %v2110 = vpack.c.b16 %v1810, %v1798
        %v2111 = vpack.c.b16 %v1811, %v1799
        %v2112 = vpack.c.b16 %v1812, %v1800
        %v2113 = vpack.c.b16 %v1825, %v1813
        %v2114 = vpack.c.b16 %v1826, %v1814
        %v2115 = vpack.c.b16 %v1827, %v1815
        %v2116 = vpack.c.b16 %v1828, %v1816
        %v2117 = vpack.c.b16 %v1829, %v1817
        %v2118 = vpack.c.b16 %v1830, %v1818
        %v2119 = vpack.c.b16 %v1831, %v1819
        %v2120 = vpack.c.b16 %v1832, %v1820
        %v2121 = vpack.c.b16 %v1833, %v1821
        %v2122 = vpack.c.b16 %v1834, %v1822
        %v2123 = vpack.c.b16 %v1835, %v1823
        %v2124 = vpack.c.b16 %v1836, %v1824
        %2413 = vmatprep.subr.bf16.mxu0 %v1838
        %2414 = vmatpush1.bf16.msra.mxu0 %v1837
        %2415 = vmatprep.subr.bf16.mxu0 %v1850
        %2416 = vmatpush1.bf16.msra.mxu0 %v1849
        %2417 = vmatprep.subr.bf16.mxu0 %v1862
        %2418 = vmatpush1.bf16.msra.mxu0 %v1861
        %2419 = vmatprep.subr.bf16.mxu0 %v1874
        %2420 = vmatpush1.bf16.msra.mxu0 %v1873
        %2421 = vmatprep.subr.bf16.mxu0 %v1886
        %2422 = vmatpush1.bf16.msra.mxu0 %v1885
        %2423 = vmatprep.subr.bf16.mxu0 %v1898
        %2424 = vmatpush1.bf16.msra.mxu0 %v1897
        %2425 = vmatprep.subr.bf16.mxu0 %v1910
        %2426 = vmatpush1.bf16.msra.mxu0 %v1909
        %2427 = vmatprep.subr.bf16.mxu0 %v1922
        %2428 = vmatpush1.bf16.msra.mxu0 %v1921
        %2429 = vmatprep.subr.bf16.mxu0 %v1934
        %2430 = vmatpush1.bf16.msra.mxu0 %v1933
        %2431 = vmatprep.subr.bf16.mxu0 %v1946
        %2432 = vmatpush1.bf16.msra.mxu0 %v1945
        %2433 = vmatprep.subr.bf16.mxu0 %v1958
        %2434 = vmatpush1.bf16.msra.mxu0 %v1957
        %2435 = vmatprep.subr.bf16.mxu0 %v1970
        %2436 = vmatpush1.bf16.msra.mxu0 %v1969
        %2437 = vmatprep.subr.bf16.mxu0 %v1982
        %2438 = vmatpush1.bf16.msra.mxu0 %v1981
        %2439 = vmatprep.subr.bf16.mxu0 %v1994
        %2440 = vmatpush1.bf16.msra.mxu0 %v1993
        %2441 = vmatprep.subr.bf16.mxu0 %v2006
        %2442 = vmatpush1.bf16.msra.mxu0 %v2005
        %2443 = vmatprep.subr.bf16.mxu0 %v2018
        %2444 = vmatpush1.bf16.msra.mxu0 %v2017
        %2445 = vmatprep.mubr.bf16.mxu0 %v878
        %2446 = vmatmul.mubr.bf16.gmra.mrb[0].mxu0 %v877
        %v2447 = vpop.f32.mrb[0].mxu0
        %v2448 = vadd.f32 %v660, %v2447
        %v2449 = vpop.f32.mrb[0].mxu0
        %v2450 = vadd.f32 %v664, %v2449
        %v2451 = vpop.f32.mrb[0].mxu0
        %v2452 = vadd.f32 %v660, %v2451
        %v2453 = vpop.f32.mrb[0].mxu0
        %v2454 = vadd.f32 %v664, %v2453
        %2455 = vmatprep.mubr.bf16.mxu0 %v881
        %2456 = vmatmul.mubr.bf16.gmra.mrb[0].mxu0 %v880
        %v2457 = vpop.f32.mrb[0].mxu0
        %v2458 = vadd.f32 %v660, %v2457
        %v2459 = vpop.f32.mrb[0].mxu0
        %v2460 = vadd.f32 %v664, %v2459
        %v2461 = vpop.f32.mrb[0].mxu0
        %v2462 = vadd.f32 %v660, %v2461
        %v2463 = vpop.f32.mrb[0].mxu0
        %v2464 = vadd.f32 %v664, %v2463
        %2465 = vmatprep.mubr.bf16.mxu0 %v884
        %2466 = vmatmul.mubr.bf16.gmra.mrb[0].mxu0 %v883
        %v2467 = vpop.f32.mrb[0].mxu0
        %v2468 = vadd.f32 %v660, %v2467
        %v2469 = vpop.f32.mrb[0].mxu0
        %v2470 = vadd.f32 %v664, %v2469
        %v2471 = vpop.f32.mrb[0].mxu0
        %v2472 = vadd.f32 %v660, %v2471
        %v2473 = vpop.f32.mrb[0].mxu0
        %v2474 = vadd.f32 %v664, %v2473
        %2475 = vmatprep.mubr.bf16.mxu0 %v887
        %2476 = vmatmul.mubr.bf16.gmra.mrb[0].mxu0 %v886
        %v2477 = vpop.f32.mrb[0].mxu0
        %v2478 = vadd.f32 %v660, %v2477
        %v2479 = vpop.f32.mrb[0].mxu0
        %v2480 = vadd.f32 %v664, %v2479
        %v2481 = vpop.f32.mrb[0].mxu0
        %v2482 = vadd.f32 %v660, %v2481
        %v2483 = vpop.f32.mrb[0].mxu0
        %v2484 = vadd.f32 %v664, %v2483
        %2485 = vmatprep.mubr.bf16.mxu0 %v890
        %2486 = vmatmul.mubr.bf16.gmra.mrb[0].mxu0 %v889
        %v2487 = vpop.f32.mrb[0].mxu0
        %v2488 = vadd.f32 %v660, %v2487
        %v2489 = vpop.f32.mrb[0].mxu0
        %v2490 = vadd.f32 %v664, %v2489
        %v2491 = vpop.f32.mrb[0].mxu0
        %v2492 = vadd.f32 %v660, %v2491
        %v2493 = vpop.f32.mrb[0].mxu0
        %v2494 = vadd.f32 %v664, %v2493
        %2495 = vmatprep.mubr.bf16.mxu0 %v893
        %2496 = vmatmul.mubr.bf16.gmra.mrb[0].mxu0 %v892
        %v2497 = vpop.f32.mrb[0].mxu0
        %v2498 = vadd.f32 %v660, %v2497
        %v2499 = vpop.f32.mrb[0].mxu0
        %v2500 = vadd.f32 %v664, %v2499
        %v2501 = vpop.f32.mrb[0].mxu0
        %v2502 = vadd.f32 %v660, %v2501
        %v2503 = vpop.f32.mrb[0].mxu0
        %v2504 = vadd.f32 %v664, %v2503
        %2505 = vmatprep.mubr.bf16.mxu0 %v896
        %2506 = vmatmul.mubr.bf16.gmra.mrb[0].mxu0 %v895
        %v2507 = vpop.f32.mrb[0].mxu0
        %v2508 = vadd.f32 %v660, %v2507
        %v2509 = vpop.f32.mrb[0].mxu0
        %v2510 = vadd.f32 %v664, %v2509
        %v2511 = vpop.f32.mrb[0].mxu0
        %v2512 = vadd.f32 %v660, %v2511
        %v2513 = vpop.f32.mrb[0].mxu0
        %v2514 = vadd.f32 %v664, %v2513
        %2515 = vmatprep.mubr.bf16.mxu0 %v899
        %2516 = vmatmul.mubr.bf16.gmra.mrb[0].mxu0 %v898
        %v2517 = vpop.f32.mrb[0].mxu0
        %v2518 = vadd.f32 %v660, %v2517
        %v2519 = vpop.f32.mrb[0].mxu0
        %v2520 = vadd.f32 %v664, %v2519
        %v2521 = vpop.f32.mrb[0].mxu0
        %v2522 = vadd.f32 %v660, %v2521
        %v2523 = vpop.f32.mrb[0].mxu0
        %v2524 = vadd.f32 %v664, %v2523
        %2525 = vmatprep.mubr.bf16.mxu0 %v902
        %2526 = vmatmul.mubr.bf16.gmra.mrb[0].mxu0 %v901
        %v2527 = vpop.f32.mrb[0].mxu0
        %v2528 = vadd.f32 %v660, %v2527
        %v2529 = vpop.f32.mrb[0].mxu0
        %v2530 = vadd.f32 %v664, %v2529
        %v2531 = vpop.f32.mrb[0].mxu0
        %v2532 = vadd.f32 %v660, %v2531
        %v2533 = vpop.f32.mrb[0].mxu0
        %v2534 = vadd.f32 %v664, %v2533
        %2535 = vmatprep.mubr.bf16.mxu0 %v905
        %2536 = vmatmul.mubr.bf16.gmra.mrb[0].mxu0 %v904
        %v2537 = vpop.f32.mrb[0].mxu0
        %v2538 = vadd.f32 %v660, %v2537
        %v2539 = vpop.f32.mrb[0].mxu0
        %v2540 = vadd.f32 %v664, %v2539
        %v2541 = vpop.f32.mrb[0].mxu0
        %v2542 = vadd.f32 %v660, %v2541
        %v2543 = vpop.f32.mrb[0].mxu0
        %v2544 = vadd.f32 %v664, %v2543
        %2545 = vmatprep.mubr.bf16.mxu0 %v908
        %2546 = vmatmul.mubr.bf16.gmra.mrb[0].mxu0 %v907
        %v2547 = vpop.f32.mrb[0].mxu0
        %v2548 = vadd.f32 %v660, %v2547
        %v2549 = vpop.f32.mrb[0].mxu0
        %v2550 = vadd.f32 %v664, %v2549
        %v2551 = vpop.f32.mrb[0].mxu0
        %v2552 = vadd.f32 %v660, %v2551
        %v2553 = vpop.f32.mrb[0].mxu0
        %v2554 = vadd.f32 %v664, %v2553
        %2555 = vmatprep.mubr.bf16.mxu0 %v911
        %2556 = vmatmul.mubr.bf16.gmra.mrb[0].mxu0 %v910
        %v2557 = vpop.f32.mrb[0].mxu0
        %v2558 = vadd.f32 %v660, %v2557
        %v2559 = vpop.f32.mrb[0].mxu0
        %v2560 = vadd.f32 %v664, %v2559
        %v2561 = vpop.f32.mrb[0].mxu0
        %v2562 = vadd.f32 %v660, %v2561
        %v2563 = vpop.f32.mrb[0].mxu0
        %v2564 = vadd.f32 %v664, %v2563
        %2565 = vmatprep.mubr.bf16.mxu0 %v914
        %2566 = vmatmul.mubr.bf16.gmra.mrb[0].mxu0 %v913
        %v2567 = vpop.f32.mrb[0].mxu0
        %v2568 = vadd.f32 %v660, %v2567
        %v2569 = vpop.f32.mrb[0].mxu0
        %v2570 = vadd.f32 %v664, %v2569
        %v2571 = vpop.f32.mrb[0].mxu0
        %v2572 = vadd.f32 %v660, %v2571
        %v2573 = vpop.f32.mrb[0].mxu0
        %v2574 = vadd.f32 %v664, %v2573
        %2575 = vmatprep.mubr.bf16.mxu0 %v917
        %2576 = vmatmul.mubr.bf16.gmra.mrb[0].mxu0 %v916
        %v2577 = vpop.f32.mrb[0].mxu0
        %v2578 = vadd.f32 %v660, %v2577
        %v2579 = vpop.f32.mrb[0].mxu0
        %v2580 = vadd.f32 %v664, %v2579
        %v2581 = vpop.f32.mrb[0].mxu0
        %v2582 = vadd.f32 %v660, %v2581
        %v2583 = vpop.f32.mrb[0].mxu0
        %v2584 = vadd.f32 %v664, %v2583
        %2585 = vmatprep.mubr.bf16.mxu0 %v920
        %2586 = vmatmul.mubr.bf16.gmra.mrb[0].mxu0 %v919
        %v2587 = vpop.f32.mrb[0].mxu0
        %v2588 = vadd.f32 %v660, %v2587
        %v2589 = vpop.f32.mrb[0].mxu0
        %v2590 = vadd.f32 %v664, %v2589
        %v2591 = vpop.f32.mrb[0].mxu0
        %v2592 = vadd.f32 %v660, %v2591
        %v2593 = vpop.f32.mrb[0].mxu0
        %v2594 = vadd.f32 %v664, %v2593
        %2595 = vmatprep.mubr.bf16.mxu0 %v923
        %2596 = vmatmul.mubr.bf16.gmra.mrb[0].mxu0 %v922
        %v2597 = vpop.f32.mrb[0].mxu0
        %v2598 = vadd.f32 %v660, %v2597
        %v2599 = vpop.f32.mrb[0].mxu0
        %v2600 = vadd.f32 %v664, %v2599
        %v2601 = vpop.f32.mrb[0].mxu0
        %v2602 = vadd.f32 %v660, %v2601
        %v2603 = vpop.f32.mrb[0].mxu0
        %v2604 = vadd.f32 %v664, %v2603
        %2605 = vdwg.mxu0
        %2606 = vmatprep.subr.bf16.mxu0 %v2030
        %2607 = vmatpush1.bf16.msra.mxu0 %v2029
        %2608 = vmatprep.subr.bf16.mxu0 %v2042
        %2609 = vmatpush1.bf16.msra.mxu0 %v2041
        %2610 = vmatprep.subr.bf16.mxu0 %v2054
        %2611 = vmatpush1.bf16.msra.mxu0 %v2053
        %2612 = vmatprep.subr.bf16.mxu0 %v2066
        %2613 = vmatpush1.bf16.msra.mxu0 %v2065
        %2614 = vmatprep.subr.bf16.mxu0 %v2078
        %2615 = vmatpush1.bf16.msra.mxu0 %v2077
        %2616 = vmatprep.subr.bf16.mxu0 %v2090
        %2617 = vmatpush1.bf16.msra.mxu0 %v2089
        %2618 = vmatprep.subr.bf16.mxu0 %v2102
        %2619 = vmatpush1.bf16.msra.mxu0 %v2101
        %2620 = vmatprep.subr.bf16.mxu0 %v2114
        %2621 = vmatpush1.bf16.msra.mxu0 %v2113
        %2622 = vmatprep.subr.bf16.mxu0 0
        %2623 = vmatpush1.bf16.msra.mxu0 0
        %2624 = vmatprep.subr.bf16.mxu0 0
        %2625 = vmatpush1.bf16.msra.mxu0 0
        %2626 = vmatprep.subr.bf16.mxu0 0
        %2627 = vmatpush1.bf16.msra.mxu0 0
        %2628 = vmatprep.subr.bf16.mxu0 0
        %2629 = vmatpush1.bf16.msra.mxu0 0
        %2630 = vmatprep.subr.bf16.mxu0 0
        %2631 = vmatpush1.bf16.msra.mxu0 0
        %2632 = vmatprep.subr.bf16.mxu0 0
        %2633 = vmatpush1.bf16.msra.mxu0 0
        %2634 = vmatprep.subr.bf16.mxu0 0
        %2635 = vmatpush1.bf16.msra.mxu0 0
        %2636 = vmatprep.subr.bf16.mxu0 0
        %2637 = vmatpush1.bf16.msra.mxu0 0
        %2638 = vmatprep.mubr.bf16.mxu0 0
        %2639 = vmatmul.mubr.bf16.gmra.mrb[0].mxu0 %v879
        %v2640 = vpop.f32.mrb[0].mxu0
        %v2641 = vadd.f32 %v2448, %v2640
        %v2642 = vpop.f32.mrb[0].mxu0
        %v2643 = vadd.f32 %v2450, %v2642
        %v2644 = vpop.f32.mrb[0].mxu0
        %v2645 = vadd.f32 %v2452, %v2644
        %v2646 = vpop.f32.mrb[0].mxu0
        %v2647 = vadd.f32 %v2454, %v2646
        %2648 = vmatprep.mubr.bf16.mxu0 0
        %2649 = vmatmul.mubr.bf16.gmra.mrb[0].mxu0 %v882
        %v2650 = vpop.f32.mrb[0].mxu0
        %v2651 = vadd.f32 %v2458, %v2650
        %v2652 = vpop.f32.mrb[0].mxu0
        %v2653 = vadd.f32 %v2460, %v2652
        %v2654 = vpop.f32.mrb[0].mxu0
        %v2655 = vadd.f32 %v2462, %v2654
        %v2656 = vpop.f32.mrb[0].mxu0
        %v2657 = vadd.f32 %v2464, %v2656
        %2658 = vmatprep.mubr.bf16.mxu0 0
        %2659 = vmatmul.mubr.bf16.gmra.mrb[0].mxu0 %v885
        %v2660 = vpop.f32.mrb[0].mxu0
        %v2661 = vadd.f32 %v2468, %v2660
        %v2662 = vpop.f32.mrb[0].mxu0
        %v2663 = vadd.f32 %v2470, %v2662
        %v2664 = vpop.f32.mrb[0].mxu0
        %v2665 = vadd.f32 %v2472, %v2664
        %v2666 = vpop.f32.mrb[0].mxu0
        %v2667 = vadd.f32 %v2474, %v2666
        %2668 = vmatprep.mubr.bf16.mxu0 0
        %2669 = vmatmul.mubr.bf16.gmra.mrb[0].mxu0 %v888
        %v2670 = vpop.f32.mrb[0].mxu0
        %v2671 = vadd.f32 %v2478, %v2670
        %v2672 = vpop.f32.mrb[0].mxu0
        %v2673 = vadd.f32 %v2480, %v2672
        %v2674 = vpop.f32.mrb[0].mxu0
        %v2675 = vadd.f32 %v2482, %v2674
        %v2676 = vpop.f32.mrb[0].mxu0
        %v2677 = vadd.f32 %v2484, %v2676
        %2678 = vmatprep.mubr.bf16.mxu0 0
        %2679 = vmatmul.mubr.bf16.gmra.mrb[0].mxu0 %v891
        %v2680 = vpop.f32.mrb[0].mxu0
        %v2681 = vadd.f32 %v2488, %v2680
        %v2682 = vpop.f32.mrb[0].mxu0
        %v2683 = vadd.f32 %v2490, %v2682
        %v2684 = vpop.f32.mrb[0].mxu0
        %v2685 = vadd.f32 %v2492, %v2684
        %v2686 = vpop.f32.mrb[0].mxu0
        %v2687 = vadd.f32 %v2494, %v2686
        %2688 = vmatprep.mubr.bf16.mxu0 0
        %2689 = vmatmul.mubr.bf16.gmra.mrb[0].mxu0 %v894
        %v2690 = vpop.f32.mrb[0].mxu0
        %v2691 = vadd.f32 %v2498, %v2690
        %v2692 = vpop.f32.mrb[0].mxu0
        %v2693 = vadd.f32 %v2500, %v2692
        %v2694 = vpop.f32.mrb[0].mxu0
        %v2695 = vadd.f32 %v2502, %v2694
        %v2696 = vpop.f32.mrb[0].mxu0
        %v2697 = vadd.f32 %v2504, %v2696
        %2698 = vmatprep.mubr.bf16.mxu0 0
        %2699 = vmatmul.mubr.bf16.gmra.mrb[0].mxu0 %v897
        %v2700 = vpop.f32.mrb[0].mxu0
        %v2701 = vadd.f32 %v2508, %v2700
        %v2702 = vpop.f32.mrb[0].mxu0
        %v2703 = vadd.f32 %v2510, %v2702
        %v2704 = vpop.f32.mrb[0].mxu0
        %v2705 = vadd.f32 %v2512, %v2704
        %v2706 = vpop.f32.mrb[0].mxu0
        %v2707 = vadd.f32 %v2514, %v2706
        %2708 = vmatprep.mubr.bf16.mxu0 0
        %2709 = vmatmul.mubr.bf16.gmra.mrb[0].mxu0 %v900
        %v2710 = vpop.f32.mrb[0].mxu0
        %v2711 = vadd.f32 %v2518, %v2710
        %v2712 = vpop.f32.mrb[0].mxu0
        %v2713 = vadd.f32 %v2520, %v2712
        %v2714 = vpop.f32.mrb[0].mxu0
        %v2715 = vadd.f32 %v2522, %v2714
        %v2716 = vpop.f32.mrb[0].mxu0
        %v2717 = vadd.f32 %v2524, %v2716
        %2718 = vmatprep.mubr.bf16.mxu0 0
        %2719 = vmatmul.mubr.bf16.gmra.mrb[0].mxu0 %v903
        %v2720 = vpop.f32.mrb[0].mxu0
        %v2721 = vadd.f32 %v2528, %v2720
        %v2722 = vpop.f32.mrb[0].mxu0
        %v2723 = vadd.f32 %v2530, %v2722
        %v2724 = vpop.f32.mrb[0].mxu0
        %v2725 = vadd.f32 %v2532, %v2724
        %v2726 = vpop.f32.mrb[0].mxu0
        %v2727 = vadd.f32 %v2534, %v2726
        %2728 = vmatprep.mubr.bf16.mxu0 0
        %2729 = vmatmul.mubr.bf16.gmra.mrb[0].mxu0 %v906
        %v2730 = vpop.f32.mrb[0].mxu0
        %v2731 = vadd.f32 %v2538, %v2730
        %v2732 = vpop.f32.mrb[0].mxu0
        %v2733 = vadd.f32 %v2540, %v2732
        %v2734 = vpop.f32.mrb[0].mxu0
        %v2735 = vadd.f32 %v2542, %v2734
        %v2736 = vpop.f32.mrb[0].mxu0
        %v2737 = vadd.f32 %v2544, %v2736
        %2738 = vmatprep.mubr.bf16.mxu0 0
        %2739 = vmatmul.mubr.bf16.gmra.mrb[0].mxu0 %v909
        %v2740 = vpop.f32.mrb[0].mxu0
        %v2741 = vadd.f32 %v2548, %v2740
        %v2742 = vpop.f32.mrb[0].mxu0
        %v2743 = vadd.f32 %v2550, %v2742
        %v2744 = vpop.f32.mrb[0].mxu0
        %v2745 = vadd.f32 %v2552, %v2744
        %v2746 = vpop.f32.mrb[0].mxu0
        %v2747 = vadd.f32 %v2554, %v2746
        %2748 = vmatprep.mubr.bf16.mxu0 0
        %2749 = vmatmul.mubr.bf16.gmra.mrb[0].mxu0 %v912
        %v2750 = vpop.f32.mrb[0].mxu0
        %v2751 = vadd.f32 %v2558, %v2750
        %v2752 = vpop.f32.mrb[0].mxu0
        %v2753 = vadd.f32 %v2560, %v2752
        %v2754 = vpop.f32.mrb[0].mxu0
        %v2755 = vadd.f32 %v2562, %v2754
        %v2756 = vpop.f32.mrb[0].mxu0
        %v2757 = vadd.f32 %v2564, %v2756
        %2758 = vmatprep.mubr.bf16.mxu0 0
        %2759 = vmatmul.mubr.bf16.gmra.mrb[0].mxu0 %v915
        %v2760 = vpop.f32.mrb[0].mxu0
        %v2761 = vadd.f32 %v2568, %v2760
        %v2762 = vpop.f32.mrb[0].mxu0
        %v2763 = vadd.f32 %v2570, %v2762
        %v2764 = vpop.f32.mrb[0].mxu0
        %v2765 = vadd.f32 %v2572, %v2764
        %v2766 = vpop.f32.mrb[0].mxu0
        %v2767 = vadd.f32 %v2574, %v2766
        %2768 = vmatprep.mubr.bf16.mxu0 0
        %2769 = vmatmul.mubr.bf16.gmra.mrb[0].mxu0 %v918
        %v2770 = vpop.f32.mrb[0].mxu0
        %v2771 = vadd.f32 %v2578, %v2770
        %v2772 = vpop.f32.mrb[0].mxu0
        %v2773 = vadd.f32 %v2580, %v2772
        %v2774 = vpop.f32.mrb[0].mxu0
        %v2775 = vadd.f32 %v2582, %v2774
        %v2776 = vpop.f32.mrb[0].mxu0
        %v2777 = vadd.f32 %v2584, %v2776
        %2778 = vmatprep.mubr.bf16.mxu0 0
        %2779 = vmatmul.mubr.bf16.gmra.mrb[0].mxu0 %v921
        %v2780 = vpop.f32.mrb[0].mxu0
        %v2781 = vadd.f32 %v2588, %v2780
        %v2782 = vpop.f32.mrb[0].mxu0
        %v2783 = vadd.f32 %v2590, %v2782
        %v2784 = vpop.f32.mrb[0].mxu0
        %v2785 = vadd.f32 %v2592, %v2784
        %v2786 = vpop.f32.mrb[0].mxu0
        %v2787 = vadd.f32 %v2594, %v2786
        %2788 = vmatprep.mubr.bf16.mxu0 0
        %2789 = vmatmul.mubr.bf16.gmra.mrb[0].mxu0 %v924
        %v2790 = vpop.f32.mrb[0].mxu0
        %v2791 = vadd.f32 %v2598, %v2790
        %v2792 = vpop.f32.mrb[0].mxu0
        %v2793 = vadd.f32 %v2600, %v2792
        %v2794 = vpop.f32.mrb[0].mxu0
        %v2795 = vadd.f32 %v2602, %v2794
        %v2796 = vpop.f32.mrb[0].mxu0
        %v2797 = vadd.f32 %v2604, %v2796
        %2798 = vdwg.mxu0
        %2799 = vmatprep.subr.bf16.mxu0 %v1840
        %2800 = vmatpush1.bf16.msra.mxu0 %v1839
        %2801 = vmatprep.subr.bf16.mxu0 %v1852
        %2802 = vmatpush1.bf16.msra.mxu0 %v1851
        %2803 = vmatprep.subr.bf16.mxu0 %v1864
        %2804 = vmatpush1.bf16.msra.mxu0 %v1863
        %2805 = vmatprep.subr.bf16.mxu0 %v1876
        %2806 = vmatpush1.bf16.msra.mxu0 %v1875
        %2807 = vmatprep.subr.bf16.mxu0 %v1888
        %2808 = vmatpush1.bf16.msra.mxu0 %v1887
        %2809 = vmatprep.subr.bf16.mxu0 %v1900
        %2810 = vmatpush1.bf16.msra.mxu0 %v1899
        %2811 = vmatprep.subr.bf16.mxu0 %v1912
        %2812 = vmatpush1.bf16.msra.mxu0 %v1911
        %2813 = vmatprep.subr.bf16.mxu0 %v1924
        %2814 = vmatpush1.bf16.msra.mxu0 %v1923
        %2815 = vmatprep.subr.bf16.mxu0 %v1936
        %2816 = vmatpush1.bf16.msra.mxu0 %v1935
        %2817 = vmatprep.subr.bf16.mxu0 %v1948
        %2818 = vmatpush1.bf16.msra.mxu0 %v1947
        %2819 = vmatprep.subr.bf16.mxu0 %v1960
        %2820 = vmatpush1.bf16.msra.mxu0 %v1959
        %2821 = vmatprep.subr.bf16.mxu0 %v1972
        %2822 = vmatpush1.bf16.msra.mxu0 %v1971
        %2823 = vmatprep.subr.bf16.mxu0 %v1984
        %2824 = vmatpush1.bf16.msra.mxu0 %v1983
        %2825 = vmatprep.subr.bf16.mxu0 %v1996
        %2826 = vmatpush1.bf16.msra.mxu0 %v1995
        %2827 = vmatprep.subr.bf16.mxu0 %v2008
        %2828 = vmatpush1.bf16.msra.mxu0 %v2007
        %2829 = vmatprep.subr.bf16.mxu0 %v2020
        %2830 = vmatpush1.bf16.msra.mxu0 %v2019
        %2831 = vmatprep.mubr.bf16.mxu0 %v878
        %2832 = vmatmul.mubr.bf16.gmra.mrb[0].mxu0 %v877
        %v2833 = vpop.f32.mrb[0].mxu0
        %v2834 = vadd.f32 %v668, %v2833
        %v2835 = vpop.f32.mrb[0].mxu0
        %v2836 = vadd.f32 %v672, %v2835
        %v2837 = vpop.f32.mrb[0].mxu0
        %v2838 = vadd.f32 %v668, %v2837
        %v2839 = vpop.f32.mrb[0].mxu0
        %v2840 = vadd.f32 %v672, %v2839
        %2841 = vmatprep.mubr.bf16.mxu0 %v881
        %2842 = vmatmul.mubr.bf16.gmra.mrb[0].mxu0 %v880
        %v2843 = vpop.f32.mrb[0].mxu0
        %v2844 = vadd.f32 %v668, %v2843
        %v2845 = vpop.f32.mrb[0].mxu0
        %v2846 = vadd.f32 %v672, %v2845
        %v2847 = vpop.f32.mrb[0].mxu0
        %v2848 = vadd.f32 %v668, %v2847
        %v2849 = vpop.f32.mrb[0].mxu0
        %v2850 = vadd.f32 %v672, %v2849
        %2851 = vmatprep.mubr.bf16.mxu0 %v884
        %2852 = vmatmul.mubr.bf16.gmra.mrb[0].mxu0 %v883
        %v2853 = vpop.f32.mrb[0].mxu0
        %v2854 = vadd.f32 %v668, %v2853
        %v2855 = vpop.f32.mrb[0].mxu0
        %v2856 = vadd.f32 %v672, %v2855
        %v2857 = vpop.f32.mrb[0].mxu0
        %v2858 = vadd.f32 %v668, %v2857
        %v2859 = vpop.f32.mrb[0].mxu0
        %v2860 = vadd.f32 %v672, %v2859
        %2861 = vmatprep.mubr.bf16.mxu0 %v887
        %2862 = vmatmul.mubr.bf16.gmra.mrb[0].mxu0 %v886
        %v2863 = vpop.f32.mrb[0].mxu0
        %v2864 = vadd.f32 %v668, %v2863
        %v2865 = vpop.f32.mrb[0].mxu0
        %v2866 = vadd.f32 %v672, %v2865
        %v2867 = vpop.f32.mrb[0].mxu0
        %v2868 = vadd.f32 %v668, %v2867
        %v2869 = vpop.f32.mrb[0].mxu0
        %v2870 = vadd.f32 %v672, %v2869
        %2871 = vmatprep.mubr.bf16.mxu0 %v890
        %2872 = vmatmul.mubr.bf16.gmra.mrb[0].mxu0 %v889
        %v2873 = vpop.f32.mrb[0].mxu0
        %v2874 = vadd.f32 %v668, %v2873
        %v2875 = vpop.f32.mrb[0].mxu0
        %v2876 = vadd.f32 %v672, %v2875
        %v2877 = vpop.f32.mrb[0].mxu0
        %v2878 = vadd.f32 %v668, %v2877
        %v2879 = vpop.f32.mrb[0].mxu0
        %v2880 = vadd.f32 %v672, %v2879
        %2881 = vmatprep.mubr.bf16.mxu0 %v893
        %2882 = vmatmul.mubr.bf16.gmra.mrb[0].mxu0 %v892
        %v2883 = vpop.f32.mrb[0].mxu0
        %v2884 = vadd.f32 %v668, %v2883
        %v2885 = vpop.f32.mrb[0].mxu0
        %v2886 = vadd.f32 %v672, %v2885
        %v2887 = vpop.f32.mrb[0].mxu0
        %v2888 = vadd.f32 %v668, %v2887
        %v2889 = vpop.f32.mrb[0].mxu0
        %v2890 = vadd.f32 %v672, %v2889
        %2891 = vmatprep.mubr.bf16.mxu0 %v896
        %2892 = vmatmul.mubr.bf16.gmra.mrb[0].mxu0 %v895
        %v2893 = vpop.f32.mrb[0].mxu0
        %v2894 = vadd.f32 %v668, %v2893
        %v2895 = vpop.f32.mrb[0].mxu0
        %v2896 = vadd.f32 %v672, %v2895
        %v2897 = vpop.f32.mrb[0].mxu0
        %v2898 = vadd.f32 %v668, %v2897
        %v2899 = vpop.f32.mrb[0].mxu0
        %v2900 = vadd.f32 %v672, %v2899
        %2901 = vmatprep.mubr.bf16.mxu0 %v899
        %2902 = vmatmul.mubr.bf16.gmra.mrb[0].mxu0 %v898
        %v2903 = vpop.f32.mrb[0].mxu0
        %v2904 = vadd.f32 %v668, %v2903
        %v2905 = vpop.f32.mrb[0].mxu0
        %v2906 = vadd.f32 %v672, %v2905
        %v2907 = vpop.f32.mrb[0].mxu0
        %v2908 = vadd.f32 %v668, %v2907
        %v2909 = vpop.f32.mrb[0].mxu0
        %v2910 = vadd.f32 %v672, %v2909
        %2911 = vmatprep.mubr.bf16.mxu0 %v902
        %2912 = vmatmul.mubr.bf16.gmra.mrb[0].mxu0 %v901
        %v2913 = vpop.f32.mrb[0].mxu0
        %v2914 = vadd.f32 %v668, %v2913
        %v2915 = vpop.f32.mrb[0].mxu0
        %v2916 = vadd.f32 %v672, %v2915
        %v2917 = vpop.f32.mrb[0].mxu0
        %v2918 = vadd.f32 %v668, %v2917
        %v2919 = vpop.f32.mrb[0].mxu0
        %v2920 = vadd.f32 %v672, %v2919
        %2921 = vmatprep.mubr.bf16.mxu0 %v905
        %2922 = vmatmul.mubr.bf16.gmra.mrb[0].mxu0 %v904
        %v2923 = vpop.f32.mrb[0].mxu0
        %v2924 = vadd.f32 %v668, %v2923
        %v2925 = vpop.f32.mrb[0].mxu0
        %v2926 = vadd.f32 %v672, %v2925
        %v2927 = vpop.f32.mrb[0].mxu0
        %v2928 = vadd.f32 %v668, %v2927
        %v2929 = vpop.f32.mrb[0].mxu0
        %v2930 = vadd.f32 %v672, %v2929
        %2931 = vmatprep.mubr.bf16.mxu0 %v908
        %2932 = vmatmul.mubr.bf16.gmra.mrb[0].mxu0 %v907
        %v2933 = vpop.f32.mrb[0].mxu0
        %v2934 = vadd.f32 %v668, %v2933
        %v2935 = vpop.f32.mrb[0].mxu0
        %v2936 = vadd.f32 %v672, %v2935
        %v2937 = vpop.f32.mrb[0].mxu0
        %v2938 = vadd.f32 %v668, %v2937
        %v2939 = vpop.f32.mrb[0].mxu0
        %v2940 = vadd.f32 %v672, %v2939
        %2941 = vmatprep.mubr.bf16.mxu0 %v911
        %2942 = vmatmul.mubr.bf16.gmra.mrb[0].mxu0 %v910
        %v2943 = vpop.f32.mrb[0].mxu0
        %v2944 = vadd.f32 %v668, %v2943
        %v2945 = vpop.f32.mrb[0].mxu0
        %v2946 = vadd.f32 %v672, %v2945
        %v2947 = vpop.f32.mrb[0].mxu0
        %v2948 = vadd.f32 %v668, %v2947
        %v2949 = vpop.f32.mrb[0].mxu0
        %v2950 = vadd.f32 %v672, %v2949
        %2951 = vmatprep.mubr.bf16.mxu0 %v914
        %2952 = vmatmul.mubr.bf16.gmra.mrb[0].mxu0 %v913
        %v2953 = vpop.f32.mrb[0].mxu0
        %v2954 = vadd.f32 %v668, %v2953
        %v2955 = vpop.f32.mrb[0].mxu0
        %v2956 = vadd.f32 %v672, %v2955
        %v2957 = vpop.f32.mrb[0].mxu0
        %v2958 = vadd.f32 %v668, %v2957
        %v2959 = vpop.f32.mrb[0].mxu0
        %v2960 = vadd.f32 %v672, %v2959
        %2961 = vmatprep.mubr.bf16.mxu0 %v917
        %2962 = vmatmul.mubr.bf16.gmra.mrb[0].mxu0 %v916
        %v2963 = vpop.f32.mrb[0].mxu0
        %v2964 = vadd.f32 %v668, %v2963
        %v2965 = vpop.f32.mrb[0].mxu0
        %v2966 = vadd.f32 %v672, %v2965
        %v2967 = vpop.f32.mrb[0].mxu0
        %v2968 = vadd.f32 %v668, %v2967
        %v2969 = vpop.f32.mrb[0].mxu0
        %v2970 = vadd.f32 %v672, %v2969
        %2971 = vmatprep.mubr.bf16.mxu0 %v920
        %2972 = vmatmul.mubr.bf16.gmra.mrb[0].mxu0 %v919
        %v2973 = vpop.f32.mrb[0].mxu0
        %v2974 = vadd.f32 %v668, %v2973
        %v2975 = vpop.f32.mrb[0].mxu0
        %v2976 = vadd.f32 %v672, %v2975
        %v2977 = vpop.f32.mrb[0].mxu0
        %v2978 = vadd.f32 %v668, %v2977
        %v2979 = vpop.f32.mrb[0].mxu0
        %v2980 = vadd.f32 %v672, %v2979
        %2981 = vmatprep.mubr.bf16.mxu0 %v923
        %2982 = vmatmul.mubr.bf16.gmra.mrb[0].mxu0 %v922
        %v2983 = vpop.f32.mrb[0].mxu0
        %v2984 = vadd.f32 %v668, %v2983
        %v2985 = vpop.f32.mrb[0].mxu0
        %v2986 = vadd.f32 %v672, %v2985
        %v2987 = vpop.f32.mrb[0].mxu0
        %v2988 = vadd.f32 %v668, %v2987
        %v2989 = vpop.f32.mrb[0].mxu0
        %v2990 = vadd.f32 %v672, %v2989
        %2991 = vdwg.mxu0
        %2992 = vmatprep.subr.bf16.mxu0 %v2032
        %2993 = vmatpush1.bf16.msra.mxu0 %v2031
        %2994 = vmatprep.subr.bf16.mxu0 %v2044
        %2995 = vmatpush1.bf16.msra.mxu0 %v2043
        %2996 = vmatprep.subr.bf16.mxu0 %v2056
        %2997 = vmatpush1.bf16.msra.mxu0 %v2055
        %2998 = vmatprep.subr.bf16.mxu0 %v2068
        %2999 = vmatpush1.bf16.msra.mxu0 %v2067
        %3000 = vmatprep.subr.bf16.mxu0 %v2080
        %3001 = vmatpush1.bf16.msra.mxu0 %v2079
        %3002 = vmatprep.subr.bf16.mxu0 %v2092
        %3003 = vmatpush1.bf16.msra.mxu0 %v2091
        %3004 = vmatprep.subr.bf16.mxu0 %v2104
        %3005 = vmatpush1.bf16.msra.mxu0 %v2103
        %3006 = vmatprep.subr.bf16.mxu0 %v2116
        %3007 = vmatpush1.bf16.msra.mxu0 %v2115
        %3008 = vmatprep.subr.bf16.mxu0 0
        %3009 = vmatpush1.bf16.msra.mxu0 0
        %3010 = vmatprep.subr.bf16.mxu0 0
        %3011 = vmatpush1.bf16.msra.mxu0 0
        %3012 = vmatprep.subr.bf16.mxu0 0
        %3013 = vmatpush1.bf16.msra.mxu0 0
        %3014 = vmatprep.subr.bf16.mxu0 0
        %3015 = vmatpush1.bf16.msra.mxu0 0
        %3016 = vmatprep.subr.bf16.mxu0 0
        %3017 = vmatpush1.bf16.msra.mxu0 0
        %3018 = vmatprep.subr.bf16.mxu0 0
        %3019 = vmatpush1.bf16.msra.mxu0 0
        %3020 = vmatprep.subr.bf16.mxu0 0
        %3021 = vmatpush1.bf16.msra.mxu0 0
        %3022 = vmatprep.subr.bf16.mxu0 0
        %3023 = vmatpush1.bf16.msra.mxu0 0
        %3024 = vmatprep.mubr.bf16.mxu0 0
        %3025 = vmatmul.mubr.bf16.gmra.mrb[0].mxu0 %v879
        %v3026 = vpop.f32.mrb[0].mxu0
        %v3027 = vadd.f32 %v2834, %v3026
        %v3028 = vpop.f32.mrb[0].mxu0
        %v3029 = vadd.f32 %v2836, %v3028
        %v3030 = vpop.f32.mrb[0].mxu0
        %v3031 = vadd.f32 %v2838, %v3030
        %v3032 = vpop.f32.mrb[0].mxu0
        %v3033 = vadd.f32 %v2840, %v3032
        %3034 = vmatprep.mubr.bf16.mxu0 0
        %3035 = vmatmul.mubr.bf16.gmra.mrb[0].mxu0 %v882
        %v3036 = vpop.f32.mrb[0].mxu0
        %v3037 = vadd.f32 %v2844, %v3036
        %v3038 = vpop.f32.mrb[0].mxu0
        %v3039 = vadd.f32 %v2846, %v3038
        %v3040 = vpop.f32.mrb[0].mxu0
        %v3041 = vadd.f32 %v2848, %v3040
        %v3042 = vpop.f32.mrb[0].mxu0
        %v3043 = vadd.f32 %v2850, %v3042
        %3044 = vmatprep.mubr.bf16.mxu0 0
        %3045 = vmatmul.mubr.bf16.gmra.mrb[0].mxu0 %v885
        %v3046 = vpop.f32.mrb[0].mxu0
        %v3047 = vadd.f32 %v2854, %v3046
        %v3048 = vpop.f32.mrb[0].mxu0
        %v3049 = vadd.f32 %v2856, %v3048
        %v3050 = vpop.f32.mrb[0].mxu0
        %v3051 = vadd.f32 %v2858, %v3050
        %v3052 = vpop.f32.mrb[0].mxu0
        %v3053 = vadd.f32 %v2860, %v3052
        %3054 = vmatprep.mubr.bf16.mxu0 0
        %3055 = vmatmul.mubr.bf16.gmra.mrb[0].mxu0 %v888
        %v3056 = vpop.f32.mrb[0].mxu0
        %v3057 = vadd.f32 %v2864, %v3056
        %v3058 = vpop.f32.mrb[0].mxu0
        %v3059 = vadd.f32 %v2866, %v3058
        %v3060 = vpop.f32.mrb[0].mxu0
        %v3061 = vadd.f32 %v2868, %v3060
        %v3062 = vpop.f32.mrb[0].mxu0
        %v3063 = vadd.f32 %v2870, %v3062
        %3064 = vmatprep.mubr.bf16.mxu0 0
        %3065 = vmatmul.mubr.bf16.gmra.mrb[0].mxu0 %v891
        %v3066 = vpop.f32.mrb[0].mxu0
        %v3067 = vadd.f32 %v2874, %v3066
        %v3068 = vpop.f32.mrb[0].mxu0
        %v3069 = vadd.f32 %v2876, %v3068
        %v3070 = vpop.f32.mrb[0].mxu0
        %v3071 = vadd.f32 %v2878, %v3070
        %v3072 = vpop.f32.mrb[0].mxu0
        %v3073 = vadd.f32 %v2880, %v3072
        %3074 = vmatprep.mubr.bf16.mxu0 0
        %3075 = vmatmul.mubr.bf16.gmra.mrb[0].mxu0 %v894
        %v3076 = vpop.f32.mrb[0].mxu0
        %v3077 = vadd.f32 %v2884, %v3076
        %v3078 = vpop.f32.mrb[0].mxu0
        %v3079 = vadd.f32 %v2886, %v3078
        %v3080 = vpop.f32.mrb[0].mxu0
        %v3081 = vadd.f32 %v2888, %v3080
        %v3082 = vpop.f32.mrb[0].mxu0
        %v3083 = vadd.f32 %v2890, %v3082
        %3084 = vmatprep.mubr.bf16.mxu0 0
        %3085 = vmatmul.mubr.bf16.gmra.mrb[0].mxu0 %v897
        %v3086 = vpop.f32.mrb[0].mxu0
        %v3087 = vadd.f32 %v2894, %v3086
        %v3088 = vpop.f32.mrb[0].mxu0
        %v3089 = vadd.f32 %v2896, %v3088
        %v3090 = vpop.f32.mrb[0].mxu0
        %v3091 = vadd.f32 %v2898, %v3090
        %v3092 = vpop.f32.mrb[0].mxu0
        %v3093 = vadd.f32 %v2900, %v3092
        %3094 = vmatprep.mubr.bf16.mxu0 0
        %3095 = vmatmul.mubr.bf16.gmra.mrb[0].mxu0 %v900
        %v3096 = vpop.f32.mrb[0].mxu0
        %v3097 = vadd.f32 %v2904, %v3096
        %v3098 = vpop.f32.mrb[0].mxu0
        %v3099 = vadd.f32 %v2906, %v3098
        %v3100 = vpop.f32.mrb[0].mxu0
        %v3101 = vadd.f32 %v2908, %v3100
        %v3102 = vpop.f32.mrb[0].mxu0
        %v3103 = vadd.f32 %v2910, %v3102
        %3104 = vmatprep.mubr.bf16.mxu0 0
        %3105 = vmatmul.mubr.bf16.gmra.mrb[0].mxu0 %v903
        %v3106 = vpop.f32.mrb[0].mxu0
        %v3107 = vadd.f32 %v2914, %v3106
        %v3108 = vpop.f32.mrb[0].mxu0
        %v3109 = vadd.f32 %v2916, %v3108
        %v3110 = vpop.f32.mrb[0].mxu0
        %v3111 = vadd.f32 %v2918, %v3110
        %v3112 = vpop.f32.mrb[0].mxu0
        %v3113 = vadd.f32 %v2920, %v3112
        %3114 = vmatprep.mubr.bf16.mxu0 0
        %3115 = vmatmul.mubr.bf16.gmra.mrb[0].mxu0 %v906
        %v3116 = vpop.f32.mrb[0].mxu0
        %v3117 = vadd.f32 %v2924, %v3116
        %v3118 = vpop.f32.mrb[0].mxu0
        %v3119 = vadd.f32 %v2926, %v3118
        %v3120 = vpop.f32.mrb[0].mxu0
        %v3121 = vadd.f32 %v2928, %v3120
        %v3122 = vpop.f32.mrb[0].mxu0
        %v3123 = vadd.f32 %v2930, %v3122
        %3124 = vmatprep.mubr.bf16.mxu0 0
        %3125 = vmatmul.mubr.bf16.gmra.mrb[0].mxu0 %v909
        %v3126 = vpop.f32.mrb[0].mxu0
        %v3127 = vadd.f32 %v2934, %v3126
        %v3128 = vpop.f32.mrb[0].mxu0
        %v3129 = vadd.f32 %v2936, %v3128
        %v3130 = vpop.f32.mrb[0].mxu0
        %v3131 = vadd.f32 %v2938, %v3130
        %v3132 = vpop.f32.mrb[0].mxu0
        %v3133 = vadd.f32 %v2940, %v3132
        %3134 = vmatprep.mubr.bf16.mxu0 0
        %3135 = vmatmul.mubr.bf16.gmra.mrb[0].mxu0 %v912
        %v3136 = vpop.f32.mrb[0].mxu0
        %v3137 = vadd.f32 %v2944, %v3136
        %v3138 = vpop.f32.mrb[0].mxu0
        %v3139 = vadd.f32 %v2946, %v3138
        %v3140 = vpop.f32.mrb[0].mxu0
        %v3141 = vadd.f32 %v2948, %v3140
        %v3142 = vpop.f32.mrb[0].mxu0
        %v3143 = vadd.f32 %v2950, %v3142
        %3144 = vmatprep.mubr.bf16.mxu0 0
        %3145 = vmatmul.mubr.bf16.gmra.mrb[0].mxu0 %v915
        %v3146 = vpop.f32.mrb[0].mxu0
        %v3147 = vadd.f32 %v2954, %v3146
        %v3148 = vpop.f32.mrb[0].mxu0
        %v3149 = vadd.f32 %v2956, %v3148
        %v3150 = vpop.f32.mrb[0].mxu0
        %v3151 = vadd.f32 %v2958, %v3150
        %v3152 = vpop.f32.mrb[0].mxu0
        %v3153 = vadd.f32 %v2960, %v3152
        %3154 = vmatprep.mubr.bf16.mxu0 0
        %3155 = vmatmul.mubr.bf16.gmra.mrb[0].mxu0 %v918
        %v3156 = vpop.f32.mrb[0].mxu0
        %v3157 = vadd.f32 %v2964, %v3156
        %v3158 = vpop.f32.mrb[0].mxu0
        %v3159 = vadd.f32 %v2966, %v3158
        %v3160 = vpop.f32.mrb[0].mxu0
        %v3161 = vadd.f32 %v2968, %v3160
        %v3162 = vpop.f32.mrb[0].mxu0
        %v3163 = vadd.f32 %v2970, %v3162
        %3164 = vmatprep.mubr.bf16.mxu0 0
        %3165 = vmatmul.mubr.bf16.gmra.mrb[0].mxu0 %v921
        %v3166 = vpop.f32.mrb[0].mxu0
        %v3167 = vadd.f32 %v2974, %v3166
        %v3168 = vpop.f32.mrb[0].mxu0
        %v3169 = vadd.f32 %v2976, %v3168
        %v3170 = vpop.f32.mrb[0].mxu0
        %v3171 = vadd.f32 %v2978, %v3170
        %v3172 = vpop.f32.mrb[0].mxu0
        %v3173 = vadd.f32 %v2980, %v3172
        %3174 = vmatprep.mubr.bf16.mxu0 0
        %3175 = vmatmul.mubr.bf16.gmra.mrb[0].mxu0 %v924
        %v3176 = vpop.f32.mrb[0].mxu0
        %v3177 = vadd.f32 %v2984, %v3176
        %v3178 = vpop.f32.mrb[0].mxu0
        %v3179 = vadd.f32 %v2986, %v3178
        %v3180 = vpop.f32.mrb[0].mxu0
        %v3181 = vadd.f32 %v2988, %v3180
        %v3182 = vpop.f32.mrb[0].mxu0
        %v3183 = vadd.f32 %v2990, %v3182
        %3184 = vdwg.mxu0
        %3185 = vmatprep.subr.bf16.mxu0 %v1842
        %3186 = vmatpush1.bf16.msra.mxu0 %v1841
        %3187 = vmatprep.subr.bf16.mxu0 %v1854
        %3188 = vmatpush1.bf16.msra.mxu0 %v1853
        %3189 = vmatprep.subr.bf16.mxu0 %v1866
        %3190 = vmatpush1.bf16.msra.mxu0 %v1865
        %3191 = vmatprep.subr.bf16.mxu0 %v1878
        %3192 = vmatpush1.bf16.msra.mxu0 %v1877
        %3193 = vmatprep.subr.bf16.mxu0 %v1890
        %3194 = vmatpush1.bf16.msra.mxu0 %v1889
        %3195 = vmatprep.subr.bf16.mxu0 %v1902
        %3196 = vmatpush1.bf16.msra.mxu0 %v1901
        %3197 = vmatprep.subr.bf16.mxu0 %v1914
        %3198 = vmatpush1.bf16.msra.mxu0 %v1913
        %3199 = vmatprep.subr.bf16.mxu0 %v1926
        %3200 = vmatpush1.bf16.msra.mxu0 %v1925
        %3201 = vmatprep.subr.bf16.mxu0 %v1938
        %3202 = vmatpush1.bf16.msra.mxu0 %v1937
        %3203 = vmatprep.subr.bf16.mxu0 %v1950
        %3204 = vmatpush1.bf16.msra.mxu0 %v1949
        %3205 = vmatprep.subr.bf16.mxu0 %v1962
        %3206 = vmatpush1.bf16.msra.mxu0 %v1961
        %3207 = vmatprep.subr.bf16.mxu0 %v1974
        %3208 = vmatpush1.bf16.msra.mxu0 %v1973
        %3209 = vmatprep.subr.bf16.mxu0 %v1986
        %3210 = vmatpush1.bf16.msra.mxu0 %v1985
        %3211 = vmatprep.subr.bf16.mxu0 %v1998
        %3212 = vmatpush1.bf16.msra.mxu0 %v1997
        %3213 = vmatprep.subr.bf16.mxu0 %v2010
        %3214 = vmatpush1.bf16.msra.mxu0 %v2009
        %3215 = vmatprep.subr.bf16.mxu0 %v2022
        %3216 = vmatpush1.bf16.msra.mxu0 %v2021
        %3217 = vmatprep.mubr.bf16.mxu0 %v878
        %3218 = vmatmul.mubr.bf16.gmra.mrb[0].mxu0 %v877
        %v3219 = vpop.f32.mrb[0].mxu0
        %v3220 = vadd.f32 %v676, %v3219
        %v3221 = vpop.f32.mrb[0].mxu0
        %v3222 = vadd.f32 %v680, %v3221
        %v3223 = vpop.f32.mrb[0].mxu0
        %v3224 = vadd.f32 %v676, %v3223
        %v3225 = vpop.f32.mrb[0].mxu0
        %v3226 = vadd.f32 %v680, %v3225
        %3227 = vmatprep.mubr.bf16.mxu0 %v881
        %3228 = vmatmul.mubr.bf16.gmra.mrb[0].mxu0 %v880
        %v3229 = vpop.f32.mrb[0].mxu0
        %v3230 = vadd.f32 %v676, %v3229
        %v3231 = vpop.f32.mrb[0].mxu0
        %v3232 = vadd.f32 %v680, %v3231
        %v3233 = vpop.f32.mrb[0].mxu0
        %v3234 = vadd.f32 %v676, %v3233
        %v3235 = vpop.f32.mrb[0].mxu0
        %v3236 = vadd.f32 %v680, %v3235
        %3237 = vmatprep.mubr.bf16.mxu0 %v884
        %3238 = vmatmul.mubr.bf16.gmra.mrb[0].mxu0 %v883
        %v3239 = vpop.f32.mrb[0].mxu0
        %v3240 = vadd.f32 %v676, %v3239
        %v3241 = vpop.f32.mrb[0].mxu0
        %v3242 = vadd.f32 %v680, %v3241
        %v3243 = vpop.f32.mrb[0].mxu0
        %v3244 = vadd.f32 %v676, %v3243
        %v3245 = vpop.f32.mrb[0].mxu0
        %v3246 = vadd.f32 %v680, %v3245
        %3247 = vmatprep.mubr.bf16.mxu0 %v887
        %3248 = vmatmul.mubr.bf16.gmra.mrb[0].mxu0 %v886
        %v3249 = vpop.f32.mrb[0].mxu0
        %v3250 = vadd.f32 %v676, %v3249
        %v3251 = vpop.f32.mrb[0].mxu0
        %v3252 = vadd.f32 %v680, %v3251
        %v3253 = vpop.f32.mrb[0].mxu0
        %v3254 = vadd.f32 %v676, %v3253
        %v3255 = vpop.f32.mrb[0].mxu0
        %v3256 = vadd.f32 %v680, %v3255
        %3257 = vmatprep.mubr.bf16.mxu0 %v890
        %3258 = vmatmul.mubr.bf16.gmra.mrb[0].mxu0 %v889
        %v3259 = vpop.f32.mrb[0].mxu0
        %v3260 = vadd.f32 %v676, %v3259
        %v3261 = vpop.f32.mrb[0].mxu0
        %v3262 = vadd.f32 %v680, %v3261
        %v3263 = vpop.f32.mrb[0].mxu0
        %v3264 = vadd.f32 %v676, %v3263
        %v3265 = vpop.f32.mrb[0].mxu0
        %v3266 = vadd.f32 %v680, %v3265
        %3267 = vmatprep.mubr.bf16.mxu0 %v893
        %3268 = vmatmul.mubr.bf16.gmra.mrb[0].mxu0 %v892
        %v3269 = vpop.f32.mrb[0].mxu0
        %v3270 = vadd.f32 %v676, %v3269
        %v3271 = vpop.f32.mrb[0].mxu0
        %v3272 = vadd.f32 %v680, %v3271
        %v3273 = vpop.f32.mrb[0].mxu0
        %v3274 = vadd.f32 %v676, %v3273
        %v3275 = vpop.f32.mrb[0].mxu0
        %v3276 = vadd.f32 %v680, %v3275
        %3277 = vmatprep.mubr.bf16.mxu0 %v896
        %3278 = vmatmul.mubr.bf16.gmra.mrb[0].mxu0 %v895
        %v3279 = vpop.f32.mrb[0].mxu0
        %v3280 = vadd.f32 %v676, %v3279
        %v3281 = vpop.f32.mrb[0].mxu0
        %v3282 = vadd.f32 %v680, %v3281
        %v3283 = vpop.f32.mrb[0].mxu0
        %v3284 = vadd.f32 %v676, %v3283
        %v3285 = vpop.f32.mrb[0].mxu0
        %v3286 = vadd.f32 %v680, %v3285
        %3287 = vmatprep.mubr.bf16.mxu0 %v899
        %3288 = vmatmul.mubr.bf16.gmra.mrb[0].mxu0 %v898
        %v3289 = vpop.f32.mrb[0].mxu0
        %v3290 = vadd.f32 %v676, %v3289
        %v3291 = vpop.f32.mrb[0].mxu0
        %v3292 = vadd.f32 %v680, %v3291
        %v3293 = vpop.f32.mrb[0].mxu0
        %v3294 = vadd.f32 %v676, %v3293
        %v3295 = vpop.f32.mrb[0].mxu0
        %v3296 = vadd.f32 %v680, %v3295
        %3297 = vmatprep.mubr.bf16.mxu0 %v902
        %3298 = vmatmul.mubr.bf16.gmra.mrb[0].mxu0 %v901
        %v3299 = vpop.f32.mrb[0].mxu0
        %v3300 = vadd.f32 %v676, %v3299
        %v3301 = vpop.f32.mrb[0].mxu0
        %v3302 = vadd.f32 %v680, %v3301
        %v3303 = vpop.f32.mrb[0].mxu0
        %v3304 = vadd.f32 %v676, %v3303
        %v3305 = vpop.f32.mrb[0].mxu0
        %v3306 = vadd.f32 %v680, %v3305
        %3307 = vmatprep.mubr.bf16.mxu0 %v905
        %3308 = vmatmul.mubr.bf16.gmra.mrb[0].mxu0 %v904
        %v3309 = vpop.f32.mrb[0].mxu0
        %v3310 = vadd.f32 %v676, %v3309
        %v3311 = vpop.f32.mrb[0].mxu0
        %v3312 = vadd.f32 %v680, %v3311
        %v3313 = vpop.f32.mrb[0].mxu0
        %v3314 = vadd.f32 %v676, %v3313
        %v3315 = vpop.f32.mrb[0].mxu0
        %v3316 = vadd.f32 %v680, %v3315
        %3317 = vmatprep.mubr.bf16.mxu0 %v908
        %3318 = vmatmul.mubr.bf16.gmra.mrb[0].mxu0 %v907
        %v3319 = vpop.f32.mrb[0].mxu0
        %v3320 = vadd.f32 %v676, %v3319
        %v3321 = vpop.f32.mrb[0].mxu0
        %v3322 = vadd.f32 %v680, %v3321
        %v3323 = vpop.f32.mrb[0].mxu0
        %v3324 = vadd.f32 %v676, %v3323
        %v3325 = vpop.f32.mrb[0].mxu0
        %v3326 = vadd.f32 %v680, %v3325
        %3327 = vmatprep.mubr.bf16.mxu0 %v911
        %3328 = vmatmul.mubr.bf16.gmra.mrb[0].mxu0 %v910
        %v3329 = vpop.f32.mrb[0].mxu0
        %v3330 = vadd.f32 %v676, %v3329
        %v3331 = vpop.f32.mrb[0].mxu0
        %v3332 = vadd.f32 %v680, %v3331
        %v3333 = vpop.f32.mrb[0].mxu0
        %v3334 = vadd.f32 %v676, %v3333
        %v3335 = vpop.f32.mrb[0].mxu0
        %v3336 = vadd.f32 %v680, %v3335
        %3337 = vmatprep.mubr.bf16.mxu0 %v914
        %3338 = vmatmul.mubr.bf16.gmra.mrb[0].mxu0 %v913
        %v3339 = vpop.f32.mrb[0].mxu0
        %v3340 = vadd.f32 %v676, %v3339
        %v3341 = vpop.f32.mrb[0].mxu0
        %v3342 = vadd.f32 %v680, %v3341
        %v3343 = vpop.f32.mrb[0].mxu0
        %v3344 = vadd.f32 %v676, %v3343
        %v3345 = vpop.f32.mrb[0].mxu0
        %v3346 = vadd.f32 %v680, %v3345
        %3347 = vmatprep.mubr.bf16.mxu0 %v917
        %3348 = vmatmul.mubr.bf16.gmra.mrb[0].mxu0 %v916
        %v3349 = vpop.f32.mrb[0].mxu0
        %v3350 = vadd.f32 %v676, %v3349
        %v3351 = vpop.f32.mrb[0].mxu0
        %v3352 = vadd.f32 %v680, %v3351
        %v3353 = vpop.f32.mrb[0].mxu0
        %v3354 = vadd.f32 %v676, %v3353
        %v3355 = vpop.f32.mrb[0].mxu0
        %v3356 = vadd.f32 %v680, %v3355
        %3357 = vmatprep.mubr.bf16.mxu0 %v920
        %3358 = vmatmul.mubr.bf16.gmra.mrb[0].mxu0 %v919
        %v3359 = vpop.f32.mrb[0].mxu0
        %v3360 = vadd.f32 %v676, %v3359
        %v3361 = vpop.f32.mrb[0].mxu0
        %v3362 = vadd.f32 %v680, %v3361
        %v3363 = vpop.f32.mrb[0].mxu0
        %v3364 = vadd.f32 %v676, %v3363
        %v3365 = vpop.f32.mrb[0].mxu0
        %v3366 = vadd.f32 %v680, %v3365
        %3367 = vmatprep.mubr.bf16.mxu0 %v923
        %3368 = vmatmul.mubr.bf16.gmra.mrb[0].mxu0 %v922
        %v3369 = vpop.f32.mrb[0].mxu0
        %v3370 = vadd.f32 %v676, %v3369
        %v3371 = vpop.f32.mrb[0].mxu0
        %v3372 = vadd.f32 %v680, %v3371
        %v3373 = vpop.f32.mrb[0].mxu0
        %v3374 = vadd.f32 %v676, %v3373
        %v3375 = vpop.f32.mrb[0].mxu0
        %v3376 = vadd.f32 %v680, %v3375
        %3377 = vdwg.mxu0
        %3378 = vmatprep.subr.bf16.mxu0 %v2034
        %3379 = vmatpush1.bf16.msra.mxu0 %v2033
        %3380 = vmatprep.subr.bf16.mxu0 %v2046
        %3381 = vmatpush1.bf16.msra.mxu0 %v2045
        %3382 = vmatprep.subr.bf16.mxu0 %v2058
        %3383 = vmatpush1.bf16.msra.mxu0 %v2057
        %3384 = vmatprep.subr.bf16.mxu0 %v2070
        %3385 = vmatpush1.bf16.msra.mxu0 %v2069
        %3386 = vmatprep.subr.bf16.mxu0 %v2082
        %3387 = vmatpush1.bf16.msra.mxu0 %v2081
        %3388 = vmatprep.subr.bf16.mxu0 %v2094
        %3389 = vmatpush1.bf16.msra.mxu0 %v2093
        %3390 = vmatprep.subr.bf16.mxu0 %v2106
        %3391 = vmatpush1.bf16.msra.mxu0 %v2105
        %3392 = vmatprep.subr.bf16.mxu0 %v2118
        %3393 = vmatpush1.bf16.msra.mxu0 %v2117
        %3394 = vmatprep.subr.bf16.mxu0 0
        %3395 = vmatpush1.bf16.msra.mxu0 0
        %3396 = vmatprep.subr.bf16.mxu0 0
        %3397 = vmatpush1.bf16.msra.mxu0 0
        %3398 = vmatprep.subr.bf16.mxu0 0
        %3399 = vmatpush1.bf16.msra.mxu0 0
        %3400 = vmatprep.subr.bf16.mxu0 0
        %3401 = vmatpush1.bf16.msra.mxu0 0
        %3402 = vmatprep.subr.bf16.mxu0 0
        %3403 = vmatpush1.bf16.msra.mxu0 0
        %3404 = vmatprep.subr.bf16.mxu0 0
        %3405 = vmatpush1.bf16.msra.mxu0 0
        %3406 = vmatprep.subr.bf16.mxu0 0
        %3407 = vmatpush1.bf16.msra.mxu0 0
        %3408 = vmatprep.subr.bf16.mxu0 0
        %3409 = vmatpush1.bf16.msra.mxu0 0
        %3410 = vmatprep.mubr.bf16.mxu0 0
        %3411 = vmatmul.mubr.bf16.gmra.mrb[0].mxu0 %v879
        %v3412 = vpop.f32.mrb[0].mxu0
        %v3413 = vadd.f32 %v3220, %v3412
        %v3414 = vpop.f32.mrb[0].mxu0
        %v3415 = vadd.f32 %v3222, %v3414
        %v3416 = vpop.f32.mrb[0].mxu0
        %v3417 = vadd.f32 %v3224, %v3416
        %v3418 = vpop.f32.mrb[0].mxu0
        %v3419 = vadd.f32 %v3226, %v3418
        %3420 = vmatprep.mubr.bf16.mxu0 0
        %3421 = vmatmul.mubr.bf16.gmra.mrb[0].mxu0 %v882
        %v3422 = vpop.f32.mrb[0].mxu0
        %v3423 = vadd.f32 %v3230, %v3422
        %v3424 = vpop.f32.mrb[0].mxu0
        %v3425 = vadd.f32 %v3232, %v3424
        %v3426 = vpop.f32.mrb[0].mxu0
        %v3427 = vadd.f32 %v3234, %v3426
        %v3428 = vpop.f32.mrb[0].mxu0
        %v3429 = vadd.f32 %v3236, %v3428
        %3430 = vmatprep.mubr.bf16.mxu0 0
        %3431 = vmatmul.mubr.bf16.gmra.mrb[0].mxu0 %v885
        %v3432 = vpop.f32.mrb[0].mxu0
        %v3433 = vadd.f32 %v3240, %v3432
        %v3434 = vpop.f32.mrb[0].mxu0
        %v3435 = vadd.f32 %v3242, %v3434
        %v3436 = vpop.f32.mrb[0].mxu0
        %v3437 = vadd.f32 %v3244, %v3436
        %v3438 = vpop.f32.mrb[0].mxu0
        %v3439 = vadd.f32 %v3246, %v3438
        %3440 = vmatprep.mubr.bf16.mxu0 0
        %3441 = vmatmul.mubr.bf16.gmra.mrb[0].mxu0 %v888
        %v3442 = vpop.f32.mrb[0].mxu0
        %v3443 = vadd.f32 %v3250, %v3442
        %v3444 = vpop.f32.mrb[0].mxu0
        %v3445 = vadd.f32 %v3252, %v3444
        %v3446 = vpop.f32.mrb[0].mxu0
        %v3447 = vadd.f32 %v3254, %v3446
        %v3448 = vpop.f32.mrb[0].mxu0
        %v3449 = vadd.f32 %v3256, %v3448
        %3450 = vmatprep.mubr.bf16.mxu0 0
        %3451 = vmatmul.mubr.bf16.gmra.mrb[0].mxu0 %v891
        %v3452 = vpop.f32.mrb[0].mxu0
        %v3453 = vadd.f32 %v3260, %v3452
        %v3454 = vpop.f32.mrb[0].mxu0
        %v3455 = vadd.f32 %v3262, %v3454
        %v3456 = vpop.f32.mrb[0].mxu0
        %v3457 = vadd.f32 %v3264, %v3456
        %v3458 = vpop.f32.mrb[0].mxu0
        %v3459 = vadd.f32 %v3266, %v3458
        %3460 = vmatprep.mubr.bf16.mxu0 0
        %3461 = vmatmul.mubr.bf16.gmra.mrb[0].mxu0 %v894
        %v3462 = vpop.f32.mrb[0].mxu0
        %v3463 = vadd.f32 %v3270, %v3462
        %v3464 = vpop.f32.mrb[0].mxu0
        %v3465 = vadd.f32 %v3272, %v3464
        %v3466 = vpop.f32.mrb[0].mxu0
        %v3467 = vadd.f32 %v3274, %v3466
        %v3468 = vpop.f32.mrb[0].mxu0
        %v3469 = vadd.f32 %v3276, %v3468
        %3470 = vmatprep.mubr.bf16.mxu0 0
        %3471 = vmatmul.mubr.bf16.gmra.mrb[0].mxu0 %v897
        %v3472 = vpop.f32.mrb[0].mxu0
        %v3473 = vadd.f32 %v3280, %v3472
        %v3474 = vpop.f32.mrb[0].mxu0
        %v3475 = vadd.f32 %v3282, %v3474
        %v3476 = vpop.f32.mrb[0].mxu0
        %v3477 = vadd.f32 %v3284, %v3476
        %v3478 = vpop.f32.mrb[0].mxu0
        %v3479 = vadd.f32 %v3286, %v3478
        %3480 = vmatprep.mubr.bf16.mxu0 0
        %3481 = vmatmul.mubr.bf16.gmra.mrb[0].mxu0 %v900
        %v3482 = vpop.f32.mrb[0].mxu0
        %v3483 = vadd.f32 %v3290, %v3482
        %v3484 = vpop.f32.mrb[0].mxu0
        %v3485 = vadd.f32 %v3292, %v3484
        %v3486 = vpop.f32.mrb[0].mxu0
        %v3487 = vadd.f32 %v3294, %v3486
        %v3488 = vpop.f32.mrb[0].mxu0
        %v3489 = vadd.f32 %v3296, %v3488
        %3490 = vmatprep.mubr.bf16.mxu0 0
        %3491 = vmatmul.mubr.bf16.gmra.mrb[0].mxu0 %v903
        %v3492 = vpop.f32.mrb[0].mxu0
        %v3493 = vadd.f32 %v3300, %v3492
        %v3494 = vpop.f32.mrb[0].mxu0
        %v3495 = vadd.f32 %v3302, %v3494
        %v3496 = vpop.f32.mrb[0].mxu0
        %v3497 = vadd.f32 %v3304, %v3496
        %v3498 = vpop.f32.mrb[0].mxu0
        %v3499 = vadd.f32 %v3306, %v3498
        %3500 = vmatprep.mubr.bf16.mxu0 0
        %3501 = vmatmul.mubr.bf16.gmra.mrb[0].mxu0 %v906
        %v3502 = vpop.f32.mrb[0].mxu0
        %v3503 = vadd.f32 %v3310, %v3502
        %v3504 = vpop.f32.mrb[0].mxu0
        %v3505 = vadd.f32 %v3312, %v3504
        %v3506 = vpop.f32.mrb[0].mxu0
        %v3507 = vadd.f32 %v3314, %v3506
        %v3508 = vpop.f32.mrb[0].mxu0
        %v3509 = vadd.f32 %v3316, %v3508
        %3510 = vmatprep.mubr.bf16.mxu0 0
        %3511 = vmatmul.mubr.bf16.gmra.mrb[0].mxu0 %v909
        %v3512 = vpop.f32.mrb[0].mxu0
        %v3513 = vadd.f32 %v3320, %v3512
        %v3514 = vpop.f32.mrb[0].mxu0
        %v3515 = vadd.f32 %v3322, %v3514
        %v3516 = vpop.f32.mrb[0].mxu0
        %v3517 = vadd.f32 %v3324, %v3516
        %v3518 = vpop.f32.mrb[0].mxu0
        %v3519 = vadd.f32 %v3326, %v3518
        %3520 = vmatprep.mubr.bf16.mxu0 0
        %3521 = vmatmul.mubr.bf16.gmra.mrb[0].mxu0 %v912
        %v3522 = vpop.f32.mrb[0].mxu0
        %v3523 = vadd.f32 %v3330, %v3522
        %v3524 = vpop.f32.mrb[0].mxu0
        %v3525 = vadd.f32 %v3332, %v3524
        %v3526 = vpop.f32.mrb[0].mxu0
        %v3527 = vadd.f32 %v3334, %v3526
        %v3528 = vpop.f32.mrb[0].mxu0
        %v3529 = vadd.f32 %v3336, %v3528
        %3530 = vmatprep.mubr.bf16.mxu0 0
        %3531 = vmatmul.mubr.bf16.gmra.mrb[0].mxu0 %v915
        %v3532 = vpop.f32.mrb[0].mxu0
        %v3533 = vadd.f32 %v3340, %v3532
        %v3534 = vpop.f32.mrb[0].mxu0
        %v3535 = vadd.f32 %v3342, %v3534
        %v3536 = vpop.f32.mrb[0].mxu0
        %v3537 = vadd.f32 %v3344, %v3536
        %v3538 = vpop.f32.mrb[0].mxu0
        %v3539 = vadd.f32 %v3346, %v3538
        %3540 = vmatprep.mubr.bf16.mxu0 0
        %3541 = vmatmul.mubr.bf16.gmra.mrb[0].mxu0 %v918
        %v3542 = vpop.f32.mrb[0].mxu0
        %v3543 = vadd.f32 %v3350, %v3542
        %v3544 = vpop.f32.mrb[0].mxu0
        %v3545 = vadd.f32 %v3352, %v3544
        %v3546 = vpop.f32.mrb[0].mxu0
        %v3547 = vadd.f32 %v3354, %v3546
        %v3548 = vpop.f32.mrb[0].mxu0
        %v3549 = vadd.f32 %v3356, %v3548
        %3550 = vmatprep.mubr.bf16.mxu0 0
        %3551 = vmatmul.mubr.bf16.gmra.mrb[0].mxu0 %v921
        %v3552 = vpop.f32.mrb[0].mxu0
        %v3553 = vadd.f32 %v3360, %v3552
        %v3554 = vpop.f32.mrb[0].mxu0
        %v3555 = vadd.f32 %v3362, %v3554
        %v3556 = vpop.f32.mrb[0].mxu0
        %v3557 = vadd.f32 %v3364, %v3556
        %v3558 = vpop.f32.mrb[0].mxu0
        %v3559 = vadd.f32 %v3366, %v3558
        %3560 = vmatprep.mubr.bf16.mxu0 0
        %3561 = vmatmul.mubr.bf16.gmra.mrb[0].mxu0 %v924
        %v3562 = vpop.f32.mrb[0].mxu0
        %v3563 = vadd.f32 %v3370, %v3562
        %v3564 = vpop.f32.mrb[0].mxu0
        %v3565 = vadd.f32 %v3372, %v3564
        %v3566 = vpop.f32.mrb[0].mxu0
        %v3567 = vadd.f32 %v3374, %v3566
        %v3568 = vpop.f32.mrb[0].mxu0
        %v3569 = vadd.f32 %v3376, %v3568
        %3570 = vdwg.mxu0
        %3571 = vmatprep.subr.bf16.mxu0 %v1844
        %3572 = vmatpush1.bf16.msra.mxu0 %v1843
        %3573 = vmatprep.subr.bf16.mxu0 %v1856
        %3574 = vmatpush1.bf16.msra.mxu0 %v1855
        %3575 = vmatprep.subr.bf16.mxu0 %v1868
        %3576 = vmatpush1.bf16.msra.mxu0 %v1867
        %3577 = vmatprep.subr.bf16.mxu0 %v1880
        %3578 = vmatpush1.bf16.msra.mxu0 %v1879
        %3579 = vmatprep.subr.bf16.mxu0 %v1892
        %3580 = vmatpush1.bf16.msra.mxu0 %v1891
        %3581 = vmatprep.subr.bf16.mxu0 %v1904
        %3582 = vmatpush1.bf16.msra.mxu0 %v1903
        %3583 = vmatprep.subr.bf16.mxu0 %v1916
        %3584 = vmatpush1.bf16.msra.mxu0 %v1915
        %3585 = vmatprep.subr.bf16.mxu0 %v1928
        %3586 = vmatpush1.bf16.msra.mxu0 %v1927
        %3587 = vmatprep.subr.bf16.mxu0 %v1940
        %3588 = vmatpush1.bf16.msra.mxu0 %v1939
        %3589 = vmatprep.subr.bf16.mxu0 %v1952
        %3590 = vmatpush1.bf16.msra.mxu0 %v1951
        %3591 = vmatprep.subr.bf16.mxu0 %v1964
        %3592 = vmatpush1.bf16.msra.mxu0 %v1963
        %3593 = vmatprep.subr.bf16.mxu0 %v1976
        %3594 = vmatpush1.bf16.msra.mxu0 %v1975
        %3595 = vmatprep.subr.bf16.mxu0 %v1988
        %3596 = vmatpush1.bf16.msra.mxu0 %v1987
        %3597 = vmatprep.subr.bf16.mxu0 %v2000
        %3598 = vmatpush1.bf16.msra.mxu0 %v1999
        %3599 = vmatprep.subr.bf16.mxu0 %v2012
        %3600 = vmatpush1.bf16.msra.mxu0 %v2011
        %3601 = vmatprep.subr.bf16.mxu0 %v2024
        %3602 = vmatpush1.bf16.msra.mxu0 %v2023
        %3603 = vmatprep.mubr.bf16.mxu0 %v878
        %3604 = vmatmul.mubr.bf16.gmra.mrb[0].mxu0 %v877
        %v3605 = vpop.f32.mrb[0].mxu0
        %v3606 = vadd.f32 %v684, %v3605
        %v3607 = vpop.f32.mrb[0].mxu0
        %v3608 = vadd.f32 %v688, %v3607
        %v3609 = vpop.f32.mrb[0].mxu0
        %v3610 = vadd.f32 %v684, %v3609
        %v3611 = vpop.f32.mrb[0].mxu0
        %v3612 = vadd.f32 %v688, %v3611
        %3613 = vmatprep.mubr.bf16.mxu0 %v881
        %3614 = vmatmul.mubr.bf16.gmra.mrb[0].mxu0 %v880
        %v3615 = vpop.f32.mrb[0].mxu0
        %v3616 = vadd.f32 %v684, %v3615
        %v3617 = vpop.f32.mrb[0].mxu0
        %v3618 = vadd.f32 %v688, %v3617
        %v3619 = vpop.f32.mrb[0].mxu0
        %v3620 = vadd.f32 %v684, %v3619
        %v3621 = vpop.f32.mrb[0].mxu0
        %v3622 = vadd.f32 %v688, %v3621
        %3623 = vmatprep.mubr.bf16.mxu0 %v884
        %3624 = vmatmul.mubr.bf16.gmra.mrb[0].mxu0 %v883
        %v3625 = vpop.f32.mrb[0].mxu0
        %v3626 = vadd.f32 %v684, %v3625
        %v3627 = vpop.f32.mrb[0].mxu0
        %v3628 = vadd.f32 %v688, %v3627
        %v3629 = vpop.f32.mrb[0].mxu0
        %v3630 = vadd.f32 %v684, %v3629
        %v3631 = vpop.f32.mrb[0].mxu0
        %v3632 = vadd.f32 %v688, %v3631
        %3633 = vmatprep.mubr.bf16.mxu0 %v887
        %3634 = vmatmul.mubr.bf16.gmra.mrb[0].mxu0 %v886
        %v3635 = vpop.f32.mrb[0].mxu0
        %v3636 = vadd.f32 %v684, %v3635
        %v3637 = vpop.f32.mrb[0].mxu0
        %v3638 = vadd.f32 %v688, %v3637
        %v3639 = vpop.f32.mrb[0].mxu0
        %v3640 = vadd.f32 %v684, %v3639
        %v3641 = vpop.f32.mrb[0].mxu0
        %v3642 = vadd.f32 %v688, %v3641
        %3643 = vmatprep.mubr.bf16.mxu0 %v890
        %3644 = vmatmul.mubr.bf16.gmra.mrb[0].mxu0 %v889
        %v3645 = vpop.f32.mrb[0].mxu0
        %v3646 = vadd.f32 %v684, %v3645
        %v3647 = vpop.f32.mrb[0].mxu0
        %v3648 = vadd.f32 %v688, %v3647
        %v3649 = vpop.f32.mrb[0].mxu0
        %v3650 = vadd.f32 %v684, %v3649
        %v3651 = vpop.f32.mrb[0].mxu0
        %v3652 = vadd.f32 %v688, %v3651
        %3653 = vmatprep.mubr.bf16.mxu0 %v893
        %3654 = vmatmul.mubr.bf16.gmra.mrb[0].mxu0 %v892
        %v3655 = vpop.f32.mrb[0].mxu0
        %v3656 = vadd.f32 %v684, %v3655
        %v3657 = vpop.f32.mrb[0].mxu0
        %v3658 = vadd.f32 %v688, %v3657
        %v3659 = vpop.f32.mrb[0].mxu0
        %v3660 = vadd.f32 %v684, %v3659
        %v3661 = vpop.f32.mrb[0].mxu0
        %v3662 = vadd.f32 %v688, %v3661
        %3663 = vmatprep.mubr.bf16.mxu0 %v896
        %3664 = vmatmul.mubr.bf16.gmra.mrb[0].mxu0 %v895
        %v3665 = vpop.f32.mrb[0].mxu0
        %v3666 = vadd.f32 %v684, %v3665
        %v3667 = vpop.f32.mrb[0].mxu0
        %v3668 = vadd.f32 %v688, %v3667
        %v3669 = vpop.f32.mrb[0].mxu0
        %v3670 = vadd.f32 %v684, %v3669
        %v3671 = vpop.f32.mrb[0].mxu0
        %v3672 = vadd.f32 %v688, %v3671
        %3673 = vmatprep.mubr.bf16.mxu0 %v899
        %3674 = vmatmul.mubr.bf16.gmra.mrb[0].mxu0 %v898
        %v3675 = vpop.f32.mrb[0].mxu0
        %v3676 = vadd.f32 %v684, %v3675
        %v3677 = vpop.f32.mrb[0].mxu0
        %v3678 = vadd.f32 %v688, %v3677
        %v3679 = vpop.f32.mrb[0].mxu0
        %v3680 = vadd.f32 %v684, %v3679
        %v3681 = vpop.f32.mrb[0].mxu0
        %v3682 = vadd.f32 %v688, %v3681
        %3683 = vmatprep.mubr.bf16.mxu0 %v902
        %3684 = vmatmul.mubr.bf16.gmra.mrb[0].mxu0 %v901
        %v3685 = vpop.f32.mrb[0].mxu0
        %v3686 = vadd.f32 %v684, %v3685
        %v3687 = vpop.f32.mrb[0].mxu0
        %v3688 = vadd.f32 %v688, %v3687
        %v3689 = vpop.f32.mrb[0].mxu0
        %v3690 = vadd.f32 %v684, %v3689
        %v3691 = vpop.f32.mrb[0].mxu0
        %v3692 = vadd.f32 %v688, %v3691
        %3693 = vmatprep.mubr.bf16.mxu0 %v905
        %3694 = vmatmul.mubr.bf16.gmra.mrb[0].mxu0 %v904
        %v3695 = vpop.f32.mrb[0].mxu0
        %v3696 = vadd.f32 %v684, %v3695
        %v3697 = vpop.f32.mrb[0].mxu0
        %v3698 = vadd.f32 %v688, %v3697
        %v3699 = vpop.f32.mrb[0].mxu0
        %v3700 = vadd.f32 %v684, %v3699
        %v3701 = vpop.f32.mrb[0].mxu0
        %v3702 = vadd.f32 %v688, %v3701
        %3703 = vmatprep.mubr.bf16.mxu0 %v908
        %3704 = vmatmul.mubr.bf16.gmra.mrb[0].mxu0 %v907
        %v3705 = vpop.f32.mrb[0].mxu0
        %v3706 = vadd.f32 %v684, %v3705
        %v3707 = vpop.f32.mrb[0].mxu0
        %v3708 = vadd.f32 %v688, %v3707
        %v3709 = vpop.f32.mrb[0].mxu0
        %v3710 = vadd.f32 %v684, %v3709
        %v3711 = vpop.f32.mrb[0].mxu0
        %v3712 = vadd.f32 %v688, %v3711
        %3713 = vmatprep.mubr.bf16.mxu0 %v911
        %3714 = vmatmul.mubr.bf16.gmra.mrb[0].mxu0 %v910
        %v3715 = vpop.f32.mrb[0].mxu0
        %v3716 = vadd.f32 %v684, %v3715
        %v3717 = vpop.f32.mrb[0].mxu0
        %v3718 = vadd.f32 %v688, %v3717
        %v3719 = vpop.f32.mrb[0].mxu0
        %v3720 = vadd.f32 %v684, %v3719
        %v3721 = vpop.f32.mrb[0].mxu0
        %v3722 = vadd.f32 %v688, %v3721
        %3723 = vmatprep.mubr.bf16.mxu0 %v914
        %3724 = vmatmul.mubr.bf16.gmra.mrb[0].mxu0 %v913
        %v3725 = vpop.f32.mrb[0].mxu0
        %v3726 = vadd.f32 %v684, %v3725
        %v3727 = vpop.f32.mrb[0].mxu0
        %v3728 = vadd.f32 %v688, %v3727
        %v3729 = vpop.f32.mrb[0].mxu0
        %v3730 = vadd.f32 %v684, %v3729
        %v3731 = vpop.f32.mrb[0].mxu0
        %v3732 = vadd.f32 %v688, %v3731
        %3733 = vmatprep.mubr.bf16.mxu0 %v917
        %3734 = vmatmul.mubr.bf16.gmra.mrb[0].mxu0 %v916
        %v3735 = vpop.f32.mrb[0].mxu0
        %v3736 = vadd.f32 %v684, %v3735
        %v3737 = vpop.f32.mrb[0].mxu0
        %v3738 = vadd.f32 %v688, %v3737
        %v3739 = vpop.f32.mrb[0].mxu0
        %v3740 = vadd.f32 %v684, %v3739
        %v3741 = vpop.f32.mrb[0].mxu0
        %v3742 = vadd.f32 %v688, %v3741
        %3743 = vmatprep.mubr.bf16.mxu0 %v920
        %3744 = vmatmul.mubr.bf16.gmra.mrb[0].mxu0 %v919
        %v3745 = vpop.f32.mrb[0].mxu0
        %v3746 = vadd.f32 %v684, %v3745
        %v3747 = vpop.f32.mrb[0].mxu0
        %v3748 = vadd.f32 %v688, %v3747
        %v3749 = vpop.f32.mrb[0].mxu0
        %v3750 = vadd.f32 %v684, %v3749
        %v3751 = vpop.f32.mrb[0].mxu0
        %v3752 = vadd.f32 %v688, %v3751
        %3753 = vmatprep.mubr.bf16.mxu0 %v923
        %3754 = vmatmul.mubr.bf16.gmra.mrb[0].mxu0 %v922
        %v3755 = vpop.f32.mrb[0].mxu0
        %v3756 = vadd.f32 %v684, %v3755
        %v3757 = vpop.f32.mrb[0].mxu0
        %v3758 = vadd.f32 %v688, %v3757
        %v3759 = vpop.f32.mrb[0].mxu0
        %v3760 = vadd.f32 %v684, %v3759
        %v3761 = vpop.f32.mrb[0].mxu0
        %v3762 = vadd.f32 %v688, %v3761
        %3763 = vdwg.mxu0
        %3764 = vmatprep.subr.bf16.mxu0 %v2036
        %3765 = vmatpush1.bf16.msra.mxu0 %v2035
        %3766 = vmatprep.subr.bf16.mxu0 %v2048
        %3767 = vmatpush1.bf16.msra.mxu0 %v2047
        %3768 = vmatprep.subr.bf16.mxu0 %v2060
        %3769 = vmatpush1.bf16.msra.mxu0 %v2059
        %3770 = vmatprep.subr.bf16.mxu0 %v2072
        %3771 = vmatpush1.bf16.msra.mxu0 %v2071
        %3772 = vmatprep.subr.bf16.mxu0 %v2084
        %3773 = vmatpush1.bf16.msra.mxu0 %v2083
        %3774 = vmatprep.subr.bf16.mxu0 %v2096
        %3775 = vmatpush1.bf16.msra.mxu0 %v2095
        %3776 = vmatprep.subr.bf16.mxu0 %v2108
        %3777 = vmatpush1.bf16.msra.mxu0 %v2107
        %3778 = vmatprep.subr.bf16.mxu0 %v2120
        %3779 = vmatpush1.bf16.msra.mxu0 %v2119
        %3780 = vmatprep.subr.bf16.mxu0 0
        %3781 = vmatpush1.bf16.msra.mxu0 0
        %3782 = vmatprep.subr.bf16.mxu0 0
        %3783 = vmatpush1.bf16.msra.mxu0 0
        %3784 = vmatprep.subr.bf16.mxu0 0
        %3785 = vmatpush1.bf16.msra.mxu0 0
        %3786 = vmatprep.subr.bf16.mxu0 0
        %3787 = vmatpush1.bf16.msra.mxu0 0
        %3788 = vmatprep.subr.bf16.mxu0 0
        %3789 = vmatpush1.bf16.msra.mxu0 0
        %3790 = vmatprep.subr.bf16.mxu0 0
        %3791 = vmatpush1.bf16.msra.mxu0 0
        %3792 = vmatprep.subr.bf16.mxu0 0
        %3793 = vmatpush1.bf16.msra.mxu0 0
        %3794 = vmatprep.subr.bf16.mxu0 0
        %3795 = vmatpush1.bf16.msra.mxu0 0
        %3796 = vmatprep.mubr.bf16.mxu0 0
        %3797 = vmatmul.mubr.bf16.gmra.mrb[0].mxu0 %v879
        %v3798 = vpop.f32.mrb[0].mxu0
        %v3799 = vadd.f32 %v3606, %v3798
        %v3800 = vpop.f32.mrb[0].mxu0
        %v3801 = vadd.f32 %v3608, %v3800
        %v3802 = vpop.f32.mrb[0].mxu0
        %v3803 = vadd.f32 %v3610, %v3802
        %v3804 = vpop.f32.mrb[0].mxu0
        %v3805 = vadd.f32 %v3612, %v3804
        %3806 = vmatprep.mubr.bf16.mxu0 0
        %3807 = vmatmul.mubr.bf16.gmra.mrb[0].mxu0 %v882
        %v3808 = vpop.f32.mrb[0].mxu0
        %v3809 = vadd.f32 %v3616, %v3808
        %v3810 = vpop.f32.mrb[0].mxu0
        %v3811 = vadd.f32 %v3618, %v3810
        %v3812 = vpop.f32.mrb[0].mxu0
        %v3813 = vadd.f32 %v3620, %v3812
        %v3814 = vpop.f32.mrb[0].mxu0
        %v3815 = vadd.f32 %v3622, %v3814
        %3816 = vmatprep.mubr.bf16.mxu0 0
        %3817 = vmatmul.mubr.bf16.gmra.mrb[0].mxu0 %v885
        %v3818 = vpop.f32.mrb[0].mxu0
        %v3819 = vadd.f32 %v3626, %v3818
        %v3820 = vpop.f32.mrb[0].mxu0
        %v3821 = vadd.f32 %v3628, %v3820
        %v3822 = vpop.f32.mrb[0].mxu0
        %v3823 = vadd.f32 %v3630, %v3822
        %v3824 = vpop.f32.mrb[0].mxu0
        %v3825 = vadd.f32 %v3632, %v3824
        %3826 = vmatprep.mubr.bf16.mxu0 0
        %3827 = vmatmul.mubr.bf16.gmra.mrb[0].mxu0 %v888
        %v3828 = vpop.f32.mrb[0].mxu0
        %v3829 = vadd.f32 %v3636, %v3828
        %v3830 = vpop.f32.mrb[0].mxu0
        %v3831 = vadd.f32 %v3638, %v3830
        %v3832 = vpop.f32.mrb[0].mxu0
        %v3833 = vadd.f32 %v3640, %v3832
        %v3834 = vpop.f32.mrb[0].mxu0
        %v3835 = vadd.f32 %v3642, %v3834
        %3836 = vmatprep.mubr.bf16.mxu0 0
        %3837 = vmatmul.mubr.bf16.gmra.mrb[0].mxu0 %v891
        %v3838 = vpop.f32.mrb[0].mxu0
        %v3839 = vadd.f32 %v3646, %v3838
        %v3840 = vpop.f32.mrb[0].mxu0
        %v3841 = vadd.f32 %v3648, %v3840
        %v3842 = vpop.f32.mrb[0].mxu0
        %v3843 = vadd.f32 %v3650, %v3842
        %v3844 = vpop.f32.mrb[0].mxu0
        %v3845 = vadd.f32 %v3652, %v3844
        %3846 = vmatprep.mubr.bf16.mxu0 0
        %3847 = vmatmul.mubr.bf16.gmra.mrb[0].mxu0 %v894
        %v3848 = vpop.f32.mrb[0].mxu0
        %v3849 = vadd.f32 %v3656, %v3848
        %v3850 = vpop.f32.mrb[0].mxu0
        %v3851 = vadd.f32 %v3658, %v3850
        %v3852 = vpop.f32.mrb[0].mxu0
        %v3853 = vadd.f32 %v3660, %v3852
        %v3854 = vpop.f32.mrb[0].mxu0
        %v3855 = vadd.f32 %v3662, %v3854
        %3856 = vmatprep.mubr.bf16.mxu0 0
        %3857 = vmatmul.mubr.bf16.gmra.mrb[0].mxu0 %v897
        %v3858 = vpop.f32.mrb[0].mxu0
        %v3859 = vadd.f32 %v3666, %v3858
        %v3860 = vpop.f32.mrb[0].mxu0
        %v3861 = vadd.f32 %v3668, %v3860
        %v3862 = vpop.f32.mrb[0].mxu0
        %v3863 = vadd.f32 %v3670, %v3862
        %v3864 = vpop.f32.mrb[0].mxu0
        %v3865 = vadd.f32 %v3672, %v3864
        %3866 = vmatprep.mubr.bf16.mxu0 0
        %3867 = vmatmul.mubr.bf16.gmra.mrb[0].mxu0 %v900
        %v3868 = vpop.f32.mrb[0].mxu0
        %v3869 = vadd.f32 %v3676, %v3868
        %v3870 = vpop.f32.mrb[0].mxu0
        %v3871 = vadd.f32 %v3678, %v3870
        %v3872 = vpop.f32.mrb[0].mxu0
        %v3873 = vadd.f32 %v3680, %v3872
        %v3874 = vpop.f32.mrb[0].mxu0
        %v3875 = vadd.f32 %v3682, %v3874
        %3876 = vmatprep.mubr.bf16.mxu0 0
        %3877 = vmatmul.mubr.bf16.gmra.mrb[0].mxu0 %v903
        %v3878 = vpop.f32.mrb[0].mxu0
        %v3879 = vadd.f32 %v3686, %v3878
        %v3880 = vpop.f32.mrb[0].mxu0
        %v3881 = vadd.f32 %v3688, %v3880
        %v3882 = vpop.f32.mrb[0].mxu0
        %v3883 = vadd.f32 %v3690, %v3882
        %v3884 = vpop.f32.mrb[0].mxu0
        %v3885 = vadd.f32 %v3692, %v3884
        %3886 = vmatprep.mubr.bf16.mxu0 0
        %3887 = vmatmul.mubr.bf16.gmra.mrb[0].mxu0 %v906
        %v3888 = vpop.f32.mrb[0].mxu0
        %v3889 = vadd.f32 %v3696, %v3888
        %v3890 = vpop.f32.mrb[0].mxu0
        %v3891 = vadd.f32 %v3698, %v3890
        %v3892 = vpop.f32.mrb[0].mxu0
        %v3893 = vadd.f32 %v3700, %v3892
        %v3894 = vpop.f32.mrb[0].mxu0
        %v3895 = vadd.f32 %v3702, %v3894
        %3896 = vmatprep.mubr.bf16.mxu0 0
        %3897 = vmatmul.mubr.bf16.gmra.mrb[0].mxu0 %v909
        %v3898 = vpop.f32.mrb[0].mxu0
        %v3899 = vadd.f32 %v3706, %v3898
        %v3900 = vpop.f32.mrb[0].mxu0
        %v3901 = vadd.f32 %v3708, %v3900
        %v3902 = vpop.f32.mrb[0].mxu0
        %v3903 = vadd.f32 %v3710, %v3902
        %v3904 = vpop.f32.mrb[0].mxu0
        %v3905 = vadd.f32 %v3712, %v3904
        %3906 = vmatprep.mubr.bf16.mxu0 0
        %3907 = vmatmul.mubr.bf16.gmra.mrb[0].mxu0 %v912
        %v3908 = vpop.f32.mrb[0].mxu0
        %v3909 = vadd.f32 %v3716, %v3908
        %v3910 = vpop.f32.mrb[0].mxu0
        %v3911 = vadd.f32 %v3718, %v3910
        %v3912 = vpop.f32.mrb[0].mxu0
        %v3913 = vadd.f32 %v3720, %v3912
        %v3914 = vpop.f32.mrb[0].mxu0
        %v3915 = vadd.f32 %v3722, %v3914
        %3916 = vmatprep.mubr.bf16.mxu0 0
        %3917 = vmatmul.mubr.bf16.gmra.mrb[0].mxu0 %v915
        %v3918 = vpop.f32.mrb[0].mxu0
        %v3919 = vadd.f32 %v3726, %v3918
        %v3920 = vpop.f32.mrb[0].mxu0
        %v3921 = vadd.f32 %v3728, %v3920
        %v3922 = vpop.f32.mrb[0].mxu0
        %v3923 = vadd.f32 %v3730, %v3922
        %v3924 = vpop.f32.mrb[0].mxu0
        %v3925 = vadd.f32 %v3732, %v3924
        %3926 = vmatprep.mubr.bf16.mxu0 0
        %3927 = vmatmul.mubr.bf16.gmra.mrb[0].mxu0 %v918
        %v3928 = vpop.f32.mrb[0].mxu0
        %v3929 = vadd.f32 %v3736, %v3928
        %v3930 = vpop.f32.mrb[0].mxu0
        %v3931 = vadd.f32 %v3738, %v3930
        %v3932 = vpop.f32.mrb[0].mxu0
        %v3933 = vadd.f32 %v3740, %v3932
        %v3934 = vpop.f32.mrb[0].mxu0
        %v3935 = vadd.f32 %v3742, %v3934
        %3936 = vmatprep.mubr.bf16.mxu0 0
        %3937 = vmatmul.mubr.bf16.gmra.mrb[0].mxu0 %v921
        %v3938 = vpop.f32.mrb[0].mxu0
        %v3939 = vadd.f32 %v3746, %v3938
        %v3940 = vpop.f32.mrb[0].mxu0
        %v3941 = vadd.f32 %v3748, %v3940
        %v3942 = vpop.f32.mrb[0].mxu0
        %v3943 = vadd.f32 %v3750, %v3942
        %v3944 = vpop.f32.mrb[0].mxu0
        %v3945 = vadd.f32 %v3752, %v3944
        %3946 = vmatprep.mubr.bf16.mxu0 0
        %3947 = vmatmul.mubr.bf16.gmra.mrb[0].mxu0 %v924
        %v3948 = vpop.f32.mrb[0].mxu0
        %v3949 = vadd.f32 %v3756, %v3948
        %v3950 = vpop.f32.mrb[0].mxu0
        %v3951 = vadd.f32 %v3758, %v3950
        %v3952 = vpop.f32.mrb[0].mxu0
        %v3953 = vadd.f32 %v3760, %v3952
        %v3954 = vpop.f32.mrb[0].mxu0
        %v3955 = vadd.f32 %v3762, %v3954
        %3956 = vdwg.mxu0
        %3957 = vmatprep.subr.bf16.mxu0 %v1846
        %3958 = vmatpush1.bf16.msra.mxu0 %v1845
        %3959 = vmatprep.subr.bf16.mxu0 %v1858
        %3960 = vmatpush1.bf16.msra.mxu0 %v1857
        %3961 = vmatprep.subr.bf16.mxu0 %v1870
        %3962 = vmatpush1.bf16.msra.mxu0 %v1869
        %3963 = vmatprep.subr.bf16.mxu0 %v1882
        %3964 = vmatpush1.bf16.msra.mxu0 %v1881
        %3965 = vmatprep.subr.bf16.mxu0 %v1894
        %3966 = vmatpush1.bf16.msra.mxu0 %v1893
        %3967 = vmatprep.subr.bf16.mxu0 %v1906
        %3968 = vmatpush1.bf16.msra.mxu0 %v1905
        %3969 = vmatprep.subr.bf16.mxu0 %v1918
        %3970 = vmatpush1.bf16.msra.mxu0 %v1917
        %3971 = vmatprep.subr.bf16.mxu0 %v1930
        %3972 = vmatpush1.bf16.msra.mxu0 %v1929
        %3973 = vmatprep.subr.bf16.mxu0 %v1942
        %3974 = vmatpush1.bf16.msra.mxu0 %v1941
        %3975 = vmatprep.subr.bf16.mxu0 %v1954
        %3976 = vmatpush1.bf16.msra.mxu0 %v1953
        %3977 = vmatprep.subr.bf16.mxu0 %v1966
        %3978 = vmatpush1.bf16.msra.mxu0 %v1965
        %3979 = vmatprep.subr.bf16.mxu0 %v1978
        %3980 = vmatpush1.bf16.msra.mxu0 %v1977
        %3981 = vmatprep.subr.bf16.mxu0 %v1990
        %3982 = vmatpush1.bf16.msra.mxu0 %v1989
        %3983 = vmatprep.subr.bf16.mxu0 %v2002
        %3984 = vmatpush1.bf16.msra.mxu0 %v2001
        %3985 = vmatprep.subr.bf16.mxu0 %v2014
        %3986 = vmatpush1.bf16.msra.mxu0 %v2013
        %3987 = vmatprep.subr.bf16.mxu0 %v2026
        %3988 = vmatpush1.bf16.msra.mxu0 %v2025
        %3989 = vmatprep.mubr.bf16.mxu0 %v878
        %3990 = vmatmul.mubr.bf16.gmra.mrb[0].mxu0 %v877
        %v3991 = vpop.f32.mrb[0].mxu0
        %v3992 = vadd.f32 %v692, %v3991
        %v3993 = vpop.f32.mrb[0].mxu0
        %v3994 = vadd.f32 %v696, %v3993
        %v3995 = vpop.f32.mrb[0].mxu0
        %v3996 = vadd.f32 %v692, %v3995
        %v3997 = vpop.f32.mrb[0].mxu0
        %v3998 = vadd.f32 %v696, %v3997
        %3999 = vmatprep.mubr.bf16.mxu0 %v881
        %4000 = vmatmul.mubr.bf16.gmra.mrb[0].mxu0 %v880
        %v4001 = vpop.f32.mrb[0].mxu0
        %v4002 = vadd.f32 %v692, %v4001
        %v4003 = vpop.f32.mrb[0].mxu0
        %v4004 = vadd.f32 %v696, %v4003
        %v4005 = vpop.f32.mrb[0].mxu0
        %v4006 = vadd.f32 %v692, %v4005
        %v4007 = vpop.f32.mrb[0].mxu0
        %v4008 = vadd.f32 %v696, %v4007
        %4009 = vmatprep.mubr.bf16.mxu0 %v884
        %4010 = vmatmul.mubr.bf16.gmra.mrb[0].mxu0 %v883
        %v4011 = vpop.f32.mrb[0].mxu0
        %v4012 = vadd.f32 %v692, %v4011
        %v4013 = vpop.f32.mrb[0].mxu0
        %v4014 = vadd.f32 %v696, %v4013
        %v4015 = vpop.f32.mrb[0].mxu0
        %v4016 = vadd.f32 %v692, %v4015
        %v4017 = vpop.f32.mrb[0].mxu0
        %v4018 = vadd.f32 %v696, %v4017
        %4019 = vmatprep.mubr.bf16.mxu0 %v887
        %4020 = vmatmul.mubr.bf16.gmra.mrb[0].mxu0 %v886
        %v4021 = vpop.f32.mrb[0].mxu0
        %v4022 = vadd.f32 %v692, %v4021
        %v4023 = vpop.f32.mrb[0].mxu0
        %v4024 = vadd.f32 %v696, %v4023
        %v4025 = vpop.f32.mrb[0].mxu0
        %v4026 = vadd.f32 %v692, %v4025
        %v4027 = vpop.f32.mrb[0].mxu0
        %v4028 = vadd.f32 %v696, %v4027
        %4029 = vmatprep.mubr.bf16.mxu0 %v890
        %4030 = vmatmul.mubr.bf16.gmra.mrb[0].mxu0 %v889
        %v4031 = vpop.f32.mrb[0].mxu0
        %v4032 = vadd.f32 %v692, %v4031
        %v4033 = vpop.f32.mrb[0].mxu0
        %v4034 = vadd.f32 %v696, %v4033
        %v4035 = vpop.f32.mrb[0].mxu0
        %v4036 = vadd.f32 %v692, %v4035
        %v4037 = vpop.f32.mrb[0].mxu0
        %v4038 = vadd.f32 %v696, %v4037
        %4039 = vmatprep.mubr.bf16.mxu0 %v893
        %4040 = vmatmul.mubr.bf16.gmra.mrb[0].mxu0 %v892
        %v4041 = vpop.f32.mrb[0].mxu0
        %v4042 = vadd.f32 %v692, %v4041
        %v4043 = vpop.f32.mrb[0].mxu0
        %v4044 = vadd.f32 %v696, %v4043
        %v4045 = vpop.f32.mrb[0].mxu0
        %v4046 = vadd.f32 %v692, %v4045
        %v4047 = vpop.f32.mrb[0].mxu0
        %v4048 = vadd.f32 %v696, %v4047
        %4049 = vmatprep.mubr.bf16.mxu0 %v896
        %4050 = vmatmul.mubr.bf16.gmra.mrb[0].mxu0 %v895
        %v4051 = vpop.f32.mrb[0].mxu0
        %v4052 = vadd.f32 %v692, %v4051
        %v4053 = vpop.f32.mrb[0].mxu0
        %v4054 = vadd.f32 %v696, %v4053
        %v4055 = vpop.f32.mrb[0].mxu0
        %v4056 = vadd.f32 %v692, %v4055
        %v4057 = vpop.f32.mrb[0].mxu0
        %v4058 = vadd.f32 %v696, %v4057
        %4059 = vmatprep.mubr.bf16.mxu0 %v899
        %4060 = vmatmul.mubr.bf16.gmra.mrb[0].mxu0 %v898
        %v4061 = vpop.f32.mrb[0].mxu0
        %v4062 = vadd.f32 %v692, %v4061
        %v4063 = vpop.f32.mrb[0].mxu0
        %v4064 = vadd.f32 %v696, %v4063
        %v4065 = vpop.f32.mrb[0].mxu0
        %v4066 = vadd.f32 %v692, %v4065
        %v4067 = vpop.f32.mrb[0].mxu0
        %v4068 = vadd.f32 %v696, %v4067
        %4069 = vmatprep.mubr.bf16.mxu0 %v902
        %4070 = vmatmul.mubr.bf16.gmra.mrb[0].mxu0 %v901
        %v4071 = vpop.f32.mrb[0].mxu0
        %v4072 = vadd.f32 %v692, %v4071
        %v4073 = vpop.f32.mrb[0].mxu0
        %v4074 = vadd.f32 %v696, %v4073
        %v4075 = vpop.f32.mrb[0].mxu0
        %v4076 = vadd.f32 %v692, %v4075
        %v4077 = vpop.f32.mrb[0].mxu0
        %v4078 = vadd.f32 %v696, %v4077
        %4079 = vmatprep.mubr.bf16.mxu0 %v905
        %4080 = vmatmul.mubr.bf16.gmra.mrb[0].mxu0 %v904
        %v4081 = vpop.f32.mrb[0].mxu0
        %v4082 = vadd.f32 %v692, %v4081
        %v4083 = vpop.f32.mrb[0].mxu0
        %v4084 = vadd.f32 %v696, %v4083
        %v4085 = vpop.f32.mrb[0].mxu0
        %v4086 = vadd.f32 %v692, %v4085
        %v4087 = vpop.f32.mrb[0].mxu0
        %v4088 = vadd.f32 %v696, %v4087
        %4089 = vmatprep.mubr.bf16.mxu0 %v908
        %4090 = vmatmul.mubr.bf16.gmra.mrb[0].mxu0 %v907
        %v4091 = vpop.f32.mrb[0].mxu0
        %v4092 = vadd.f32 %v692, %v4091
        %v4093 = vpop.f32.mrb[0].mxu0
        %v4094 = vadd.f32 %v696, %v4093
        %v4095 = vpop.f32.mrb[0].mxu0
        %v4096 = vadd.f32 %v692, %v4095
        %v4097 = vpop.f32.mrb[0].mxu0
        %v4098 = vadd.f32 %v696, %v4097
        %4099 = vmatprep.mubr.bf16.mxu0 %v911
        %4100 = vmatmul.mubr.bf16.gmra.mrb[0].mxu0 %v910
        %v4101 = vpop.f32.mrb[0].mxu0
        %v4102 = vadd.f32 %v692, %v4101
        %v4103 = vpop.f32.mrb[0].mxu0
        %v4104 = vadd.f32 %v696, %v4103
        %v4105 = vpop.f32.mrb[0].mxu0
        %v4106 = vadd.f32 %v692, %v4105
        %v4107 = vpop.f32.mrb[0].mxu0
        %v4108 = vadd.f32 %v696, %v4107
        %4109 = vmatprep.mubr.bf16.mxu0 %v914
        %4110 = vmatmul.mubr.bf16.gmra.mrb[0].mxu0 %v913
        %v4111 = vpop.f32.mrb[0].mxu0
        %v4112 = vadd.f32 %v692, %v4111
        %v4113 = vpop.f32.mrb[0].mxu0
        %v4114 = vadd.f32 %v696, %v4113
        %v4115 = vpop.f32.mrb[0].mxu0
        %v4116 = vadd.f32 %v692, %v4115
        %v4117 = vpop.f32.mrb[0].mxu0
        %v4118 = vadd.f32 %v696, %v4117
        %4119 = vmatprep.mubr.bf16.mxu0 %v917
        %4120 = vmatmul.mubr.bf16.gmra.mrb[0].mxu0 %v916
        %v4121 = vpop.f32.mrb[0].mxu0
        %v4122 = vadd.f32 %v692, %v4121
        %v4123 = vpop.f32.mrb[0].mxu0
        %v4124 = vadd.f32 %v696, %v4123
        %v4125 = vpop.f32.mrb[0].mxu0
        %v4126 = vadd.f32 %v692, %v4125
        %v4127 = vpop.f32.mrb[0].mxu0
        %v4128 = vadd.f32 %v696, %v4127
        %4129 = vmatprep.mubr.bf16.mxu0 %v920
        %4130 = vmatmul.mubr.bf16.gmra.mrb[0].mxu0 %v919
        %v4131 = vpop.f32.mrb[0].mxu0
        %v4132 = vadd.f32 %v692, %v4131
        %v4133 = vpop.f32.mrb[0].mxu0
        %v4134 = vadd.f32 %v696, %v4133
        %v4135 = vpop.f32.mrb[0].mxu0
        %v4136 = vadd.f32 %v692, %v4135
        %v4137 = vpop.f32.mrb[0].mxu0
        %v4138 = vadd.f32 %v696, %v4137
        %4139 = vmatprep.mubr.bf16.mxu0 %v923
        %4140 = vmatmul.mubr.bf16.gmra.mrb[0].mxu0 %v922
        %v4141 = vpop.f32.mrb[0].mxu0
        %v4142 = vadd.f32 %v692, %v4141
        %v4143 = vpop.f32.mrb[0].mxu0
        %v4144 = vadd.f32 %v696, %v4143
        %v4145 = vpop.f32.mrb[0].mxu0
        %v4146 = vadd.f32 %v692, %v4145
        %v4147 = vpop.f32.mrb[0].mxu0
        %v4148 = vadd.f32 %v696, %v4147
        %4149 = vdwg.mxu0
        %4150 = vmatprep.subr.bf16.mxu0 %v2038
        %4151 = vmatpush1.bf16.msra.mxu0 %v2037
        %4152 = vmatprep.subr.bf16.mxu0 %v2050
        %4153 = vmatpush1.bf16.msra.mxu0 %v2049
        %4154 = vmatprep.subr.bf16.mxu0 %v2062
        %4155 = vmatpush1.bf16.msra.mxu0 %v2061
        %4156 = vmatprep.subr.bf16.mxu0 %v2074
        %4157 = vmatpush1.bf16.msra.mxu0 %v2073
        %4158 = vmatprep.subr.bf16.mxu0 %v2086
        %4159 = vmatpush1.bf16.msra.mxu0 %v2085
        %4160 = vmatprep.subr.bf16.mxu0 %v2098
        %4161 = vmatpush1.bf16.msra.mxu0 %v2097
        %4162 = vmatprep.subr.bf16.mxu0 %v2110
        %4163 = vmatpush1.bf16.msra.mxu0 %v2109
        %4164 = vmatprep.subr.bf16.mxu0 %v2122
        %4165 = vmatpush1.bf16.msra.mxu0 %v2121
        %4166 = vmatprep.subr.bf16.mxu0 0
        %4167 = vmatpush1.bf16.msra.mxu0 0
        %4168 = vmatprep.subr.bf16.mxu0 0
        %4169 = vmatpush1.bf16.msra.mxu0 0
        %4170 = vmatprep.subr.bf16.mxu0 0
        %4171 = vmatpush1.bf16.msra.mxu0 0
        %4172 = vmatprep.subr.bf16.mxu0 0
        %4173 = vmatpush1.bf16.msra.mxu0 0
        %4174 = vmatprep.subr.bf16.mxu0 0
        %4175 = vmatpush1.bf16.msra.mxu0 0
        %4176 = vmatprep.subr.bf16.mxu0 0
        %4177 = vmatpush1.bf16.msra.mxu0 0
        %4178 = vmatprep.subr.bf16.mxu0 0
        %4179 = vmatpush1.bf16.msra.mxu0 0
        %4180 = vmatprep.subr.bf16.mxu0 0
        %4181 = vmatpush1.bf16.msra.mxu0 0
        %4182 = vmatprep.mubr.bf16.mxu0 0
        %4183 = vmatmul.mubr.bf16.gmra.mrb[0].mxu0 %v879
        %v4184 = vpop.f32.mrb[0].mxu0
        %v4185 = vadd.f32 %v3992, %v4184
        %v4186 = vpop.f32.mrb[0].mxu0
        %v4187 = vadd.f32 %v3994, %v4186
        %v4188 = vpop.f32.mrb[0].mxu0
        %v4189 = vadd.f32 %v3996, %v4188
        %v4190 = vpop.f32.mrb[0].mxu0
        %v4191 = vadd.f32 %v3998, %v4190
        %4192 = vmatprep.mubr.bf16.mxu0 0
        %4193 = vmatmul.mubr.bf16.gmra.mrb[0].mxu0 %v882
        %v4194 = vpop.f32.mrb[0].mxu0
        %v4195 = vadd.f32 %v4002, %v4194
        %v4196 = vpop.f32.mrb[0].mxu0
        %v4197 = vadd.f32 %v4004, %v4196
        %v4198 = vpop.f32.mrb[0].mxu0
        %v4199 = vadd.f32 %v4006, %v4198
        %v4200 = vpop.f32.mrb[0].mxu0
        %v4201 = vadd.f32 %v4008, %v4200
        %4202 = vmatprep.mubr.bf16.mxu0 0
        %4203 = vmatmul.mubr.bf16.gmra.mrb[0].mxu0 %v885
        %v4204 = vpop.f32.mrb[0].mxu0
        %v4205 = vadd.f32 %v4012, %v4204
        %v4206 = vpop.f32.mrb[0].mxu0
        %v4207 = vadd.f32 %v4014, %v4206
        %v4208 = vpop.f32.mrb[0].mxu0
        %v4209 = vadd.f32 %v4016, %v4208
        %v4210 = vpop.f32.mrb[0].mxu0
        %v4211 = vadd.f32 %v4018, %v4210
        %4212 = vmatprep.mubr.bf16.mxu0 0
        %4213 = vmatmul.mubr.bf16.gmra.mrb[0].mxu0 %v888
        %v4214 = vpop.f32.mrb[0].mxu0
        %v4215 = vadd.f32 %v4022, %v4214
        %v4216 = vpop.f32.mrb[0].mxu0
        %v4217 = vadd.f32 %v4024, %v4216
        %v4218 = vpop.f32.mrb[0].mxu0
        %v4219 = vadd.f32 %v4026, %v4218
        %v4220 = vpop.f32.mrb[0].mxu0
        %v4221 = vadd.f32 %v4028, %v4220
        %4222 = vmatprep.mubr.bf16.mxu0 0
        %4223 = vmatmul.mubr.bf16.gmra.mrb[0].mxu0 %v891
        %v4224 = vpop.f32.mrb[0].mxu0
        %v4225 = vadd.f32 %v4032, %v4224
        %v4226 = vpop.f32.mrb[0].mxu0
        %v4227 = vadd.f32 %v4034, %v4226
        %v4228 = vpop.f32.mrb[0].mxu0
        %v4229 = vadd.f32 %v4036, %v4228
        %v4230 = vpop.f32.mrb[0].mxu0
        %v4231 = vadd.f32 %v4038, %v4230
        %4232 = vmatprep.mubr.bf16.mxu0 0
        %4233 = vmatmul.mubr.bf16.gmra.mrb[0].mxu0 %v894
        %v4234 = vpop.f32.mrb[0].mxu0
        %v4235 = vadd.f32 %v4042, %v4234
        %v4236 = vpop.f32.mrb[0].mxu0
        %v4237 = vadd.f32 %v4044, %v4236
        %v4238 = vpop.f32.mrb[0].mxu0
        %v4239 = vadd.f32 %v4046, %v4238
        %v4240 = vpop.f32.mrb[0].mxu0
        %v4241 = vadd.f32 %v4048, %v4240
        %4242 = vmatprep.mubr.bf16.mxu0 0
        %4243 = vmatmul.mubr.bf16.gmra.mrb[0].mxu0 %v897
        %v4244 = vpop.f32.mrb[0].mxu0
        %v4245 = vadd.f32 %v4052, %v4244
        %v4246 = vpop.f32.mrb[0].mxu0
        %v4247 = vadd.f32 %v4054, %v4246
        %v4248 = vpop.f32.mrb[0].mxu0
        %v4249 = vadd.f32 %v4056, %v4248
        %v4250 = vpop.f32.mrb[0].mxu0
        %v4251 = vadd.f32 %v4058, %v4250
        %4252 = vmatprep.mubr.bf16.mxu0 0
        %4253 = vmatmul.mubr.bf16.gmra.mrb[0].mxu0 %v900
        %v4254 = vpop.f32.mrb[0].mxu0
        %v4255 = vadd.f32 %v4062, %v4254
        %v4256 = vpop.f32.mrb[0].mxu0
        %v4257 = vadd.f32 %v4064, %v4256
        %v4258 = vpop.f32.mrb[0].mxu0
        %v4259 = vadd.f32 %v4066, %v4258
        %v4260 = vpop.f32.mrb[0].mxu0
        %v4261 = vadd.f32 %v4068, %v4260
        %4262 = vmatprep.mubr.bf16.mxu0 0
        %4263 = vmatmul.mubr.bf16.gmra.mrb[0].mxu0 %v903
        %v4264 = vpop.f32.mrb[0].mxu0
        %v4265 = vadd.f32 %v4072, %v4264
        %v4266 = vpop.f32.mrb[0].mxu0
        %v4267 = vadd.f32 %v4074, %v4266
        %v4268 = vpop.f32.mrb[0].mxu0
        %v4269 = vadd.f32 %v4076, %v4268
        %v4270 = vpop.f32.mrb[0].mxu0
        %v4271 = vadd.f32 %v4078, %v4270
        %4272 = vmatprep.mubr.bf16.mxu0 0
        %4273 = vmatmul.mubr.bf16.gmra.mrb[0].mxu0 %v906
        %v4274 = vpop.f32.mrb[0].mxu0
        %v4275 = vadd.f32 %v4082, %v4274
        %v4276 = vpop.f32.mrb[0].mxu0
        %v4277 = vadd.f32 %v4084, %v4276
        %v4278 = vpop.f32.mrb[0].mxu0
        %v4279 = vadd.f32 %v4086, %v4278
        %v4280 = vpop.f32.mrb[0].mxu0
        %v4281 = vadd.f32 %v4088, %v4280
        %4282 = vmatprep.mubr.bf16.mxu0 0
        %4283 = vmatmul.mubr.bf16.gmra.mrb[0].mxu0 %v909
        %v4284 = vpop.f32.mrb[0].mxu0
        %v4285 = vadd.f32 %v4092, %v4284
        %v4286 = vpop.f32.mrb[0].mxu0
        %v4287 = vadd.f32 %v4094, %v4286
        %v4288 = vpop.f32.mrb[0].mxu0
        %v4289 = vadd.f32 %v4096, %v4288
        %v4290 = vpop.f32.mrb[0].mxu0
        %v4291 = vadd.f32 %v4098, %v4290
        %4292 = vmatprep.mubr.bf16.mxu0 0
        %4293 = vmatmul.mubr.bf16.gmra.mrb[0].mxu0 %v912
        %v4294 = vpop.f32.mrb[0].mxu0
        %v4295 = vadd.f32 %v4102, %v4294
        %v4296 = vpop.f32.mrb[0].mxu0
        %v4297 = vadd.f32 %v4104, %v4296
        %v4298 = vpop.f32.mrb[0].mxu0
        %v4299 = vadd.f32 %v4106, %v4298
        %v4300 = vpop.f32.mrb[0].mxu0
        %v4301 = vadd.f32 %v4108, %v4300
        %4302 = vmatprep.mubr.bf16.mxu0 0
        %4303 = vmatmul.mubr.bf16.gmra.mrb[0].mxu0 %v915
        %v4304 = vpop.f32.mrb[0].mxu0
        %v4305 = vadd.f32 %v4112, %v4304
        %v4306 = vpop.f32.mrb[0].mxu0
        %v4307 = vadd.f32 %v4114, %v4306
        %v4308 = vpop.f32.mrb[0].mxu0
        %v4309 = vadd.f32 %v4116, %v4308
        %v4310 = vpop.f32.mrb[0].mxu0
        %v4311 = vadd.f32 %v4118, %v4310
        %4312 = vmatprep.mubr.bf16.mxu0 0
        %4313 = vmatmul.mubr.bf16.gmra.mrb[0].mxu0 %v918
        %v4314 = vpop.f32.mrb[0].mxu0
        %v4315 = vadd.f32 %v4122, %v4314
        %v4316 = vpop.f32.mrb[0].mxu0
        %v4317 = vadd.f32 %v4124, %v4316
        %v4318 = vpop.f32.mrb[0].mxu0
        %v4319 = vadd.f32 %v4126, %v4318
        %v4320 = vpop.f32.mrb[0].mxu0
        %v4321 = vadd.f32 %v4128, %v4320
        %4322 = vmatprep.mubr.bf16.mxu0 0
        %4323 = vmatmul.mubr.bf16.gmra.mrb[0].mxu0 %v921
        %v4324 = vpop.f32.mrb[0].mxu0
        %v4325 = vadd.f32 %v4132, %v4324
        %v4326 = vpop.f32.mrb[0].mxu0
        %v4327 = vadd.f32 %v4134, %v4326
        %v4328 = vpop.f32.mrb[0].mxu0
        %v4329 = vadd.f32 %v4136, %v4328
        %v4330 = vpop.f32.mrb[0].mxu0
        %v4331 = vadd.f32 %v4138, %v4330
        %4332 = vmatprep.mubr.bf16.mxu0 0
        %4333 = vmatmul.mubr.bf16.gmra.mrb[0].mxu0 %v924
        %v4334 = vpop.f32.mrb[0].mxu0
        %v4335 = vadd.f32 %v4142, %v4334
        %v4336 = vpop.f32.mrb[0].mxu0
        %v4337 = vadd.f32 %v4144, %v4336
        %v4338 = vpop.f32.mrb[0].mxu0
        %v4339 = vadd.f32 %v4146, %v4338
        %v4340 = vpop.f32.mrb[0].mxu0
        %v4341 = vadd.f32 %v4148, %v4340
        %4342 = vdwg.mxu0
        %4343 = vmatprep.subr.bf16.mxu0 %v1848
        %4344 = vmatpush1.bf16.msra.mxu0 %v1847
        %4345 = vmatprep.subr.bf16.mxu0 %v1860
        %4346 = vmatpush1.bf16.msra.mxu0 %v1859
        %4347 = vmatprep.subr.bf16.mxu0 %v1872
        %4348 = vmatpush1.bf16.msra.mxu0 %v1871
        %4349 = vmatprep.subr.bf16.mxu0 %v1884
        %4350 = vmatpush1.bf16.msra.mxu0 %v1883
        %4351 = vmatprep.subr.bf16.mxu0 %v1896
        %4352 = vmatpush1.bf16.msra.mxu0 %v1895
        %4353 = vmatprep.subr.bf16.mxu0 %v1908
        %4354 = vmatpush1.bf16.msra.mxu0 %v1907
        %4355 = vmatprep.subr.bf16.mxu0 %v1920
        %4356 = vmatpush1.bf16.msra.mxu0 %v1919
        %4357 = vmatprep.subr.bf16.mxu0 %v1932
        %4358 = vmatpush1.bf16.msra.mxu0 %v1931
        %4359 = vmatprep.subr.bf16.mxu0 %v1944
        %4360 = vmatpush1.bf16.msra.mxu0 %v1943
        %4361 = vmatprep.subr.bf16.mxu0 %v1956
        %4362 = vmatpush1.bf16.msra.mxu0 %v1955
        %4363 = vmatprep.subr.bf16.mxu0 %v1968
        %4364 = vmatpush1.bf16.msra.mxu0 %v1967
        %4365 = vmatprep.subr.bf16.mxu0 %v1980
        %4366 = vmatpush1.bf16.msra.mxu0 %v1979
        %4367 = vmatprep.subr.bf16.mxu0 %v1992
        %4368 = vmatpush1.bf16.msra.mxu0 %v1991
        %4369 = vmatprep.subr.bf16.mxu0 %v2004
        %4370 = vmatpush1.bf16.msra.mxu0 %v2003
        %4371 = vmatprep.subr.bf16.mxu0 %v2016
        %4372 = vmatpush1.bf16.msra.mxu0 %v2015
        %4373 = vmatprep.subr.bf16.mxu0 %v2028
        %4374 = vmatpush1.bf16.msra.mxu0 %v2027
        %4375 = vmatprep.mubr.bf16.mxu0 %v878
        %4376 = vmatmul.mubr.bf16.gmra.mrb[0].mxu0 %v877
        %v4377 = vpop.f32.mrb[0].mxu0
        %v4378 = vadd.f32 %v700, %v4377
        %v4379 = vpop.f32.mrb[0].mxu0
        %v4380 = vadd.f32 %v704, %v4379
        %v4381 = vpop.f32.mrb[0].mxu0
        %v4382 = vadd.f32 %v700, %v4381
        %v4383 = vpop.f32.mrb[0].mxu0
        %v4384 = vadd.f32 %v704, %v4383
        %4385 = vmatprep.mubr.bf16.mxu0 %v881
        %4386 = vmatmul.mubr.bf16.gmra.mrb[0].mxu0 %v880
        %v4387 = vpop.f32.mrb[0].mxu0
        %v4388 = vadd.f32 %v700, %v4387
        %v4389 = vpop.f32.mrb[0].mxu0
        %v4390 = vadd.f32 %v704, %v4389
        %v4391 = vpop.f32.mrb[0].mxu0
        %v4392 = vadd.f32 %v700, %v4391
        %v4393 = vpop.f32.mrb[0].mxu0
        %v4394 = vadd.f32 %v704, %v4393
        %4395 = vmatprep.mubr.bf16.mxu0 %v884
        %4396 = vmatmul.mubr.bf16.gmra.mrb[0].mxu0 %v883
        %v4397 = vpop.f32.mrb[0].mxu0
        %v4398 = vadd.f32 %v700, %v4397
        %v4399 = vpop.f32.mrb[0].mxu0
        %v4400 = vadd.f32 %v704, %v4399
        %v4401 = vpop.f32.mrb[0].mxu0
        %v4402 = vadd.f32 %v700, %v4401
        %v4403 = vpop.f32.mrb[0].mxu0
        %v4404 = vadd.f32 %v704, %v4403
        %4405 = vmatprep.mubr.bf16.mxu0 %v887
        %4406 = vmatmul.mubr.bf16.gmra.mrb[0].mxu0 %v886
        %v4407 = vpop.f32.mrb[0].mxu0
        %v4408 = vadd.f32 %v700, %v4407
        %v4409 = vpop.f32.mrb[0].mxu0
        %v4410 = vadd.f32 %v704, %v4409
        %v4411 = vpop.f32.mrb[0].mxu0
        %v4412 = vadd.f32 %v700, %v4411
        %v4413 = vpop.f32.mrb[0].mxu0
        %v4414 = vadd.f32 %v704, %v4413
        %4415 = vmatprep.mubr.bf16.mxu0 %v890
        %4416 = vmatmul.mubr.bf16.gmra.mrb[0].mxu0 %v889
        %v4417 = vpop.f32.mrb[0].mxu0
        %v4418 = vadd.f32 %v700, %v4417
        %v4419 = vpop.f32.mrb[0].mxu0
        %v4420 = vadd.f32 %v704, %v4419
        %v4421 = vpop.f32.mrb[0].mxu0
        %v4422 = vadd.f32 %v700, %v4421
        %v4423 = vpop.f32.mrb[0].mxu0
        %v4424 = vadd.f32 %v704, %v4423
        %4425 = vmatprep.mubr.bf16.mxu0 %v893
        %4426 = vmatmul.mubr.bf16.gmra.mrb[0].mxu0 %v892
        %v4427 = vpop.f32.mrb[0].mxu0
        %v4428 = vadd.f32 %v700, %v4427
        %v4429 = vpop.f32.mrb[0].mxu0
        %v4430 = vadd.f32 %v704, %v4429
        %v4431 = vpop.f32.mrb[0].mxu0
        %v4432 = vadd.f32 %v700, %v4431
        %v4433 = vpop.f32.mrb[0].mxu0
        %v4434 = vadd.f32 %v704, %v4433
        %4435 = vmatprep.mubr.bf16.mxu0 %v896
        %4436 = vmatmul.mubr.bf16.gmra.mrb[0].mxu0 %v895
        %v4437 = vpop.f32.mrb[0].mxu0
        %v4438 = vadd.f32 %v700, %v4437
        %v4439 = vpop.f32.mrb[0].mxu0
        %v4440 = vadd.f32 %v704, %v4439
        %v4441 = vpop.f32.mrb[0].mxu0
        %v4442 = vadd.f32 %v700, %v4441
        %v4443 = vpop.f32.mrb[0].mxu0
        %v4444 = vadd.f32 %v704, %v4443
        %4445 = vmatprep.mubr.bf16.mxu0 %v899
        %4446 = vmatmul.mubr.bf16.gmra.mrb[0].mxu0 %v898
        %v4447 = vpop.f32.mrb[0].mxu0
        %v4448 = vadd.f32 %v700, %v4447
        %v4449 = vpop.f32.mrb[0].mxu0
        %v4450 = vadd.f32 %v704, %v4449
        %v4451 = vpop.f32.mrb[0].mxu0
        %v4452 = vadd.f32 %v700, %v4451
        %v4453 = vpop.f32.mrb[0].mxu0
        %v4454 = vadd.f32 %v704, %v4453
        %4455 = vmatprep.mubr.bf16.mxu0 %v902
        %4456 = vmatmul.mubr.bf16.gmra.mrb[0].mxu0 %v901
        %v4457 = vpop.f32.mrb[0].mxu0
        %v4458 = vadd.f32 %v700, %v4457
        %v4459 = vpop.f32.mrb[0].mxu0
        %v4460 = vadd.f32 %v704, %v4459
        %v4461 = vpop.f32.mrb[0].mxu0
        %v4462 = vadd.f32 %v700, %v4461
        %v4463 = vpop.f32.mrb[0].mxu0
        %v4464 = vadd.f32 %v704, %v4463
        %4465 = vmatprep.mubr.bf16.mxu0 %v905
        %4466 = vmatmul.mubr.bf16.gmra.mrb[0].mxu0 %v904
        %v4467 = vpop.f32.mrb[0].mxu0
        %v4468 = vadd.f32 %v700, %v4467
        %v4469 = vpop.f32.mrb[0].mxu0
        %v4470 = vadd.f32 %v704, %v4469
        %v4471 = vpop.f32.mrb[0].mxu0
        %v4472 = vadd.f32 %v700, %v4471
        %v4473 = vpop.f32.mrb[0].mxu0
        %v4474 = vadd.f32 %v704, %v4473
        %4475 = vmatprep.mubr.bf16.mxu0 %v908
        %4476 = vmatmul.mubr.bf16.gmra.mrb[0].mxu0 %v907
        %v4477 = vpop.f32.mrb[0].mxu0
        %v4478 = vadd.f32 %v700, %v4477
        %v4479 = vpop.f32.mrb[0].mxu0
        %v4480 = vadd.f32 %v704, %v4479
        %v4481 = vpop.f32.mrb[0].mxu0
        %v4482 = vadd.f32 %v700, %v4481
        %v4483 = vpop.f32.mrb[0].mxu0
        %v4484 = vadd.f32 %v704, %v4483
        %4485 = vmatprep.mubr.bf16.mxu0 %v911
        %4486 = vmatmul.mubr.bf16.gmra.mrb[0].mxu0 %v910
        %v4487 = vpop.f32.mrb[0].mxu0
        %v4488 = vadd.f32 %v700, %v4487
        %v4489 = vpop.f32.mrb[0].mxu0
        %v4490 = vadd.f32 %v704, %v4489
        %v4491 = vpop.f32.mrb[0].mxu0
        %v4492 = vadd.f32 %v700, %v4491
        %v4493 = vpop.f32.mrb[0].mxu0
        %v4494 = vadd.f32 %v704, %v4493
        %4495 = vmatprep.mubr.bf16.mxu0 %v914
        %4496 = vmatmul.mubr.bf16.gmra.mrb[0].mxu0 %v913
        %v4497 = vpop.f32.mrb[0].mxu0
        %v4498 = vadd.f32 %v700, %v4497
        %v4499 = vpop.f32.mrb[0].mxu0
        %v4500 = vadd.f32 %v704, %v4499
        %v4501 = vpop.f32.mrb[0].mxu0
        %v4502 = vadd.f32 %v700, %v4501
        %v4503 = vpop.f32.mrb[0].mxu0
        %v4504 = vadd.f32 %v704, %v4503
        %4505 = vmatprep.mubr.bf16.mxu0 %v917
        %4506 = vmatmul.mubr.bf16.gmra.mrb[0].mxu0 %v916
        %v4507 = vpop.f32.mrb[0].mxu0
        %v4508 = vadd.f32 %v700, %v4507
        %v4509 = vpop.f32.mrb[0].mxu0
        %v4510 = vadd.f32 %v704, %v4509
        %v4511 = vpop.f32.mrb[0].mxu0
        %v4512 = vadd.f32 %v700, %v4511
        %v4513 = vpop.f32.mrb[0].mxu0
        %v4514 = vadd.f32 %v704, %v4513
        %4515 = vmatprep.mubr.bf16.mxu0 %v920
        %4516 = vmatmul.mubr.bf16.gmra.mrb[0].mxu0 %v919
        %v4517 = vpop.f32.mrb[0].mxu0
        %v4518 = vadd.f32 %v700, %v4517
        %v4519 = vpop.f32.mrb[0].mxu0
        %v4520 = vadd.f32 %v704, %v4519
        %v4521 = vpop.f32.mrb[0].mxu0
        %v4522 = vadd.f32 %v700, %v4521
        %v4523 = vpop.f32.mrb[0].mxu0
        %v4524 = vadd.f32 %v704, %v4523
        %4525 = vmatprep.mubr.bf16.mxu0 %v923
        %4526 = vmatmul.mubr.bf16.gmra.mrb[0].mxu0 %v922
        %v4527 = vpop.f32.mrb[0].mxu0
        %v4528 = vadd.f32 %v700, %v4527
        %v4529 = vpop.f32.mrb[0].mxu0
        %v4530 = vadd.f32 %v704, %v4529
        %v4531 = vpop.f32.mrb[0].mxu0
        %v4532 = vadd.f32 %v700, %v4531
        %v4533 = vpop.f32.mrb[0].mxu0
        %v4534 = vadd.f32 %v704, %v4533
        %4535 = vdwg.mxu0
        %4536 = vmatprep.subr.bf16.mxu0 %v2040
        %4537 = vmatpush1.bf16.msra.mxu0 %v2039
        %4538 = vmatprep.subr.bf16.mxu0 %v2052
        %4539 = vmatpush1.bf16.msra.mxu0 %v2051
        %4540 = vmatprep.subr.bf16.mxu0 %v2064
        %4541 = vmatpush1.bf16.msra.mxu0 %v2063
        %4542 = vmatprep.subr.bf16.mxu0 %v2076
        %4543 = vmatpush1.bf16.msra.mxu0 %v2075
        %4544 = vmatprep.subr.bf16.mxu0 %v2088
        %4545 = vmatpush1.bf16.msra.mxu0 %v2087
        %4546 = vmatprep.subr.bf16.mxu0 %v2100
        %4547 = vmatpush1.bf16.msra.mxu0 %v2099
        %4548 = vmatprep.subr.bf16.mxu0 %v2112
        %4549 = vmatpush1.bf16.msra.mxu0 %v2111
        %4550 = vmatprep.subr.bf16.mxu0 %v2124
        %4551 = vmatpush1.bf16.msra.mxu0 %v2123
        %4552 = vmatprep.subr.bf16.mxu0 0
        %4553 = vmatpush1.bf16.msra.mxu0 0
        %4554 = vmatprep.subr.bf16.mxu0 0
        %4555 = vmatpush1.bf16.msra.mxu0 0
        %4556 = vmatprep.subr.bf16.mxu0 0
        %4557 = vmatpush1.bf16.msra.mxu0 0
        %4558 = vmatprep.subr.bf16.mxu0 0
        %4559 = vmatpush1.bf16.msra.mxu0 0
        %4560 = vmatprep.subr.bf16.mxu0 0
        %4561 = vmatpush1.bf16.msra.mxu0 0
        %4562 = vmatprep.subr.bf16.mxu0 0
        %4563 = vmatpush1.bf16.msra.mxu0 0
        %4564 = vmatprep.subr.bf16.mxu0 0
        %4565 = vmatpush1.bf16.msra.mxu0 0
        %4566 = vmatprep.subr.bf16.mxu0 0
        %4567 = vmatpush1.bf16.msra.mxu0 0
        %4568 = vmatprep.mubr.bf16.mxu0 0
        %4569 = vmatmul.mubr.bf16.gmra.mrb[0].mxu0 %v879
        %v4570 = vpop.f32.mrb[0].mxu0
        %v4571 = vadd.f32 %v4378, %v4570
        %v4572 = vpop.f32.mrb[0].mxu0
        %v4573 = vadd.f32 %v4380, %v4572
        %v4574 = vpop.f32.mrb[0].mxu0
        %v4575 = vadd.f32 %v4382, %v4574
        %v4576 = vpop.f32.mrb[0].mxu0
        %v4577 = vadd.f32 %v4384, %v4576
        %4578 = vmatprep.mubr.bf16.mxu0 0
        %4579 = vmatmul.mubr.bf16.gmra.mrb[0].mxu0 %v882
        %v4580 = vpop.f32.mrb[0].mxu0
        %v4581 = vadd.f32 %v4388, %v4580
        %v4582 = vpop.f32.mrb[0].mxu0
        %v4583 = vadd.f32 %v4390, %v4582
        %v4584 = vpop.f32.mrb[0].mxu0
        %v4585 = vadd.f32 %v4392, %v4584
        %v4586 = vpop.f32.mrb[0].mxu0
        %v4587 = vadd.f32 %v4394, %v4586
        %4588 = vmatprep.mubr.bf16.mxu0 0
        %4589 = vmatmul.mubr.bf16.gmra.mrb[0].mxu0 %v885
        %v4590 = vpop.f32.mrb[0].mxu0
        %v4591 = vadd.f32 %v4398, %v4590
        %v4592 = vpop.f32.mrb[0].mxu0
        %v4593 = vadd.f32 %v4400, %v4592
        %v4594 = vpop.f32.mrb[0].mxu0
        %v4595 = vadd.f32 %v4402, %v4594
        %v4596 = vpop.f32.mrb[0].mxu0
        %v4597 = vadd.f32 %v4404, %v4596
        %4598 = vmatprep.mubr.bf16.mxu0 0
        %4599 = vmatmul.mubr.bf16.gmra.mrb[0].mxu0 %v888
        %v4600 = vpop.f32.mrb[0].mxu0
        %v4601 = vadd.f32 %v4408, %v4600
        %v4602 = vpop.f32.mrb[0].mxu0
        %v4603 = vadd.f32 %v4410, %v4602
        %v4604 = vpop.f32.mrb[0].mxu0
        %v4605 = vadd.f32 %v4412, %v4604
        %v4606 = vpop.f32.mrb[0].mxu0
        %v4607 = vadd.f32 %v4414, %v4606
        %4608 = vmatprep.mubr.bf16.mxu0 0
        %4609 = vmatmul.mubr.bf16.gmra.mrb[0].mxu0 %v891
        %v4610 = vpop.f32.mrb[0].mxu0
        %v4611 = vadd.f32 %v4418, %v4610
        %v4612 = vpop.f32.mrb[0].mxu0
        %v4613 = vadd.f32 %v4420, %v4612
        %v4614 = vpop.f32.mrb[0].mxu0
        %v4615 = vadd.f32 %v4422, %v4614
        %v4616 = vpop.f32.mrb[0].mxu0
        %v4617 = vadd.f32 %v4424, %v4616
        %4618 = vmatprep.mubr.bf16.mxu0 0
        %4619 = vmatmul.mubr.bf16.gmra.mrb[0].mxu0 %v894
        %v4620 = vpop.f32.mrb[0].mxu0
        %v4621 = vadd.f32 %v4428, %v4620
        %v4622 = vpop.f32.mrb[0].mxu0
        %v4623 = vadd.f32 %v4430, %v4622
        %v4624 = vpop.f32.mrb[0].mxu0
        %v4625 = vadd.f32 %v4432, %v4624
        %v4626 = vpop.f32.mrb[0].mxu0
        %v4627 = vadd.f32 %v4434, %v4626
        %4628 = vmatprep.mubr.bf16.mxu0 0
        %4629 = vmatmul.mubr.bf16.gmra.mrb[0].mxu0 %v897
        %v4630 = vpop.f32.mrb[0].mxu0
        %v4631 = vadd.f32 %v4438, %v4630
        %v4632 = vpop.f32.mrb[0].mxu0
        %v4633 = vadd.f32 %v4440, %v4632
        %v4634 = vpop.f32.mrb[0].mxu0
        %v4635 = vadd.f32 %v4442, %v4634
        %v4636 = vpop.f32.mrb[0].mxu0
        %v4637 = vadd.f32 %v4444, %v4636
        %4638 = vmatprep.mubr.bf16.mxu0 0
        %4639 = vmatmul.mubr.bf16.gmra.mrb[0].mxu0 %v900
        %v4640 = vpop.f32.mrb[0].mxu0
        %v4641 = vadd.f32 %v4448, %v4640
        %v4642 = vpop.f32.mrb[0].mxu0
        %v4643 = vadd.f32 %v4450, %v4642
        %v4644 = vpop.f32.mrb[0].mxu0
        %v4645 = vadd.f32 %v4452, %v4644
        %v4646 = vpop.f32.mrb[0].mxu0
        %v4647 = vadd.f32 %v4454, %v4646
        %4648 = vmatprep.mubr.bf16.mxu0 0
        %4649 = vmatmul.mubr.bf16.gmra.mrb[0].mxu0 %v903
        %v4650 = vpop.f32.mrb[0].mxu0
        %v4651 = vadd.f32 %v4458, %v4650
        %v4652 = vpop.f32.mrb[0].mxu0
        %v4653 = vadd.f32 %v4460, %v4652
        %v4654 = vpop.f32.mrb[0].mxu0
        %v4655 = vadd.f32 %v4462, %v4654
        %v4656 = vpop.f32.mrb[0].mxu0
        %v4657 = vadd.f32 %v4464, %v4656
        %4658 = vmatprep.mubr.bf16.mxu0 0
        %4659 = vmatmul.mubr.bf16.gmra.mrb[0].mxu0 %v906
        %v4660 = vpop.f32.mrb[0].mxu0
        %v4661 = vadd.f32 %v4468, %v4660
        %v4662 = vpop.f32.mrb[0].mxu0
        %v4663 = vadd.f32 %v4470, %v4662
        %v4664 = vpop.f32.mrb[0].mxu0
        %v4665 = vadd.f32 %v4472, %v4664
        %v4666 = vpop.f32.mrb[0].mxu0
        %v4667 = vadd.f32 %v4474, %v4666
        %4668 = vmatprep.mubr.bf16.mxu0 0
        %4669 = vmatmul.mubr.bf16.gmra.mrb[0].mxu0 %v909
        %v4670 = vpop.f32.mrb[0].mxu0
        %v4671 = vadd.f32 %v4478, %v4670
        %v4672 = vpop.f32.mrb[0].mxu0
        %v4673 = vadd.f32 %v4480, %v4672
        %v4674 = vpop.f32.mrb[0].mxu0
        %v4675 = vadd.f32 %v4482, %v4674
        %v4676 = vpop.f32.mrb[0].mxu0
        %v4677 = vadd.f32 %v4484, %v4676
        %4678 = vmatprep.mubr.bf16.mxu0 0
        %4679 = vmatmul.mubr.bf16.gmra.mrb[0].mxu0 %v912
        %v4680 = vpop.f32.mrb[0].mxu0
        %v4681 = vadd.f32 %v4488, %v4680
        %v4682 = vpop.f32.mrb[0].mxu0
        %v4683 = vadd.f32 %v4490, %v4682
        %v4684 = vpop.f32.mrb[0].mxu0
        %v4685 = vadd.f32 %v4492, %v4684
        %v4686 = vpop.f32.mrb[0].mxu0
        %v4687 = vadd.f32 %v4494, %v4686
        %4688 = vmatprep.mubr.bf16.mxu0 0
        %4689 = vmatmul.mubr.bf16.gmra.mrb[0].mxu0 %v915
        %v4690 = vpop.f32.mrb[0].mxu0
        %v4691 = vadd.f32 %v4498, %v4690
        %v4692 = vpop.f32.mrb[0].mxu0
        %v4693 = vadd.f32 %v4500, %v4692
        %v4694 = vpop.f32.mrb[0].mxu0
        %v4695 = vadd.f32 %v4502, %v4694
        %v4696 = vpop.f32.mrb[0].mxu0
        %v4697 = vadd.f32 %v4504, %v4696
        %4698 = vmatprep.mubr.bf16.mxu0 0
        %4699 = vmatmul.mubr.bf16.gmra.mrb[0].mxu0 %v918
        %v4700 = vpop.f32.mrb[0].mxu0
        %v4701 = vadd.f32 %v4508, %v4700
        %v4702 = vpop.f32.mrb[0].mxu0
        %v4703 = vadd.f32 %v4510, %v4702
        %v4704 = vpop.f32.mrb[0].mxu0
        %v4705 = vadd.f32 %v4512, %v4704
        %v4706 = vpop.f32.mrb[0].mxu0
        %v4707 = vadd.f32 %v4514, %v4706
        %4708 = vmatprep.mubr.bf16.mxu0 0
        %4709 = vmatmul.mubr.bf16.gmra.mrb[0].mxu0 %v921
        %v4710 = vpop.f32.mrb[0].mxu0
        %v4711 = vadd.f32 %v4518, %v4710
        %v4712 = vpop.f32.mrb[0].mxu0
        %v4713 = vadd.f32 %v4520, %v4712
        %v4714 = vpop.f32.mrb[0].mxu0
        %v4715 = vadd.f32 %v4522, %v4714
        %v4716 = vpop.f32.mrb[0].mxu0
        %v4717 = vadd.f32 %v4524, %v4716
        %4718 = vmatprep.mubr.bf16.mxu0 0
        %4719 = vmatmul.mubr.bf16.gmra.mrb[0].mxu0 %v924
        %v4720 = vpop.f32.mrb[0].mxu0
        %v4721 = vadd.f32 %v4528, %v4720
        %v4722 = vpop.f32.mrb[0].mxu0
        %v4723 = vadd.f32 %v4530, %v4722
        %v4724 = vpop.f32.mrb[0].mxu0
        %v4725 = vadd.f32 %v4532, %v4724
        %v4726 = vpop.f32.mrb[0].mxu0
        %v4727 = vadd.f32 %v4534, %v4726
        %4728 = vdwg.mxu0
        %v4729 = vmax.f32 %v2641, 0.0
        %v4730 = vmax.f32 %v2643, 0.0
        %v4731 = vmax.f32 %v3027, 0.0
        %v4732 = vmax.f32 %v3029, 0.0
        %v4733 = vmax.f32 %v3413, 0.0
        %v4734 = vmax.f32 %v3415, 0.0
        %v4735 = vmax.f32 %v3799, 0.0
        %v4736 = vmax.f32 %v3801, 0.0
        %v4737 = vmax.f32 %v4185, 0.0
        %v4738 = vmax.f32 %v4187, 0.0
        %v4739 = vmax.f32 %v4571, 0.0
        %v4740 = vmax.f32 %v4573, 0.0
        %v4741 = vmax.f32 %v2645, 0.0
        %v4742 = vmax.f32 %v2647, 0.0
        %v4743 = vmax.f32 %v3031, 0.0
        %v4744 = vmax.f32 %v3033, 0.0
        %v4745 = vmax.f32 %v3417, 0.0
        %v4746 = vmax.f32 %v3419, 0.0
        %v4747 = vmax.f32 %v3803, 0.0
        %v4748 = vmax.f32 %v3805, 0.0
        %v4749 = vmax.f32 %v4189, 0.0
        %v4750 = vmax.f32 %v4191, 0.0
        %v4751 = vmax.f32 %v4575, 0.0
        %v4752 = vmax.f32 %v4577, 0.0
        %v4753 = vmax.f32 %v2651, 0.0
        %v4754 = vmax.f32 %v2653, 0.0
        %v4755 = vmax.f32 %v3037, 0.0
        %v4756 = vmax.f32 %v3039, 0.0
        %v4757 = vmax.f32 %v3423, 0.0
        %v4758 = vmax.f32 %v3425, 0.0
        %v4759 = vmax.f32 %v3809, 0.0
        %v4760 = vmax.f32 %v3811, 0.0
        %v4761 = vmax.f32 %v4195, 0.0
        %v4762 = vmax.f32 %v4197, 0.0
        %v4763 = vmax.f32 %v4581, 0.0
        %v4764 = vmax.f32 %v4583, 0.0
        %v4765 = vmax.f32 %v2655, 0.0
        %v4766 = vmax.f32 %v2657, 0.0
        %v4767 = vmax.f32 %v3041, 0.0
        %v4768 = vmax.f32 %v3043, 0.0
        %v4769 = vmax.f32 %v3427, 0.0
        %v4770 = vmax.f32 %v3429, 0.0
        %v4771 = vmax.f32 %v3813, 0.0
        %v4772 = vmax.f32 %v3815, 0.0
        %v4773 = vmax.f32 %v4199, 0.0
        %v4774 = vmax.f32 %v4201, 0.0
        %v4775 = vmax.f32 %v4585, 0.0
        %v4776 = vmax.f32 %v4587, 0.0
        %v4777 = vmax.f32 %v2661, 0.0
        %v4778 = vmax.f32 %v2663, 0.0
        %v4779 = vmax.f32 %v3047, 0.0
        %v4780 = vmax.f32 %v3049, 0.0
        %v4781 = vmax.f32 %v3433, 0.0
        %v4782 = vmax.f32 %v3435, 0.0
        %v4783 = vmax.f32 %v3819, 0.0
        %v4784 = vmax.f32 %v3821, 0.0
        %v4785 = vmax.f32 %v4205, 0.0
        %v4786 = vmax.f32 %v4207, 0.0
        %v4787 = vmax.f32 %v4591, 0.0
        %v4788 = vmax.f32 %v4593, 0.0
        %v4789 = vmax.f32 %v2665, 0.0
        %v4790 = vmax.f32 %v2667, 0.0
        %v4791 = vmax.f32 %v3051, 0.0
        %v4792 = vmax.f32 %v3053, 0.0
        %v4793 = vmax.f32 %v3437, 0.0
        %v4794 = vmax.f32 %v3439, 0.0
        %v4795 = vmax.f32 %v3823, 0.0
        %v4796 = vmax.f32 %v3825, 0.0
        %v4797 = vmax.f32 %v4209, 0.0
        %v4798 = vmax.f32 %v4211, 0.0
        %v4799 = vmax.f32 %v4595, 0.0
        %v4800 = vmax.f32 %v4597, 0.0
        %v4801 = vmax.f32 %v2671, 0.0
        %v4802 = vmax.f32 %v2673, 0.0
        %v4803 = vmax.f32 %v3057, 0.0
        %v4804 = vmax.f32 %v3059, 0.0
        %v4805 = vmax.f32 %v3443, 0.0
        %v4806 = vmax.f32 %v3445, 0.0
        %v4807 = vmax.f32 %v3829, 0.0
        %v4808 = vmax.f32 %v3831, 0.0
        %v4809 = vmax.f32 %v4215, 0.0
        %v4810 = vmax.f32 %v4217, 0.0
        %v4811 = vmax.f32 %v4601, 0.0
        %v4812 = vmax.f32 %v4603, 0.0
        %v4813 = vmax.f32 %v2675, 0.0
        %v4814 = vmax.f32 %v2677, 0.0
        %v4815 = vmax.f32 %v3061, 0.0
        %v4816 = vmax.f32 %v3063, 0.0
        %v4817 = vmax.f32 %v3447, 0.0
        %v4818 = vmax.f32 %v3449, 0.0
        %v4819 = vmax.f32 %v3833, 0.0
        %v4820 = vmax.f32 %v3835, 0.0
        %v4821 = vmax.f32 %v4219, 0.0
        %v4822 = vmax.f32 %v4221, 0.0
        %v4823 = vmax.f32 %v4605, 0.0
        %v4824 = vmax.f32 %v4607, 0.0
        %v4825 = vmax.f32 %v2681, 0.0
        %v4826 = vmax.f32 %v2683, 0.0
        %v4827 = vmax.f32 %v3067, 0.0
        %v4828 = vmax.f32 %v3069, 0.0
        %v4829 = vmax.f32 %v3453, 0.0
        %v4830 = vmax.f32 %v3455, 0.0
        %v4831 = vmax.f32 %v3839, 0.0
        %v4832 = vmax.f32 %v3841, 0.0
        %v4833 = vmax.f32 %v4225, 0.0
        %v4834 = vmax.f32 %v4227, 0.0
        %v4835 = vmax.f32 %v4611, 0.0
        %v4836 = vmax.f32 %v4613, 0.0
        %v4837 = vmax.f32 %v2685, 0.0
        %v4838 = vmax.f32 %v2687, 0.0
        %v4839 = vmax.f32 %v3071, 0.0
        %v4840 = vmax.f32 %v3073, 0.0
        %v4841 = vmax.f32 %v3457, 0.0
        %v4842 = vmax.f32 %v3459, 0.0
        %v4843 = vmax.f32 %v3843, 0.0
        %v4844 = vmax.f32 %v3845, 0.0
        %v4845 = vmax.f32 %v4229, 0.0
        %v4846 = vmax.f32 %v4231, 0.0
        %v4847 = vmax.f32 %v4615, 0.0
        %v4848 = vmax.f32 %v4617, 0.0
        %v4849 = vmax.f32 %v2691, 0.0
        %v4850 = vmax.f32 %v2693, 0.0
        %v4851 = vmax.f32 %v3077, 0.0
        %v4852 = vmax.f32 %v3079, 0.0
        %v4853 = vmax.f32 %v3463, 0.0
        %v4854 = vmax.f32 %v3465, 0.0
        %v4855 = vmax.f32 %v3849, 0.0
        %v4856 = vmax.f32 %v3851, 0.0
        %v4857 = vmax.f32 %v4235, 0.0
        %v4858 = vmax.f32 %v4237, 0.0
        %v4859 = vmax.f32 %v4621, 0.0
        %v4860 = vmax.f32 %v4623, 0.0
        %v4861 = vmax.f32 %v2695, 0.0
        %v4862 = vmax.f32 %v2697, 0.0
        %v4863 = vmax.f32 %v3081, 0.0
        %v4864 = vmax.f32 %v3083, 0.0
        %v4865 = vmax.f32 %v3467, 0.0
        %v4866 = vmax.f32 %v3469, 0.0
        %v4867 = vmax.f32 %v3853, 0.0
        %v4868 = vmax.f32 %v3855, 0.0
        %v4869 = vmax.f32 %v4239, 0.0
        %v4870 = vmax.f32 %v4241, 0.0
        %v4871 = vmax.f32 %v4625, 0.0
        %v4872 = vmax.f32 %v4627, 0.0
        %v4873 = vmax.f32 %v2701, 0.0
        %v4874 = vmax.f32 %v2703, 0.0
        %v4875 = vmax.f32 %v3087, 0.0
        %v4876 = vmax.f32 %v3089, 0.0
        %v4877 = vmax.f32 %v3473, 0.0
        %v4878 = vmax.f32 %v3475, 0.0
        %v4879 = vmax.f32 %v3859, 0.0
        %v4880 = vmax.f32 %v3861, 0.0
        %v4881 = vmax.f32 %v4245, 0.0
        %v4882 = vmax.f32 %v4247, 0.0
        %v4883 = vmax.f32 %v4631, 0.0
        %v4884 = vmax.f32 %v4633, 0.0
        %v4885 = vmax.f32 %v2705, 0.0
        %v4886 = vmax.f32 %v2707, 0.0
        %v4887 = vmax.f32 %v3091, 0.0
        %v4888 = vmax.f32 %v3093, 0.0
        %v4889 = vmax.f32 %v3477, 0.0
        %v4890 = vmax.f32 %v3479, 0.0
        %v4891 = vmax.f32 %v3863, 0.0
        %v4892 = vmax.f32 %v3865, 0.0
        %v4893 = vmax.f32 %v4249, 0.0
        %v4894 = vmax.f32 %v4251, 0.0
        %v4895 = vmax.f32 %v4635, 0.0
        %v4896 = vmax.f32 %v4637, 0.0
        %v4897 = vmax.f32 %v2711, 0.0
        %v4898 = vmax.f32 %v2713, 0.0
        %v4899 = vmax.f32 %v3097, 0.0
        %v4900 = vmax.f32 %v3099, 0.0
        %v4901 = vmax.f32 %v3483, 0.0
        %v4902 = vmax.f32 %v3485, 0.0
        %v4903 = vmax.f32 %v3869, 0.0
        %v4904 = vmax.f32 %v3871, 0.0
        %v4905 = vmax.f32 %v4255, 0.0
        %v4906 = vmax.f32 %v4257, 0.0
        %v4907 = vmax.f32 %v4641, 0.0
        %v4908 = vmax.f32 %v4643, 0.0
        %v4909 = vmax.f32 %v2715, 0.0
        %v4910 = vmax.f32 %v2717, 0.0
        %v4911 = vmax.f32 %v3101, 0.0
        %v4912 = vmax.f32 %v3103, 0.0
        %v4913 = vmax.f32 %v3487, 0.0
        %v4914 = vmax.f32 %v3489, 0.0
        %v4915 = vmax.f32 %v3873, 0.0
        %v4916 = vmax.f32 %v3875, 0.0
        %v4917 = vmax.f32 %v4259, 0.0
        %v4918 = vmax.f32 %v4261, 0.0
        %v4919 = vmax.f32 %v4645, 0.0
        %v4920 = vmax.f32 %v4647, 0.0
        %v4921 = vmax.f32 %v2721, 0.0
        %v4922 = vmax.f32 %v2723, 0.0
        %v4923 = vmax.f32 %v3107, 0.0
        %v4924 = vmax.f32 %v3109, 0.0
        %v4925 = vmax.f32 %v3493, 0.0
        %v4926 = vmax.f32 %v3495, 0.0
        %v4927 = vmax.f32 %v3879, 0.0
        %v4928 = vmax.f32 %v3881, 0.0
        %v4929 = vmax.f32 %v4265, 0.0
        %v4930 = vmax.f32 %v4267, 0.0
        %v4931 = vmax.f32 %v4651, 0.0
        %v4932 = vmax.f32 %v4653, 0.0
        %v4933 = vmax.f32 %v2725, 0.0
        %v4934 = vmax.f32 %v2727, 0.0
        %v4935 = vmax.f32 %v3111, 0.0
        %v4936 = vmax.f32 %v3113, 0.0
        %v4937 = vmax.f32 %v3497, 0.0
        %v4938 = vmax.f32 %v3499, 0.0
        %v4939 = vmax.f32 %v3883, 0.0
        %v4940 = vmax.f32 %v3885, 0.0
        %v4941 = vmax.f32 %v4269, 0.0
        %v4942 = vmax.f32 %v4271, 0.0
        %v4943 = vmax.f32 %v4655, 0.0
        %v4944 = vmax.f32 %v4657, 0.0
        %v4945 = vmax.f32 %v2731, 0.0
        %v4946 = vmax.f32 %v2733, 0.0
        %v4947 = vmax.f32 %v3117, 0.0
        %v4948 = vmax.f32 %v3119, 0.0
        %v4949 = vmax.f32 %v3503, 0.0
        %v4950 = vmax.f32 %v3505, 0.0
        %v4951 = vmax.f32 %v3889, 0.0
        %v4952 = vmax.f32 %v3891, 0.0
        %v4953 = vmax.f32 %v4275, 0.0
        %v4954 = vmax.f32 %v4277, 0.0
        %v4955 = vmax.f32 %v4661, 0.0
        %v4956 = vmax.f32 %v4663, 0.0
        %v4957 = vmax.f32 %v2735, 0.0
        %v4958 = vmax.f32 %v2737, 0.0
        %v4959 = vmax.f32 %v3121, 0.0
        %v4960 = vmax.f32 %v3123, 0.0
        %v4961 = vmax.f32 %v3507, 0.0
        %v4962 = vmax.f32 %v3509, 0.0
        %v4963 = vmax.f32 %v3893, 0.0
        %v4964 = vmax.f32 %v3895, 0.0
        %v4965 = vmax.f32 %v4279, 0.0
        %v4966 = vmax.f32 %v4281, 0.0
        %v4967 = vmax.f32 %v4665, 0.0
        %v4968 = vmax.f32 %v4667, 0.0
        %v4969 = vmax.f32 %v2741, 0.0
        %v4970 = vmax.f32 %v2743, 0.0
        %v4971 = vmax.f32 %v3127, 0.0
        %v4972 = vmax.f32 %v3129, 0.0
        %v4973 = vmax.f32 %v3513, 0.0
        %v4974 = vmax.f32 %v3515, 0.0
        %v4975 = vmax.f32 %v3899, 0.0
        %v4976 = vmax.f32 %v3901, 0.0
        %v4977 = vmax.f32 %v4285, 0.0
        %v4978 = vmax.f32 %v4287, 0.0
        %v4979 = vmax.f32 %v4671, 0.0
        %v4980 = vmax.f32 %v4673, 0.0
        %v4981 = vmax.f32 %v2745, 0.0
        %v4982 = vmax.f32 %v2747, 0.0
        %v4983 = vmax.f32 %v3131, 0.0
        %v4984 = vmax.f32 %v3133, 0.0
        %v4985 = vmax.f32 %v3517, 0.0
        %v4986 = vmax.f32 %v3519, 0.0
        %v4987 = vmax.f32 %v3903, 0.0
        %v4988 = vmax.f32 %v3905, 0.0
        %v4989 = vmax.f32 %v4289, 0.0
        %v4990 = vmax.f32 %v4291, 0.0
        %v4991 = vmax.f32 %v4675, 0.0
        %v4992 = vmax.f32 %v4677, 0.0
        %v4993 = vmax.f32 %v2751, 0.0
        %v4994 = vmax.f32 %v2753, 0.0
        %v4995 = vmax.f32 %v3137, 0.0
        %v4996 = vmax.f32 %v3139, 0.0
        %v4997 = vmax.f32 %v3523, 0.0
        %v4998 = vmax.f32 %v3525, 0.0
        %v4999 = vmax.f32 %v3909, 0.0
        %v5000 = vmax.f32 %v3911, 0.0
        %v5001 = vmax.f32 %v4295, 0.0
        %v5002 = vmax.f32 %v4297, 0.0
        %v5003 = vmax.f32 %v4681, 0.0
        %v5004 = vmax.f32 %v4683, 0.0
        %v5005 = vmax.f32 %v2755, 0.0
        %v5006 = vmax.f32 %v2757, 0.0
        %v5007 = vmax.f32 %v3141, 0.0
        %v5008 = vmax.f32 %v3143, 0.0
        %v5009 = vmax.f32 %v3527, 0.0
        %v5010 = vmax.f32 %v3529, 0.0
        %v5011 = vmax.f32 %v3913, 0.0
        %v5012 = vmax.f32 %v3915, 0.0
        %v5013 = vmax.f32 %v4299, 0.0
        %v5014 = vmax.f32 %v4301, 0.0
        %v5015 = vmax.f32 %v4685, 0.0
        %v5016 = vmax.f32 %v4687, 0.0
        %v5017 = vmax.f32 %v2761, 0.0
        %v5018 = vmax.f32 %v2763, 0.0
        %v5019 = vmax.f32 %v3147, 0.0
        %v5020 = vmax.f32 %v3149, 0.0
        %v5021 = vmax.f32 %v3533, 0.0
        %v5022 = vmax.f32 %v3535, 0.0
        %v5023 = vmax.f32 %v3919, 0.0
        %v5024 = vmax.f32 %v3921, 0.0
        %v5025 = vmax.f32 %v4305, 0.0
        %v5026 = vmax.f32 %v4307, 0.0
        %v5027 = vmax.f32 %v4691, 0.0
        %v5028 = vmax.f32 %v4693, 0.0
        %v5029 = vmax.f32 %v2765, 0.0
        %v5030 = vmax.f32 %v2767, 0.0
        %v5031 = vmax.f32 %v3151, 0.0
        %v5032 = vmax.f32 %v3153, 0.0
        %v5033 = vmax.f32 %v3537, 0.0
        %v5034 = vmax.f32 %v3539, 0.0
        %v5035 = vmax.f32 %v3923, 0.0
        %v5036 = vmax.f32 %v3925, 0.0
        %v5037 = vmax.f32 %v4309, 0.0
        %v5038 = vmax.f32 %v4311, 0.0
        %v5039 = vmax.f32 %v4695, 0.0
        %v5040 = vmax.f32 %v4697, 0.0
        %v5041 = vmax.f32 %v2771, 0.0
        %v5042 = vmax.f32 %v2773, 0.0
        %v5043 = vmax.f32 %v3157, 0.0
        %v5044 = vmax.f32 %v3159, 0.0
        %v5045 = vmax.f32 %v3543, 0.0
        %v5046 = vmax.f32 %v3545, 0.0
        %v5047 = vmax.f32 %v3929, 0.0
        %v5048 = vmax.f32 %v3931, 0.0
        %v5049 = vmax.f32 %v4315, 0.0
        %v5050 = vmax.f32 %v4317, 0.0
        %v5051 = vmax.f32 %v4701, 0.0
        %v5052 = vmax.f32 %v4703, 0.0
        %v5053 = vmax.f32 %v2775, 0.0
        %v5054 = vmax.f32 %v2777, 0.0
        %v5055 = vmax.f32 %v3161, 0.0
        %v5056 = vmax.f32 %v3163, 0.0
        %v5057 = vmax.f32 %v3547, 0.0
        %v5058 = vmax.f32 %v3549, 0.0
        %v5059 = vmax.f32 %v3933, 0.0
        %v5060 = vmax.f32 %v3935, 0.0
        %v5061 = vmax.f32 %v4319, 0.0
        %v5062 = vmax.f32 %v4321, 0.0
        %v5063 = vmax.f32 %v4705, 0.0
        %v5064 = vmax.f32 %v4707, 0.0
        %v5065 = vmax.f32 %v2781, 0.0
        %v5066 = vmax.f32 %v2783, 0.0
        %v5067 = vmax.f32 %v3167, 0.0
        %v5068 = vmax.f32 %v3169, 0.0
        %v5069 = vmax.f32 %v3553, 0.0
        %v5070 = vmax.f32 %v3555, 0.0
        %v5071 = vmax.f32 %v3939, 0.0
        %v5072 = vmax.f32 %v3941, 0.0
        %v5073 = vmax.f32 %v4325, 0.0
        %v5074 = vmax.f32 %v4327, 0.0
        %v5075 = vmax.f32 %v4711, 0.0
        %v5076 = vmax.f32 %v4713, 0.0
        %v5077 = vmax.f32 %v2785, 0.0
        %v5078 = vmax.f32 %v2787, 0.0
        %v5079 = vmax.f32 %v3171, 0.0
        %v5080 = vmax.f32 %v3173, 0.0
        %v5081 = vmax.f32 %v3557, 0.0
        %v5082 = vmax.f32 %v3559, 0.0
        %v5083 = vmax.f32 %v3943, 0.0
        %v5084 = vmax.f32 %v3945, 0.0
        %v5085 = vmax.f32 %v4329, 0.0
        %v5086 = vmax.f32 %v4331, 0.0
        %v5087 = vmax.f32 %v4715, 0.0
        %v5088 = vmax.f32 %v4717, 0.0
        %v5089 = vmax.f32 %v2791, 0.0
        %v5090 = vmax.f32 %v2793, 0.0
        %v5091 = vmax.f32 %v3177, 0.0
        %v5092 = vmax.f32 %v3179, 0.0
        %v5093 = vmax.f32 %v3563, 0.0
        %v5094 = vmax.f32 %v3565, 0.0
        %v5095 = vmax.f32 %v3949, 0.0
        %v5096 = vmax.f32 %v3951, 0.0
        %v5097 = vmax.f32 %v4335, 0.0
        %v5098 = vmax.f32 %v4337, 0.0
        %v5099 = vmax.f32 %v4721, 0.0
        %v5100 = vmax.f32 %v4723, 0.0
        %v5101 = vmax.f32 %v2795, 0.0
        %v5102 = vmax.f32 %v2797, 0.0
        %v5103 = vmax.f32 %v3181, 0.0
        %v5104 = vmax.f32 %v3183, 0.0
        %v5105 = vmax.f32 %v3567, 0.0
        %v5106 = vmax.f32 %v3569, 0.0
        %v5107 = vmax.f32 %v3953, 0.0
        %v5108 = vmax.f32 %v3955, 0.0
        %v5109 = vmax.f32 %v4339, 0.0
        %v5110 = vmax.f32 %v4341, 0.0
        %v5111 = vmax.f32 %v4725, 0.0
        %v5112 = vmax.f32 %v4727, 0.0
        %v5113 = vpack.c.bf16 %v4741, %v4729
        %v5114 = vpack.c.bf16 %v4742, %v4730
        %v5115 = vpack.c.bf16 %v4743, %v4731
        %v5116 = vpack.c.bf16 %v4744, %v4732
        %v5117 = vpack.c.bf16 %v4745, %v4733
        %v5118 = vpack.c.bf16 %v4746, %v4734
        %v5119 = vpack.c.bf16 %v4747, %v4735
        %v5120 = vpack.c.bf16 %v4748, %v4736
        %v5121 = vpack.c.bf16 %v4749, %v4737
        %v5122 = vpack.c.bf16 %v4750, %v4738
        %v5123 = vpack.c.bf16 %v4751, %v4739
        %v5124 = vpack.c.bf16 %v4752, %v4740
        %v5125 = vpack.c.bf16 %v4765, %v4753
        %v5126 = vpack.c.bf16 %v4766, %v4754
        %v5127 = vpack.c.bf16 %v4767, %v4755
        %v5128 = vpack.c.bf16 %v4768, %v4756
        %v5129 = vpack.c.bf16 %v4769, %v4757
        %v5130 = vpack.c.bf16 %v4770, %v4758
        %v5131 = vpack.c.bf16 %v4771, %v4759
        %v5132 = vpack.c.bf16 %v4772, %v4760
        %v5133 = vpack.c.bf16 %v4773, %v4761
        %v5134 = vpack.c.bf16 %v4774, %v4762
        %v5135 = vpack.c.bf16 %v4775, %v4763
        %v5136 = vpack.c.bf16 %v4776, %v4764
        %v5137 = vpack.c.bf16 %v4789, %v4777
        %v5138 = vpack.c.bf16 %v4790, %v4778
        %v5139 = vpack.c.bf16 %v4791, %v4779
        %v5140 = vpack.c.bf16 %v4792, %v4780
        %v5141 = vpack.c.bf16 %v4793, %v4781
        %v5142 = vpack.c.bf16 %v4794, %v4782
        %v5143 = vpack.c.bf16 %v4795, %v4783
        %v5144 = vpack.c.bf16 %v4796, %v4784
        %v5145 = vpack.c.bf16 %v4797, %v4785
        %v5146 = vpack.c.bf16 %v4798, %v4786
        %v5147 = vpack.c.bf16 %v4799, %v4787
        %v5148 = vpack.c.bf16 %v4800, %v4788
        %v5149 = vpack.c.bf16 %v4813, %v4801
        %v5150 = vpack.c.bf16 %v4814, %v4802
        %v5151 = vpack.c.bf16 %v4815, %v4803
        %v5152 = vpack.c.bf16 %v4816, %v4804
        %v5153 = vpack.c.bf16 %v4817, %v4805
        %v5154 = vpack.c.bf16 %v4818, %v4806
        %v5155 = vpack.c.bf16 %v4819, %v4807
        %v5156 = vpack.c.bf16 %v4820, %v4808
        %v5157 = vpack.c.bf16 %v4821, %v4809
        %v5158 = vpack.c.bf16 %v4822, %v4810
        %v5159 = vpack.c.bf16 %v4823, %v4811
        %v5160 = vpack.c.bf16 %v4824, %v4812
        %v5161 = vpack.c.bf16 %v4837, %v4825
        %v5162 = vpack.c.bf16 %v4838, %v4826
        %v5163 = vpack.c.bf16 %v4839, %v4827
        %v5164 = vpack.c.bf16 %v4840, %v4828
        %v5165 = vpack.c.bf16 %v4841, %v4829
        %v5166 = vpack.c.bf16 %v4842, %v4830
        %v5167 = vpack.c.bf16 %v4843, %v4831
        %v5168 = vpack.c.bf16 %v4844, %v4832
        %v5169 = vpack.c.bf16 %v4845, %v4833
        %v5170 = vpack.c.bf16 %v4846, %v4834
        %v5171 = vpack.c.bf16 %v4847, %v4835
        %v5172 = vpack.c.bf16 %v4848, %v4836
        %v5173 = vpack.c.bf16 %v4861, %v4849
        %v5174 = vpack.c.bf16 %v4862, %v4850
        %v5175 = vpack.c.bf16 %v4863, %v4851
        %v5176 = vpack.c.bf16 %v4864, %v4852
        %v5177 = vpack.c.bf16 %v4865, %v4853
        %v5178 = vpack.c.bf16 %v4866, %v4854
        %v5179 = vpack.c.bf16 %v4867, %v4855
        %v5180 = vpack.c.bf16 %v4868, %v4856
        %v5181 = vpack.c.bf16 %v4869, %v4857
        %v5182 = vpack.c.bf16 %v4870, %v4858
        %v5183 = vpack.c.bf16 %v4871, %v4859
        %v5184 = vpack.c.bf16 %v4872, %v4860
        %v5185 = vpack.c.bf16 %v4885, %v4873
        %v5186 = vpack.c.bf16 %v4886, %v4874
        %v5187 = vpack.c.bf16 %v4887, %v4875
        %v5188 = vpack.c.bf16 %v4888, %v4876
        %v5189 = vpack.c.bf16 %v4889, %v4877
        %v5190 = vpack.c.bf16 %v4890, %v4878
        %v5191 = vpack.c.bf16 %v4891, %v4879
        %v5192 = vpack.c.bf16 %v4892, %v4880
        %v5193 = vpack.c.bf16 %v4893, %v4881
        %v5194 = vpack.c.bf16 %v4894, %v4882
        %v5195 = vpack.c.bf16 %v4895, %v4883
        %v5196 = vpack.c.bf16 %v4896, %v4884
        %v5197 = vpack.c.bf16 %v4909, %v4897
        %v5198 = vpack.c.bf16 %v4910, %v4898
        %v5199 = vpack.c.bf16 %v4911, %v4899
        %v5200 = vpack.c.bf16 %v4912, %v4900
        %v5201 = vpack.c.bf16 %v4913, %v4901
        %v5202 = vpack.c.bf16 %v4914, %v4902
        %v5203 = vpack.c.bf16 %v4915, %v4903
        %v5204 = vpack.c.bf16 %v4916, %v4904
        %v5205 = vpack.c.bf16 %v4917, %v4905
        %v5206 = vpack.c.bf16 %v4918, %v4906
        %v5207 = vpack.c.bf16 %v4919, %v4907
        %v5208 = vpack.c.bf16 %v4920, %v4908
        %v5209 = vpack.c.bf16 %v4933, %v4921
        %v5210 = vpack.c.bf16 %v4934, %v4922
        %v5211 = vpack.c.bf16 %v4935, %v4923
        %v5212 = vpack.c.bf16 %v4936, %v4924
        %v5213 = vpack.c.bf16 %v4937, %v4925
        %v5214 = vpack.c.bf16 %v4938, %v4926
        %v5215 = vpack.c.bf16 %v4939, %v4927
        %v5216 = vpack.c.bf16 %v4940, %v4928
        %v5217 = vpack.c.bf16 %v4941, %v4929
        %v5218 = vpack.c.bf16 %v4942, %v4930
        %v5219 = vpack.c.bf16 %v4943, %v4931
        %v5220 = vpack.c.bf16 %v4944, %v4932
        %v5221 = vpack.c.bf16 %v4957, %v4945
        %v5222 = vpack.c.bf16 %v4958, %v4946
        %v5223 = vpack.c.bf16 %v4959, %v4947
        %v5224 = vpack.c.bf16 %v4960, %v4948
        %v5225 = vpack.c.bf16 %v4961, %v4949
        %v5226 = vpack.c.bf16 %v4962, %v4950
        %v5227 = vpack.c.bf16 %v4963, %v4951
        %v5228 = vpack.c.bf16 %v4964, %v4952
        %v5229 = vpack.c.bf16 %v4965, %v4953
        %v5230 = vpack.c.bf16 %v4966, %v4954
        %v5231 = vpack.c.bf16 %v4967, %v4955
        %v5232 = vpack.c.bf16 %v4968, %v4956
        %v5233 = vpack.c.bf16 %v4981, %v4969
        %v5234 = vpack.c.bf16 %v4982, %v4970
        %v5235 = vpack.c.bf16 %v4983, %v4971
        %v5236 = vpack.c.bf16 %v4984, %v4972
        %v5237 = vpack.c.bf16 %v4985, %v4973
        %v5238 = vpack.c.bf16 %v4986, %v4974
        %v5239 = vpack.c.bf16 %v4987, %v4975
        %v5240 = vpack.c.bf16 %v4988, %v4976
        %v5241 = vpack.c.bf16 %v4989, %v4977
        %v5242 = vpack.c.bf16 %v4990, %v4978
        %v5243 = vpack.c.bf16 %v4991, %v4979
        %v5244 = vpack.c.bf16 %v4992, %v4980
        %v5245 = vpack.c.bf16 %v5005, %v4993
        %v5246 = vpack.c.bf16 %v5006, %v4994
        %v5247 = vpack.c.bf16 %v5007, %v4995
        %v5248 = vpack.c.bf16 %v5008, %v4996
        %v5249 = vpack.c.bf16 %v5009, %v4997
        %v5250 = vpack.c.bf16 %v5010, %v4998
        %v5251 = vpack.c.bf16 %v5011, %v4999
        %v5252 = vpack.c.bf16 %v5012, %v5000
        %v5253 = vpack.c.bf16 %v5013, %v5001
        %v5254 = vpack.c.bf16 %v5014, %v5002
        %v5255 = vpack.c.bf16 %v5015, %v5003
        %v5256 = vpack.c.bf16 %v5016, %v5004
        %v5257 = vpack.c.bf16 %v5029, %v5017
        %v5258 = vpack.c.bf16 %v5030, %v5018
        %v5259 = vpack.c.bf16 %v5031, %v5019
        %v5260 = vpack.c.bf16 %v5032, %v5020
        %v5261 = vpack.c.bf16 %v5033, %v5021
        %v5262 = vpack.c.bf16 %v5034, %v5022
        %v5263 = vpack.c.bf16 %v5035, %v5023
        %v5264 = vpack.c.bf16 %v5036, %v5024
        %v5265 = vpack.c.bf16 %v5037, %v5025
        %v5266 = vpack.c.bf16 %v5038, %v5026
        %v5267 = vpack.c.bf16 %v5039, %v5027
        %v5268 = vpack.c.bf16 %v5040, %v5028
        %v5269 = vpack.c.bf16 %v5053, %v5041
        %v5270 = vpack.c.bf16 %v5054, %v5042
        %v5271 = vpack.c.bf16 %v5055, %v5043
        %v5272 = vpack.c.bf16 %v5056, %v5044
        %v5273 = vpack.c.bf16 %v5057, %v5045
        %v5274 = vpack.c.bf16 %v5058, %v5046
        %v5275 = vpack.c.bf16 %v5059, %v5047
        %v5276 = vpack.c.bf16 %v5060, %v5048
        %v5277 = vpack.c.bf16 %v5061, %v5049
        %v5278 = vpack.c.bf16 %v5062, %v5050
        %v5279 = vpack.c.bf16 %v5063, %v5051
        %v5280 = vpack.c.bf16 %v5064, %v5052
        %v5281 = vpack.c.bf16 %v5077, %v5065
        %v5282 = vpack.c.bf16 %v5078, %v5066
        %v5283 = vpack.c.bf16 %v5079, %v5067
        %v5284 = vpack.c.bf16 %v5080, %v5068
        %v5285 = vpack.c.bf16 %v5081, %v5069
        %v5286 = vpack.c.bf16 %v5082, %v5070
        %v5287 = vpack.c.bf16 %v5083, %v5071
        %v5288 = vpack.c.bf16 %v5084, %v5072
        %v5289 = vpack.c.bf16 %v5085, %v5073
        %v5290 = vpack.c.bf16 %v5086, %v5074
        %v5291 = vpack.c.bf16 %v5087, %v5075
        %v5292 = vpack.c.bf16 %v5088, %v5076
        %v5293 = vpack.c.bf16 %v5101, %v5089
        %v5294 = vpack.c.bf16 %v5102, %v5090
        %v5295 = vpack.c.bf16 %v5103, %v5091
        %v5296 = vpack.c.bf16 %v5104, %v5092
        %v5297 = vpack.c.bf16 %v5105, %v5093
        %v5298 = vpack.c.bf16 %v5106, %v5094
        %v5299 = vpack.c.bf16 %v5107, %v5095
        %v5300 = vpack.c.bf16 %v5108, %v5096
        %v5301 = vpack.c.bf16 %v5109, %v5097
        %v5302 = vpack.c.bf16 %v5110, %v5098
        %v5303 = vpack.c.bf16 %v5111, %v5099
        %v5304 = vpack.c.bf16 %v5112, %v5100
        %v5305 = vld [vmem:[#allocation8] sm:$0xff]
        %v5306 = vld [vmem:[#allocation8 + $0x8] sm:$0xf]
        %v5307 = vld [vmem:[#allocation8 + $0xc] sm:$0xff]
        %v5308 = vld [vmem:[#allocation8 + $0x14] sm:$0xf]
        %v5309 = vld [vmem:[#allocation8 + $0x18] sm:$0xff]
        %v5310 = vld [vmem:[#allocation8 + $0x20] sm:$0xf]
        %v5311 = vld [vmem:[#allocation8 + $0x24] sm:$0xff]
        %v5312 = vld [vmem:[#allocation8 + $0x2c] sm:$0xf]
        %v5313 = vld [vmem:[#allocation8 + $0x30] sm:$0xff]
        %v5314 = vld [vmem:[#allocation8 + $0x38] sm:$0xf]
        %v5315 = vld [vmem:[#allocation8 + $0x3c] sm:$0xff]
        %v5316 = vld [vmem:[#allocation8 + $0x44] sm:$0xf]
        %v5317 = vld [vmem:[#allocation8 + $0x48] sm:$0xff]
        %v5318 = vld [vmem:[#allocation8 + $0x50] sm:$0xf]
        %v5319 = vld [vmem:[#allocation8 + $0x54] sm:$0xff]
        %v5320 = vld [vmem:[#allocation8 + $0x5c] sm:$0xf]
        %v5321 = vld [vmem:[#allocation8 + $0x60] sm:$0xff]
        %v5322 = vld [vmem:[#allocation8 + $0x68] sm:$0xf]
        %v5323 = vld [vmem:[#allocation8 + $0x6c] sm:$0xff]
        %v5324 = vld [vmem:[#allocation8 + $0x74] sm:$0xf]
        %v5325 = vld [vmem:[#allocation8 + $0x78] sm:$0xff]
        %v5326 = vld [vmem:[#allocation8 + $0x80] sm:$0xf]
        %v5327 = vld [vmem:[#allocation8 + $0x84] sm:$0xff]
        %v5328 = vld [vmem:[#allocation8 + $0x8c] sm:$0xf]
        %v5329 = vld [vmem:[#allocation8 + $0x90] sm:$0xff]
        %v5330 = vld [vmem:[#allocation8 + $0x98] sm:$0xf]
        %v5331 = vld [vmem:[#allocation8 + $0x9c] sm:$0xff]
        %v5332 = vld [vmem:[#allocation8 + $0xa4] sm:$0xf]
        %v5333 = vld [vmem:[#allocation8 + $0xa8] sm:$0xff]
        %v5334 = vld [vmem:[#allocation8 + $0xb0] sm:$0xf]
        %v5335 = vld [vmem:[#allocation8 + $0xb4] sm:$0xff]
        %v5336 = vld [vmem:[#allocation8 + $0xbc] sm:$0xf]
        %v5337 = vld [vmem:[#allocation8 + $0xc0] sm:$0xff]
        %v5338 = vld [vmem:[#allocation8 + $0xc8] sm:$0xf]
        %v5339 = vld [vmem:[#allocation8 + $0xcc] sm:$0xff]
        %v5340 = vld [vmem:[#allocation8 + $0xd4] sm:$0xf]
        %v5341 = vld [vmem:[#allocation8 + $0xd8] sm:$0xff]
        %v5342 = vld [vmem:[#allocation8 + $0xe0] sm:$0xf]
        %v5343 = vld [vmem:[#allocation8 + $0xe4] sm:$0xff]
        %v5344 = vld [vmem:[#allocation8 + $0xec] sm:$0xf]
        %v5345 = vld [vmem:[#allocation8 + $0xf0] sm:$0xff]
        %v5346 = vld [vmem:[#allocation8 + $0xf8] sm:$0xf]
        %v5347 = vld [vmem:[#allocation8 + $0xfc] sm:$0xff]
        %v5348 = vld [vmem:[#allocation8 + $0x104] sm:$0xf]
        %v5349 = vld [vmem:[#allocation8 + $0x108] sm:$0xff]
        %v5350 = vld [vmem:[#allocation8 + $0x110] sm:$0xf]
        %v5351 = vld [vmem:[#allocation8 + $0x114] sm:$0xff]
        %v5352 = vld [vmem:[#allocation8 + $0x11c] sm:$0xf]
        %v5353 = vld [vmem:[#allocation8 + $0x120] sm:$0xff]
        %v5354 = vld [vmem:[#allocation8 + $0x128] sm:$0xf]
        %v5355 = vld [vmem:[#allocation8 + $0x12c] sm:$0xff]
        %v5356 = vld [vmem:[#allocation8 + $0x134] sm:$0xf]
        %v5357 = vld [vmem:[#allocation8 + $0x138] sm:$0xff]
        %v5358 = vld [vmem:[#allocation8 + $0x140] sm:$0xf]
        %v5359 = vld [vmem:[#allocation8 + $0x144] sm:$0xff]
        %v5360 = vld [vmem:[#allocation8 + $0x14c] sm:$0xf]
        %v5361 = vld [vmem:[#allocation8 + $0x150] sm:$0xff]
        %v5362 = vld [vmem:[#allocation8 + $0x158] sm:$0xf]
        %v5363 = vld [vmem:[#allocation8 + $0x15c] sm:$0xff]
        %v5364 = vld [vmem:[#allocation8 + $0x164] sm:$0xf]
        %v5365 = vld [vmem:[#allocation8 + $0x168] sm:$0xff]
        %v5366 = vld [vmem:[#allocation8 + $0x170] sm:$0xf]
        %v5367 = vld [vmem:[#allocation8 + $0x174] sm:$0xff]
        %v5368 = vld [vmem:[#allocation8 + $0x17c] sm:$0xf]
        %v5369 = vld [vmem:[#allocation8 + $0x180] sm:$0xff]
        %v5370 = vld [vmem:[#allocation8 + $0x188] sm:$0xf]
        %v5371 = vld [vmem:[#allocation8 + $0x18c] sm:$0xff]
        %v5372 = vld [vmem:[#allocation8 + $0x194] sm:$0xf]
        %v5373 = vld [vmem:[#allocation8 + $0x198] sm:$0xff]
        %v5374 = vld [vmem:[#allocation8 + $0x1a0] sm:$0xf]
        %v5375 = vld [vmem:[#allocation8 + $0x1a4] sm:$0xff]
        %v5376 = vld [vmem:[#allocation8 + $0x1ac] sm:$0xf]
        %v5377 = vld [vmem:[#allocation8 + $0x1b0] sm:$0xff]
        %v5378 = vld [vmem:[#allocation8 + $0x1b8] sm:$0xf]
        %v5379 = vld [vmem:[#allocation8 + $0x1bc] sm:$0xff]
        %v5380 = vld [vmem:[#allocation8 + $0x1c4] sm:$0xf]
        %v5381 = vld [vmem:[#allocation8 + $0x1c8] sm:$0xff]
        %v5382 = vld [vmem:[#allocation8 + $0x1d0] sm:$0xf]
        %v5383 = vld [vmem:[#allocation8 + $0x1d4] sm:$0xff]
        %v5384 = vld [vmem:[#allocation8 + $0x1dc] sm:$0xf]
        %v5385 = vld [vmem:[#allocation8 + $0x1e0] sm:$0xff]
        %v5386 = vld [vmem:[#allocation8 + $0x1e8] sm:$0xf]
        %v5387 = vld [vmem:[#allocation8 + $0x1ec] sm:$0xff]
        %v5388 = vld [vmem:[#allocation8 + $0x1f4] sm:$0xf]
        %v5389 = vld [vmem:[#allocation8 + $0x1f8] sm:$0xff]
        %v5390 = vld [vmem:[#allocation8 + $0x200] sm:$0xf]
        %v5391 = vld [vmem:[#allocation8 + $0x204] sm:$0xff]
        %v5392 = vld [vmem:[#allocation8 + $0x20c] sm:$0xf]
        %v5393 = vld [vmem:[#allocation8 + $0x210] sm:$0xff]
        %v5394 = vld [vmem:[#allocation8 + $0x218] sm:$0xf]
        %v5395 = vld [vmem:[#allocation8 + $0x21c] sm:$0xff]
        %v5396 = vld [vmem:[#allocation8 + $0x224] sm:$0xf]
        %v5397 = vld [vmem:[#allocation8 + $0x228] sm:$0xff]
        %v5398 = vld [vmem:[#allocation8 + $0x230] sm:$0xf]
        %v5399 = vld [vmem:[#allocation8 + $0x234] sm:$0xff]
        %v5400 = vld [vmem:[#allocation8 + $0x23c] sm:$0xf]
        %v5401 = vld [vmem:[#allocation8 + $0x240] sm:$0xff]
        %v5402 = vld [vmem:[#allocation8 + $0x248] sm:$0xf]
        %v5403 = vld [vmem:[#allocation8 + $0x24c] sm:$0xff]
        %v5404 = vld [vmem:[#allocation8 + $0x254] sm:$0xf]
        %v5405 = vld [vmem:[#allocation8 + $0x258] sm:$0xff]
        %v5406 = vld [vmem:[#allocation8 + $0x260] sm:$0xf]
        %v5407 = vld [vmem:[#allocation8 + $0x264] sm:$0xff]
        %v5408 = vld [vmem:[#allocation8 + $0x26c] sm:$0xf]
        %v5409 = vld [vmem:[#allocation8 + $0x270] sm:$0xff]
        %v5410 = vld [vmem:[#allocation8 + $0x278] sm:$0xf]
        %v5411 = vld [vmem:[#allocation8 + $0x27c] sm:$0xff]
        %v5412 = vld [vmem:[#allocation8 + $0x284] sm:$0xf]
        %v5413 = vld [vmem:[#allocation8 + $0x288] sm:$0xff]
        %v5414 = vld [vmem:[#allocation8 + $0x290] sm:$0xf]
        %v5415 = vld [vmem:[#allocation8 + $0x294] sm:$0xff]
        %v5416 = vld [vmem:[#allocation8 + $0x29c] sm:$0xf]
        %v5417 = vld [vmem:[#allocation8 + $0x2a0] sm:$0xff]
        %v5418 = vld [vmem:[#allocation8 + $0x2a8] sm:$0xf]
        %v5419 = vld [vmem:[#allocation8 + $0x2ac] sm:$0xff]
        %v5420 = vld [vmem:[#allocation8 + $0x2b4] sm:$0xf]
        %v5421 = vld [vmem:[#allocation8 + $0x2b8] sm:$0xff]
        %v5422 = vld [vmem:[#allocation8 + $0x2c0] sm:$0xf]
        %v5423 = vld [vmem:[#allocation8 + $0x2c4] sm:$0xff]
        %v5424 = vld [vmem:[#allocation8 + $0x2cc] sm:$0xf]
        %v5425 = vld [vmem:[#allocation8 + $0x2d0] sm:$0xff]
        %v5426 = vld [vmem:[#allocation8 + $0x2d8] sm:$0xf]
        %v5427 = vld [vmem:[#allocation8 + $0x2dc] sm:$0xff]
        %v5428 = vld [vmem:[#allocation8 + $0x2e4] sm:$0xf]
        %v5429 = vld [vmem:[#allocation8 + $0x2e8] sm:$0xff]
        %v5430 = vld [vmem:[#allocation8 + $0x2f0] sm:$0xf]
        %v5431 = vld [vmem:[#allocation8 + $0x2f4] sm:$0xff]
        %v5432 = vld [vmem:[#allocation8 + $0x2fc] sm:$0xf]
        %v5433 = vld [vmem:[#allocation8 + $0x300] sm:$0xff]
        %v5434 = vld [vmem:[#allocation8 + $0x308] sm:$0xf]
        %v5435 = vld [vmem:[#allocation8 + $0x30c] sm:$0xff]
        %v5436 = vld [vmem:[#allocation8 + $0x314] sm:$0xf]
        %v5437 = vld [vmem:[#allocation8 + $0x318] sm:$0xff]
        %v5438 = vld [vmem:[#allocation8 + $0x320] sm:$0xf]
        %v5439 = vld [vmem:[#allocation8 + $0x324] sm:$0xff]
        %v5440 = vld [vmem:[#allocation8 + $0x32c] sm:$0xf]
        %v5441 = vld [vmem:[#allocation8 + $0x330] sm:$0xff]
        %v5442 = vld [vmem:[#allocation8 + $0x338] sm:$0xf]
        %v5443 = vld [vmem:[#allocation8 + $0x33c] sm:$0xff]
        %v5444 = vld [vmem:[#allocation8 + $0x344] sm:$0xf]
        %v5445 = vld [vmem:[#allocation8 + $0x348] sm:$0xff]
        %v5446 = vld [vmem:[#allocation8 + $0x350] sm:$0xf]
        %v5447 = vld [vmem:[#allocation8 + $0x354] sm:$0xff]
        %v5448 = vld [vmem:[#allocation8 + $0x35c] sm:$0xf]
        %v5449 = vld [vmem:[#allocation8 + $0x360] sm:$0xff]
        %v5450 = vld [vmem:[#allocation8 + $0x368] sm:$0xf]
        %v5451 = vld [vmem:[#allocation8 + $0x36c] sm:$0xff]
        %v5452 = vld [vmem:[#allocation8 + $0x374] sm:$0xf]
        %v5453 = vld [vmem:[#allocation8 + $0x378] sm:$0xff]
        %v5454 = vld [vmem:[#allocation8 + $0x380] sm:$0xf]
        %v5455 = vld [vmem:[#allocation8 + $0x384] sm:$0xff]
        %v5456 = vld [vmem:[#allocation8 + $0x38c] sm:$0xf]
        %v5457 = vld [vmem:[#allocation8 + $0x390] sm:$0xff]
        %v5458 = vld [vmem:[#allocation8 + $0x398] sm:$0xf]
        %v5459 = vld [vmem:[#allocation8 + $0x39c] sm:$0xff]
        %v5460 = vld [vmem:[#allocation8 + $0x3a4] sm:$0xf]
        %v5461 = vld [vmem:[#allocation8 + $0x3a8] sm:$0xff]
        %v5462 = vld [vmem:[#allocation8 + $0x3b0] sm:$0xf]
        %v5463 = vld [vmem:[#allocation8 + $0x3b4] sm:$0xff]
        %v5464 = vld [vmem:[#allocation8 + $0x3bc] sm:$0xf]
        %v5465 = vld [vmem:[#allocation8 + $0x3c0] sm:$0xff]
        %v5466 = vld [vmem:[#allocation8 + $0x3c8] sm:$0xf]
        %v5467 = vld [vmem:[#allocation8 + $0x3cc] sm:$0xff]
        %v5468 = vld [vmem:[#allocation8 + $0x3d4] sm:$0xf]
        %v5469 = vld [vmem:[#allocation8 + $0x3d8] sm:$0xff]
        %v5470 = vld [vmem:[#allocation8 + $0x3e0] sm:$0xf]
        %v5471 = vld [vmem:[#allocation8 + $0x3e4] sm:$0xff]
        %v5472 = vld [vmem:[#allocation8 + $0x3ec] sm:$0xf]
        %v5473 = vld [vmem:[#allocation8 + $0x3f0] sm:$0xff]
        %v5474 = vld [vmem:[#allocation8 + $0x3f8] sm:$0xf]
        %v5475 = vld [vmem:[#allocation8 + $0x3fc] sm:$0xff]
        %v5476 = vld [vmem:[#allocation8 + $0x404] sm:$0xf]
        %v5477 = vld [vmem:[#allocation8 + $0x408] sm:$0xff]
        %v5478 = vld [vmem:[#allocation8 + $0x410] sm:$0xf]
        %v5479 = vld [vmem:[#allocation8 + $0x414] sm:$0xff]
        %v5480 = vld [vmem:[#allocation8 + $0x41c] sm:$0xf]
        %v5481 = vld [vmem:[#allocation8 + $0x420] sm:$0xff]
        %v5482 = vld [vmem:[#allocation8 + $0x428] sm:$0xf]
        %v5483 = vld [vmem:[#allocation8 + $0x42c] sm:$0xff]
        %v5484 = vld [vmem:[#allocation8 + $0x434] sm:$0xf]
        %v5485 = vld [vmem:[#allocation8 + $0x438] sm:$0xff]
        %v5486 = vld [vmem:[#allocation8 + $0x440] sm:$0xf]
        %v5487 = vld [vmem:[#allocation8 + $0x444] sm:$0xff]
        %v5488 = vld [vmem:[#allocation8 + $0x44c] sm:$0xf]
        %v5489 = vld [vmem:[#allocation8 + $0x450] sm:$0xff]
        %v5490 = vld [vmem:[#allocation8 + $0x458] sm:$0xf]
        %v5491 = vld [vmem:[#allocation8 + $0x45c] sm:$0xff]
        %v5492 = vld [vmem:[#allocation8 + $0x464] sm:$0xf]
        %v5493 = vld [vmem:[#allocation8 + $0x468] sm:$0xff]
        %v5494 = vld [vmem:[#allocation8 + $0x470] sm:$0xf]
        %v5495 = vld [vmem:[#allocation8 + $0x474] sm:$0xff]
        %v5496 = vld [vmem:[#allocation8 + $0x47c] sm:$0xf]
        %v5497 = vld [vmem:[#allocation8 + $0x480] sm:$0xff]
        %v5498 = vld [vmem:[#allocation8 + $0x488] sm:$0xf]
        %v5499 = vld [vmem:[#allocation8 + $0x48c] sm:$0xff]
        %v5500 = vld [vmem:[#allocation8 + $0x494] sm:$0xf]
        %v5501 = vld [vmem:[#allocation8 + $0x498] sm:$0xff]
        %v5502 = vld [vmem:[#allocation8 + $0x4a0] sm:$0xf]
        %v5503 = vld [vmem:[#allocation8 + $0x4a4] sm:$0xff]
        %v5504 = vld [vmem:[#allocation8 + $0x4ac] sm:$0xf]
        %v5505 = vld [vmem:[#allocation8 + $0x4b0] sm:$0xff]
        %v5506 = vld [vmem:[#allocation8 + $0x4b8] sm:$0xf]
        %v5507 = vld [vmem:[#allocation8 + $0x4bc] sm:$0xff]
        %v5508 = vld [vmem:[#allocation8 + $0x4c4] sm:$0xf]
        %v5509 = vld [vmem:[#allocation8 + $0x4c8] sm:$0xff]
        %v5510 = vld [vmem:[#allocation8 + $0x4d0] sm:$0xf]
        %v5511 = vld [vmem:[#allocation8 + $0x4d4] sm:$0xff]
        %v5512 = vld [vmem:[#allocation8 + $0x4dc] sm:$0xf]
        %v5513 = vld [vmem:[#allocation8 + $0x4e0] sm:$0xff]
        %v5514 = vld [vmem:[#allocation8 + $0x4e8] sm:$0xf]
        %v5515 = vld [vmem:[#allocation8 + $0x4ec] sm:$0xff]
        %v5516 = vld [vmem:[#allocation8 + $0x4f4] sm:$0xf]
        %v5517 = vld [vmem:[#allocation8 + $0x4f8] sm:$0xff]
        %v5518 = vld [vmem:[#allocation8 + $0x500] sm:$0xf]
        %v5519 = vld [vmem:[#allocation8 + $0x504] sm:$0xff]
        %v5520 = vld [vmem:[#allocation8 + $0x50c] sm:$0xf]
        %v5521 = vld [vmem:[#allocation8 + $0x510] sm:$0xff]
        %v5522 = vld [vmem:[#allocation8 + $0x518] sm:$0xf]
        %v5523 = vld [vmem:[#allocation8 + $0x51c] sm:$0xff]
        %v5524 = vld [vmem:[#allocation8 + $0x524] sm:$0xf]
        %v5525 = vld [vmem:[#allocation8 + $0x528] sm:$0xff]
        %v5526 = vld [vmem:[#allocation8 + $0x530] sm:$0xf]
        %v5527 = vld [vmem:[#allocation8 + $0x534] sm:$0xff]
        %v5528 = vld [vmem:[#allocation8 + $0x53c] sm:$0xf]
        %v5529 = vld [vmem:[#allocation8 + $0x540] sm:$0xff]
        %v5530 = vld [vmem:[#allocation8 + $0x548] sm:$0xf]
        %v5531 = vld [vmem:[#allocation8 + $0x54c] sm:$0xff]
        %v5532 = vld [vmem:[#allocation8 + $0x554] sm:$0xf]
        %v5533 = vld [vmem:[#allocation8 + $0x558] sm:$0xff]
        %v5534 = vld [vmem:[#allocation8 + $0x560] sm:$0xf]
        %v5535 = vld [vmem:[#allocation8 + $0x564] sm:$0xff]
        %v5536 = vld [vmem:[#allocation8 + $0x56c] sm:$0xf]
        %v5537 = vld [vmem:[#allocation8 + $0x570] sm:$0xff]
        %v5538 = vld [vmem:[#allocation8 + $0x578] sm:$0xf]
        %v5539 = vld [vmem:[#allocation8 + $0x57c] sm:$0xff]
        %v5540 = vld [vmem:[#allocation8 + $0x584] sm:$0xf]
        %v5541 = vld [vmem:[#allocation8 + $0x588] sm:$0xff]
        %v5542 = vld [vmem:[#allocation8 + $0x590] sm:$0xf]
        %v5543 = vld [vmem:[#allocation8 + $0x594] sm:$0xff]
        %v5544 = vld [vmem:[#allocation8 + $0x59c] sm:$0xf]
        %v5545 = vld [vmem:[#allocation8 + $0x5a0] sm:$0xff]
        %v5546 = vld [vmem:[#allocation8 + $0x5a8] sm:$0xf]
        %v5547 = vld [vmem:[#allocation8 + $0x5ac] sm:$0xff]
        %v5548 = vld [vmem:[#allocation8 + $0x5b4] sm:$0xf]
        %v5549 = vld [vmem:[#allocation8 + $0x5b8] sm:$0xff]
        %v5550 = vld [vmem:[#allocation8 + $0x5c0] sm:$0xf]
        %v5551 = vld [vmem:[#allocation8 + $0x5c4] sm:$0xff]
        %v5552 = vld [vmem:[#allocation8 + $0x5cc] sm:$0xf]
        %v5553 = vld [vmem:[#allocation8 + $0x5d0] sm:$0xff]
        %v5554 = vld [vmem:[#allocation8 + $0x5d8] sm:$0xf]
        %v5555 = vld [vmem:[#allocation8 + $0x5dc] sm:$0xff]
        %v5556 = vld [vmem:[#allocation8 + $0x5e4] sm:$0xf]
        %v5557 = vld [vmem:[#allocation8 + $0x5e8] sm:$0xff]
        %v5558 = vld [vmem:[#allocation8 + $0x5f0] sm:$0xf]
        %v5559 = vld [vmem:[#allocation8 + $0x5f4] sm:$0xff]
        %v5560 = vld [vmem:[#allocation8 + $0x5fc] sm:$0xf]
        %v5561 = vld [vmem:[#allocation8 + $0x600] sm:$0xff]
        %v5562 = vld [vmem:[#allocation8 + $0x608] sm:$0xf]
        %v5563 = vld [vmem:[#allocation8 + $0x60c] sm:$0xff]
        %v5564 = vld [vmem:[#allocation8 + $0x614] sm:$0xf]
        %v5565 = vld [vmem:[#allocation8 + $0x618] sm:$0xff]
        %v5566 = vld [vmem:[#allocation8 + $0x620] sm:$0xf]
        %v5567 = vld [vmem:[#allocation8 + $0x624] sm:$0xff]
        %v5568 = vld [vmem:[#allocation8 + $0x62c] sm:$0xf]
        %v5569 = vld [vmem:[#allocation8 + $0x630] sm:$0xff]
        %v5570 = vld [vmem:[#allocation8 + $0x638] sm:$0xf]
        %v5571 = vld [vmem:[#allocation8 + $0x63c] sm:$0xff]
        %v5572 = vld [vmem:[#allocation8 + $0x644] sm:$0xf]
        %v5573 = vld [vmem:[#allocation8 + $0x648] sm:$0xff]
        %v5574 = vld [vmem:[#allocation8 + $0x650] sm:$0xf]
        %v5575 = vld [vmem:[#allocation8 + $0x654] sm:$0xff]
        %v5576 = vld [vmem:[#allocation8 + $0x65c] sm:$0xf]
        %v5577 = vld [vmem:[#allocation8 + $0x660] sm:$0xff]
        %v5578 = vld [vmem:[#allocation8 + $0x668] sm:$0xf]
        %v5579 = vld [vmem:[#allocation8 + $0x66c] sm:$0xff]
        %v5580 = vld [vmem:[#allocation8 + $0x674] sm:$0xf]
        %v5581 = vld [vmem:[#allocation8 + $0x678] sm:$0xff]
        %v5582 = vld [vmem:[#allocation8 + $0x680] sm:$0xf]
        %v5583 = vld [vmem:[#allocation8 + $0x684] sm:$0xff]
        %v5584 = vld [vmem:[#allocation8 + $0x68c] sm:$0xf]
        %v5585 = vld [vmem:[#allocation8 + $0x690] sm:$0xff]
        %v5586 = vld [vmem:[#allocation8 + $0x698] sm:$0xf]
        %v5587 = vld [vmem:[#allocation8 + $0x69c] sm:$0xff]
        %v5588 = vld [vmem:[#allocation8 + $0x6a4] sm:$0xf]
        %v5589 = vld [vmem:[#allocation8 + $0x6a8] sm:$0xff]
        %v5590 = vld [vmem:[#allocation8 + $0x6b0] sm:$0xf]
        %v5591 = vld [vmem:[#allocation8 + $0x6b4] sm:$0xff]
        %v5592 = vld [vmem:[#allocation8 + $0x6bc] sm:$0xf]
        %v5593 = vld [vmem:[#allocation8 + $0x6c0] sm:$0xff]
        %v5594 = vld [vmem:[#allocation8 + $0x6c8] sm:$0xf]
        %v5595 = vld [vmem:[#allocation8 + $0x6cc] sm:$0xff]
        %v5596 = vld [vmem:[#allocation8 + $0x6d4] sm:$0xf]
        %v5597 = vld [vmem:[#allocation8 + $0x6d8] sm:$0xff]
        %v5598 = vld [vmem:[#allocation8 + $0x6e0] sm:$0xf]
        %v5599 = vld [vmem:[#allocation8 + $0x6e4] sm:$0xff]
        %v5600 = vld [vmem:[#allocation8 + $0x6ec] sm:$0xf]
        %v5601 = vld [vmem:[#allocation8 + $0x6f0] sm:$0xff]
        %v5602 = vld [vmem:[#allocation8 + $0x6f8] sm:$0xf]
        %v5603 = vld [vmem:[#allocation8 + $0x6fc] sm:$0xff]
        %v5604 = vld [vmem:[#allocation8 + $0x704] sm:$0xf]
        %v5605 = vld [vmem:[#allocation8 + $0x708] sm:$0xff]
        %v5606 = vld [vmem:[#allocation8 + $0x710] sm:$0xf]
        %v5607 = vld [vmem:[#allocation8 + $0x714] sm:$0xff]
        %v5608 = vld [vmem:[#allocation8 + $0x71c] sm:$0xf]
        %v5609 = vld [vmem:[#allocation8 + $0x720] sm:$0xff]
        %v5610 = vld [vmem:[#allocation8 + $0x728] sm:$0xf]
        %v5611 = vld [vmem:[#allocation8 + $0x72c] sm:$0xff]
        %v5612 = vld [vmem:[#allocation8 + $0x734] sm:$0xf]
        %v5613 = vld [vmem:[#allocation8 + $0x738] sm:$0xff]
        %v5614 = vld [vmem:[#allocation8 + $0x740] sm:$0xf]
        %v5615 = vld [vmem:[#allocation8 + $0x744] sm:$0xff]
        %v5616 = vld [vmem:[#allocation8 + $0x74c] sm:$0xf]
        %v5617 = vld [vmem:[#allocation8 + $0x750] sm:$0xff]
        %v5618 = vld [vmem:[#allocation8 + $0x758] sm:$0xf]
        %v5619 = vld [vmem:[#allocation8 + $0x75c] sm:$0xff]
        %v5620 = vld [vmem:[#allocation8 + $0x764] sm:$0xf]
        %v5621 = vld [vmem:[#allocation8 + $0x768] sm:$0xff]
        %v5622 = vld [vmem:[#allocation8 + $0x770] sm:$0xf]
        %v5623 = vld [vmem:[#allocation8 + $0x774] sm:$0xff]
        %v5624 = vld [vmem:[#allocation8 + $0x77c] sm:$0xf]
        %v5625 = vld [vmem:[#allocation8 + $0x780] sm:$0xff]
        %v5626 = vld [vmem:[#allocation8 + $0x788] sm:$0xf]
        %v5627 = vld [vmem:[#allocation8 + $0x78c] sm:$0xff]
        %v5628 = vld [vmem:[#allocation8 + $0x794] sm:$0xf]
        %v5629 = vld [vmem:[#allocation8 + $0x798] sm:$0xff]
        %v5630 = vld [vmem:[#allocation8 + $0x7a0] sm:$0xf]
        %v5631 = vld [vmem:[#allocation8 + $0x7a4] sm:$0xff]
        %v5632 = vld [vmem:[#allocation8 + $0x7ac] sm:$0xf]
        %v5633 = vld [vmem:[#allocation8 + $0x7b0] sm:$0xff]
        %v5634 = vld [vmem:[#allocation8 + $0x7b8] sm:$0xf]
        %v5635 = vld [vmem:[#allocation8 + $0x7bc] sm:$0xff]
        %v5636 = vld [vmem:[#allocation8 + $0x7c4] sm:$0xf]
        %v5637 = vld [vmem:[#allocation8 + $0x7c8] sm:$0xff]
        %v5638 = vld [vmem:[#allocation8 + $0x7d0] sm:$0xf]
        %v5639 = vld [vmem:[#allocation8 + $0x7d4] sm:$0xff]
        %v5640 = vld [vmem:[#allocation8 + $0x7dc] sm:$0xf]
        %v5641 = vld [vmem:[#allocation8 + $0x7e0] sm:$0xff]
        %v5642 = vld [vmem:[#allocation8 + $0x7e8] sm:$0xf]
        %v5643 = vld [vmem:[#allocation8 + $0x7ec] sm:$0xff]
        %v5644 = vld [vmem:[#allocation8 + $0x7f4] sm:$0xf]
        %v5645 = vld [vmem:[#allocation8 + $0x7f8] sm:$0xff]
        %v5646 = vld [vmem:[#allocation8 + $0x800] sm:$0xf]
        %v5647 = vld [vmem:[#allocation8 + $0x804] sm:$0xff]
        %v5648 = vld [vmem:[#allocation8 + $0x80c] sm:$0xf]
        %v5649 = vld [vmem:[#allocation8 + $0x810] sm:$0xff]
        %v5650 = vld [vmem:[#allocation8 + $0x818] sm:$0xf]
        %v5651 = vld [vmem:[#allocation8 + $0x81c] sm:$0xff]
        %v5652 = vld [vmem:[#allocation8 + $0x824] sm:$0xf]
        %v5653 = vld [vmem:[#allocation8 + $0x828] sm:$0xff]
        %v5654 = vld [vmem:[#allocation8 + $0x830] sm:$0xf]
        %v5655 = vld [vmem:[#allocation8 + $0x834] sm:$0xff]
        %v5656 = vld [vmem:[#allocation8 + $0x83c] sm:$0xf]
        %v5657 = vld [vmem:[#allocation8 + $0x840] sm:$0xff]
        %v5658 = vld [vmem:[#allocation8 + $0x848] sm:$0xf]
        %v5659 = vld [vmem:[#allocation8 + $0x84c] sm:$0xff]
        %v5660 = vld [vmem:[#allocation8 + $0x854] sm:$0xf]
        %v5661 = vld [vmem:[#allocation8 + $0x858] sm:$0xff]
        %v5662 = vld [vmem:[#allocation8 + $0x860] sm:$0xf]
        %v5663 = vld [vmem:[#allocation8 + $0x864] sm:$0xff]
        %v5664 = vld [vmem:[#allocation8 + $0x86c] sm:$0xf]
        %v5665 = vld [vmem:[#allocation8 + $0x870] sm:$0xff]
        %v5666 = vld [vmem:[#allocation8 + $0x878] sm:$0xf]
        %v5667 = vld [vmem:[#allocation8 + $0x87c] sm:$0xff]
        %v5668 = vld [vmem:[#allocation8 + $0x884] sm:$0xf]
        %v5669 = vld [vmem:[#allocation8 + $0x888] sm:$0xff]
        %v5670 = vld [vmem:[#allocation8 + $0x890] sm:$0xf]
        %v5671 = vld [vmem:[#allocation8 + $0x894] sm:$0xff]
        %v5672 = vld [vmem:[#allocation8 + $0x89c] sm:$0xf]
        %v5673 = vld [vmem:[#allocation8 + $0x8a0] sm:$0xff]
        %v5674 = vld [vmem:[#allocation8 + $0x8a8] sm:$0xf]
        %v5675 = vld [vmem:[#allocation8 + $0x8ac] sm:$0xff]
        %v5676 = vld [vmem:[#allocation8 + $0x8b4] sm:$0xf]
        %v5677 = vld [vmem:[#allocation8 + $0x8b8] sm:$0xff]
        %v5678 = vld [vmem:[#allocation8 + $0x8c0] sm:$0xf]
        %v5679 = vld [vmem:[#allocation8 + $0x8c4] sm:$0xff]
        %v5680 = vld [vmem:[#allocation8 + $0x8cc] sm:$0xf]
        %v5681 = vld [vmem:[#allocation8 + $0x8d0] sm:$0xff]
        %v5682 = vld [vmem:[#allocation8 + $0x8d8] sm:$0xf]
        %v5683 = vld [vmem:[#allocation8 + $0x8dc] sm:$0xff]
        %v5684 = vld [vmem:[#allocation8 + $0x8e4] sm:$0xf]
        %v5685 = vld [vmem:[#allocation8 + $0x8e8] sm:$0xff]
        %v5686 = vld [vmem:[#allocation8 + $0x8f0] sm:$0xf]
        %v5687 = vld [vmem:[#allocation8 + $0x8f4] sm:$0xff]
        %v5688 = vld [vmem:[#allocation8 + $0x8fc] sm:$0xf]
        %v5689 = vld [vmem:[#allocation10] sm:$0x7]
        %v5691 = vlaneseq
        %v5692 = vshrl.u32 %v5691, 7
        %v5693 = vsub.s32 0, %v5692
        %v5694 = vrot.slane %v5689, %v5693
        %v5695 = vlaneseq
        %v5696 = vshrl.u32 %v5695, 7
        %v5697 = vsub.s32 1, %v5696
        %v5698 = vrot.slane %v5689, %v5697
        %v5699 = vlaneseq
        %v5700 = vshrl.u32 %v5699, 7
        %v5701 = vsub.s32 2, %v5700
        %v5702 = vrot.slane %v5689, %v5701
        %v6090 = vunpack.c.l.b16 %v5305
        %v6091 = vunpack.c.h.b16 %v5305
        %v6092 = vunpack.c.l.b16 %v5306
        %v6093 = vunpack.c.l.b16 %v5307
        %v6094 = vunpack.c.h.b16 %v5307
        %v6095 = vunpack.c.l.b16 %v5308
        %v6096 = vunpack.c.l.b16 %v5309
        %v6097 = vunpack.c.h.b16 %v5309
        %v6098 = vunpack.c.l.b16 %v5310
        %v6099 = vunpack.c.l.b16 %v5311
        %v6100 = vunpack.c.h.b16 %v5311
        %v6101 = vunpack.c.l.b16 %v5312
        %v6102 = vunpack.c.l.b16 %v5313
        %v6103 = vunpack.c.h.b16 %v5313
        %v6104 = vunpack.c.l.b16 %v5314
        %v6105 = vunpack.c.l.b16 %v5315
        %v6106 = vunpack.c.h.b16 %v5315
        %v6107 = vunpack.c.l.b16 %v5316
        %v6108 = vunpack.c.l.b16 %v5317
        %v6109 = vunpack.c.h.b16 %v5317
        %v6110 = vunpack.c.l.b16 %v5318
        %v6111 = vunpack.c.l.b16 %v5319
        %v6112 = vunpack.c.h.b16 %v5319
        %v6113 = vunpack.c.l.b16 %v5320
        %v6114 = vunpack.c.l.b16 %v5321
        %v6115 = vunpack.c.h.b16 %v5321
        %v6116 = vunpack.c.l.b16 %v5322
        %v6117 = vunpack.c.l.b16 %v5323
        %v6118 = vunpack.c.h.b16 %v5323
        %v6119 = vunpack.c.l.b16 %v5324
        %v6120 = vunpack.c.l.b16 %v5325
        %v6121 = vunpack.c.h.b16 %v5325
        %v6122 = vunpack.c.l.b16 %v5326
        %v6123 = vunpack.c.l.b16 %v5327
        %v6124 = vunpack.c.h.b16 %v5327
        %v6125 = vunpack.c.l.b16 %v5328
        %v6126 = vunpack.c.l.b16 %v5329
        %v6127 = vunpack.c.h.b16 %v5329
        %v6128 = vunpack.c.l.b16 %v5330
        %v6129 = vunpack.c.l.b16 %v5331
        %v6130 = vunpack.c.h.b16 %v5331
        %v6131 = vunpack.c.l.b16 %v5332
        %v6132 = vunpack.c.l.b16 %v5333
        %v6133 = vunpack.c.h.b16 %v5333
        %v6134 = vunpack.c.l.b16 %v5334
        %v6135 = vunpack.c.l.b16 %v5335
        %v6136 = vunpack.c.h.b16 %v5335
        %v6137 = vunpack.c.l.b16 %v5336
        %v6138 = vunpack.c.l.b16 %v5337
        %v6139 = vunpack.c.h.b16 %v5337
        %v6140 = vunpack.c.l.b16 %v5338
        %v6141 = vunpack.c.l.b16 %v5339
        %v6142 = vunpack.c.h.b16 %v5339
        %v6143 = vunpack.c.l.b16 %v5340
        %v6144 = vunpack.c.l.b16 %v5341
        %v6145 = vunpack.c.h.b16 %v5341
        %v6146 = vunpack.c.l.b16 %v5342
        %v6147 = vunpack.c.l.b16 %v5343
        %v6148 = vunpack.c.h.b16 %v5343
        %v6149 = vunpack.c.l.b16 %v5344
        %v6150 = vunpack.c.l.b16 %v5345
        %v6151 = vunpack.c.h.b16 %v5345
        %v6152 = vunpack.c.l.b16 %v5346
        %v6153 = vunpack.c.l.b16 %v5347
        %v6154 = vunpack.c.h.b16 %v5347
        %v6155 = vunpack.c.l.b16 %v5348
        %v6156 = vunpack.c.l.b16 %v5349
        %v6157 = vunpack.c.h.b16 %v5349
        %v6158 = vunpack.c.l.b16 %v5350
        %v6159 = vunpack.c.l.b16 %v5351
        %v6160 = vunpack.c.h.b16 %v5351
        %v6161 = vunpack.c.l.b16 %v5352
        %v6162 = vunpack.c.l.b16 %v5353
        %v6163 = vunpack.c.h.b16 %v5353
        %v6164 = vunpack.c.l.b16 %v5354
        %v6165 = vunpack.c.l.b16 %v5355
        %v6166 = vunpack.c.h.b16 %v5355
        %v6167 = vunpack.c.l.b16 %v5356
        %v6168 = vunpack.c.l.b16 %v5357
        %v6169 = vunpack.c.h.b16 %v5357
        %v6170 = vunpack.c.l.b16 %v5358
        %v6171 = vunpack.c.l.b16 %v5359
        %v6172 = vunpack.c.h.b16 %v5359
        %v6173 = vunpack.c.l.b16 %v5360
        %v6174 = vunpack.c.l.b16 %v5361
        %v6175 = vunpack.c.h.b16 %v5361
        %v6176 = vunpack.c.l.b16 %v5362
        %v6177 = vunpack.c.l.b16 %v5363
        %v6178 = vunpack.c.h.b16 %v5363
        %v6179 = vunpack.c.l.b16 %v5364
        %v6180 = vunpack.c.l.b16 %v5365
        %v6181 = vunpack.c.h.b16 %v5365
        %v6182 = vunpack.c.l.b16 %v5366
        %v6183 = vunpack.c.l.b16 %v5367
        %v6184 = vunpack.c.h.b16 %v5367
        %v6185 = vunpack.c.l.b16 %v5368
        %v6186 = vunpack.c.l.b16 %v5369
        %v6187 = vunpack.c.h.b16 %v5369
        %v6188 = vunpack.c.l.b16 %v5370
        %v6189 = vunpack.c.l.b16 %v5371
        %v6190 = vunpack.c.h.b16 %v5371
        %v6191 = vunpack.c.l.b16 %v5372
        %v6192 = vunpack.c.l.b16 %v5373
        %v6193 = vunpack.c.h.b16 %v5373
        %v6194 = vunpack.c.l.b16 %v5374
        %v6195 = vunpack.c.l.b16 %v5375
        %v6196 = vunpack.c.h.b16 %v5375
        %v6197 = vunpack.c.l.b16 %v5376
        %v6198 = vunpack.c.l.b16 %v5377
        %v6199 = vunpack.c.h.b16 %v5377
        %v6200 = vunpack.c.l.b16 %v5378
        %v6201 = vunpack.c.l.b16 %v5379
        %v6202 = vunpack.c.h.b16 %v5379
        %v6203 = vunpack.c.l.b16 %v5380
        %v6204 = vunpack.c.l.b16 %v5381
        %v6205 = vunpack.c.h.b16 %v5381
        %v6206 = vunpack.c.l.b16 %v5382
        %v6207 = vunpack.c.l.b16 %v5383
        %v6208 = vunpack.c.h.b16 %v5383
        %v6209 = vunpack.c.l.b16 %v5384
        %v6210 = vunpack.c.l.b16 %v5385
        %v6211 = vunpack.c.h.b16 %v5385
        %v6212 = vunpack.c.l.b16 %v5386
        %v6213 = vunpack.c.l.b16 %v5387
        %v6214 = vunpack.c.h.b16 %v5387
        %v6215 = vunpack.c.l.b16 %v5388
        %v6216 = vunpack.c.l.b16 %v5389
        %v6217 = vunpack.c.h.b16 %v5389
        %v6218 = vunpack.c.l.b16 %v5390
        %v6219 = vunpack.c.l.b16 %v5391
        %v6220 = vunpack.c.h.b16 %v5391
        %v6221 = vunpack.c.l.b16 %v5392
        %v6222 = vunpack.c.l.b16 %v5393
        %v6223 = vunpack.c.h.b16 %v5393
        %v6224 = vunpack.c.l.b16 %v5394
        %v6225 = vunpack.c.l.b16 %v5395
        %v6226 = vunpack.c.h.b16 %v5395
        %v6227 = vunpack.c.l.b16 %v5396
        %v6228 = vunpack.c.l.b16 %v5397
        %v6229 = vunpack.c.h.b16 %v5397
        %v6230 = vunpack.c.l.b16 %v5398
        %v6231 = vunpack.c.l.b16 %v5399
        %v6232 = vunpack.c.h.b16 %v5399
        %v6233 = vunpack.c.l.b16 %v5400
        %v6234 = vunpack.c.l.b16 %v5401
        %v6235 = vunpack.c.h.b16 %v5401
        %v6236 = vunpack.c.l.b16 %v5402
        %v6237 = vunpack.c.l.b16 %v5403
        %v6238 = vunpack.c.h.b16 %v5403
        %v6239 = vunpack.c.l.b16 %v5404
        %v6240 = vunpack.c.l.b16 %v5405
        %v6241 = vunpack.c.h.b16 %v5405
        %v6242 = vunpack.c.l.b16 %v5406
        %v6243 = vunpack.c.l.b16 %v5407
        %v6244 = vunpack.c.h.b16 %v5407
        %v6245 = vunpack.c.l.b16 %v5408
        %v6246 = vunpack.c.l.b16 %v5409
        %v6247 = vunpack.c.h.b16 %v5409
        %v6248 = vunpack.c.l.b16 %v5410
        %v6249 = vunpack.c.l.b16 %v5411
        %v6250 = vunpack.c.h.b16 %v5411
        %v6251 = vunpack.c.l.b16 %v5412
        %v6252 = vunpack.c.l.b16 %v5413
        %v6253 = vunpack.c.h.b16 %v5413
        %v6254 = vunpack.c.l.b16 %v5414
        %v6255 = vunpack.c.l.b16 %v5415
        %v6256 = vunpack.c.h.b16 %v5415
        %v6257 = vunpack.c.l.b16 %v5416
        %v6258 = vunpack.c.l.b16 %v5417
        %v6259 = vunpack.c.h.b16 %v5417
        %v6260 = vunpack.c.l.b16 %v5418
        %v6261 = vunpack.c.l.b16 %v5419
        %v6262 = vunpack.c.h.b16 %v5419
        %v6263 = vunpack.c.l.b16 %v5420
        %v6264 = vunpack.c.l.b16 %v5421
        %v6265 = vunpack.c.h.b16 %v5421
        %v6266 = vunpack.c.l.b16 %v5422
        %v6267 = vunpack.c.l.b16 %v5423
        %v6268 = vunpack.c.h.b16 %v5423
        %v6269 = vunpack.c.l.b16 %v5424
        %v6270 = vunpack.c.l.b16 %v5425
        %v6271 = vunpack.c.h.b16 %v5425
        %v6272 = vunpack.c.l.b16 %v5426
        %v6273 = vunpack.c.l.b16 %v5427
        %v6274 = vunpack.c.h.b16 %v5427
        %v6275 = vunpack.c.l.b16 %v5428
        %v6276 = vunpack.c.l.b16 %v5429
        %v6277 = vunpack.c.h.b16 %v5429
        %v6278 = vunpack.c.l.b16 %v5430
        %v6279 = vunpack.c.l.b16 %v5431
        %v6280 = vunpack.c.h.b16 %v5431
        %v6281 = vunpack.c.l.b16 %v5432
        %v6282 = vunpack.c.l.b16 %v5433
        %v6283 = vunpack.c.h.b16 %v5433
        %v6284 = vunpack.c.l.b16 %v5434
        %v6285 = vunpack.c.l.b16 %v5435
        %v6286 = vunpack.c.h.b16 %v5435
        %v6287 = vunpack.c.l.b16 %v5436
        %v6288 = vunpack.c.l.b16 %v5437
        %v6289 = vunpack.c.h.b16 %v5437
        %v6290 = vunpack.c.l.b16 %v5438
        %v6291 = vunpack.c.l.b16 %v5439
        %v6292 = vunpack.c.h.b16 %v5439
        %v6293 = vunpack.c.l.b16 %v5440
        %v6294 = vunpack.c.l.b16 %v5441
        %v6295 = vunpack.c.h.b16 %v5441
        %v6296 = vunpack.c.l.b16 %v5442
        %v6297 = vunpack.c.l.b16 %v5443
        %v6298 = vunpack.c.h.b16 %v5443
        %v6299 = vunpack.c.l.b16 %v5444
        %v6300 = vunpack.c.l.b16 %v5445
        %v6301 = vunpack.c.h.b16 %v5445
        %v6302 = vunpack.c.l.b16 %v5446
        %v6303 = vunpack.c.l.b16 %v5447
        %v6304 = vunpack.c.h.b16 %v5447
        %v6305 = vunpack.c.l.b16 %v5448
        %v6306 = vunpack.c.l.b16 %v5449
        %v6307 = vunpack.c.h.b16 %v5449
        %v6308 = vunpack.c.l.b16 %v5450
        %v6309 = vunpack.c.l.b16 %v5451
        %v6310 = vunpack.c.h.b16 %v5451
        %v6311 = vunpack.c.l.b16 %v5452
        %v6312 = vunpack.c.l.b16 %v5453
        %v6313 = vunpack.c.h.b16 %v5453
        %v6314 = vunpack.c.l.b16 %v5454
        %v6315 = vunpack.c.l.b16 %v5455
        %v6316 = vunpack.c.h.b16 %v5455
        %v6317 = vunpack.c.l.b16 %v5456
        %v6318 = vunpack.c.l.b16 %v5457
        %v6319 = vunpack.c.h.b16 %v5457
        %v6320 = vunpack.c.l.b16 %v5458
        %v6321 = vunpack.c.l.b16 %v5459
        %v6322 = vunpack.c.h.b16 %v5459
        %v6323 = vunpack.c.l.b16 %v5460
        %v6324 = vunpack.c.l.b16 %v5461
        %v6325 = vunpack.c.h.b16 %v5461
        %v6326 = vunpack.c.l.b16 %v5462
        %v6327 = vunpack.c.l.b16 %v5463
        %v6328 = vunpack.c.h.b16 %v5463
        %v6329 = vunpack.c.l.b16 %v5464
        %v6330 = vunpack.c.l.b16 %v5465
        %v6331 = vunpack.c.h.b16 %v5465
        %v6332 = vunpack.c.l.b16 %v5466
        %v6333 = vunpack.c.l.b16 %v5467
        %v6334 = vunpack.c.h.b16 %v5467
        %v6335 = vunpack.c.l.b16 %v5468
        %v6336 = vunpack.c.l.b16 %v5469
        %v6337 = vunpack.c.h.b16 %v5469
        %v6338 = vunpack.c.l.b16 %v5470
        %v6339 = vunpack.c.l.b16 %v5471
        %v6340 = vunpack.c.h.b16 %v5471
        %v6341 = vunpack.c.l.b16 %v5472
        %v6342 = vunpack.c.l.b16 %v5473
        %v6343 = vunpack.c.h.b16 %v5473
        %v6344 = vunpack.c.l.b16 %v5474
        %v6345 = vunpack.c.l.b16 %v5475
        %v6346 = vunpack.c.h.b16 %v5475
        %v6347 = vunpack.c.l.b16 %v5476
        %v6348 = vunpack.c.l.b16 %v5477
        %v6349 = vunpack.c.h.b16 %v5477
        %v6350 = vunpack.c.l.b16 %v5478
        %v6351 = vunpack.c.l.b16 %v5479
        %v6352 = vunpack.c.h.b16 %v5479
        %v6353 = vunpack.c.l.b16 %v5480
        %v6354 = vunpack.c.l.b16 %v5481
        %v6355 = vunpack.c.h.b16 %v5481
        %v6356 = vunpack.c.l.b16 %v5482
        %v6357 = vunpack.c.l.b16 %v5483
        %v6358 = vunpack.c.h.b16 %v5483
        %v6359 = vunpack.c.l.b16 %v5484
        %v6360 = vunpack.c.l.b16 %v5485
        %v6361 = vunpack.c.h.b16 %v5485
        %v6362 = vunpack.c.l.b16 %v5486
        %v6363 = vunpack.c.l.b16 %v5487
        %v6364 = vunpack.c.h.b16 %v5487
        %v6365 = vunpack.c.l.b16 %v5488
        %v6366 = vunpack.c.l.b16 %v5489
        %v6367 = vunpack.c.h.b16 %v5489
        %v6368 = vunpack.c.l.b16 %v5490
        %v6369 = vunpack.c.l.b16 %v5491
        %v6370 = vunpack.c.h.b16 %v5491
        %v6371 = vunpack.c.l.b16 %v5492
        %v6372 = vunpack.c.l.b16 %v5493
        %v6373 = vunpack.c.h.b16 %v5493
        %v6374 = vunpack.c.l.b16 %v5494
        %v6375 = vunpack.c.l.b16 %v5495
        %v6376 = vunpack.c.h.b16 %v5495
        %v6377 = vunpack.c.l.b16 %v5496
        %v6378 = vunpack.c.l.b16 %v5497
        %v6379 = vunpack.c.h.b16 %v5497
        %v6380 = vunpack.c.l.b16 %v5498
        %v6381 = vunpack.c.l.b16 %v5499
        %v6382 = vunpack.c.h.b16 %v5499
        %v6383 = vunpack.c.l.b16 %v5500
        %v6384 = vunpack.c.l.b16 %v5501
        %v6385 = vunpack.c.h.b16 %v5501
        %v6386 = vunpack.c.l.b16 %v5502
        %v6387 = vunpack.c.l.b16 %v5503
        %v6388 = vunpack.c.h.b16 %v5503
        %v6389 = vunpack.c.l.b16 %v5504
        %v6390 = vunpack.c.l.b16 %v5505
        %v6391 = vunpack.c.h.b16 %v5505
        %v6392 = vunpack.c.l.b16 %v5506
        %v6393 = vunpack.c.l.b16 %v5507
        %v6394 = vunpack.c.h.b16 %v5507
        %v6395 = vunpack.c.l.b16 %v5508
        %v6396 = vunpack.c.l.b16 %v5509
        %v6397 = vunpack.c.h.b16 %v5509
        %v6398 = vunpack.c.l.b16 %v5510
        %v6399 = vunpack.c.l.b16 %v5511
        %v6400 = vunpack.c.h.b16 %v5511
        %v6401 = vunpack.c.l.b16 %v5512
        %v6402 = vunpack.c.l.b16 %v5513
        %v6403 = vunpack.c.h.b16 %v5513
        %v6404 = vunpack.c.l.b16 %v5514
        %v6405 = vunpack.c.l.b16 %v5515
        %v6406 = vunpack.c.h.b16 %v5515
        %v6407 = vunpack.c.l.b16 %v5516
        %v6408 = vunpack.c.l.b16 %v5517
        %v6409 = vunpack.c.h.b16 %v5517
        %v6410 = vunpack.c.l.b16 %v5518
        %v6411 = vunpack.c.l.b16 %v5519
        %v6412 = vunpack.c.h.b16 %v5519
        %v6413 = vunpack.c.l.b16 %v5520
        %v6414 = vunpack.c.l.b16 %v5521
        %v6415 = vunpack.c.h.b16 %v5521
        %v6416 = vunpack.c.l.b16 %v5522
        %v6417 = vunpack.c.l.b16 %v5523
        %v6418 = vunpack.c.h.b16 %v5523
        %v6419 = vunpack.c.l.b16 %v5524
        %v6420 = vunpack.c.l.b16 %v5525
        %v6421 = vunpack.c.h.b16 %v5525
        %v6422 = vunpack.c.l.b16 %v5526
        %v6423 = vunpack.c.l.b16 %v5527
        %v6424 = vunpack.c.h.b16 %v5527
        %v6425 = vunpack.c.l.b16 %v5528
        %v6426 = vunpack.c.l.b16 %v5529
        %v6427 = vunpack.c.h.b16 %v5529
        %v6428 = vunpack.c.l.b16 %v5530
        %v6429 = vunpack.c.l.b16 %v5531
        %v6430 = vunpack.c.h.b16 %v5531
        %v6431 = vunpack.c.l.b16 %v5532
        %v6432 = vunpack.c.l.b16 %v5533
        %v6433 = vunpack.c.h.b16 %v5533
        %v6434 = vunpack.c.l.b16 %v5534
        %v6435 = vunpack.c.l.b16 %v5535
        %v6436 = vunpack.c.h.b16 %v5535
        %v6437 = vunpack.c.l.b16 %v5536
        %v6438 = vunpack.c.l.b16 %v5537
        %v6439 = vunpack.c.h.b16 %v5537
        %v6440 = vunpack.c.l.b16 %v5538
        %v6441 = vunpack.c.l.b16 %v5539
        %v6442 = vunpack.c.h.b16 %v5539
        %v6443 = vunpack.c.l.b16 %v5540
        %v6444 = vunpack.c.l.b16 %v5541
        %v6445 = vunpack.c.h.b16 %v5541
        %v6446 = vunpack.c.l.b16 %v5542
        %v6447 = vunpack.c.l.b16 %v5543
        %v6448 = vunpack.c.h.b16 %v5543
        %v6449 = vunpack.c.l.b16 %v5544
        %v6450 = vunpack.c.l.b16 %v5545
        %v6451 = vunpack.c.h.b16 %v5545
        %v6452 = vunpack.c.l.b16 %v5546
        %v6453 = vunpack.c.l.b16 %v5547
        %v6454 = vunpack.c.h.b16 %v5547
        %v6455 = vunpack.c.l.b16 %v5548
        %v6456 = vunpack.c.l.b16 %v5549
        %v6457 = vunpack.c.h.b16 %v5549
        %v6458 = vunpack.c.l.b16 %v5550
        %v6459 = vunpack.c.l.b16 %v5551
        %v6460 = vunpack.c.h.b16 %v5551
        %v6461 = vunpack.c.l.b16 %v5552
        %v6462 = vunpack.c.l.b16 %v5553
        %v6463 = vunpack.c.h.b16 %v5553
        %v6464 = vunpack.c.l.b16 %v5554
        %v6465 = vunpack.c.l.b16 %v5555
        %v6466 = vunpack.c.h.b16 %v5555
        %v6467 = vunpack.c.l.b16 %v5556
        %v6468 = vunpack.c.l.b16 %v5557
        %v6469 = vunpack.c.h.b16 %v5557
        %v6470 = vunpack.c.l.b16 %v5558
        %v6471 = vunpack.c.l.b16 %v5559
        %v6472 = vunpack.c.h.b16 %v5559
        %v6473 = vunpack.c.l.b16 %v5560
        %v6474 = vunpack.c.l.b16 %v5561
        %v6475 = vunpack.c.h.b16 %v5561
        %v6476 = vunpack.c.l.b16 %v5562
        %v6477 = vunpack.c.l.b16 %v5563
        %v6478 = vunpack.c.h.b16 %v5563
        %v6479 = vunpack.c.l.b16 %v5564
        %v6480 = vunpack.c.l.b16 %v5565
        %v6481 = vunpack.c.h.b16 %v5565
        %v6482 = vunpack.c.l.b16 %v5566
        %v6483 = vunpack.c.l.b16 %v5567
        %v6484 = vunpack.c.h.b16 %v5567
        %v6485 = vunpack.c.l.b16 %v5568
        %v6486 = vunpack.c.l.b16 %v5569
        %v6487 = vunpack.c.h.b16 %v5569
        %v6488 = vunpack.c.l.b16 %v5570
        %v6489 = vunpack.c.l.b16 %v5571
        %v6490 = vunpack.c.h.b16 %v5571
        %v6491 = vunpack.c.l.b16 %v5572
        %v6492 = vunpack.c.l.b16 %v5573
        %v6493 = vunpack.c.h.b16 %v5573
        %v6494 = vunpack.c.l.b16 %v5574
        %v6495 = vunpack.c.l.b16 %v5575
        %v6496 = vunpack.c.h.b16 %v5575
        %v6497 = vunpack.c.l.b16 %v5576
        %v6498 = vunpack.c.l.b16 %v5577
        %v6499 = vunpack.c.h.b16 %v5577
        %v6500 = vunpack.c.l.b16 %v5578
        %v6501 = vunpack.c.l.b16 %v5579
        %v6502 = vunpack.c.h.b16 %v5579
        %v6503 = vunpack.c.l.b16 %v5580
        %v6504 = vunpack.c.l.b16 %v5581
        %v6505 = vunpack.c.h.b16 %v5581
        %v6506 = vunpack.c.l.b16 %v5582
        %v6507 = vunpack.c.l.b16 %v5583
        %v6508 = vunpack.c.h.b16 %v5583
        %v6509 = vunpack.c.l.b16 %v5584
        %v6510 = vunpack.c.l.b16 %v5585
        %v6511 = vunpack.c.h.b16 %v5585
        %v6512 = vunpack.c.l.b16 %v5586
        %v6513 = vunpack.c.l.b16 %v5587
        %v6514 = vunpack.c.h.b16 %v5587
        %v6515 = vunpack.c.l.b16 %v5588
        %v6516 = vunpack.c.l.b16 %v5589
        %v6517 = vunpack.c.h.b16 %v5589
        %v6518 = vunpack.c.l.b16 %v5590
        %v6519 = vunpack.c.l.b16 %v5591
        %v6520 = vunpack.c.h.b16 %v5591
        %v6521 = vunpack.c.l.b16 %v5592
        %v6522 = vunpack.c.l.b16 %v5593
        %v6523 = vunpack.c.h.b16 %v5593
        %v6524 = vunpack.c.l.b16 %v5594
        %v6525 = vunpack.c.l.b16 %v5595
        %v6526 = vunpack.c.h.b16 %v5595
        %v6527 = vunpack.c.l.b16 %v5596
        %v6528 = vunpack.c.l.b16 %v5597
        %v6529 = vunpack.c.h.b16 %v5597
        %v6530 = vunpack.c.l.b16 %v5598
        %v6531 = vunpack.c.l.b16 %v5599
        %v6532 = vunpack.c.h.b16 %v5599
        %v6533 = vunpack.c.l.b16 %v5600
        %v6534 = vunpack.c.l.b16 %v5601
        %v6535 = vunpack.c.h.b16 %v5601
        %v6536 = vunpack.c.l.b16 %v5602
        %v6537 = vunpack.c.l.b16 %v5603
        %v6538 = vunpack.c.h.b16 %v5603
        %v6539 = vunpack.c.l.b16 %v5604
        %v6540 = vunpack.c.l.b16 %v5605
        %v6541 = vunpack.c.h.b16 %v5605
        %v6542 = vunpack.c.l.b16 %v5606
        %v6543 = vunpack.c.l.b16 %v5607
        %v6544 = vunpack.c.h.b16 %v5607
        %v6545 = vunpack.c.l.b16 %v5608
        %v6546 = vunpack.c.l.b16 %v5609
        %v6547 = vunpack.c.h.b16 %v5609
        %v6548 = vunpack.c.l.b16 %v5610
        %v6549 = vunpack.c.l.b16 %v5611
        %v6550 = vunpack.c.h.b16 %v5611
        %v6551 = vunpack.c.l.b16 %v5612
        %v6552 = vunpack.c.l.b16 %v5613
        %v6553 = vunpack.c.h.b16 %v5613
        %v6554 = vunpack.c.l.b16 %v5614
        %v6555 = vunpack.c.l.b16 %v5615
        %v6556 = vunpack.c.h.b16 %v5615
        %v6557 = vunpack.c.l.b16 %v5616
        %v6558 = vunpack.c.l.b16 %v5617
        %v6559 = vunpack.c.h.b16 %v5617
        %v6560 = vunpack.c.l.b16 %v5618
        %v6561 = vunpack.c.l.b16 %v5619
        %v6562 = vunpack.c.h.b16 %v5619
        %v6563 = vunpack.c.l.b16 %v5620
        %v6564 = vunpack.c.l.b16 %v5621
        %v6565 = vunpack.c.h.b16 %v5621
        %v6566 = vunpack.c.l.b16 %v5622
        %v6567 = vunpack.c.l.b16 %v5623
        %v6568 = vunpack.c.h.b16 %v5623
        %v6569 = vunpack.c.l.b16 %v5624
        %v6570 = vunpack.c.l.b16 %v5625
        %v6571 = vunpack.c.h.b16 %v5625
        %v6572 = vunpack.c.l.b16 %v5626
        %v6573 = vunpack.c.l.b16 %v5627
        %v6574 = vunpack.c.h.b16 %v5627
        %v6575 = vunpack.c.l.b16 %v5628
        %v6576 = vunpack.c.l.b16 %v5629
        %v6577 = vunpack.c.h.b16 %v5629
        %v6578 = vunpack.c.l.b16 %v5630
        %v6579 = vunpack.c.l.b16 %v5631
        %v6580 = vunpack.c.h.b16 %v5631
        %v6581 = vunpack.c.l.b16 %v5632
        %v6582 = vunpack.c.l.b16 %v5633
        %v6583 = vunpack.c.h.b16 %v5633
        %v6584 = vunpack.c.l.b16 %v5634
        %v6585 = vunpack.c.l.b16 %v5635
        %v6586 = vunpack.c.h.b16 %v5635
        %v6587 = vunpack.c.l.b16 %v5636
        %v6588 = vunpack.c.l.b16 %v5637
        %v6589 = vunpack.c.h.b16 %v5637
        %v6590 = vunpack.c.l.b16 %v5638
        %v6591 = vunpack.c.l.b16 %v5639
        %v6592 = vunpack.c.h.b16 %v5639
        %v6593 = vunpack.c.l.b16 %v5640
        %v6594 = vunpack.c.l.b16 %v5641
        %v6595 = vunpack.c.h.b16 %v5641
        %v6596 = vunpack.c.l.b16 %v5642
        %v6597 = vunpack.c.l.b16 %v5643
        %v6598 = vunpack.c.h.b16 %v5643
        %v6599 = vunpack.c.l.b16 %v5644
        %v6600 = vunpack.c.l.b16 %v5645
        %v6601 = vunpack.c.h.b16 %v5645
        %v6602 = vunpack.c.l.b16 %v5646
        %v6603 = vunpack.c.l.b16 %v5647
        %v6604 = vunpack.c.h.b16 %v5647
        %v6605 = vunpack.c.l.b16 %v5648
        %v6606 = vunpack.c.l.b16 %v5649
        %v6607 = vunpack.c.h.b16 %v5649
        %v6608 = vunpack.c.l.b16 %v5650
        %v6609 = vunpack.c.l.b16 %v5651
        %v6610 = vunpack.c.h.b16 %v5651
        %v6611 = vunpack.c.l.b16 %v5652
        %v6612 = vunpack.c.l.b16 %v5653
        %v6613 = vunpack.c.h.b16 %v5653
        %v6614 = vunpack.c.l.b16 %v5654
        %v6615 = vunpack.c.l.b16 %v5655
        %v6616 = vunpack.c.h.b16 %v5655
        %v6617 = vunpack.c.l.b16 %v5656
        %v6618 = vunpack.c.l.b16 %v5657
        %v6619 = vunpack.c.h.b16 %v5657
        %v6620 = vunpack.c.l.b16 %v5658
        %v6621 = vunpack.c.l.b16 %v5659
        %v6622 = vunpack.c.h.b16 %v5659
        %v6623 = vunpack.c.l.b16 %v5660
        %v6624 = vunpack.c.l.b16 %v5661
        %v6625 = vunpack.c.h.b16 %v5661
        %v6626 = vunpack.c.l.b16 %v5662
        %v6627 = vunpack.c.l.b16 %v5663
        %v6628 = vunpack.c.h.b16 %v5663
        %v6629 = vunpack.c.l.b16 %v5664
        %v6630 = vunpack.c.l.b16 %v5665
        %v6631 = vunpack.c.h.b16 %v5665
        %v6632 = vunpack.c.l.b16 %v5666
        %v6633 = vunpack.c.l.b16 %v5667
        %v6634 = vunpack.c.h.b16 %v5667
        %v6635 = vunpack.c.l.b16 %v5668
        %v6636 = vunpack.c.l.b16 %v5669
        %v6637 = vunpack.c.h.b16 %v5669
        %v6638 = vunpack.c.l.b16 %v5670
        %v6639 = vunpack.c.l.b16 %v5671
        %v6640 = vunpack.c.h.b16 %v5671
        %v6641 = vunpack.c.l.b16 %v5672
        %v6642 = vunpack.c.l.b16 %v5673
        %v6643 = vunpack.c.h.b16 %v5673
        %v6644 = vunpack.c.l.b16 %v5674
        %v6645 = vunpack.c.l.b16 %v5675
        %v6646 = vunpack.c.h.b16 %v5675
        %v6647 = vunpack.c.l.b16 %v5676
        %v6648 = vunpack.c.l.b16 %v5677
        %v6649 = vunpack.c.h.b16 %v5677
        %v6650 = vunpack.c.l.b16 %v5678
        %v6651 = vunpack.c.l.b16 %v5679
        %v6652 = vunpack.c.h.b16 %v5679
        %v6653 = vunpack.c.l.b16 %v5680
        %v6654 = vunpack.c.l.b16 %v5681
        %v6655 = vunpack.c.h.b16 %v5681
        %v6656 = vunpack.c.l.b16 %v5682
        %v6657 = vunpack.c.l.b16 %v5683
        %v6658 = vunpack.c.h.b16 %v5683
        %v6659 = vunpack.c.l.b16 %v5684
        %v6660 = vunpack.c.l.b16 %v5685
        %v6661 = vunpack.c.h.b16 %v5685
        %v6662 = vunpack.c.l.b16 %v5686
        %v6663 = vunpack.c.l.b16 %v5687
        %v6664 = vunpack.c.h.b16 %v5687
        %v6665 = vunpack.c.l.b16 %v5688
        %v6666 = vpack.c.b16 %v6093, %v6090
        %v6667 = vpack.c.b16 %v6094, %v6091
        %v6668 = vpack.c.b16 %v6095, %v6092
        %v6669 = vpack.c.b16 %v6099, %v6096
        %v6670 = vpack.c.b16 %v6100, %v6097
        %v6671 = vpack.c.b16 %v6101, %v6098
        %v6672 = vpack.c.b16 %v6105, %v6102
        %v6673 = vpack.c.b16 %v6106, %v6103
        %v6674 = vpack.c.b16 %v6107, %v6104
        %v6675 = vpack.c.b16 %v6111, %v6108
        %v6676 = vpack.c.b16 %v6112, %v6109
        %v6677 = vpack.c.b16 %v6113, %v6110
        %v6678 = vpack.c.b16 %v6117, %v6114
        %v6679 = vpack.c.b16 %v6118, %v6115
        %v6680 = vpack.c.b16 %v6119, %v6116
        %v6681 = vpack.c.b16 %v6123, %v6120
        %v6682 = vpack.c.b16 %v6124, %v6121
        %v6683 = vpack.c.b16 %v6125, %v6122
        %v6684 = vpack.c.b16 %v6129, %v6126
        %v6685 = vpack.c.b16 %v6130, %v6127
        %v6686 = vpack.c.b16 %v6131, %v6128
        %v6687 = vpack.c.b16 %v6135, %v6132
        %v6688 = vpack.c.b16 %v6136, %v6133
        %v6689 = vpack.c.b16 %v6137, %v6134
        %v6690 = vpack.c.b16 %v6141, %v6138
        %v6691 = vpack.c.b16 %v6142, %v6139
        %v6692 = vpack.c.b16 %v6143, %v6140
        %v6693 = vpack.c.b16 %v6147, %v6144
        %v6694 = vpack.c.b16 %v6148, %v6145
        %v6695 = vpack.c.b16 %v6149, %v6146
        %v6696 = vpack.c.b16 %v6153, %v6150
        %v6697 = vpack.c.b16 %v6154, %v6151
        %v6698 = vpack.c.b16 %v6155, %v6152
        %v6699 = vpack.c.b16 %v6159, %v6156
        %v6700 = vpack.c.b16 %v6160, %v6157
        %v6701 = vpack.c.b16 %v6161, %v6158
        %v6702 = vpack.c.b16 %v6165, %v6162
        %v6703 = vpack.c.b16 %v6166, %v6163
        %v6704 = vpack.c.b16 %v6167, %v6164
        %v6705 = vpack.c.b16 %v6171, %v6168
        %v6706 = vpack.c.b16 %v6172, %v6169
        %v6707 = vpack.c.b16 %v6173, %v6170
        %v6708 = vpack.c.b16 %v6177, %v6174
        %v6709 = vpack.c.b16 %v6178, %v6175
        %v6710 = vpack.c.b16 %v6179, %v6176
        %v6711 = vpack.c.b16 %v6183, %v6180
        %v6712 = vpack.c.b16 %v6184, %v6181
        %v6713 = vpack.c.b16 %v6185, %v6182
        %v6714 = vpack.c.b16 %v6189, %v6186
        %v6715 = vpack.c.b16 %v6190, %v6187
        %v6716 = vpack.c.b16 %v6191, %v6188
        %v6717 = vpack.c.b16 %v6195, %v6192
        %v6718 = vpack.c.b16 %v6196, %v6193
        %v6719 = vpack.c.b16 %v6197, %v6194
        %v6720 = vpack.c.b16 %v6201, %v6198
        %v6721 = vpack.c.b16 %v6202, %v6199
        %v6722 = vpack.c.b16 %v6203, %v6200
        %v6723 = vpack.c.b16 %v6207, %v6204
        %v6724 = vpack.c.b16 %v6208, %v6205
        %v6725 = vpack.c.b16 %v6209, %v6206
        %v6726 = vpack.c.b16 %v6213, %v6210
        %v6727 = vpack.c.b16 %v6214, %v6211
        %v6728 = vpack.c.b16 %v6215, %v6212
        %v6729 = vpack.c.b16 %v6219, %v6216
        %v6730 = vpack.c.b16 %v6220, %v6217
        %v6731 = vpack.c.b16 %v6221, %v6218
        %v6732 = vpack.c.b16 %v6225, %v6222
        %v6733 = vpack.c.b16 %v6226, %v6223
        %v6734 = vpack.c.b16 %v6227, %v6224
        %v6735 = vpack.c.b16 %v6231, %v6228
        %v6736 = vpack.c.b16 %v6232, %v6229
        %v6737 = vpack.c.b16 %v6233, %v6230
        %v6738 = vpack.c.b16 %v6237, %v6234
        %v6739 = vpack.c.b16 %v6238, %v6235
        %v6740 = vpack.c.b16 %v6239, %v6236
        %v6741 = vpack.c.b16 %v6243, %v6240
        %v6742 = vpack.c.b16 %v6244, %v6241
        %v6743 = vpack.c.b16 %v6245, %v6242
        %v6744 = vpack.c.b16 %v6249, %v6246
        %v6745 = vpack.c.b16 %v6250, %v6247
        %v6746 = vpack.c.b16 %v6251, %v6248
        %v6747 = vpack.c.b16 %v6255, %v6252
        %v6748 = vpack.c.b16 %v6256, %v6253
        %v6749 = vpack.c.b16 %v6257, %v6254
        %v6750 = vpack.c.b16 %v6261, %v6258
        %v6751 = vpack.c.b16 %v6262, %v6259
        %v6752 = vpack.c.b16 %v6263, %v6260
        %v6753 = vpack.c.b16 %v6267, %v6264
        %v6754 = vpack.c.b16 %v6268, %v6265
        %v6755 = vpack.c.b16 %v6269, %v6266
        %v6756 = vpack.c.b16 %v6273, %v6270
        %v6757 = vpack.c.b16 %v6274, %v6271
        %v6758 = vpack.c.b16 %v6275, %v6272
        %v6759 = vpack.c.b16 %v6279, %v6276
        %v6760 = vpack.c.b16 %v6280, %v6277
        %v6761 = vpack.c.b16 %v6281, %v6278
        %v6762 = vpack.c.b16 %v6285, %v6282
        %v6763 = vpack.c.b16 %v6286, %v6283
        %v6764 = vpack.c.b16 %v6287, %v6284
        %v6765 = vpack.c.b16 %v6291, %v6288
        %v6766 = vpack.c.b16 %v6292, %v6289
        %v6767 = vpack.c.b16 %v6293, %v6290
        %v6768 = vpack.c.b16 %v6297, %v6294
        %v6769 = vpack.c.b16 %v6298, %v6295
        %v6770 = vpack.c.b16 %v6299, %v6296
        %v6771 = vpack.c.b16 %v6303, %v6300
        %v6772 = vpack.c.b16 %v6304, %v6301
        %v6773 = vpack.c.b16 %v6305, %v6302
        %v6774 = vpack.c.b16 %v6309, %v6306
        %v6775 = vpack.c.b16 %v6310, %v6307
        %v6776 = vpack.c.b16 %v6311, %v6308
        %v6777 = vpack.c.b16 %v6315, %v6312
        %v6778 = vpack.c.b16 %v6316, %v6313
        %v6779 = vpack.c.b16 %v6317, %v6314
        %v6780 = vpack.c.b16 %v6321, %v6318
        %v6781 = vpack.c.b16 %v6322, %v6319
        %v6782 = vpack.c.b16 %v6323, %v6320
        %v6783 = vpack.c.b16 %v6327, %v6324
        %v6784 = vpack.c.b16 %v6328, %v6325
        %v6785 = vpack.c.b16 %v6329, %v6326
        %v6786 = vpack.c.b16 %v6333, %v6330
        %v6787 = vpack.c.b16 %v6334, %v6331
        %v6788 = vpack.c.b16 %v6335, %v6332
        %v6789 = vpack.c.b16 %v6339, %v6336
        %v6790 = vpack.c.b16 %v6340, %v6337
        %v6791 = vpack.c.b16 %v6341, %v6338
        %v6792 = vpack.c.b16 %v6345, %v6342
        %v6793 = vpack.c.b16 %v6346, %v6343
        %v6794 = vpack.c.b16 %v6347, %v6344
        %v6795 = vpack.c.b16 %v6351, %v6348
        %v6796 = vpack.c.b16 %v6352, %v6349
        %v6797 = vpack.c.b16 %v6353, %v6350
        %v6798 = vpack.c.b16 %v6357, %v6354
        %v6799 = vpack.c.b16 %v6358, %v6355
        %v6800 = vpack.c.b16 %v6359, %v6356
        %v6801 = vpack.c.b16 %v6363, %v6360
        %v6802 = vpack.c.b16 %v6364, %v6361
        %v6803 = vpack.c.b16 %v6365, %v6362
        %v6804 = vpack.c.b16 %v6369, %v6366
        %v6805 = vpack.c.b16 %v6370, %v6367
        %v6806 = vpack.c.b16 %v6371, %v6368
        %v6807 = vpack.c.b16 %v6375, %v6372
        %v6808 = vpack.c.b16 %v6376, %v6373
        %v6809 = vpack.c.b16 %v6377, %v6374
        %v6810 = vpack.c.b16 %v6381, %v6378
        %v6811 = vpack.c.b16 %v6382, %v6379
        %v6812 = vpack.c.b16 %v6383, %v6380
        %v6813 = vpack.c.b16 %v6387, %v6384
        %v6814 = vpack.c.b16 %v6388, %v6385
        %v6815 = vpack.c.b16 %v6389, %v6386
        %v6816 = vpack.c.b16 %v6393, %v6390
        %v6817 = vpack.c.b16 %v6394, %v6391
        %v6818 = vpack.c.b16 %v6395, %v6392
        %v6819 = vpack.c.b16 %v6399, %v6396
        %v6820 = vpack.c.b16 %v6400, %v6397
        %v6821 = vpack.c.b16 %v6401, %v6398
        %v6822 = vpack.c.b16 %v6405, %v6402
        %v6823 = vpack.c.b16 %v6406, %v6403
        %v6824 = vpack.c.b16 %v6407, %v6404
        %v6825 = vpack.c.b16 %v6411, %v6408
        %v6826 = vpack.c.b16 %v6412, %v6409
        %v6827 = vpack.c.b16 %v6413, %v6410
        %v6828 = vpack.c.b16 %v6417, %v6414
        %v6829 = vpack.c.b16 %v6418, %v6415
        %v6830 = vpack.c.b16 %v6419, %v6416
        %v6831 = vpack.c.b16 %v6423, %v6420
        %v6832 = vpack.c.b16 %v6424, %v6421
        %v6833 = vpack.c.b16 %v6425, %v6422
        %v6834 = vpack.c.b16 %v6429, %v6426
        %v6835 = vpack.c.b16 %v6430, %v6427
        %v6836 = vpack.c.b16 %v6431, %v6428
        %v6837 = vpack.c.b16 %v6435, %v6432
        %v6838 = vpack.c.b16 %v6436, %v6433
        %v6839 = vpack.c.b16 %v6437, %v6434
        %v6840 = vpack.c.b16 %v6441, %v6438
        %v6841 = vpack.c.b16 %v6442, %v6439
        %v6842 = vpack.c.b16 %v6443, %v6440
        %v6843 = vpack.c.b16 %v6447, %v6444
        %v6844 = vpack.c.b16 %v6448, %v6445
        %v6845 = vpack.c.b16 %v6449, %v6446
        %v6846 = vpack.c.b16 %v6453, %v6450
        %v6847 = vpack.c.b16 %v6454, %v6451
        %v6848 = vpack.c.b16 %v6455, %v6452
        %v6849 = vpack.c.b16 %v6459, %v6456
        %v6850 = vpack.c.b16 %v6460, %v6457
        %v6851 = vpack.c.b16 %v6461, %v6458
        %v6852 = vpack.c.b16 %v6465, %v6462
        %v6853 = vpack.c.b16 %v6466, %v6463
        %v6854 = vpack.c.b16 %v6467, %v6464
        %v6855 = vpack.c.b16 %v6471, %v6468
        %v6856 = vpack.c.b16 %v6472, %v6469
        %v6857 = vpack.c.b16 %v6473, %v6470
        %v6858 = vpack.c.b16 %v6477, %v6474
        %v6859 = vpack.c.b16 %v6478, %v6475
        %v6860 = vpack.c.b16 %v6479, %v6476
        %v6861 = vpack.c.b16 %v6483, %v6480
        %v6862 = vpack.c.b16 %v6484, %v6481
        %v6863 = vpack.c.b16 %v6485, %v6482
        %v6864 = vpack.c.b16 %v6489, %v6486
        %v6865 = vpack.c.b16 %v6490, %v6487
        %v6866 = vpack.c.b16 %v6491, %v6488
        %v6867 = vpack.c.b16 %v6495, %v6492
        %v6868 = vpack.c.b16 %v6496, %v6493
        %v6869 = vpack.c.b16 %v6497, %v6494
        %v6870 = vpack.c.b16 %v6501, %v6498
        %v6871 = vpack.c.b16 %v6502, %v6499
        %v6872 = vpack.c.b16 %v6503, %v6500
        %v6873 = vpack.c.b16 %v6507, %v6504
        %v6874 = vpack.c.b16 %v6508, %v6505
        %v6875 = vpack.c.b16 %v6509, %v6506
        %v6876 = vpack.c.b16 %v6513, %v6510
        %v6877 = vpack.c.b16 %v6514, %v6511
        %v6878 = vpack.c.b16 %v6515, %v6512
        %v6879 = vpack.c.b16 %v6519, %v6516
        %v6880 = vpack.c.b16 %v6520, %v6517
        %v6881 = vpack.c.b16 %v6521, %v6518
        %v6882 = vpack.c.b16 %v6525, %v6522
        %v6883 = vpack.c.b16 %v6526, %v6523
        %v6884 = vpack.c.b16 %v6527, %v6524
        %v6885 = vpack.c.b16 %v6531, %v6528
        %v6886 = vpack.c.b16 %v6532, %v6529
        %v6887 = vpack.c.b16 %v6533, %v6530
        %v6888 = vpack.c.b16 %v6537, %v6534
        %v6889 = vpack.c.b16 %v6538, %v6535
        %v6890 = vpack.c.b16 %v6539, %v6536
        %v6891 = vpack.c.b16 %v6543, %v6540
        %v6892 = vpack.c.b16 %v6544, %v6541
        %v6893 = vpack.c.b16 %v6545, %v6542
        %v6894 = vpack.c.b16 %v6549, %v6546
        %v6895 = vpack.c.b16 %v6550, %v6547
        %v6896 = vpack.c.b16 %v6551, %v6548
        %v6897 = vpack.c.b16 %v6555, %v6552
        %v6898 = vpack.c.b16 %v6556, %v6553
        %v6899 = vpack.c.b16 %v6557, %v6554
        %v6900 = vpack.c.b16 %v6561, %v6558
        %v6901 = vpack.c.b16 %v6562, %v6559
        %v6902 = vpack.c.b16 %v6563, %v6560
        %v6903 = vpack.c.b16 %v6567, %v6564
        %v6904 = vpack.c.b16 %v6568, %v6565
        %v6905 = vpack.c.b16 %v6569, %v6566
        %v6906 = vpack.c.b16 %v6573, %v6570
        %v6907 = vpack.c.b16 %v6574, %v6571
        %v6908 = vpack.c.b16 %v6575, %v6572
        %v6909 = vpack.c.b16 %v6579, %v6576
        %v6910 = vpack.c.b16 %v6580, %v6577
        %v6911 = vpack.c.b16 %v6581, %v6578
        %v6912 = vpack.c.b16 %v6585, %v6582
        %v6913 = vpack.c.b16 %v6586, %v6583
        %v6914 = vpack.c.b16 %v6587, %v6584
        %v6915 = vpack.c.b16 %v6591, %v6588
        %v6916 = vpack.c.b16 %v6592, %v6589
        %v6917 = vpack.c.b16 %v6593, %v6590
        %v6918 = vpack.c.b16 %v6597, %v6594
        %v6919 = vpack.c.b16 %v6598, %v6595
        %v6920 = vpack.c.b16 %v6599, %v6596
        %v6921 = vpack.c.b16 %v6603, %v6600
        %v6922 = vpack.c.b16 %v6604, %v6601
        %v6923 = vpack.c.b16 %v6605, %v6602
        %v6924 = vpack.c.b16 %v6609, %v6606
        %v6925 = vpack.c.b16 %v6610, %v6607
        %v6926 = vpack.c.b16 %v6611, %v6608
        %v6927 = vpack.c.b16 %v6615, %v6612
        %v6928 = vpack.c.b16 %v6616, %v6613
        %v6929 = vpack.c.b16 %v6617, %v6614
        %v6930 = vpack.c.b16 %v6621, %v6618
        %v6931 = vpack.c.b16 %v6622, %v6619
        %v6932 = vpack.c.b16 %v6623, %v6620
        %v6933 = vpack.c.b16 %v6627, %v6624
        %v6934 = vpack.c.b16 %v6628, %v6625
        %v6935 = vpack.c.b16 %v6629, %v6626
        %v6936 = vpack.c.b16 %v6633, %v6630
        %v6937 = vpack.c.b16 %v6634, %v6631
        %v6938 = vpack.c.b16 %v6635, %v6632
        %v6939 = vpack.c.b16 %v6639, %v6636
        %v6940 = vpack.c.b16 %v6640, %v6637
        %v6941 = vpack.c.b16 %v6641, %v6638
        %v6942 = vpack.c.b16 %v6645, %v6642
        %v6943 = vpack.c.b16 %v6646, %v6643
        %v6944 = vpack.c.b16 %v6647, %v6644
        %v6945 = vpack.c.b16 %v6651, %v6648
        %v6946 = vpack.c.b16 %v6652, %v6649
        %v6947 = vpack.c.b16 %v6653, %v6650
        %v6948 = vpack.c.b16 %v6657, %v6654
        %v6949 = vpack.c.b16 %v6658, %v6655
        %v6950 = vpack.c.b16 %v6659, %v6656
        %v6951 = vpack.c.b16 %v6663, %v6660
        %v6952 = vpack.c.b16 %v6664, %v6661
        %v6953 = vpack.c.b16 %v6665, %v6662
        %7242 = vmatprep.subr.bf16.mxu0 %v6667
        %7243 = vmatpush1.bf16.msra.mxu0 %v6666
        %7244 = vmatprep.subr.bf16.mxu0 %v6670
        %7245 = vmatpush1.bf16.msra.mxu0 %v6669
        %7246 = vmatprep.subr.bf16.mxu0 %v6673
        %7247 = vmatpush1.bf16.msra.mxu0 %v6672
        %7248 = vmatprep.subr.bf16.mxu0 %v6676
        %7249 = vmatpush1.bf16.msra.mxu0 %v6675
        %7250 = vmatprep.subr.bf16.mxu0 %v6679
        %7251 = vmatpush1.bf16.msra.mxu0 %v6678
        %7252 = vmatprep.subr.bf16.mxu0 %v6682
        %7253 = vmatpush1.bf16.msra.mxu0 %v6681
        %7254 = vmatprep.subr.bf16.mxu0 %v6685
        %7255 = vmatpush1.bf16.msra.mxu0 %v6684
        %7256 = vmatprep.subr.bf16.mxu0 %v6688
        %7257 = vmatpush1.bf16.msra.mxu0 %v6687
        %7258 = vmatprep.subr.bf16.mxu0 %v6691
        %7259 = vmatpush1.bf16.msra.mxu0 %v6690
        %7260 = vmatprep.subr.bf16.mxu0 %v6694
        %7261 = vmatpush1.bf16.msra.mxu0 %v6693
        %7262 = vmatprep.subr.bf16.mxu0 %v6697
        %7263 = vmatpush1.bf16.msra.mxu0 %v6696
        %7264 = vmatprep.subr.bf16.mxu0 %v6700
        %7265 = vmatpush1.bf16.msra.mxu0 %v6699
        %7266 = vmatprep.subr.bf16.mxu0 %v6703
        %7267 = vmatpush1.bf16.msra.mxu0 %v6702
        %7268 = vmatprep.subr.bf16.mxu0 %v6706
        %7269 = vmatpush1.bf16.msra.mxu0 %v6705
        %7270 = vmatprep.subr.bf16.mxu0 %v6709
        %7271 = vmatpush1.bf16.msra.mxu0 %v6708
        %7272 = vmatprep.subr.bf16.mxu0 %v6712
        %7273 = vmatpush1.bf16.msra.mxu0 %v6711
        %7274 = vmatprep.mubr.bf16.mxu0 %v5114
        %7275 = vmatmul.mubr.bf16.gmra.mrb[0].mxu0 %v5113
        %v7276 = vpop.f32.mrb[0].mxu0
        %v7277 = vadd.f32 %v5694, %v7276
        %v7278 = vpop.f32.mrb[0].mxu0
        %v7279 = vadd.f32 %v5698, %v7278
        %v7280 = vpop.f32.mrb[0].mxu0
        %v7281 = vadd.f32 %v5694, %v7280
        %v7282 = vpop.f32.mrb[0].mxu0
        %v7283 = vadd.f32 %v5698, %v7282
        %7284 = vmatprep.mubr.bf16.mxu0 %v5126
        %7285 = vmatmul.mubr.bf16.gmra.mrb[0].mxu0 %v5125
        %v7286 = vpop.f32.mrb[0].mxu0
        %v7287 = vadd.f32 %v5694, %v7286
        %v7288 = vpop.f32.mrb[0].mxu0
        %v7289 = vadd.f32 %v5698, %v7288
        %v7290 = vpop.f32.mrb[0].mxu0
        %v7291 = vadd.f32 %v5694, %v7290
        %v7292 = vpop.f32.mrb[0].mxu0
        %v7293 = vadd.f32 %v5698, %v7292
        %7294 = vmatprep.mubr.bf16.mxu0 %v5138
        %7295 = vmatmul.mubr.bf16.gmra.mrb[0].mxu0 %v5137
        %v7296 = vpop.f32.mrb[0].mxu0
        %v7297 = vadd.f32 %v5694, %v7296
        %v7298 = vpop.f32.mrb[0].mxu0
        %v7299 = vadd.f32 %v5698, %v7298
        %v7300 = vpop.f32.mrb[0].mxu0
        %v7301 = vadd.f32 %v5694, %v7300
        %v7302 = vpop.f32.mrb[0].mxu0
        %v7303 = vadd.f32 %v5698, %v7302
        %7304 = vmatprep.mubr.bf16.mxu0 %v5150
        %7305 = vmatmul.mubr.bf16.gmra.mrb[0].mxu0 %v5149
        %v7306 = vpop.f32.mrb[0].mxu0
        %v7307 = vadd.f32 %v5694, %v7306
        %v7308 = vpop.f32.mrb[0].mxu0
        %v7309 = vadd.f32 %v5698, %v7308
        %v7310 = vpop.f32.mrb[0].mxu0
        %v7311 = vadd.f32 %v5694, %v7310
        %v7312 = vpop.f32.mrb[0].mxu0
        %v7313 = vadd.f32 %v5698, %v7312
        %7314 = vmatprep.mubr.bf16.mxu0 %v5162
        %7315 = vmatmul.mubr.bf16.gmra.mrb[0].mxu0 %v5161
        %v7316 = vpop.f32.mrb[0].mxu0
        %v7317 = vadd.f32 %v5694, %v7316
        %v7318 = vpop.f32.mrb[0].mxu0
        %v7319 = vadd.f32 %v5698, %v7318
        %v7320 = vpop.f32.mrb[0].mxu0
        %v7321 = vadd.f32 %v5694, %v7320
        %v7322 = vpop.f32.mrb[0].mxu0
        %v7323 = vadd.f32 %v5698, %v7322
        %7324 = vmatprep.mubr.bf16.mxu0 %v5174
        %7325 = vmatmul.mubr.bf16.gmra.mrb[0].mxu0 %v5173
        %v7326 = vpop.f32.mrb[0].mxu0
        %v7327 = vadd.f32 %v5694, %v7326
        %v7328 = vpop.f32.mrb[0].mxu0
        %v7329 = vadd.f32 %v5698, %v7328
        %v7330 = vpop.f32.mrb[0].mxu0
        %v7331 = vadd.f32 %v5694, %v7330
        %v7332 = vpop.f32.mrb[0].mxu0
        %v7333 = vadd.f32 %v5698, %v7332
        %7334 = vmatprep.mubr.bf16.mxu0 %v5186
        %7335 = vmatmul.mubr.bf16.gmra.mrb[0].mxu0 %v5185
        %v7336 = vpop.f32.mrb[0].mxu0
        %v7337 = vadd.f32 %v5694, %v7336
        %v7338 = vpop.f32.mrb[0].mxu0
        %v7339 = vadd.f32 %v5698, %v7338
        %v7340 = vpop.f32.mrb[0].mxu0
        %v7341 = vadd.f32 %v5694, %v7340
        %v7342 = vpop.f32.mrb[0].mxu0
        %v7343 = vadd.f32 %v5698, %v7342
        %7344 = vmatprep.mubr.bf16.mxu0 %v5198
        %7345 = vmatmul.mubr.bf16.gmra.mrb[0].mxu0 %v5197
        %v7346 = vpop.f32.mrb[0].mxu0
        %v7347 = vadd.f32 %v5694, %v7346
        %v7348 = vpop.f32.mrb[0].mxu0
        %v7349 = vadd.f32 %v5698, %v7348
        %v7350 = vpop.f32.mrb[0].mxu0
        %v7351 = vadd.f32 %v5694, %v7350
        %v7352 = vpop.f32.mrb[0].mxu0
        %v7353 = vadd.f32 %v5698, %v7352
        %7354 = vmatprep.mubr.bf16.mxu0 %v5210
        %7355 = vmatmul.mubr.bf16.gmra.mrb[0].mxu0 %v5209
        %v7356 = vpop.f32.mrb[0].mxu0
        %v7357 = vadd.f32 %v5694, %v7356
        %v7358 = vpop.f32.mrb[0].mxu0
        %v7359 = vadd.f32 %v5698, %v7358
        %v7360 = vpop.f32.mrb[0].mxu0
        %v7361 = vadd.f32 %v5694, %v7360
        %v7362 = vpop.f32.mrb[0].mxu0
        %v7363 = vadd.f32 %v5698, %v7362
        %7364 = vmatprep.mubr.bf16.mxu0 %v5222
        %7365 = vmatmul.mubr.bf16.gmra.mrb[0].mxu0 %v5221
        %v7366 = vpop.f32.mrb[0].mxu0
        %v7367 = vadd.f32 %v5694, %v7366
        %v7368 = vpop.f32.mrb[0].mxu0
        %v7369 = vadd.f32 %v5698, %v7368
        %v7370 = vpop.f32.mrb[0].mxu0
        %v7371 = vadd.f32 %v5694, %v7370
        %v7372 = vpop.f32.mrb[0].mxu0
        %v7373 = vadd.f32 %v5698, %v7372
        %7374 = vmatprep.mubr.bf16.mxu0 %v5234
        %7375 = vmatmul.mubr.bf16.gmra.mrb[0].mxu0 %v5233
        %v7376 = vpop.f32.mrb[0].mxu0
        %v7377 = vadd.f32 %v5694, %v7376
        %v7378 = vpop.f32.mrb[0].mxu0
        %v7379 = vadd.f32 %v5698, %v7378
        %v7380 = vpop.f32.mrb[0].mxu0
        %v7381 = vadd.f32 %v5694, %v7380
        %v7382 = vpop.f32.mrb[0].mxu0
        %v7383 = vadd.f32 %v5698, %v7382
        %7384 = vmatprep.mubr.bf16.mxu0 %v5246
        %7385 = vmatmul.mubr.bf16.gmra.mrb[0].mxu0 %v5245
        %v7386 = vpop.f32.mrb[0].mxu0
        %v7387 = vadd.f32 %v5694, %v7386
        %v7388 = vpop.f32.mrb[0].mxu0
        %v7389 = vadd.f32 %v5698, %v7388
        %v7390 = vpop.f32.mrb[0].mxu0
        %v7391 = vadd.f32 %v5694, %v7390
        %v7392 = vpop.f32.mrb[0].mxu0
        %v7393 = vadd.f32 %v5698, %v7392
        %7394 = vmatprep.mubr.bf16.mxu0 %v5258
        %7395 = vmatmul.mubr.bf16.gmra.mrb[0].mxu0 %v5257
        %v7396 = vpop.f32.mrb[0].mxu0
        %v7397 = vadd.f32 %v5694, %v7396
        %v7398 = vpop.f32.mrb[0].mxu0
        %v7399 = vadd.f32 %v5698, %v7398
        %v7400 = vpop.f32.mrb[0].mxu0
        %v7401 = vadd.f32 %v5694, %v7400
        %v7402 = vpop.f32.mrb[0].mxu0
        %v7403 = vadd.f32 %v5698, %v7402
        %7404 = vmatprep.mubr.bf16.mxu0 %v5270
        %7405 = vmatmul.mubr.bf16.gmra.mrb[0].mxu0 %v5269
        %v7406 = vpop.f32.mrb[0].mxu0
        %v7407 = vadd.f32 %v5694, %v7406
        %v7408 = vpop.f32.mrb[0].mxu0
        %v7409 = vadd.f32 %v5698, %v7408
        %v7410 = vpop.f32.mrb[0].mxu0
        %v7411 = vadd.f32 %v5694, %v7410
        %v7412 = vpop.f32.mrb[0].mxu0
        %v7413 = vadd.f32 %v5698, %v7412
        %7414 = vmatprep.mubr.bf16.mxu0 %v5282
        %7415 = vmatmul.mubr.bf16.gmra.mrb[0].mxu0 %v5281
        %v7416 = vpop.f32.mrb[0].mxu0
        %v7417 = vadd.f32 %v5694, %v7416
        %v7418 = vpop.f32.mrb[0].mxu0
        %v7419 = vadd.f32 %v5698, %v7418
        %v7420 = vpop.f32.mrb[0].mxu0
        %v7421 = vadd.f32 %v5694, %v7420
        %v7422 = vpop.f32.mrb[0].mxu0
        %v7423 = vadd.f32 %v5698, %v7422
        %7424 = vmatprep.mubr.bf16.mxu0 %v5294
        %7425 = vmatmul.mubr.bf16.gmra.mrb[0].mxu0 %v5293
        %v7426 = vpop.f32.mrb[0].mxu0
        %v7427 = vadd.f32 %v5694, %v7426
        %v7428 = vpop.f32.mrb[0].mxu0
        %v7429 = vadd.f32 %v5698, %v7428
        %v7430 = vpop.f32.mrb[0].mxu0
        %v7431 = vadd.f32 %v5694, %v7430
        %v7432 = vpop.f32.mrb[0].mxu0
        %v7433 = vadd.f32 %v5698, %v7432
        %7434 = vdwg.mxu0
        %7435 = vmatprep.subr.bf16.mxu0 %v6715
        %7436 = vmatpush1.bf16.msra.mxu0 %v6714
        %7437 = vmatprep.subr.bf16.mxu0 %v6718
        %7438 = vmatpush1.bf16.msra.mxu0 %v6717
        %7439 = vmatprep.subr.bf16.mxu0 %v6721
        %7440 = vmatpush1.bf16.msra.mxu0 %v6720
        %7441 = vmatprep.subr.bf16.mxu0 %v6724
        %7442 = vmatpush1.bf16.msra.mxu0 %v6723
        %7443 = vmatprep.subr.bf16.mxu0 %v6727
        %7444 = vmatpush1.bf16.msra.mxu0 %v6726
        %7445 = vmatprep.subr.bf16.mxu0 %v6730
        %7446 = vmatpush1.bf16.msra.mxu0 %v6729
        %7447 = vmatprep.subr.bf16.mxu0 %v6733
        %7448 = vmatpush1.bf16.msra.mxu0 %v6732
        %7449 = vmatprep.subr.bf16.mxu0 %v6736
        %7450 = vmatpush1.bf16.msra.mxu0 %v6735
        %7451 = vmatprep.subr.bf16.mxu0 %v6739
        %7452 = vmatpush1.bf16.msra.mxu0 %v6738
        %7453 = vmatprep.subr.bf16.mxu0 %v6742
        %7454 = vmatpush1.bf16.msra.mxu0 %v6741
        %7455 = vmatprep.subr.bf16.mxu0 %v6745
        %7456 = vmatpush1.bf16.msra.mxu0 %v6744
        %7457 = vmatprep.subr.bf16.mxu0 %v6748
        %7458 = vmatpush1.bf16.msra.mxu0 %v6747
        %7459 = vmatprep.subr.bf16.mxu0 %v6751
        %7460 = vmatpush1.bf16.msra.mxu0 %v6750
        %7461 = vmatprep.subr.bf16.mxu0 %v6754
        %7462 = vmatpush1.bf16.msra.mxu0 %v6753
        %7463 = vmatprep.subr.bf16.mxu0 %v6757
        %7464 = vmatpush1.bf16.msra.mxu0 %v6756
        %7465 = vmatprep.subr.bf16.mxu0 %v6760
        %7466 = vmatpush1.bf16.msra.mxu0 %v6759
        %7467 = vmatprep.mubr.bf16.mxu0 %v5116
        %7468 = vmatmul.mubr.bf16.gmra.mrb[0].mxu0 %v5115
        %v7469 = vpop.f32.mrb[0].mxu0
        %v7470 = vadd.f32 %v7277, %v7469
        %v7471 = vpop.f32.mrb[0].mxu0
        %v7472 = vadd.f32 %v7279, %v7471
        %v7473 = vpop.f32.mrb[0].mxu0
        %v7474 = vadd.f32 %v7281, %v7473
        %v7475 = vpop.f32.mrb[0].mxu0
        %v7476 = vadd.f32 %v7283, %v7475
        %7477 = vmatprep.mubr.bf16.mxu0 %v5128
        %7478 = vmatmul.mubr.bf16.gmra.mrb[0].mxu0 %v5127
        %v7479 = vpop.f32.mrb[0].mxu0
        %v7480 = vadd.f32 %v7287, %v7479
        %v7481 = vpop.f32.mrb[0].mxu0
        %v7482 = vadd.f32 %v7289, %v7481
        %v7483 = vpop.f32.mrb[0].mxu0
        %v7484 = vadd.f32 %v7291, %v7483
        %v7485 = vpop.f32.mrb[0].mxu0
        %v7486 = vadd.f32 %v7293, %v7485
        %7487 = vmatprep.mubr.bf16.mxu0 %v5140
        %7488 = vmatmul.mubr.bf16.gmra.mrb[0].mxu0 %v5139
        %v7489 = vpop.f32.mrb[0].mxu0
        %v7490 = vadd.f32 %v7297, %v7489
        %v7491 = vpop.f32.mrb[0].mxu0
        %v7492 = vadd.f32 %v7299, %v7491
        %v7493 = vpop.f32.mrb[0].mxu0
        %v7494 = vadd.f32 %v7301, %v7493
        %v7495 = vpop.f32.mrb[0].mxu0
        %v7496 = vadd.f32 %v7303, %v7495
        %7497 = vmatprep.mubr.bf16.mxu0 %v5152
        %7498 = vmatmul.mubr.bf16.gmra.mrb[0].mxu0 %v5151
        %v7499 = vpop.f32.mrb[0].mxu0
        %v7500 = vadd.f32 %v7307, %v7499
        %v7501 = vpop.f32.mrb[0].mxu0
        %v7502 = vadd.f32 %v7309, %v7501
        %v7503 = vpop.f32.mrb[0].mxu0
        %v7504 = vadd.f32 %v7311, %v7503
        %v7505 = vpop.f32.mrb[0].mxu0
        %v7506 = vadd.f32 %v7313, %v7505
        %7507 = vmatprep.mubr.bf16.mxu0 %v5164
        %7508 = vmatmul.mubr.bf16.gmra.mrb[0].mxu0 %v5163
        %v7509 = vpop.f32.mrb[0].mxu0
        %v7510 = vadd.f32 %v7317, %v7509
        %v7511 = vpop.f32.mrb[0].mxu0
        %v7512 = vadd.f32 %v7319, %v7511
        %v7513 = vpop.f32.mrb[0].mxu0
        %v7514 = vadd.f32 %v7321, %v7513
        %v7515 = vpop.f32.mrb[0].mxu0
        %v7516 = vadd.f32 %v7323, %v7515
        %7517 = vmatprep.mubr.bf16.mxu0 %v5176
        %7518 = vmatmul.mubr.bf16.gmra.mrb[0].mxu0 %v5175
        %v7519 = vpop.f32.mrb[0].mxu0
        %v7520 = vadd.f32 %v7327, %v7519
        %v7521 = vpop.f32.mrb[0].mxu0
        %v7522 = vadd.f32 %v7329, %v7521
        %v7523 = vpop.f32.mrb[0].mxu0
        %v7524 = vadd.f32 %v7331, %v7523
        %v7525 = vpop.f32.mrb[0].mxu0
        %v7526 = vadd.f32 %v7333, %v7525
        %7527 = vmatprep.mubr.bf16.mxu0 %v5188
        %7528 = vmatmul.mubr.bf16.gmra.mrb[0].mxu0 %v5187
        %v7529 = vpop.f32.mrb[0].mxu0
        %v7530 = vadd.f32 %v7337, %v7529
        %v7531 = vpop.f32.mrb[0].mxu0
        %v7532 = vadd.f32 %v7339, %v7531
        %v7533 = vpop.f32.mrb[0].mxu0
        %v7534 = vadd.f32 %v7341, %v7533
        %v7535 = vpop.f32.mrb[0].mxu0
        %v7536 = vadd.f32 %v7343, %v7535
        %7537 = vmatprep.mubr.bf16.mxu0 %v5200
        %7538 = vmatmul.mubr.bf16.gmra.mrb[0].mxu0 %v5199
        %v7539 = vpop.f32.mrb[0].mxu0
        %v7540 = vadd.f32 %v7347, %v7539
        %v7541 = vpop.f32.mrb[0].mxu0
        %v7542 = vadd.f32 %v7349, %v7541
        %v7543 = vpop.f32.mrb[0].mxu0
        %v7544 = vadd.f32 %v7351, %v7543
        %v7545 = vpop.f32.mrb[0].mxu0
        %v7546 = vadd.f32 %v7353, %v7545
        %7547 = vmatprep.mubr.bf16.mxu0 %v5212
        %7548 = vmatmul.mubr.bf16.gmra.mrb[0].mxu0 %v5211
        %v7549 = vpop.f32.mrb[0].mxu0
        %v7550 = vadd.f32 %v7357, %v7549
        %v7551 = vpop.f32.mrb[0].mxu0
        %v7552 = vadd.f32 %v7359, %v7551
        %v7553 = vpop.f32.mrb[0].mxu0
        %v7554 = vadd.f32 %v7361, %v7553
        %v7555 = vpop.f32.mrb[0].mxu0
        %v7556 = vadd.f32 %v7363, %v7555
        %7557 = vmatprep.mubr.bf16.mxu0 %v5224
        %7558 = vmatmul.mubr.bf16.gmra.mrb[0].mxu0 %v5223
        %v7559 = vpop.f32.mrb[0].mxu0
        %v7560 = vadd.f32 %v7367, %v7559
        %v7561 = vpop.f32.mrb[0].mxu0
        %v7562 = vadd.f32 %v7369, %v7561
        %v7563 = vpop.f32.mrb[0].mxu0
        %v7564 = vadd.f32 %v7371, %v7563
        %v7565 = vpop.f32.mrb[0].mxu0
        %v7566 = vadd.f32 %v7373, %v7565
        %7567 = vmatprep.mubr.bf16.mxu0 %v5236
        %7568 = vmatmul.mubr.bf16.gmra.mrb[0].mxu0 %v5235
        %v7569 = vpop.f32.mrb[0].mxu0
        %v7570 = vadd.f32 %v7377, %v7569
        %v7571 = vpop.f32.mrb[0].mxu0
        %v7572 = vadd.f32 %v7379, %v7571
        %v7573 = vpop.f32.mrb[0].mxu0
        %v7574 = vadd.f32 %v7381, %v7573
        %v7575 = vpop.f32.mrb[0].mxu0
        %v7576 = vadd.f32 %v7383, %v7575
        %7577 = vmatprep.mubr.bf16.mxu0 %v5248
        %7578 = vmatmul.mubr.bf16.gmra.mrb[0].mxu0 %v5247
        %v7579 = vpop.f32.mrb[0].mxu0
        %v7580 = vadd.f32 %v7387, %v7579
        %v7581 = vpop.f32.mrb[0].mxu0
        %v7582 = vadd.f32 %v7389, %v7581
        %v7583 = vpop.f32.mrb[0].mxu0
        %v7584 = vadd.f32 %v7391, %v7583
        %v7585 = vpop.f32.mrb[0].mxu0
        %v7586 = vadd.f32 %v7393, %v7585
        %7587 = vmatprep.mubr.bf16.mxu0 %v5260
        %7588 = vmatmul.mubr.bf16.gmra.mrb[0].mxu0 %v5259
        %v7589 = vpop.f32.mrb[0].mxu0
        %v7590 = vadd.f32 %v7397, %v7589
        %v7591 = vpop.f32.mrb[0].mxu0
        %v7592 = vadd.f32 %v7399, %v7591
        %v7593 = vpop.f32.mrb[0].mxu0
        %v7594 = vadd.f32 %v7401, %v7593
        %v7595 = vpop.f32.mrb[0].mxu0
        %v7596 = vadd.f32 %v7403, %v7595
        %7597 = vmatprep.mubr.bf16.mxu0 %v5272
        %7598 = vmatmul.mubr.bf16.gmra.mrb[0].mxu0 %v5271
        %v7599 = vpop.f32.mrb[0].mxu0
        %v7600 = vadd.f32 %v7407, %v7599
        %v7601 = vpop.f32.mrb[0].mxu0
        %v7602 = vadd.f32 %v7409, %v7601
        %v7603 = vpop.f32.mrb[0].mxu0
        %v7604 = vadd.f32 %v7411, %v7603
        %v7605 = vpop.f32.mrb[0].mxu0
        %v7606 = vadd.f32 %v7413, %v7605
        %7607 = vmatprep.mubr.bf16.mxu0 %v5284
        %7608 = vmatmul.mubr.bf16.gmra.mrb[0].mxu0 %v5283
        %v7609 = vpop.f32.mrb[0].mxu0
        %v7610 = vadd.f32 %v7417, %v7609
        %v7611 = vpop.f32.mrb[0].mxu0
        %v7612 = vadd.f32 %v7419, %v7611
        %v7613 = vpop.f32.mrb[0].mxu0
        %v7614 = vadd.f32 %v7421, %v7613
        %v7615 = vpop.f32.mrb[0].mxu0
        %v7616 = vadd.f32 %v7423, %v7615
        %7617 = vmatprep.mubr.bf16.mxu0 %v5296
        %7618 = vmatmul.mubr.bf16.gmra.mrb[0].mxu0 %v5295
        %v7619 = vpop.f32.mrb[0].mxu0
        %v7620 = vadd.f32 %v7427, %v7619
        %v7621 = vpop.f32.mrb[0].mxu0
        %v7622 = vadd.f32 %v7429, %v7621
        %v7623 = vpop.f32.mrb[0].mxu0
        %v7624 = vadd.f32 %v7431, %v7623
        %v7625 = vpop.f32.mrb[0].mxu0
        %v7626 = vadd.f32 %v7433, %v7625
        %7627 = vdwg.mxu0
        %7628 = vmatprep.subr.bf16.mxu0 %v6763
        %7629 = vmatpush1.bf16.msra.mxu0 %v6762
        %7630 = vmatprep.subr.bf16.mxu0 %v6766
        %7631 = vmatpush1.bf16.msra.mxu0 %v6765
        %7632 = vmatprep.subr.bf16.mxu0 %v6769
        %7633 = vmatpush1.bf16.msra.mxu0 %v6768
        %7634 = vmatprep.subr.bf16.mxu0 %v6772
        %7635 = vmatpush1.bf16.msra.mxu0 %v6771
        %7636 = vmatprep.subr.bf16.mxu0 %v6775
        %7637 = vmatpush1.bf16.msra.mxu0 %v6774
        %7638 = vmatprep.subr.bf16.mxu0 %v6778
        %7639 = vmatpush1.bf16.msra.mxu0 %v6777
        %7640 = vmatprep.subr.bf16.mxu0 %v6781
        %7641 = vmatpush1.bf16.msra.mxu0 %v6780
        %7642 = vmatprep.subr.bf16.mxu0 %v6784
        %7643 = vmatpush1.bf16.msra.mxu0 %v6783
        %7644 = vmatprep.subr.bf16.mxu0 %v6787
        %7645 = vmatpush1.bf16.msra.mxu0 %v6786
        %7646 = vmatprep.subr.bf16.mxu0 %v6790
        %7647 = vmatpush1.bf16.msra.mxu0 %v6789
        %7648 = vmatprep.subr.bf16.mxu0 %v6793
        %7649 = vmatpush1.bf16.msra.mxu0 %v6792
        %7650 = vmatprep.subr.bf16.mxu0 %v6796
        %7651 = vmatpush1.bf16.msra.mxu0 %v6795
        %7652 = vmatprep.subr.bf16.mxu0 %v6799
        %7653 = vmatpush1.bf16.msra.mxu0 %v6798
        %7654 = vmatprep.subr.bf16.mxu0 %v6802
        %7655 = vmatpush1.bf16.msra.mxu0 %v6801
        %7656 = vmatprep.subr.bf16.mxu0 %v6805
        %7657 = vmatpush1.bf16.msra.mxu0 %v6804
        %7658 = vmatprep.subr.bf16.mxu0 %v6808
        %7659 = vmatpush1.bf16.msra.mxu0 %v6807
        %7660 = vmatprep.mubr.bf16.mxu0 %v5118
        %7661 = vmatmul.mubr.bf16.gmra.mrb[0].mxu0 %v5117
        %v7662 = vpop.f32.mrb[0].mxu0
        %v7663 = vadd.f32 %v7470, %v7662
        %v7664 = vpop.f32.mrb[0].mxu0
        %v7665 = vadd.f32 %v7472, %v7664
        %v7666 = vpop.f32.mrb[0].mxu0
        %v7667 = vadd.f32 %v7474, %v7666
        %v7668 = vpop.f32.mrb[0].mxu0
        %v7669 = vadd.f32 %v7476, %v7668
        %7670 = vmatprep.mubr.bf16.mxu0 %v5130
        %7671 = vmatmul.mubr.bf16.gmra.mrb[0].mxu0 %v5129
        %v7672 = vpop.f32.mrb[0].mxu0
        %v7673 = vadd.f32 %v7480, %v7672
        %v7674 = vpop.f32.mrb[0].mxu0
        %v7675 = vadd.f32 %v7482, %v7674
        %v7676 = vpop.f32.mrb[0].mxu0
        %v7677 = vadd.f32 %v7484, %v7676
        %v7678 = vpop.f32.mrb[0].mxu0
        %v7679 = vadd.f32 %v7486, %v7678
        %7680 = vmatprep.mubr.bf16.mxu0 %v5142
        %7681 = vmatmul.mubr.bf16.gmra.mrb[0].mxu0 %v5141
        %v7682 = vpop.f32.mrb[0].mxu0
        %v7683 = vadd.f32 %v7490, %v7682
        %v7684 = vpop.f32.mrb[0].mxu0
        %v7685 = vadd.f32 %v7492, %v7684
        %v7686 = vpop.f32.mrb[0].mxu0
        %v7687 = vadd.f32 %v7494, %v7686
        %v7688 = vpop.f32.mrb[0].mxu0
        %v7689 = vadd.f32 %v7496, %v7688
        %7690 = vmatprep.mubr.bf16.mxu0 %v5154
        %7691 = vmatmul.mubr.bf16.gmra.mrb[0].mxu0 %v5153
        %v7692 = vpop.f32.mrb[0].mxu0
        %v7693 = vadd.f32 %v7500, %v7692
        %v7694 = vpop.f32.mrb[0].mxu0
        %v7695 = vadd.f32 %v7502, %v7694
        %v7696 = vpop.f32.mrb[0].mxu0
        %v7697 = vadd.f32 %v7504, %v7696
        %v7698 = vpop.f32.mrb[0].mxu0
        %v7699 = vadd.f32 %v7506, %v7698
        %7700 = vmatprep.mubr.bf16.mxu0 %v5166
        %7701 = vmatmul.mubr.bf16.gmra.mrb[0].mxu0 %v5165
        %v7702 = vpop.f32.mrb[0].mxu0
        %v7703 = vadd.f32 %v7510, %v7702
        %v7704 = vpop.f32.mrb[0].mxu0
        %v7705 = vadd.f32 %v7512, %v7704
        %v7706 = vpop.f32.mrb[0].mxu0
        %v7707 = vadd.f32 %v7514, %v7706
        %v7708 = vpop.f32.mrb[0].mxu0
        %v7709 = vadd.f32 %v7516, %v7708
        %7710 = vmatprep.mubr.bf16.mxu0 %v5178
        %7711 = vmatmul.mubr.bf16.gmra.mrb[0].mxu0 %v5177
        %v7712 = vpop.f32.mrb[0].mxu0
        %v7713 = vadd.f32 %v7520, %v7712
        %v7714 = vpop.f32.mrb[0].mxu0
        %v7715 = vadd.f32 %v7522, %v7714
        %v7716 = vpop.f32.mrb[0].mxu0
        %v7717 = vadd.f32 %v7524, %v7716
        %v7718 = vpop.f32.mrb[0].mxu0
        %v7719 = vadd.f32 %v7526, %v7718
        %7720 = vmatprep.mubr.bf16.mxu0 %v5190
        %7721 = vmatmul.mubr.bf16.gmra.mrb[0].mxu0 %v5189
        %v7722 = vpop.f32.mrb[0].mxu0
        %v7723 = vadd.f32 %v7530, %v7722
        %v7724 = vpop.f32.mrb[0].mxu0
        %v7725 = vadd.f32 %v7532, %v7724
        %v7726 = vpop.f32.mrb[0].mxu0
        %v7727 = vadd.f32 %v7534, %v7726
        %v7728 = vpop.f32.mrb[0].mxu0
        %v7729 = vadd.f32 %v7536, %v7728
        %7730 = vmatprep.mubr.bf16.mxu0 %v5202
        %7731 = vmatmul.mubr.bf16.gmra.mrb[0].mxu0 %v5201
        %v7732 = vpop.f32.mrb[0].mxu0
        %v7733 = vadd.f32 %v7540, %v7732
        %v7734 = vpop.f32.mrb[0].mxu0
        %v7735 = vadd.f32 %v7542, %v7734
        %v7736 = vpop.f32.mrb[0].mxu0
        %v7737 = vadd.f32 %v7544, %v7736
        %v7738 = vpop.f32.mrb[0].mxu0
        %v7739 = vadd.f32 %v7546, %v7738
        %7740 = vmatprep.mubr.bf16.mxu0 %v5214
        %7741 = vmatmul.mubr.bf16.gmra.mrb[0].mxu0 %v5213
        %v7742 = vpop.f32.mrb[0].mxu0
        %v7743 = vadd.f32 %v7550, %v7742
        %v7744 = vpop.f32.mrb[0].mxu0
        %v7745 = vadd.f32 %v7552, %v7744
        %v7746 = vpop.f32.mrb[0].mxu0
        %v7747 = vadd.f32 %v7554, %v7746
        %v7748 = vpop.f32.mrb[0].mxu0
        %v7749 = vadd.f32 %v7556, %v7748
        %7750 = vmatprep.mubr.bf16.mxu0 %v5226
        %7751 = vmatmul.mubr.bf16.gmra.mrb[0].mxu0 %v5225
        %v7752 = vpop.f32.mrb[0].mxu0
        %v7753 = vadd.f32 %v7560, %v7752
        %v7754 = vpop.f32.mrb[0].mxu0
        %v7755 = vadd.f32 %v7562, %v7754
        %v7756 = vpop.f32.mrb[0].mxu0
        %v7757 = vadd.f32 %v7564, %v7756
        %v7758 = vpop.f32.mrb[0].mxu0
        %v7759 = vadd.f32 %v7566, %v7758
        %7760 = vmatprep.mubr.bf16.mxu0 %v5238
        %7761 = vmatmul.mubr.bf16.gmra.mrb[0].mxu0 %v5237
        %v7762 = vpop.f32.mrb[0].mxu0
        %v7763 = vadd.f32 %v7570, %v7762
        %v7764 = vpop.f32.mrb[0].mxu0
        %v7765 = vadd.f32 %v7572, %v7764
        %v7766 = vpop.f32.mrb[0].mxu0
        %v7767 = vadd.f32 %v7574, %v7766
        %v7768 = vpop.f32.mrb[0].mxu0
        %v7769 = vadd.f32 %v7576, %v7768
        %7770 = vmatprep.mubr.bf16.mxu0 %v5250
        %7771 = vmatmul.mubr.bf16.gmra.mrb[0].mxu0 %v5249
        %v7772 = vpop.f32.mrb[0].mxu0
        %v7773 = vadd.f32 %v7580, %v7772
        %v7774 = vpop.f32.mrb[0].mxu0
        %v7775 = vadd.f32 %v7582, %v7774
        %v7776 = vpop.f32.mrb[0].mxu0
        %v7777 = vadd.f32 %v7584, %v7776
        %v7778 = vpop.f32.mrb[0].mxu0
        %v7779 = vadd.f32 %v7586, %v7778
        %7780 = vmatprep.mubr.bf16.mxu0 %v5262
        %7781 = vmatmul.mubr.bf16.gmra.mrb[0].mxu0 %v5261
        %v7782 = vpop.f32.mrb[0].mxu0
        %v7783 = vadd.f32 %v7590, %v7782
        %v7784 = vpop.f32.mrb[0].mxu0
        %v7785 = vadd.f32 %v7592, %v7784
        %v7786 = vpop.f32.mrb[0].mxu0
        %v7787 = vadd.f32 %v7594, %v7786
        %v7788 = vpop.f32.mrb[0].mxu0
        %v7789 = vadd.f32 %v7596, %v7788
        %7790 = vmatprep.mubr.bf16.mxu0 %v5274
        %7791 = vmatmul.mubr.bf16.gmra.mrb[0].mxu0 %v5273
        %v7792 = vpop.f32.mrb[0].mxu0
        %v7793 = vadd.f32 %v7600, %v7792
        %v7794 = vpop.f32.mrb[0].mxu0
        %v7795 = vadd.f32 %v7602, %v7794
        %v7796 = vpop.f32.mrb[0].mxu0
        %v7797 = vadd.f32 %v7604, %v7796
        %v7798 = vpop.f32.mrb[0].mxu0
        %v7799 = vadd.f32 %v7606, %v7798
        %7800 = vmatprep.mubr.bf16.mxu0 %v5286
        %7801 = vmatmul.mubr.bf16.gmra.mrb[0].mxu0 %v5285
        %v7802 = vpop.f32.mrb[0].mxu0
        %v7803 = vadd.f32 %v7610, %v7802
        %v7804 = vpop.f32.mrb[0].mxu0
        %v7805 = vadd.f32 %v7612, %v7804
        %v7806 = vpop.f32.mrb[0].mxu0
        %v7807 = vadd.f32 %v7614, %v7806
        %v7808 = vpop.f32.mrb[0].mxu0
        %v7809 = vadd.f32 %v7616, %v7808
        %7810 = vmatprep.mubr.bf16.mxu0 %v5298
        %7811 = vmatmul.mubr.bf16.gmra.mrb[0].mxu0 %v5297
        %v7812 = vpop.f32.mrb[0].mxu0
        %v7813 = vadd.f32 %v7620, %v7812
        %v7814 = vpop.f32.mrb[0].mxu0
        %v7815 = vadd.f32 %v7622, %v7814
        %v7816 = vpop.f32.mrb[0].mxu0
        %v7817 = vadd.f32 %v7624, %v7816
        %v7818 = vpop.f32.mrb[0].mxu0
        %v7819 = vadd.f32 %v7626, %v7818
        %7820 = vdwg.mxu0
        %7821 = vmatprep.subr.bf16.mxu0 %v6811
        %7822 = vmatpush1.bf16.msra.mxu0 %v6810
        %7823 = vmatprep.subr.bf16.mxu0 %v6814
        %7824 = vmatpush1.bf16.msra.mxu0 %v6813
        %7825 = vmatprep.subr.bf16.mxu0 %v6817
        %7826 = vmatpush1.bf16.msra.mxu0 %v6816
        %7827 = vmatprep.subr.bf16.mxu0 %v6820
        %7828 = vmatpush1.bf16.msra.mxu0 %v6819
        %7829 = vmatprep.subr.bf16.mxu0 %v6823
        %7830 = vmatpush1.bf16.msra.mxu0 %v6822
        %7831 = vmatprep.subr.bf16.mxu0 %v6826
        %7832 = vmatpush1.bf16.msra.mxu0 %v6825
        %7833 = vmatprep.subr.bf16.mxu0 %v6829
        %7834 = vmatpush1.bf16.msra.mxu0 %v6828
        %7835 = vmatprep.subr.bf16.mxu0 %v6832
        %7836 = vmatpush1.bf16.msra.mxu0 %v6831
        %7837 = vmatprep.subr.bf16.mxu0 %v6835
        %7838 = vmatpush1.bf16.msra.mxu0 %v6834
        %7839 = vmatprep.subr.bf16.mxu0 %v6838
        %7840 = vmatpush1.bf16.msra.mxu0 %v6837
        %7841 = vmatprep.subr.bf16.mxu0 %v6841
        %7842 = vmatpush1.bf16.msra.mxu0 %v6840
        %7843 = vmatprep.subr.bf16.mxu0 %v6844
        %7844 = vmatpush1.bf16.msra.mxu0 %v6843
        %7845 = vmatprep.subr.bf16.mxu0 %v6847
        %7846 = vmatpush1.bf16.msra.mxu0 %v6846
        %7847 = vmatprep.subr.bf16.mxu0 %v6850
        %7848 = vmatpush1.bf16.msra.mxu0 %v6849
        %7849 = vmatprep.subr.bf16.mxu0 %v6853
        %7850 = vmatpush1.bf16.msra.mxu0 %v6852
        %7851 = vmatprep.subr.bf16.mxu0 %v6856
        %7852 = vmatpush1.bf16.msra.mxu0 %v6855
        %7853 = vmatprep.mubr.bf16.mxu0 %v5120
        %7854 = vmatmul.mubr.bf16.gmra.mrb[0].mxu0 %v5119
        %v7855 = vpop.f32.mrb[0].mxu0
        %v7856 = vadd.f32 %v7663, %v7855
        %v7857 = vpop.f32.mrb[0].mxu0
        %v7858 = vadd.f32 %v7665, %v7857
        %v7859 = vpop.f32.mrb[0].mxu0
        %v7860 = vadd.f32 %v7667, %v7859
        %v7861 = vpop.f32.mrb[0].mxu0
        %v7862 = vadd.f32 %v7669, %v7861
        %7863 = vmatprep.mubr.bf16.mxu0 %v5132
        %7864 = vmatmul.mubr.bf16.gmra.mrb[0].mxu0 %v5131
        %v7865 = vpop.f32.mrb[0].mxu0
        %v7866 = vadd.f32 %v7673, %v7865
        %v7867 = vpop.f32.mrb[0].mxu0
        %v7868 = vadd.f32 %v7675, %v7867
        %v7869 = vpop.f32.mrb[0].mxu0
        %v7870 = vadd.f32 %v7677, %v7869
        %v7871 = vpop.f32.mrb[0].mxu0
        %v7872 = vadd.f32 %v7679, %v7871
        %7873 = vmatprep.mubr.bf16.mxu0 %v5144
        %7874 = vmatmul.mubr.bf16.gmra.mrb[0].mxu0 %v5143
        %v7875 = vpop.f32.mrb[0].mxu0
        %v7876 = vadd.f32 %v7683, %v7875
        %v7877 = vpop.f32.mrb[0].mxu0
        %v7878 = vadd.f32 %v7685, %v7877
        %v7879 = vpop.f32.mrb[0].mxu0
        %v7880 = vadd.f32 %v7687, %v7879
        %v7881 = vpop.f32.mrb[0].mxu0
        %v7882 = vadd.f32 %v7689, %v7881
        %7883 = vmatprep.mubr.bf16.mxu0 %v5156
        %7884 = vmatmul.mubr.bf16.gmra.mrb[0].mxu0 %v5155
        %v7885 = vpop.f32.mrb[0].mxu0
        %v7886 = vadd.f32 %v7693, %v7885
        %v7887 = vpop.f32.mrb[0].mxu0
        %v7888 = vadd.f32 %v7695, %v7887
        %v7889 = vpop.f32.mrb[0].mxu0
        %v7890 = vadd.f32 %v7697, %v7889
        %v7891 = vpop.f32.mrb[0].mxu0
        %v7892 = vadd.f32 %v7699, %v7891
        %7893 = vmatprep.mubr.bf16.mxu0 %v5168
        %7894 = vmatmul.mubr.bf16.gmra.mrb[0].mxu0 %v5167
        %v7895 = vpop.f32.mrb[0].mxu0
        %v7896 = vadd.f32 %v7703, %v7895
        %v7897 = vpop.f32.mrb[0].mxu0
        %v7898 = vadd.f32 %v7705, %v7897
        %v7899 = vpop.f32.mrb[0].mxu0
        %v7900 = vadd.f32 %v7707, %v7899
        %v7901 = vpop.f32.mrb[0].mxu0
        %v7902 = vadd.f32 %v7709, %v7901
        %7903 = vmatprep.mubr.bf16.mxu0 %v5180
        %7904 = vmatmul.mubr.bf16.gmra.mrb[0].mxu0 %v5179
        %v7905 = vpop.f32.mrb[0].mxu0
        %v7906 = vadd.f32 %v7713, %v7905
        %v7907 = vpop.f32.mrb[0].mxu0
        %v7908 = vadd.f32 %v7715, %v7907
        %v7909 = vpop.f32.mrb[0].mxu0
        %v7910 = vadd.f32 %v7717, %v7909
        %v7911 = vpop.f32.mrb[0].mxu0
        %v7912 = vadd.f32 %v7719, %v7911
        %7913 = vmatprep.mubr.bf16.mxu0 %v5192
        %7914 = vmatmul.mubr.bf16.gmra.mrb[0].mxu0 %v5191
        %v7915 = vpop.f32.mrb[0].mxu0
        %v7916 = vadd.f32 %v7723, %v7915
        %v7917 = vpop.f32.mrb[0].mxu0
        %v7918 = vadd.f32 %v7725, %v7917
        %v7919 = vpop.f32.mrb[0].mxu0
        %v7920 = vadd.f32 %v7727, %v7919
        %v7921 = vpop.f32.mrb[0].mxu0
        %v7922 = vadd.f32 %v7729, %v7921
        %7923 = vmatprep.mubr.bf16.mxu0 %v5204
        %7924 = vmatmul.mubr.bf16.gmra.mrb[0].mxu0 %v5203
        %v7925 = vpop.f32.mrb[0].mxu0
        %v7926 = vadd.f32 %v7733, %v7925
        %v7927 = vpop.f32.mrb[0].mxu0
        %v7928 = vadd.f32 %v7735, %v7927
        %v7929 = vpop.f32.mrb[0].mxu0
        %v7930 = vadd.f32 %v7737, %v7929
        %v7931 = vpop.f32.mrb[0].mxu0
        %v7932 = vadd.f32 %v7739, %v7931
        %7933 = vmatprep.mubr.bf16.mxu0 %v5216
        %7934 = vmatmul.mubr.bf16.gmra.mrb[0].mxu0 %v5215
        %v7935 = vpop.f32.mrb[0].mxu0
        %v7936 = vadd.f32 %v7743, %v7935
        %v7937 = vpop.f32.mrb[0].mxu0
        %v7938 = vadd.f32 %v7745, %v7937
        %v7939 = vpop.f32.mrb[0].mxu0
        %v7940 = vadd.f32 %v7747, %v7939
        %v7941 = vpop.f32.mrb[0].mxu0
        %v7942 = vadd.f32 %v7749, %v7941
        %7943 = vmatprep.mubr.bf16.mxu0 %v5228
        %7944 = vmatmul.mubr.bf16.gmra.mrb[0].mxu0 %v5227
        %v7945 = vpop.f32.mrb[0].mxu0
        %v7946 = vadd.f32 %v7753, %v7945
        %v7947 = vpop.f32.mrb[0].mxu0
        %v7948 = vadd.f32 %v7755, %v7947
        %v7949 = vpop.f32.mrb[0].mxu0
        %v7950 = vadd.f32 %v7757, %v7949
        %v7951 = vpop.f32.mrb[0].mxu0
        %v7952 = vadd.f32 %v7759, %v7951
        %7953 = vmatprep.mubr.bf16.mxu0 %v5240
        %7954 = vmatmul.mubr.bf16.gmra.mrb[0].mxu0 %v5239
        %v7955 = vpop.f32.mrb[0].mxu0
        %v7956 = vadd.f32 %v7763, %v7955
        %v7957 = vpop.f32.mrb[0].mxu0
        %v7958 = vadd.f32 %v7765, %v7957
        %v7959 = vpop.f32.mrb[0].mxu0
        %v7960 = vadd.f32 %v7767, %v7959
        %v7961 = vpop.f32.mrb[0].mxu0
        %v7962 = vadd.f32 %v7769, %v7961
        %7963 = vmatprep.mubr.bf16.mxu0 %v5252
        %7964 = vmatmul.mubr.bf16.gmra.mrb[0].mxu0 %v5251
        %v7965 = vpop.f32.mrb[0].mxu0
        %v7966 = vadd.f32 %v7773, %v7965
        %v7967 = vpop.f32.mrb[0].mxu0
        %v7968 = vadd.f32 %v7775, %v7967
        %v7969 = vpop.f32.mrb[0].mxu0
        %v7970 = vadd.f32 %v7777, %v7969
        %v7971 = vpop.f32.mrb[0].mxu0
        %v7972 = vadd.f32 %v7779, %v7971
        %7973 = vmatprep.mubr.bf16.mxu0 %v5264
        %7974 = vmatmul.mubr.bf16.gmra.mrb[0].mxu0 %v5263
        %v7975 = vpop.f32.mrb[0].mxu0
        %v7976 = vadd.f32 %v7783, %v7975
        %v7977 = vpop.f32.mrb[0].mxu0
        %v7978 = vadd.f32 %v7785, %v7977
        %v7979 = vpop.f32.mrb[0].mxu0
        %v7980 = vadd.f32 %v7787, %v7979
        %v7981 = vpop.f32.mrb[0].mxu0
        %v7982 = vadd.f32 %v7789, %v7981
        %7983 = vmatprep.mubr.bf16.mxu0 %v5276
        %7984 = vmatmul.mubr.bf16.gmra.mrb[0].mxu0 %v5275
        %v7985 = vpop.f32.mrb[0].mxu0
        %v7986 = vadd.f32 %v7793, %v7985
        %v7987 = vpop.f32.mrb[0].mxu0
        %v7988 = vadd.f32 %v7795, %v7987
        %v7989 = vpop.f32.mrb[0].mxu0
        %v7990 = vadd.f32 %v7797, %v7989
        %v7991 = vpop.f32.mrb[0].mxu0
        %v7992 = vadd.f32 %v7799, %v7991
        %7993 = vmatprep.mubr.bf16.mxu0 %v5288
        %7994 = vmatmul.mubr.bf16.gmra.mrb[0].mxu0 %v5287
        %v7995 = vpop.f32.mrb[0].mxu0
        %v7996 = vadd.f32 %v7803, %v7995
        %v7997 = vpop.f32.mrb[0].mxu0
        %v7998 = vadd.f32 %v7805, %v7997
        %v7999 = vpop.f32.mrb[0].mxu0
        %v8000 = vadd.f32 %v7807, %v7999
        %v8001 = vpop.f32.mrb[0].mxu0
        %v8002 = vadd.f32 %v7809, %v8001
        %8003 = vmatprep.mubr.bf16.mxu0 %v5300
        %8004 = vmatmul.mubr.bf16.gmra.mrb[0].mxu0 %v5299
        %v8005 = vpop.f32.mrb[0].mxu0
        %v8006 = vadd.f32 %v7813, %v8005
        %v8007 = vpop.f32.mrb[0].mxu0
        %v8008 = vadd.f32 %v7815, %v8007
        %v8009 = vpop.f32.mrb[0].mxu0
        %v8010 = vadd.f32 %v7817, %v8009
        %v8011 = vpop.f32.mrb[0].mxu0
        %v8012 = vadd.f32 %v7819, %v8011
        %8013 = vdwg.mxu0
        %8014 = vmatprep.subr.bf16.mxu0 %v6859
        %8015 = vmatpush1.bf16.msra.mxu0 %v6858
        %8016 = vmatprep.subr.bf16.mxu0 %v6862
        %8017 = vmatpush1.bf16.msra.mxu0 %v6861
        %8018 = vmatprep.subr.bf16.mxu0 %v6865
        %8019 = vmatpush1.bf16.msra.mxu0 %v6864
        %8020 = vmatprep.subr.bf16.mxu0 %v6868
        %8021 = vmatpush1.bf16.msra.mxu0 %v6867
        %8022 = vmatprep.subr.bf16.mxu0 %v6871
        %8023 = vmatpush1.bf16.msra.mxu0 %v6870
        %8024 = vmatprep.subr.bf16.mxu0 %v6874
        %8025 = vmatpush1.bf16.msra.mxu0 %v6873
        %8026 = vmatprep.subr.bf16.mxu0 %v6877
        %8027 = vmatpush1.bf16.msra.mxu0 %v6876
        %8028 = vmatprep.subr.bf16.mxu0 %v6880
        %8029 = vmatpush1.bf16.msra.mxu0 %v6879
        %8030 = vmatprep.subr.bf16.mxu0 %v6883
        %8031 = vmatpush1.bf16.msra.mxu0 %v6882
        %8032 = vmatprep.subr.bf16.mxu0 %v6886
        %8033 = vmatpush1.bf16.msra.mxu0 %v6885
        %8034 = vmatprep.subr.bf16.mxu0 %v6889
        %8035 = vmatpush1.bf16.msra.mxu0 %v6888
        %8036 = vmatprep.subr.bf16.mxu0 %v6892
        %8037 = vmatpush1.bf16.msra.mxu0 %v6891
        %8038 = vmatprep.subr.bf16.mxu0 %v6895
        %8039 = vmatpush1.bf16.msra.mxu0 %v6894
        %8040 = vmatprep.subr.bf16.mxu0 %v6898
        %8041 = vmatpush1.bf16.msra.mxu0 %v6897
        %8042 = vmatprep.subr.bf16.mxu0 %v6901
        %8043 = vmatpush1.bf16.msra.mxu0 %v6900
        %8044 = vmatprep.subr.bf16.mxu0 %v6904
        %8045 = vmatpush1.bf16.msra.mxu0 %v6903
        %8046 = vmatprep.mubr.bf16.mxu0 %v5122
        %8047 = vmatmul.mubr.bf16.gmra.mrb[0].mxu0 %v5121
        %v8048 = vpop.f32.mrb[0].mxu0
        %v8049 = vadd.f32 %v7856, %v8048
        %v8050 = vpop.f32.mrb[0].mxu0
        %v8051 = vadd.f32 %v7858, %v8050
        %v8052 = vpop.f32.mrb[0].mxu0
        %v8053 = vadd.f32 %v7860, %v8052
        %v8054 = vpop.f32.mrb[0].mxu0
        %v8055 = vadd.f32 %v7862, %v8054
        %8056 = vmatprep.mubr.bf16.mxu0 %v5134
        %8057 = vmatmul.mubr.bf16.gmra.mrb[0].mxu0 %v5133
        %v8058 = vpop.f32.mrb[0].mxu0
        %v8059 = vadd.f32 %v7866, %v8058
        %v8060 = vpop.f32.mrb[0].mxu0
        %v8061 = vadd.f32 %v7868, %v8060
        %v8062 = vpop.f32.mrb[0].mxu0
        %v8063 = vadd.f32 %v7870, %v8062
        %v8064 = vpop.f32.mrb[0].mxu0
        %v8065 = vadd.f32 %v7872, %v8064
        %8066 = vmatprep.mubr.bf16.mxu0 %v5146
        %8067 = vmatmul.mubr.bf16.gmra.mrb[0].mxu0 %v5145
        %v8068 = vpop.f32.mrb[0].mxu0
        %v8069 = vadd.f32 %v7876, %v8068
        %v8070 = vpop.f32.mrb[0].mxu0
        %v8071 = vadd.f32 %v7878, %v8070
        %v8072 = vpop.f32.mrb[0].mxu0
        %v8073 = vadd.f32 %v7880, %v8072
        %v8074 = vpop.f32.mrb[0].mxu0
        %v8075 = vadd.f32 %v7882, %v8074
        %8076 = vmatprep.mubr.bf16.mxu0 %v5158
        %8077 = vmatmul.mubr.bf16.gmra.mrb[0].mxu0 %v5157
        %v8078 = vpop.f32.mrb[0].mxu0
        %v8079 = vadd.f32 %v7886, %v8078
        %v8080 = vpop.f32.mrb[0].mxu0
        %v8081 = vadd.f32 %v7888, %v8080
        %v8082 = vpop.f32.mrb[0].mxu0
        %v8083 = vadd.f32 %v7890, %v8082
        %v8084 = vpop.f32.mrb[0].mxu0
        %v8085 = vadd.f32 %v7892, %v8084
        %8086 = vmatprep.mubr.bf16.mxu0 %v5170
        %8087 = vmatmul.mubr.bf16.gmra.mrb[0].mxu0 %v5169
        %v8088 = vpop.f32.mrb[0].mxu0
        %v8089 = vadd.f32 %v7896, %v8088
        %v8090 = vpop.f32.mrb[0].mxu0
        %v8091 = vadd.f32 %v7898, %v8090
        %v8092 = vpop.f32.mrb[0].mxu0
        %v8093 = vadd.f32 %v7900, %v8092
        %v8094 = vpop.f32.mrb[0].mxu0
        %v8095 = vadd.f32 %v7902, %v8094
        %8096 = vmatprep.mubr.bf16.mxu0 %v5182
        %8097 = vmatmul.mubr.bf16.gmra.mrb[0].mxu0 %v5181
        %v8098 = vpop.f32.mrb[0].mxu0
        %v8099 = vadd.f32 %v7906, %v8098
        %v8100 = vpop.f32.mrb[0].mxu0
        %v8101 = vadd.f32 %v7908, %v8100
        %v8102 = vpop.f32.mrb[0].mxu0
        %v8103 = vadd.f32 %v7910, %v8102
        %v8104 = vpop.f32.mrb[0].mxu0
        %v8105 = vadd.f32 %v7912, %v8104
        %8106 = vmatprep.mubr.bf16.mxu0 %v5194
        %8107 = vmatmul.mubr.bf16.gmra.mrb[0].mxu0 %v5193
        %v8108 = vpop.f32.mrb[0].mxu0
        %v8109 = vadd.f32 %v7916, %v8108
        %v8110 = vpop.f32.mrb[0].mxu0
        %v8111 = vadd.f32 %v7918, %v8110
        %v8112 = vpop.f32.mrb[0].mxu0
        %v8113 = vadd.f32 %v7920, %v8112
        %v8114 = vpop.f32.mrb[0].mxu0
        %v8115 = vadd.f32 %v7922, %v8114
        %8116 = vmatprep.mubr.bf16.mxu0 %v5206
        %8117 = vmatmul.mubr.bf16.gmra.mrb[0].mxu0 %v5205
        %v8118 = vpop.f32.mrb[0].mxu0
        %v8119 = vadd.f32 %v7926, %v8118
        %v8120 = vpop.f32.mrb[0].mxu0
        %v8121 = vadd.f32 %v7928, %v8120
        %v8122 = vpop.f32.mrb[0].mxu0
        %v8123 = vadd.f32 %v7930, %v8122
        %v8124 = vpop.f32.mrb[0].mxu0
        %v8125 = vadd.f32 %v7932, %v8124
        %8126 = vmatprep.mubr.bf16.mxu0 %v5218
        %8127 = vmatmul.mubr.bf16.gmra.mrb[0].mxu0 %v5217
        %v8128 = vpop.f32.mrb[0].mxu0
        %v8129 = vadd.f32 %v7936, %v8128
        %v8130 = vpop.f32.mrb[0].mxu0
        %v8131 = vadd.f32 %v7938, %v8130
        %v8132 = vpop.f32.mrb[0].mxu0
        %v8133 = vadd.f32 %v7940, %v8132
        %v8134 = vpop.f32.mrb[0].mxu0
        %v8135 = vadd.f32 %v7942, %v8134
        %8136 = vmatprep.mubr.bf16.mxu0 %v5230
        %8137 = vmatmul.mubr.bf16.gmra.mrb[0].mxu0 %v5229
        %v8138 = vpop.f32.mrb[0].mxu0
        %v8139 = vadd.f32 %v7946, %v8138
        %v8140 = vpop.f32.mrb[0].mxu0
        %v8141 = vadd.f32 %v7948, %v8140
        %v8142 = vpop.f32.mrb[0].mxu0
        %v8143 = vadd.f32 %v7950, %v8142
        %v8144 = vpop.f32.mrb[0].mxu0
        %v8145 = vadd.f32 %v7952, %v8144
        %8146 = vmatprep.mubr.bf16.mxu0 %v5242
        %8147 = vmatmul.mubr.bf16.gmra.mrb[0].mxu0 %v5241
        %v8148 = vpop.f32.mrb[0].mxu0
        %v8149 = vadd.f32 %v7956, %v8148
        %v8150 = vpop.f32.mrb[0].mxu0
        %v8151 = vadd.f32 %v7958, %v8150
        %v8152 = vpop.f32.mrb[0].mxu0
        %v8153 = vadd.f32 %v7960, %v8152
        %v8154 = vpop.f32.mrb[0].mxu0
        %v8155 = vadd.f32 %v7962, %v8154
        %8156 = vmatprep.mubr.bf16.mxu0 %v5254
        %8157 = vmatmul.mubr.bf16.gmra.mrb[0].mxu0 %v5253
        %v8158 = vpop.f32.mrb[0].mxu0
        %v8159 = vadd.f32 %v7966, %v8158
        %v8160 = vpop.f32.mrb[0].mxu0
        %v8161 = vadd.f32 %v7968, %v8160
        %v8162 = vpop.f32.mrb[0].mxu0
        %v8163 = vadd.f32 %v7970, %v8162
        %v8164 = vpop.f32.mrb[0].mxu0
        %v8165 = vadd.f32 %v7972, %v8164
        %8166 = vmatprep.mubr.bf16.mxu0 %v5266
        %8167 = vmatmul.mubr.bf16.gmra.mrb[0].mxu0 %v5265
        %v8168 = vpop.f32.mrb[0].mxu0
        %v8169 = vadd.f32 %v7976, %v8168
        %v8170 = vpop.f32.mrb[0].mxu0
        %v8171 = vadd.f32 %v7978, %v8170
        %v8172 = vpop.f32.mrb[0].mxu0
        %v8173 = vadd.f32 %v7980, %v8172
        %v8174 = vpop.f32.mrb[0].mxu0
        %v8175 = vadd.f32 %v7982, %v8174
        %8176 = vmatprep.mubr.bf16.mxu0 %v5278
        %8177 = vmatmul.mubr.bf16.gmra.mrb[0].mxu0 %v5277
        %v8178 = vpop.f32.mrb[0].mxu0
        %v8179 = vadd.f32 %v7986, %v8178
        %v8180 = vpop.f32.mrb[0].mxu0
        %v8181 = vadd.f32 %v7988, %v8180
        %v8182 = vpop.f32.mrb[0].mxu0
        %v8183 = vadd.f32 %v7990, %v8182
        %v8184 = vpop.f32.mrb[0].mxu0
        %v8185 = vadd.f32 %v7992, %v8184
        %8186 = vmatprep.mubr.bf16.mxu0 %v5290
        %8187 = vmatmul.mubr.bf16.gmra.mrb[0].mxu0 %v5289
        %v8188 = vpop.f32.mrb[0].mxu0
        %v8189 = vadd.f32 %v7996, %v8188
        %v8190 = vpop.f32.mrb[0].mxu0
        %v8191 = vadd.f32 %v7998, %v8190
        %v8192 = vpop.f32.mrb[0].mxu0
        %v8193 = vadd.f32 %v8000, %v8192
        %v8194 = vpop.f32.mrb[0].mxu0
        %v8195 = vadd.f32 %v8002, %v8194
        %8196 = vmatprep.mubr.bf16.mxu0 %v5302
        %8197 = vmatmul.mubr.bf16.gmra.mrb[0].mxu0 %v5301
        %v8198 = vpop.f32.mrb[0].mxu0
        %v8199 = vadd.f32 %v8006, %v8198
        %v8200 = vpop.f32.mrb[0].mxu0
        %v8201 = vadd.f32 %v8008, %v8200
        %v8202 = vpop.f32.mrb[0].mxu0
        %v8203 = vadd.f32 %v8010, %v8202
        %v8204 = vpop.f32.mrb[0].mxu0
        %v8205 = vadd.f32 %v8012, %v8204
        %8206 = vdwg.mxu0
        %8207 = vmatprep.subr.bf16.mxu0 %v6907
        %8208 = vmatpush1.bf16.msra.mxu0 %v6906
        %8209 = vmatprep.subr.bf16.mxu0 %v6910
        %8210 = vmatpush1.bf16.msra.mxu0 %v6909
        %8211 = vmatprep.subr.bf16.mxu0 %v6913
        %8212 = vmatpush1.bf16.msra.mxu0 %v6912
        %8213 = vmatprep.subr.bf16.mxu0 %v6916
        %8214 = vmatpush1.bf16.msra.mxu0 %v6915
        %8215 = vmatprep.subr.bf16.mxu0 %v6919
        %8216 = vmatpush1.bf16.msra.mxu0 %v6918
        %8217 = vmatprep.subr.bf16.mxu0 %v6922
        %8218 = vmatpush1.bf16.msra.mxu0 %v6921
        %8219 = vmatprep.subr.bf16.mxu0 %v6925
        %8220 = vmatpush1.bf16.msra.mxu0 %v6924
        %8221 = vmatprep.subr.bf16.mxu0 %v6928
        %8222 = vmatpush1.bf16.msra.mxu0 %v6927
        %8223 = vmatprep.subr.bf16.mxu0 %v6931
        %8224 = vmatpush1.bf16.msra.mxu0 %v6930
        %8225 = vmatprep.subr.bf16.mxu0 %v6934
        %8226 = vmatpush1.bf16.msra.mxu0 %v6933
        %8227 = vmatprep.subr.bf16.mxu0 %v6937
        %8228 = vmatpush1.bf16.msra.mxu0 %v6936
        %8229 = vmatprep.subr.bf16.mxu0 %v6940
        %8230 = vmatpush1.bf16.msra.mxu0 %v6939
        %8231 = vmatprep.subr.bf16.mxu0 %v6943
        %8232 = vmatpush1.bf16.msra.mxu0 %v6942
        %8233 = vmatprep.subr.bf16.mxu0 %v6946
        %8234 = vmatpush1.bf16.msra.mxu0 %v6945
        %8235 = vmatprep.subr.bf16.mxu0 %v6949
        %8236 = vmatpush1.bf16.msra.mxu0 %v6948
        %8237 = vmatprep.subr.bf16.mxu0 %v6952
        %8238 = vmatpush1.bf16.msra.mxu0 %v6951
        %8239 = vmatprep.mubr.bf16.mxu0 %v5124
        %8240 = vmatmul.mubr.bf16.gmra.mrb[0].mxu0 %v5123
        %v8241 = vpop.f32.mrb[0].mxu0
        %v8242 = vadd.f32 %v8049, %v8241
        %v8243 = vpop.f32.mrb[0].mxu0
        %v8244 = vadd.f32 %v8051, %v8243
        %v8245 = vpop.f32.mrb[0].mxu0
        %v8246 = vadd.f32 %v8053, %v8245
        %v8247 = vpop.f32.mrb[0].mxu0
        %v8248 = vadd.f32 %v8055, %v8247
        %8249 = vmatprep.mubr.bf16.mxu0 %v5136
        %8250 = vmatmul.mubr.bf16.gmra.mrb[0].mxu0 %v5135
        %v8251 = vpop.f32.mrb[0].mxu0
        %v8252 = vadd.f32 %v8059, %v8251
        %v8253 = vpop.f32.mrb[0].mxu0
        %v8254 = vadd.f32 %v8061, %v8253
        %v8255 = vpop.f32.mrb[0].mxu0
        %v8256 = vadd.f32 %v8063, %v8255
        %v8257 = vpop.f32.mrb[0].mxu0
        %v8258 = vadd.f32 %v8065, %v8257
        %8259 = vmatprep.mubr.bf16.mxu0 %v5148
        %8260 = vmatmul.mubr.bf16.gmra.mrb[0].mxu0 %v5147
        %v8261 = vpop.f32.mrb[0].mxu0
        %v8262 = vadd.f32 %v8069, %v8261
        %v8263 = vpop.f32.mrb[0].mxu0
        %v8264 = vadd.f32 %v8071, %v8263
        %v8265 = vpop.f32.mrb[0].mxu0
        %v8266 = vadd.f32 %v8073, %v8265
        %v8267 = vpop.f32.mrb[0].mxu0
        %v8268 = vadd.f32 %v8075, %v8267
        %8269 = vmatprep.mubr.bf16.mxu0 %v5160
        %8270 = vmatmul.mubr.bf16.gmra.mrb[0].mxu0 %v5159
        %v8271 = vpop.f32.mrb[0].mxu0
        %v8272 = vadd.f32 %v8079, %v8271
        %v8273 = vpop.f32.mrb[0].mxu0
        %v8274 = vadd.f32 %v8081, %v8273
        %v8275 = vpop.f32.mrb[0].mxu0
        %v8276 = vadd.f32 %v8083, %v8275
        %v8277 = vpop.f32.mrb[0].mxu0
        %v8278 = vadd.f32 %v8085, %v8277
        %8279 = vmatprep.mubr.bf16.mxu0 %v5172
        %8280 = vmatmul.mubr.bf16.gmra.mrb[0].mxu0 %v5171
        %v8281 = vpop.f32.mrb[0].mxu0
        %v8282 = vadd.f32 %v8089, %v8281
        %v8283 = vpop.f32.mrb[0].mxu0
        %v8284 = vadd.f32 %v8091, %v8283
        %v8285 = vpop.f32.mrb[0].mxu0
        %v8286 = vadd.f32 %v8093, %v8285
        %v8287 = vpop.f32.mrb[0].mxu0
        %v8288 = vadd.f32 %v8095, %v8287
        %8289 = vmatprep.mubr.bf16.mxu0 %v5184
        %8290 = vmatmul.mubr.bf16.gmra.mrb[0].mxu0 %v5183
        %v8291 = vpop.f32.mrb[0].mxu0
        %v8292 = vadd.f32 %v8099, %v8291
        %v8293 = vpop.f32.mrb[0].mxu0
        %v8294 = vadd.f32 %v8101, %v8293
        %v8295 = vpop.f32.mrb[0].mxu0
        %v8296 = vadd.f32 %v8103, %v8295
        %v8297 = vpop.f32.mrb[0].mxu0
        %v8298 = vadd.f32 %v8105, %v8297
        %8299 = vmatprep.mubr.bf16.mxu0 %v5196
        %8300 = vmatmul.mubr.bf16.gmra.mrb[0].mxu0 %v5195
        %v8301 = vpop.f32.mrb[0].mxu0
        %v8302 = vadd.f32 %v8109, %v8301
        %v8303 = vpop.f32.mrb[0].mxu0
        %v8304 = vadd.f32 %v8111, %v8303
        %v8305 = vpop.f32.mrb[0].mxu0
        %v8306 = vadd.f32 %v8113, %v8305
        %v8307 = vpop.f32.mrb[0].mxu0
        %v8308 = vadd.f32 %v8115, %v8307
        %8309 = vmatprep.mubr.bf16.mxu0 %v5208
        %8310 = vmatmul.mubr.bf16.gmra.mrb[0].mxu0 %v5207
        %v8311 = vpop.f32.mrb[0].mxu0
        %v8312 = vadd.f32 %v8119, %v8311
        %v8313 = vpop.f32.mrb[0].mxu0
        %v8314 = vadd.f32 %v8121, %v8313
        %v8315 = vpop.f32.mrb[0].mxu0
        %v8316 = vadd.f32 %v8123, %v8315
        %v8317 = vpop.f32.mrb[0].mxu0
        %v8318 = vadd.f32 %v8125, %v8317
        %8319 = vmatprep.mubr.bf16.mxu0 %v5220
        %8320 = vmatmul.mubr.bf16.gmra.mrb[0].mxu0 %v5219
        %v8321 = vpop.f32.mrb[0].mxu0
        %v8322 = vadd.f32 %v8129, %v8321
        %v8323 = vpop.f32.mrb[0].mxu0
        %v8324 = vadd.f32 %v8131, %v8323
        %v8325 = vpop.f32.mrb[0].mxu0
        %v8326 = vadd.f32 %v8133, %v8325
        %v8327 = vpop.f32.mrb[0].mxu0
        %v8328 = vadd.f32 %v8135, %v8327
        %8329 = vmatprep.mubr.bf16.mxu0 %v5232
        %8330 = vmatmul.mubr.bf16.gmra.mrb[0].mxu0 %v5231
        %v8331 = vpop.f32.mrb[0].mxu0
        %v8332 = vadd.f32 %v8139, %v8331
        %v8333 = vpop.f32.mrb[0].mxu0
        %v8334 = vadd.f32 %v8141, %v8333
        %v8335 = vpop.f32.mrb[0].mxu0
        %v8336 = vadd.f32 %v8143, %v8335
        %v8337 = vpop.f32.mrb[0].mxu0
        %v8338 = vadd.f32 %v8145, %v8337
        %8339 = vmatprep.mubr.bf16.mxu0 %v5244
        %8340 = vmatmul.mubr.bf16.gmra.mrb[0].mxu0 %v5243
        %v8341 = vpop.f32.mrb[0].mxu0
        %v8342 = vadd.f32 %v8149, %v8341
        %v8343 = vpop.f32.mrb[0].mxu0
        %v8344 = vadd.f32 %v8151, %v8343
        %v8345 = vpop.f32.mrb[0].mxu0
        %v8346 = vadd.f32 %v8153, %v8345
        %v8347 = vpop.f32.mrb[0].mxu0
        %v8348 = vadd.f32 %v8155, %v8347
        %8349 = vmatprep.mubr.bf16.mxu0 %v5256
        %8350 = vmatmul.mubr.bf16.gmra.mrb[0].mxu0 %v5255
        %v8351 = vpop.f32.mrb[0].mxu0
        %v8352 = vadd.f32 %v8159, %v8351
        %v8353 = vpop.f32.mrb[0].mxu0
        %v8354 = vadd.f32 %v8161, %v8353
        %v8355 = vpop.f32.mrb[0].mxu0
        %v8356 = vadd.f32 %v8163, %v8355
        %v8357 = vpop.f32.mrb[0].mxu0
        %v8358 = vadd.f32 %v8165, %v8357
        %8359 = vmatprep.mubr.bf16.mxu0 %v5268
        %8360 = vmatmul.mubr.bf16.gmra.mrb[0].mxu0 %v5267
        %v8361 = vpop.f32.mrb[0].mxu0
        %v8362 = vadd.f32 %v8169, %v8361
        %v8363 = vpop.f32.mrb[0].mxu0
        %v8364 = vadd.f32 %v8171, %v8363
        %v8365 = vpop.f32.mrb[0].mxu0
        %v8366 = vadd.f32 %v8173, %v8365
        %v8367 = vpop.f32.mrb[0].mxu0
        %v8368 = vadd.f32 %v8175, %v8367
        %8369 = vmatprep.mubr.bf16.mxu0 %v5280
        %8370 = vmatmul.mubr.bf16.gmra.mrb[0].mxu0 %v5279
        %v8371 = vpop.f32.mrb[0].mxu0
        %v8372 = vadd.f32 %v8179, %v8371
        %v8373 = vpop.f32.mrb[0].mxu0
        %v8374 = vadd.f32 %v8181, %v8373
        %v8375 = vpop.f32.mrb[0].mxu0
        %v8376 = vadd.f32 %v8183, %v8375
        %v8377 = vpop.f32.mrb[0].mxu0
        %v8378 = vadd.f32 %v8185, %v8377
        %8379 = vmatprep.mubr.bf16.mxu0 %v5292
        %8380 = vmatmul.mubr.bf16.gmra.mrb[0].mxu0 %v5291
        %v8381 = vpop.f32.mrb[0].mxu0
        %v8382 = vadd.f32 %v8189, %v8381
        %v8383 = vpop.f32.mrb[0].mxu0
        %v8384 = vadd.f32 %v8191, %v8383
        %v8385 = vpop.f32.mrb[0].mxu0
        %v8386 = vadd.f32 %v8193, %v8385
        %v8387 = vpop.f32.mrb[0].mxu0
        %v8388 = vadd.f32 %v8195, %v8387
        %8389 = vmatprep.mubr.bf16.mxu0 %v5304
        %8390 = vmatmul.mubr.bf16.gmra.mrb[0].mxu0 %v5303
        %v8391 = vpop.f32.mrb[0].mxu0
        %v8392 = vadd.f32 %v8199, %v8391
        %v8393 = vpop.f32.mrb[0].mxu0
        %v8394 = vadd.f32 %v8201, %v8393
        %v8395 = vpop.f32.mrb[0].mxu0
        %v8396 = vadd.f32 %v8203, %v8395
        %v8397 = vpop.f32.mrb[0].mxu0
        %v8398 = vadd.f32 %v8205, %v8397
        %8399 = vdwg.mxu0
        %8400 = vmatprep.subr.bf16.mxu0 0
        %8401 = vmatpush1.bf16.msra.mxu0 %v6668
        %8402 = vmatprep.subr.bf16.mxu0 0
        %8403 = vmatpush1.bf16.msra.mxu0 %v6671
        %8404 = vmatprep.subr.bf16.mxu0 0
        %8405 = vmatpush1.bf16.msra.mxu0 %v6674
        %8406 = vmatprep.subr.bf16.mxu0 0
        %8407 = vmatpush1.bf16.msra.mxu0 %v6677
        %8408 = vmatprep.subr.bf16.mxu0 0
        %8409 = vmatpush1.bf16.msra.mxu0 %v6680
        %8410 = vmatprep.subr.bf16.mxu0 0
        %8411 = vmatpush1.bf16.msra.mxu0 %v6683
        %8412 = vmatprep.subr.bf16.mxu0 0
        %8413 = vmatpush1.bf16.msra.mxu0 %v6686
        %8414 = vmatprep.subr.bf16.mxu0 0
        %8415 = vmatpush1.bf16.msra.mxu0 %v6689
        %8416 = vmatprep.subr.bf16.mxu0 0
        %8417 = vmatpush1.bf16.msra.mxu0 %v6692
        %8418 = vmatprep.subr.bf16.mxu0 0
        %8419 = vmatpush1.bf16.msra.mxu0 %v6695
        %8420 = vmatprep.subr.bf16.mxu0 0
        %8421 = vmatpush1.bf16.msra.mxu0 %v6698
        %8422 = vmatprep.subr.bf16.mxu0 0
        %8423 = vmatpush1.bf16.msra.mxu0 %v6701
        %8424 = vmatprep.subr.bf16.mxu0 0
        %8425 = vmatpush1.bf16.msra.mxu0 %v6704
        %8426 = vmatprep.subr.bf16.mxu0 0
        %8427 = vmatpush1.bf16.msra.mxu0 %v6707
        %8428 = vmatprep.subr.bf16.mxu0 0
        %8429 = vmatpush1.bf16.msra.mxu0 %v6710
        %8430 = vmatprep.subr.bf16.mxu0 0
        %8431 = vmatpush1.bf16.msra.mxu0 %v6713
        %8432 = vmatprep.mubr.bf16.mxu0 %v5114
        %8433 = vmatmul.mubr.bf16.gmra.mrb[0].mxu0 %v5113
        %v8434 = vpop.f32.mrb[0].mxu0
        %v8435 = vadd.f32 %v5702, %v8434
        %v8436 = vpop.f32.mrb[0].mxu0
        %v8437 = vpop.f32.mrb[0].mxu0
        %v8438 = vadd.f32 %v5702, %v8437
        %v8439 = vpop.f32.mrb[0].mxu0
        %8440 = vmatprep.mubr.bf16.mxu0 %v5126
        %8441 = vmatmul.mubr.bf16.gmra.mrb[0].mxu0 %v5125
        %v8442 = vpop.f32.mrb[0].mxu0
        %v8443 = vadd.f32 %v5702, %v8442
        %v8444 = vpop.f32.mrb[0].mxu0
        %v8445 = vpop.f32.mrb[0].mxu0
        %v8446 = vadd.f32 %v5702, %v8445
        %v8447 = vpop.f32.mrb[0].mxu0
        %8448 = vmatprep.mubr.bf16.mxu0 %v5138
        %8449 = vmatmul.mubr.bf16.gmra.mrb[0].mxu0 %v5137
        %v8450 = vpop.f32.mrb[0].mxu0
        %v8451 = vadd.f32 %v5702, %v8450
        %v8452 = vpop.f32.mrb[0].mxu0
        %v8453 = vpop.f32.mrb[0].mxu0
        %v8454 = vadd.f32 %v5702, %v8453
        %v8455 = vpop.f32.mrb[0].mxu0
        %8456 = vmatprep.mubr.bf16.mxu0 %v5150
        %8457 = vmatmul.mubr.bf16.gmra.mrb[0].mxu0 %v5149
        %v8458 = vpop.f32.mrb[0].mxu0
        %v8459 = vadd.f32 %v5702, %v8458
        %v8460 = vpop.f32.mrb[0].mxu0
        %v8461 = vpop.f32.mrb[0].mxu0
        %v8462 = vadd.f32 %v5702, %v8461
        %v8463 = vpop.f32.mrb[0].mxu0
        %8464 = vmatprep.mubr.bf16.mxu0 %v5162
        %8465 = vmatmul.mubr.bf16.gmra.mrb[0].mxu0 %v5161
        %v8466 = vpop.f32.mrb[0].mxu0
        %v8467 = vadd.f32 %v5702, %v8466
        %v8468 = vpop.f32.mrb[0].mxu0
        %v8469 = vpop.f32.mrb[0].mxu0
        %v8470 = vadd.f32 %v5702, %v8469
        %v8471 = vpop.f32.mrb[0].mxu0
        %8472 = vmatprep.mubr.bf16.mxu0 %v5174
        %8473 = vmatmul.mubr.bf16.gmra.mrb[0].mxu0 %v5173
        %v8474 = vpop.f32.mrb[0].mxu0
        %v8475 = vadd.f32 %v5702, %v8474
        %v8476 = vpop.f32.mrb[0].mxu0
        %v8477 = vpop.f32.mrb[0].mxu0
        %v8478 = vadd.f32 %v5702, %v8477
        %v8479 = vpop.f32.mrb[0].mxu0
        %8480 = vmatprep.mubr.bf16.mxu0 %v5186
        %8481 = vmatmul.mubr.bf16.gmra.mrb[0].mxu0 %v5185
        %v8482 = vpop.f32.mrb[0].mxu0
        %v8483 = vadd.f32 %v5702, %v8482
        %v8484 = vpop.f32.mrb[0].mxu0
        %v8485 = vpop.f32.mrb[0].mxu0
        %v8486 = vadd.f32 %v5702, %v8485
        %v8487 = vpop.f32.mrb[0].mxu0
        %8488 = vmatprep.mubr.bf16.mxu0 %v5198
        %8489 = vmatmul.mubr.bf16.gmra.mrb[0].mxu0 %v5197
        %v8490 = vpop.f32.mrb[0].mxu0
        %v8491 = vadd.f32 %v5702, %v8490
        %v8492 = vpop.f32.mrb[0].mxu0
        %v8493 = vpop.f32.mrb[0].mxu0
        %v8494 = vadd.f32 %v5702, %v8493
        %v8495 = vpop.f32.mrb[0].mxu0
        %8496 = vmatprep.mubr.bf16.mxu0 %v5210
        %8497 = vmatmul.mubr.bf16.gmra.mrb[0].mxu0 %v5209
        %v8498 = vpop.f32.mrb[0].mxu0
        %v8499 = vadd.f32 %v5702, %v8498
        %v8500 = vpop.f32.mrb[0].mxu0
        %v8501 = vpop.f32.mrb[0].mxu0
        %v8502 = vadd.f32 %v5702, %v8501
        %v8503 = vpop.f32.mrb[0].mxu0
        %8504 = vmatprep.mubr.bf16.mxu0 %v5222
        %8505 = vmatmul.mubr.bf16.gmra.mrb[0].mxu0 %v5221
        %v8506 = vpop.f32.mrb[0].mxu0
        %v8507 = vadd.f32 %v5702, %v8506
        %v8508 = vpop.f32.mrb[0].mxu0
        %v8509 = vpop.f32.mrb[0].mxu0
        %v8510 = vadd.f32 %v5702, %v8509
        %v8511 = vpop.f32.mrb[0].mxu0
        %8512 = vmatprep.mubr.bf16.mxu0 %v5234
        %8513 = vmatmul.mubr.bf16.gmra.mrb[0].mxu0 %v5233
        %v8514 = vpop.f32.mrb[0].mxu0
        %v8515 = vadd.f32 %v5702, %v8514
        %v8516 = vpop.f32.mrb[0].mxu0
        %v8517 = vpop.f32.mrb[0].mxu0
        %v8518 = vadd.f32 %v5702, %v8517
        %v8519 = vpop.f32.mrb[0].mxu0
        %8520 = vmatprep.mubr.bf16.mxu0 %v5246
        %8521 = vmatmul.mubr.bf16.gmra.mrb[0].mxu0 %v5245
        %v8522 = vpop.f32.mrb[0].mxu0
        %v8523 = vadd.f32 %v5702, %v8522
        %v8524 = vpop.f32.mrb[0].mxu0
        %v8525 = vpop.f32.mrb[0].mxu0
        %v8526 = vadd.f32 %v5702, %v8525
        %v8527 = vpop.f32.mrb[0].mxu0
        %8528 = vmatprep.mubr.bf16.mxu0 %v5258
        %8529 = vmatmul.mubr.bf16.gmra.mrb[0].mxu0 %v5257
        %v8530 = vpop.f32.mrb[0].mxu0
        %v8531 = vadd.f32 %v5702, %v8530
        %v8532 = vpop.f32.mrb[0].mxu0
        %v8533 = vpop.f32.mrb[0].mxu0
        %v8534 = vadd.f32 %v5702, %v8533
        %v8535 = vpop.f32.mrb[0].mxu0
        %8536 = vmatprep.mubr.bf16.mxu0 %v5270
        %8537 = vmatmul.mubr.bf16.gmra.mrb[0].mxu0 %v5269
        %v8538 = vpop.f32.mrb[0].mxu0
        %v8539 = vadd.f32 %v5702, %v8538
        %v8540 = vpop.f32.mrb[0].mxu0
        %v8541 = vpop.f32.mrb[0].mxu0
        %v8542 = vadd.f32 %v5702, %v8541
        %v8543 = vpop.f32.mrb[0].mxu0
        %8544 = vmatprep.mubr.bf16.mxu0 %v5282
        %8545 = vmatmul.mubr.bf16.gmra.mrb[0].mxu0 %v5281
        %v8546 = vpop.f32.mrb[0].mxu0
        %v8547 = vadd.f32 %v5702, %v8546
        %v8548 = vpop.f32.mrb[0].mxu0
        %v8549 = vpop.f32.mrb[0].mxu0
        %v8550 = vadd.f32 %v5702, %v8549
        %v8551 = vpop.f32.mrb[0].mxu0
        %8552 = vmatprep.mubr.bf16.mxu0 %v5294
        %8553 = vmatmul.mubr.bf16.gmra.mrb[0].mxu0 %v5293
        %v8554 = vpop.f32.mrb[0].mxu0
        %v8555 = vadd.f32 %v5702, %v8554
        %v8556 = vpop.f32.mrb[0].mxu0
        %v8557 = vpop.f32.mrb[0].mxu0
        %v8558 = vadd.f32 %v5702, %v8557
        %v8559 = vpop.f32.mrb[0].mxu0
        %8560 = vdwg.mxu0
        %8561 = vmatprep.subr.bf16.mxu0 0
        %8562 = vmatpush1.bf16.msra.mxu0 %v6716
        %8563 = vmatprep.subr.bf16.mxu0 0
        %8564 = vmatpush1.bf16.msra.mxu0 %v6719
        %8565 = vmatprep.subr.bf16.mxu0 0
        %8566 = vmatpush1.bf16.msra.mxu0 %v6722
        %8567 = vmatprep.subr.bf16.mxu0 0
        %8568 = vmatpush1.bf16.msra.mxu0 %v6725
        %8569 = vmatprep.subr.bf16.mxu0 0
        %8570 = vmatpush1.bf16.msra.mxu0 %v6728
        %8571 = vmatprep.subr.bf16.mxu0 0
        %8572 = vmatpush1.bf16.msra.mxu0 %v6731
        %8573 = vmatprep.subr.bf16.mxu0 0
        %8574 = vmatpush1.bf16.msra.mxu0 %v6734
        %8575 = vmatprep.subr.bf16.mxu0 0
        %8576 = vmatpush1.bf16.msra.mxu0 %v6737
        %8577 = vmatprep.subr.bf16.mxu0 0
        %8578 = vmatpush1.bf16.msra.mxu0 %v6740
        %8579 = vmatprep.subr.bf16.mxu0 0
        %8580 = vmatpush1.bf16.msra.mxu0 %v6743
        %8581 = vmatprep.subr.bf16.mxu0 0
        %8582 = vmatpush1.bf16.msra.mxu0 %v6746
        %8583 = vmatprep.subr.bf16.mxu0 0
        %8584 = vmatpush1.bf16.msra.mxu0 %v6749
        %8585 = vmatprep.subr.bf16.mxu0 0
        %8586 = vmatpush1.bf16.msra.mxu0 %v6752
        %8587 = vmatprep.subr.bf16.mxu0 0
        %8588 = vmatpush1.bf16.msra.mxu0 %v6755
        %8589 = vmatprep.subr.bf16.mxu0 0
        %8590 = vmatpush1.bf16.msra.mxu0 %v6758
        %8591 = vmatprep.subr.bf16.mxu0 0
        %8592 = vmatpush1.bf16.msra.mxu0 %v6761
        %8593 = vmatprep.mubr.bf16.mxu0 %v5116
        %8594 = vmatmul.mubr.bf16.gmra.mrb[0].mxu0 %v5115
        %v8595 = vpop.f32.mrb[0].mxu0
        %v8596 = vadd.f32 %v8435, %v8595
        %v8597 = vpop.f32.mrb[0].mxu0
        %v8598 = vpop.f32.mrb[0].mxu0
        %v8599 = vadd.f32 %v8438, %v8598
        %v8600 = vpop.f32.mrb[0].mxu0
        %8601 = vmatprep.mubr.bf16.mxu0 %v5128
        %8602 = vmatmul.mubr.bf16.gmra.mrb[0].mxu0 %v5127
        %v8603 = vpop.f32.mrb[0].mxu0
        %v8604 = vadd.f32 %v8443, %v8603
        %v8605 = vpop.f32.mrb[0].mxu0
        %v8606 = vpop.f32.mrb[0].mxu0
        %v8607 = vadd.f32 %v8446, %v8606
        %v8608 = vpop.f32.mrb[0].mxu0
        %8609 = vmatprep.mubr.bf16.mxu0 %v5140
        %8610 = vmatmul.mubr.bf16.gmra.mrb[0].mxu0 %v5139
        %v8611 = vpop.f32.mrb[0].mxu0
        %v8612 = vadd.f32 %v8451, %v8611
        %v8613 = vpop.f32.mrb[0].mxu0
        %v8614 = vpop.f32.mrb[0].mxu0
        %v8615 = vadd.f32 %v8454, %v8614
        %v8616 = vpop.f32.mrb[0].mxu0
        %8617 = vmatprep.mubr.bf16.mxu0 %v5152
        %8618 = vmatmul.mubr.bf16.gmra.mrb[0].mxu0 %v5151
        %v8619 = vpop.f32.mrb[0].mxu0
        %v8620 = vadd.f32 %v8459, %v8619
        %v8621 = vpop.f32.mrb[0].mxu0
        %v8622 = vpop.f32.mrb[0].mxu0
        %v8623 = vadd.f32 %v8462, %v8622
        %v8624 = vpop.f32.mrb[0].mxu0
        %8625 = vmatprep.mubr.bf16.mxu0 %v5164
        %8626 = vmatmul.mubr.bf16.gmra.mrb[0].mxu0 %v5163
        %v8627 = vpop.f32.mrb[0].mxu0
        %v8628 = vadd.f32 %v8467, %v8627
        %v8629 = vpop.f32.mrb[0].mxu0
        %v8630 = vpop.f32.mrb[0].mxu0
        %v8631 = vadd.f32 %v8470, %v8630
        %v8632 = vpop.f32.mrb[0].mxu0
        %8633 = vmatprep.mubr.bf16.mxu0 %v5176
        %8634 = vmatmul.mubr.bf16.gmra.mrb[0].mxu0 %v5175
        %v8635 = vpop.f32.mrb[0].mxu0
        %v8636 = vadd.f32 %v8475, %v8635
        %v8637 = vpop.f32.mrb[0].mxu0
        %v8638 = vpop.f32.mrb[0].mxu0
        %v8639 = vadd.f32 %v8478, %v8638
        %v8640 = vpop.f32.mrb[0].mxu0
        %8641 = vmatprep.mubr.bf16.mxu0 %v5188
        %8642 = vmatmul.mubr.bf16.gmra.mrb[0].mxu0 %v5187
        %v8643 = vpop.f32.mrb[0].mxu0
        %v8644 = vadd.f32 %v8483, %v8643
        %v8645 = vpop.f32.mrb[0].mxu0
        %v8646 = vpop.f32.mrb[0].mxu0
        %v8647 = vadd.f32 %v8486, %v8646
        %v8648 = vpop.f32.mrb[0].mxu0
        %8649 = vmatprep.mubr.bf16.mxu0 %v5200
        %8650 = vmatmul.mubr.bf16.gmra.mrb[0].mxu0 %v5199
        %v8651 = vpop.f32.mrb[0].mxu0
        %v8652 = vadd.f32 %v8491, %v8651
        %v8653 = vpop.f32.mrb[0].mxu0
        %v8654 = vpop.f32.mrb[0].mxu0
        %v8655 = vadd.f32 %v8494, %v8654
        %v8656 = vpop.f32.mrb[0].mxu0
        %8657 = vmatprep.mubr.bf16.mxu0 %v5212
        %8658 = vmatmul.mubr.bf16.gmra.mrb[0].mxu0 %v5211
        %v8659 = vpop.f32.mrb[0].mxu0
        %v8660 = vadd.f32 %v8499, %v8659
        %v8661 = vpop.f32.mrb[0].mxu0
        %v8662 = vpop.f32.mrb[0].mxu0
        %v8663 = vadd.f32 %v8502, %v8662
        %v8664 = vpop.f32.mrb[0].mxu0
        %8665 = vmatprep.mubr.bf16.mxu0 %v5224
        %8666 = vmatmul.mubr.bf16.gmra.mrb[0].mxu0 %v5223
        %v8667 = vpop.f32.mrb[0].mxu0
        %v8668 = vadd.f32 %v8507, %v8667
        %v8669 = vpop.f32.mrb[0].mxu0
        %v8670 = vpop.f32.mrb[0].mxu0
        %v8671 = vadd.f32 %v8510, %v8670
        %v8672 = vpop.f32.mrb[0].mxu0
        %8673 = vmatprep.mubr.bf16.mxu0 %v5236
        %8674 = vmatmul.mubr.bf16.gmra.mrb[0].mxu0 %v5235
        %v8675 = vpop.f32.mrb[0].mxu0
        %v8676 = vadd.f32 %v8515, %v8675
        %v8677 = vpop.f32.mrb[0].mxu0
        %v8678 = vpop.f32.mrb[0].mxu0
        %v8679 = vadd.f32 %v8518, %v8678
        %v8680 = vpop.f32.mrb[0].mxu0
        %8681 = vmatprep.mubr.bf16.mxu0 %v5248
        %8682 = vmatmul.mubr.bf16.gmra.mrb[0].mxu0 %v5247
        %v8683 = vpop.f32.mrb[0].mxu0
        %v8684 = vadd.f32 %v8523, %v8683
        %v8685 = vpop.f32.mrb[0].mxu0
        %v8686 = vpop.f32.mrb[0].mxu0
        %v8687 = vadd.f32 %v8526, %v8686
        %v8688 = vpop.f32.mrb[0].mxu0
        %8689 = vmatprep.mubr.bf16.mxu0 %v5260
        %8690 = vmatmul.mubr.bf16.gmra.mrb[0].mxu0 %v5259
        %v8691 = vpop.f32.mrb[0].mxu0
        %v8692 = vadd.f32 %v8531, %v8691
        %v8693 = vpop.f32.mrb[0].mxu0
        %v8694 = vpop.f32.mrb[0].mxu0
        %v8695 = vadd.f32 %v8534, %v8694
        %v8696 = vpop.f32.mrb[0].mxu0
        %8697 = vmatprep.mubr.bf16.mxu0 %v5272
        %8698 = vmatmul.mubr.bf16.gmra.mrb[0].mxu0 %v5271
        %v8699 = vpop.f32.mrb[0].mxu0
        %v8700 = vadd.f32 %v8539, %v8699
        %v8701 = vpop.f32.mrb[0].mxu0
        %v8702 = vpop.f32.mrb[0].mxu0
        %v8703 = vadd.f32 %v8542, %v8702
        %v8704 = vpop.f32.mrb[0].mxu0
        %8705 = vmatprep.mubr.bf16.mxu0 %v5284
        %8706 = vmatmul.mubr.bf16.gmra.mrb[0].mxu0 %v5283
        %v8707 = vpop.f32.mrb[0].mxu0
        %v8708 = vadd.f32 %v8547, %v8707
        %v8709 = vpop.f32.mrb[0].mxu0
        %v8710 = vpop.f32.mrb[0].mxu0
        %v8711 = vadd.f32 %v8550, %v8710
        %v8712 = vpop.f32.mrb[0].mxu0
        %8713 = vmatprep.mubr.bf16.mxu0 %v5296
        %8714 = vmatmul.mubr.bf16.gmra.mrb[0].mxu0 %v5295
        %v8715 = vpop.f32.mrb[0].mxu0
        %v8716 = vadd.f32 %v8555, %v8715
        %v8717 = vpop.f32.mrb[0].mxu0
        %v8718 = vpop.f32.mrb[0].mxu0
        %v8719 = vadd.f32 %v8558, %v8718
        %v8720 = vpop.f32.mrb[0].mxu0
        %8721 = vdwg.mxu0
        %8722 = vmatprep.subr.bf16.mxu0 0
        %8723 = vmatpush1.bf16.msra.mxu0 %v6764
        %8724 = vmatprep.subr.bf16.mxu0 0
        %8725 = vmatpush1.bf16.msra.mxu0 %v6767
        %8726 = vmatprep.subr.bf16.mxu0 0
        %8727 = vmatpush1.bf16.msra.mxu0 %v6770
        %8728 = vmatprep.subr.bf16.mxu0 0
        %8729 = vmatpush1.bf16.msra.mxu0 %v6773
        %8730 = vmatprep.subr.bf16.mxu0 0
        %8731 = vmatpush1.bf16.msra.mxu0 %v6776
        %8732 = vmatprep.subr.bf16.mxu0 0
        %8733 = vmatpush1.bf16.msra.mxu0 %v6779
        %8734 = vmatprep.subr.bf16.mxu0 0
        %8735 = vmatpush1.bf16.msra.mxu0 %v6782
        %8736 = vmatprep.subr.bf16.mxu0 0
        %8737 = vmatpush1.bf16.msra.mxu0 %v6785
        %8738 = vmatprep.subr.bf16.mxu0 0
        %8739 = vmatpush1.bf16.msra.mxu0 %v6788
        %8740 = vmatprep.subr.bf16.mxu0 0
        %8741 = vmatpush1.bf16.msra.mxu0 %v6791
        %8742 = vmatprep.subr.bf16.mxu0 0
        %8743 = vmatpush1.bf16.msra.mxu0 %v6794
        %8744 = vmatprep.subr.bf16.mxu0 0
        %8745 = vmatpush1.bf16.msra.mxu0 %v6797
        %8746 = vmatprep.subr.bf16.mxu0 0
        %8747 = vmatpush1.bf16.msra.mxu0 %v6800
        %8748 = vmatprep.subr.bf16.mxu0 0
        %8749 = vmatpush1.bf16.msra.mxu0 %v6803
        %8750 = vmatprep.subr.bf16.mxu0 0
        %8751 = vmatpush1.bf16.msra.mxu0 %v6806
        %8752 = vmatprep.subr.bf16.mxu0 0
        %8753 = vmatpush1.bf16.msra.mxu0 %v6809
        %8754 = vmatprep.mubr.bf16.mxu0 %v5118
        %8755 = vmatmul.mubr.bf16.gmra.mrb[0].mxu0 %v5117
        %v8756 = vpop.f32.mrb[0].mxu0
        %v8757 = vadd.f32 %v8596, %v8756
        %v8758 = vpop.f32.mrb[0].mxu0
        %v8759 = vpop.f32.mrb[0].mxu0
        %v8760 = vadd.f32 %v8599, %v8759
        %v8761 = vpop.f32.mrb[0].mxu0
        %8762 = vmatprep.mubr.bf16.mxu0 %v5130
        %8763 = vmatmul.mubr.bf16.gmra.mrb[0].mxu0 %v5129
        %v8764 = vpop.f32.mrb[0].mxu0
        %v8765 = vadd.f32 %v8604, %v8764
        %v8766 = vpop.f32.mrb[0].mxu0
        %v8767 = vpop.f32.mrb[0].mxu0
        %v8768 = vadd.f32 %v8607, %v8767
        %v8769 = vpop.f32.mrb[0].mxu0
        %8770 = vmatprep.mubr.bf16.mxu0 %v5142
        %8771 = vmatmul.mubr.bf16.gmra.mrb[0].mxu0 %v5141
        %v8772 = vpop.f32.mrb[0].mxu0
        %v8773 = vadd.f32 %v8612, %v8772
        %v8774 = vpop.f32.mrb[0].mxu0
        %v8775 = vpop.f32.mrb[0].mxu0
        %v8776 = vadd.f32 %v8615, %v8775
        %v8777 = vpop.f32.mrb[0].mxu0
        %8778 = vmatprep.mubr.bf16.mxu0 %v5154
        %8779 = vmatmul.mubr.bf16.gmra.mrb[0].mxu0 %v5153
        %v8780 = vpop.f32.mrb[0].mxu0
        %v8781 = vadd.f32 %v8620, %v8780
        %v8782 = vpop.f32.mrb[0].mxu0
        %v8783 = vpop.f32.mrb[0].mxu0
        %v8784 = vadd.f32 %v8623, %v8783
        %v8785 = vpop.f32.mrb[0].mxu0
        %8786 = vmatprep.mubr.bf16.mxu0 %v5166
        %8787 = vmatmul.mubr.bf16.gmra.mrb[0].mxu0 %v5165
        %v8788 = vpop.f32.mrb[0].mxu0
        %v8789 = vadd.f32 %v8628, %v8788
        %v8790 = vpop.f32.mrb[0].mxu0
        %v8791 = vpop.f32.mrb[0].mxu0
        %v8792 = vadd.f32 %v8631, %v8791
        %v8793 = vpop.f32.mrb[0].mxu0
        %8794 = vmatprep.mubr.bf16.mxu0 %v5178
        %8795 = vmatmul.mubr.bf16.gmra.mrb[0].mxu0 %v5177
        %v8796 = vpop.f32.mrb[0].mxu0
        %v8797 = vadd.f32 %v8636, %v8796
        %v8798 = vpop.f32.mrb[0].mxu0
        %v8799 = vpop.f32.mrb[0].mxu0
        %v8800 = vadd.f32 %v8639, %v8799
        %v8801 = vpop.f32.mrb[0].mxu0
        %8802 = vmatprep.mubr.bf16.mxu0 %v5190
        %8803 = vmatmul.mubr.bf16.gmra.mrb[0].mxu0 %v5189
        %v8804 = vpop.f32.mrb[0].mxu0
        %v8805 = vadd.f32 %v8644, %v8804
        %v8806 = vpop.f32.mrb[0].mxu0
        %v8807 = vpop.f32.mrb[0].mxu0
        %v8808 = vadd.f32 %v8647, %v8807
        %v8809 = vpop.f32.mrb[0].mxu0
        %8810 = vmatprep.mubr.bf16.mxu0 %v5202
        %8811 = vmatmul.mubr.bf16.gmra.mrb[0].mxu0 %v5201
        %v8812 = vpop.f32.mrb[0].mxu0
        %v8813 = vadd.f32 %v8652, %v8812
        %v8814 = vpop.f32.mrb[0].mxu0
        %v8815 = vpop.f32.mrb[0].mxu0
        %v8816 = vadd.f32 %v8655, %v8815
        %v8817 = vpop.f32.mrb[0].mxu0
        %8818 = vmatprep.mubr.bf16.mxu0 %v5214
        %8819 = vmatmul.mubr.bf16.gmra.mrb[0].mxu0 %v5213
        %v8820 = vpop.f32.mrb[0].mxu0
        %v8821 = vadd.f32 %v8660, %v8820
        %v8822 = vpop.f32.mrb[0].mxu0
        %v8823 = vpop.f32.mrb[0].mxu0
        %v8824 = vadd.f32 %v8663, %v8823
        %v8825 = vpop.f32.mrb[0].mxu0
        %8826 = vmatprep.mubr.bf16.mxu0 %v5226
        %8827 = vmatmul.mubr.bf16.gmra.mrb[0].mxu0 %v5225
        %v8828 = vpop.f32.mrb[0].mxu0
        %v8829 = vadd.f32 %v8668, %v8828
        %v8830 = vpop.f32.mrb[0].mxu0
        %v8831 = vpop.f32.mrb[0].mxu0
        %v8832 = vadd.f32 %v8671, %v8831
        %v8833 = vpop.f32.mrb[0].mxu0
        %8834 = vmatprep.mubr.bf16.mxu0 %v5238
        %8835 = vmatmul.mubr.bf16.gmra.mrb[0].mxu0 %v5237
        %v8836 = vpop.f32.mrb[0].mxu0
        %v8837 = vadd.f32 %v8676, %v8836
        %v8838 = vpop.f32.mrb[0].mxu0
        %v8839 = vpop.f32.mrb[0].mxu0
        %v8840 = vadd.f32 %v8679, %v8839
        %v8841 = vpop.f32.mrb[0].mxu0
        %8842 = vmatprep.mubr.bf16.mxu0 %v5250
        %8843 = vmatmul.mubr.bf16.gmra.mrb[0].mxu0 %v5249
        %v8844 = vpop.f32.mrb[0].mxu0
        %v8845 = vadd.f32 %v8684, %v8844
        %v8846 = vpop.f32.mrb[0].mxu0
        %v8847 = vpop.f32.mrb[0].mxu0
        %v8848 = vadd.f32 %v8687, %v8847
        %v8849 = vpop.f32.mrb[0].mxu0
        %8850 = vmatprep.mubr.bf16.mxu0 %v5262
        %8851 = vmatmul.mubr.bf16.gmra.mrb[0].mxu0 %v5261
        %v8852 = vpop.f32.mrb[0].mxu0
        %v8853 = vadd.f32 %v8692, %v8852
        %v8854 = vpop.f32.mrb[0].mxu0
        %v8855 = vpop.f32.mrb[0].mxu0
        %v8856 = vadd.f32 %v8695, %v8855
        %v8857 = vpop.f32.mrb[0].mxu0
        %8858 = vmatprep.mubr.bf16.mxu0 %v5274
        %8859 = vmatmul.mubr.bf16.gmra.mrb[0].mxu0 %v5273
        %v8860 = vpop.f32.mrb[0].mxu0
        %v8861 = vadd.f32 %v8700, %v8860
        %v8862 = vpop.f32.mrb[0].mxu0
        %v8863 = vpop.f32.mrb[0].mxu0
        %v8864 = vadd.f32 %v8703, %v8863
        %v8865 = vpop.f32.mrb[0].mxu0
        %8866 = vmatprep.mubr.bf16.mxu0 %v5286
        %8867 = vmatmul.mubr.bf16.gmra.mrb[0].mxu0 %v5285
        %v8868 = vpop.f32.mrb[0].mxu0
        %v8869 = vadd.f32 %v8708, %v8868
        %v8870 = vpop.f32.mrb[0].mxu0
        %v8871 = vpop.f32.mrb[0].mxu0
        %v8872 = vadd.f32 %v8711, %v8871
        %v8873 = vpop.f32.mrb[0].mxu0
        %8874 = vmatprep.mubr.bf16.mxu0 %v5298
        %8875 = vmatmul.mubr.bf16.gmra.mrb[0].mxu0 %v5297
        %v8876 = vpop.f32.mrb[0].mxu0
        %v8877 = vadd.f32 %v8716, %v8876
        %v8878 = vpop.f32.mrb[0].mxu0
        %v8879 = vpop.f32.mrb[0].mxu0
        %v8880 = vadd.f32 %v8719, %v8879
        %v8881 = vpop.f32.mrb[0].mxu0
        %8882 = vdwg.mxu0
        %8883 = vmatprep.subr.bf16.mxu0 0
        %8884 = vmatpush1.bf16.msra.mxu0 %v6812
        %8885 = vmatprep.subr.bf16.mxu0 0
        %8886 = vmatpush1.bf16.msra.mxu0 %v6815
        %8887 = vmatprep.subr.bf16.mxu0 0
        %8888 = vmatpush1.bf16.msra.mxu0 %v6818
        %8889 = vmatprep.subr.bf16.mxu0 0
        %8890 = vmatpush1.bf16.msra.mxu0 %v6821
        %8891 = vmatprep.subr.bf16.mxu0 0
        %8892 = vmatpush1.bf16.msra.mxu0 %v6824
        %8893 = vmatprep.subr.bf16.mxu0 0
        %8894 = vmatpush1.bf16.msra.mxu0 %v6827
        %8895 = vmatprep.subr.bf16.mxu0 0
        %8896 = vmatpush1.bf16.msra.mxu0 %v6830
        %8897 = vmatprep.subr.bf16.mxu0 0
        %8898 = vmatpush1.bf16.msra.mxu0 %v6833
        %8899 = vmatprep.subr.bf16.mxu0 0
        %8900 = vmatpush1.bf16.msra.mxu0 %v6836
        %8901 = vmatprep.subr.bf16.mxu0 0
        %8902 = vmatpush1.bf16.msra.mxu0 %v6839
        %8903 = vmatprep.subr.bf16.mxu0 0
        %8904 = vmatpush1.bf16.msra.mxu0 %v6842
        %8905 = vmatprep.subr.bf16.mxu0 0
        %8906 = vmatpush1.bf16.msra.mxu0 %v6845
        %8907 = vmatprep.subr.bf16.mxu0 0
        %8908 = vmatpush1.bf16.msra.mxu0 %v6848
        %8909 = vmatprep.subr.bf16.mxu0 0
        %8910 = vmatpush1.bf16.msra.mxu0 %v6851
        %8911 = vmatprep.subr.bf16.mxu0 0
        %8912 = vmatpush1.bf16.msra.mxu0 %v6854
        %8913 = vmatprep.subr.bf16.mxu0 0
        %8914 = vmatpush1.bf16.msra.mxu0 %v6857
        %8915 = vmatprep.mubr.bf16.mxu0 %v5120
        %8916 = vmatmul.mubr.bf16.gmra.mrb[0].mxu0 %v5119
        %v8917 = vpop.f32.mrb[0].mxu0
        %v8918 = vadd.f32 %v8757, %v8917
        %v8919 = vpop.f32.mrb[0].mxu0
        %v8920 = vpop.f32.mrb[0].mxu0
        %v8921 = vadd.f32 %v8760, %v8920
        %v8922 = vpop.f32.mrb[0].mxu0
        %8923 = vmatprep.mubr.bf16.mxu0 %v5132
        %8924 = vmatmul.mubr.bf16.gmra.mrb[0].mxu0 %v5131
        %v8925 = vpop.f32.mrb[0].mxu0
        %v8926 = vadd.f32 %v8765, %v8925
        %v8927 = vpop.f32.mrb[0].mxu0
        %v8928 = vpop.f32.mrb[0].mxu0
        %v8929 = vadd.f32 %v8768, %v8928
        %v8930 = vpop.f32.mrb[0].mxu0
        %8931 = vmatprep.mubr.bf16.mxu0 %v5144
        %8932 = vmatmul.mubr.bf16.gmra.mrb[0].mxu0 %v5143
        %v8933 = vpop.f32.mrb[0].mxu0
        %v8934 = vadd.f32 %v8773, %v8933
        %v8935 = vpop.f32.mrb[0].mxu0
        %v8936 = vpop.f32.mrb[0].mxu0
        %v8937 = vadd.f32 %v8776, %v8936
        %v8938 = vpop.f32.mrb[0].mxu0
        %8939 = vmatprep.mubr.bf16.mxu0 %v5156
        %8940 = vmatmul.mubr.bf16.gmra.mrb[0].mxu0 %v5155
        %v8941 = vpop.f32.mrb[0].mxu0
        %v8942 = vadd.f32 %v8781, %v8941
        %v8943 = vpop.f32.mrb[0].mxu0
        %v8944 = vpop.f32.mrb[0].mxu0
        %v8945 = vadd.f32 %v8784, %v8944
        %v8946 = vpop.f32.mrb[0].mxu0
        %8947 = vmatprep.mubr.bf16.mxu0 %v5168
        %8948 = vmatmul.mubr.bf16.gmra.mrb[0].mxu0 %v5167
        %v8949 = vpop.f32.mrb[0].mxu0
        %v8950 = vadd.f32 %v8789, %v8949
        %v8951 = vpop.f32.mrb[0].mxu0
        %v8952 = vpop.f32.mrb[0].mxu0
        %v8953 = vadd.f32 %v8792, %v8952
        %v8954 = vpop.f32.mrb[0].mxu0
        %8955 = vmatprep.mubr.bf16.mxu0 %v5180
        %8956 = vmatmul.mubr.bf16.gmra.mrb[0].mxu0 %v5179
        %v8957 = vpop.f32.mrb[0].mxu0
        %v8958 = vadd.f32 %v8797, %v8957
        %v8959 = vpop.f32.mrb[0].mxu0
        %v8960 = vpop.f32.mrb[0].mxu0
        %v8961 = vadd.f32 %v8800, %v8960
        %v8962 = vpop.f32.mrb[0].mxu0
        %8963 = vmatprep.mubr.bf16.mxu0 %v5192
        %8964 = vmatmul.mubr.bf16.gmra.mrb[0].mxu0 %v5191
        %v8965 = vpop.f32.mrb[0].mxu0
        %v8966 = vadd.f32 %v8805, %v8965
        %v8967 = vpop.f32.mrb[0].mxu0
        %v8968 = vpop.f32.mrb[0].mxu0
        %v8969 = vadd.f32 %v8808, %v8968
        %v8970 = vpop.f32.mrb[0].mxu0
        %8971 = vmatprep.mubr.bf16.mxu0 %v5204
        %8972 = vmatmul.mubr.bf16.gmra.mrb[0].mxu0 %v5203
        %v8973 = vpop.f32.mrb[0].mxu0
        %v8974 = vadd.f32 %v8813, %v8973
        %v8975 = vpop.f32.mrb[0].mxu0
        %v8976 = vpop.f32.mrb[0].mxu0
        %v8977 = vadd.f32 %v8816, %v8976
        %v8978 = vpop.f32.mrb[0].mxu0
        %8979 = vmatprep.mubr.bf16.mxu0 %v5216
        %8980 = vmatmul.mubr.bf16.gmra.mrb[0].mxu0 %v5215
        %v8981 = vpop.f32.mrb[0].mxu0
        %v8982 = vadd.f32 %v8821, %v8981
        %v8983 = vpop.f32.mrb[0].mxu0
        %v8984 = vpop.f32.mrb[0].mxu0
        %v8985 = vadd.f32 %v8824, %v8984
        %v8986 = vpop.f32.mrb[0].mxu0
        %8987 = vmatprep.mubr.bf16.mxu0 %v5228
        %8988 = vmatmul.mubr.bf16.gmra.mrb[0].mxu0 %v5227
        %v8989 = vpop.f32.mrb[0].mxu0
        %v8990 = vadd.f32 %v8829, %v8989
        %v8991 = vpop.f32.mrb[0].mxu0
        %v8992 = vpop.f32.mrb[0].mxu0
        %v8993 = vadd.f32 %v8832, %v8992
        %v8994 = vpop.f32.mrb[0].mxu0
        %8995 = vmatprep.mubr.bf16.mxu0 %v5240
        %8996 = vmatmul.mubr.bf16.gmra.mrb[0].mxu0 %v5239
        %v8997 = vpop.f32.mrb[0].mxu0
        %v8998 = vadd.f32 %v8837, %v8997
        %v8999 = vpop.f32.mrb[0].mxu0
        %v9000 = vpop.f32.mrb[0].mxu0
        %v9001 = vadd.f32 %v8840, %v9000
        %v9002 = vpop.f32.mrb[0].mxu0
        %9003 = vmatprep.mubr.bf16.mxu0 %v5252
        %9004 = vmatmul.mubr.bf16.gmra.mrb[0].mxu0 %v5251
        %v9005 = vpop.f32.mrb[0].mxu0
        %v9006 = vadd.f32 %v8845, %v9005
        %v9007 = vpop.f32.mrb[0].mxu0
        %v9008 = vpop.f32.mrb[0].mxu0
        %v9009 = vadd.f32 %v8848, %v9008
        %v9010 = vpop.f32.mrb[0].mxu0
        %9011 = vmatprep.mubr.bf16.mxu0 %v5264
        %9012 = vmatmul.mubr.bf16.gmra.mrb[0].mxu0 %v5263
        %v9013 = vpop.f32.mrb[0].mxu0
        %v9014 = vadd.f32 %v8853, %v9013
        %v9015 = vpop.f32.mrb[0].mxu0
        %v9016 = vpop.f32.mrb[0].mxu0
        %v9017 = vadd.f32 %v8856, %v9016
        %v9018 = vpop.f32.mrb[0].mxu0
        %9019 = vmatprep.mubr.bf16.mxu0 %v5276
        %9020 = vmatmul.mubr.bf16.gmra.mrb[0].mxu0 %v5275
        %v9021 = vpop.f32.mrb[0].mxu0
        %v9022 = vadd.f32 %v8861, %v9021
        %v9023 = vpop.f32.mrb[0].mxu0
        %v9024 = vpop.f32.mrb[0].mxu0
        %v9025 = vadd.f32 %v8864, %v9024
        %v9026 = vpop.f32.mrb[0].mxu0
        %9027 = vmatprep.mubr.bf16.mxu0 %v5288
        %9028 = vmatmul.mubr.bf16.gmra.mrb[0].mxu0 %v5287
        %v9029 = vpop.f32.mrb[0].mxu0
        %v9030 = vadd.f32 %v8869, %v9029
        %v9031 = vpop.f32.mrb[0].mxu0
        %v9032 = vpop.f32.mrb[0].mxu0
        %v9033 = vadd.f32 %v8872, %v9032
        %v9034 = vpop.f32.mrb[0].mxu0
        %9035 = vmatprep.mubr.bf16.mxu0 %v5300
        %9036 = vmatmul.mubr.bf16.gmra.mrb[0].mxu0 %v5299
        %v9037 = vpop.f32.mrb[0].mxu0
        %v9038 = vadd.f32 %v8877, %v9037
        %v9039 = vpop.f32.mrb[0].mxu0
        %v9040 = vpop.f32.mrb[0].mxu0
        %v9041 = vadd.f32 %v8880, %v9040
        %v9042 = vpop.f32.mrb[0].mxu0
        %9043 = vdwg.mxu0
        %9044 = vmatprep.subr.bf16.mxu0 0
        %9045 = vmatpush1.bf16.msra.mxu0 %v6860
        %9046 = vmatprep.subr.bf16.mxu0 0
        %9047 = vmatpush1.bf16.msra.mxu0 %v6863
        %9048 = vmatprep.subr.bf16.mxu0 0
        %9049 = vmatpush1.bf16.msra.mxu0 %v6866
        %9050 = vmatprep.subr.bf16.mxu0 0
        %9051 = vmatpush1.bf16.msra.mxu0 %v6869
        %9052 = vmatprep.subr.bf16.mxu0 0
        %9053 = vmatpush1.bf16.msra.mxu0 %v6872
        %9054 = vmatprep.subr.bf16.mxu0 0
        %9055 = vmatpush1.bf16.msra.mxu0 %v6875
        %9056 = vmatprep.subr.bf16.mxu0 0
        %9057 = vmatpush1.bf16.msra.mxu0 %v6878
        %9058 = vmatprep.subr.bf16.mxu0 0
        %9059 = vmatpush1.bf16.msra.mxu0 %v6881
        %9060 = vmatprep.subr.bf16.mxu0 0
        %9061 = vmatpush1.bf16.msra.mxu0 %v6884
        %9062 = vmatprep.subr.bf16.mxu0 0
        %9063 = vmatpush1.bf16.msra.mxu0 %v6887
        %9064 = vmatprep.subr.bf16.mxu0 0
        %9065 = vmatpush1.bf16.msra.mxu0 %v6890
        %9066 = vmatprep.subr.bf16.mxu0 0
        %9067 = vmatpush1.bf16.msra.mxu0 %v6893
        %9068 = vmatprep.subr.bf16.mxu0 0
        %9069 = vmatpush1.bf16.msra.mxu0 %v6896
        %9070 = vmatprep.subr.bf16.mxu0 0
        %9071 = vmatpush1.bf16.msra.mxu0 %v6899
        %9072 = vmatprep.subr.bf16.mxu0 0
        %9073 = vmatpush1.bf16.msra.mxu0 %v6902
        %9074 = vmatprep.subr.bf16.mxu0 0
        %9075 = vmatpush1.bf16.msra.mxu0 %v6905
        %9076 = vmatprep.mubr.bf16.mxu0 %v5122
        %9077 = vmatmul.mubr.bf16.gmra.mrb[0].mxu0 %v5121
        %v9078 = vpop.f32.mrb[0].mxu0
        %v9079 = vadd.f32 %v8918, %v9078
        %v9080 = vpop.f32.mrb[0].mxu0
        %v9081 = vpop.f32.mrb[0].mxu0
        %v9082 = vadd.f32 %v8921, %v9081
        %v9083 = vpop.f32.mrb[0].mxu0
        %9084 = vmatprep.mubr.bf16.mxu0 %v5134
        %9085 = vmatmul.mubr.bf16.gmra.mrb[0].mxu0 %v5133
        %v9086 = vpop.f32.mrb[0].mxu0
        %v9087 = vadd.f32 %v8926, %v9086
        %v9088 = vpop.f32.mrb[0].mxu0
        %v9089 = vpop.f32.mrb[0].mxu0
        %v9090 = vadd.f32 %v8929, %v9089
        %v9091 = vpop.f32.mrb[0].mxu0
        %9092 = vmatprep.mubr.bf16.mxu0 %v5146
        %9093 = vmatmul.mubr.bf16.gmra.mrb[0].mxu0 %v5145
        %v9094 = vpop.f32.mrb[0].mxu0
        %v9095 = vadd.f32 %v8934, %v9094
        %v9096 = vpop.f32.mrb[0].mxu0
        %v9097 = vpop.f32.mrb[0].mxu0
        %v9098 = vadd.f32 %v8937, %v9097
        %v9099 = vpop.f32.mrb[0].mxu0
        %9100 = vmatprep.mubr.bf16.mxu0 %v5158
        %9101 = vmatmul.mubr.bf16.gmra.mrb[0].mxu0 %v5157
        %v9102 = vpop.f32.mrb[0].mxu0
        %v9103 = vadd.f32 %v8942, %v9102
        %v9104 = vpop.f32.mrb[0].mxu0
        %v9105 = vpop.f32.mrb[0].mxu0
        %v9106 = vadd.f32 %v8945, %v9105
        %v9107 = vpop.f32.mrb[0].mxu0
        %9108 = vmatprep.mubr.bf16.mxu0 %v5170
        %9109 = vmatmul.mubr.bf16.gmra.mrb[0].mxu0 %v5169
        %v9110 = vpop.f32.mrb[0].mxu0
        %v9111 = vadd.f32 %v8950, %v9110
        %v9112 = vpop.f32.mrb[0].mxu0
        %v9113 = vpop.f32.mrb[0].mxu0
        %v9114 = vadd.f32 %v8953, %v9113
        %v9115 = vpop.f32.mrb[0].mxu0
        %9116 = vmatprep.mubr.bf16.mxu0 %v5182
        %9117 = vmatmul.mubr.bf16.gmra.mrb[0].mxu0 %v5181
        %v9118 = vpop.f32.mrb[0].mxu0
        %v9119 = vadd.f32 %v8958, %v9118
        %v9120 = vpop.f32.mrb[0].mxu0
        %v9121 = vpop.f32.mrb[0].mxu0
        %v9122 = vadd.f32 %v8961, %v9121
        %v9123 = vpop.f32.mrb[0].mxu0
        %9124 = vmatprep.mubr.bf16.mxu0 %v5194
        %9125 = vmatmul.mubr.bf16.gmra.mrb[0].mxu0 %v5193
        %v9126 = vpop.f32.mrb[0].mxu0
        %v9127 = vadd.f32 %v8966, %v9126
        %v9128 = vpop.f32.mrb[0].mxu0
        %v9129 = vpop.f32.mrb[0].mxu0
        %v9130 = vadd.f32 %v8969, %v9129
        %v9131 = vpop.f32.mrb[0].mxu0
        %9132 = vmatprep.mubr.bf16.mxu0 %v5206
        %9133 = vmatmul.mubr.bf16.gmra.mrb[0].mxu0 %v5205
        %v9134 = vpop.f32.mrb[0].mxu0
        %v9135 = vadd.f32 %v8974, %v9134
        %v9136 = vpop.f32.mrb[0].mxu0
        %v9137 = vpop.f32.mrb[0].mxu0
        %v9138 = vadd.f32 %v8977, %v9137
        %v9139 = vpop.f32.mrb[0].mxu0
        %9140 = vmatprep.mubr.bf16.mxu0 %v5218
        %9141 = vmatmul.mubr.bf16.gmra.mrb[0].mxu0 %v5217
        %v9142 = vpop.f32.mrb[0].mxu0
        %v9143 = vadd.f32 %v8982, %v9142
        %v9144 = vpop.f32.mrb[0].mxu0
        %v9145 = vpop.f32.mrb[0].mxu0
        %v9146 = vadd.f32 %v8985, %v9145
        %v9147 = vpop.f32.mrb[0].mxu0
        %9148 = vmatprep.mubr.bf16.mxu0 %v5230
        %9149 = vmatmul.mubr.bf16.gmra.mrb[0].mxu0 %v5229
        %v9150 = vpop.f32.mrb[0].mxu0
        %v9151 = vadd.f32 %v8990, %v9150
        %v9152 = vpop.f32.mrb[0].mxu0
        %v9153 = vpop.f32.mrb[0].mxu0
        %v9154 = vadd.f32 %v8993, %v9153
        %v9155 = vpop.f32.mrb[0].mxu0
        %9156 = vmatprep.mubr.bf16.mxu0 %v5242
        %9157 = vmatmul.mubr.bf16.gmra.mrb[0].mxu0 %v5241
        %v9158 = vpop.f32.mrb[0].mxu0
        %v9159 = vadd.f32 %v8998, %v9158
        %v9160 = vpop.f32.mrb[0].mxu0
        %v9161 = vpop.f32.mrb[0].mxu0
        %v9162 = vadd.f32 %v9001, %v9161
        %v9163 = vpop.f32.mrb[0].mxu0
        %9164 = vmatprep.mubr.bf16.mxu0 %v5254
        %9165 = vmatmul.mubr.bf16.gmra.mrb[0].mxu0 %v5253
        %v9166 = vpop.f32.mrb[0].mxu0
        %v9167 = vadd.f32 %v9006, %v9166
        %v9168 = vpop.f32.mrb[0].mxu0
        %v9169 = vpop.f32.mrb[0].mxu0
        %v9170 = vadd.f32 %v9009, %v9169
        %v9171 = vpop.f32.mrb[0].mxu0
        %9172 = vmatprep.mubr.bf16.mxu0 %v5266
        %9173 = vmatmul.mubr.bf16.gmra.mrb[0].mxu0 %v5265
        %v9174 = vpop.f32.mrb[0].mxu0
        %v9175 = vadd.f32 %v9014, %v9174
        %v9176 = vpop.f32.mrb[0].mxu0
        %v9177 = vpop.f32.mrb[0].mxu0
        %v9178 = vadd.f32 %v9017, %v9177
        %v9179 = vpop.f32.mrb[0].mxu0
        %9180 = vmatprep.mubr.bf16.mxu0 %v5278
        %9181 = vmatmul.mubr.bf16.gmra.mrb[0].mxu0 %v5277
        %v9182 = vpop.f32.mrb[0].mxu0
        %v9183 = vadd.f32 %v9022, %v9182
        %v9184 = vpop.f32.mrb[0].mxu0
        %v9185 = vpop.f32.mrb[0].mxu0
        %v9186 = vadd.f32 %v9025, %v9185
        %v9187 = vpop.f32.mrb[0].mxu0
        %9188 = vmatprep.mubr.bf16.mxu0 %v5290
        %9189 = vmatmul.mubr.bf16.gmra.mrb[0].mxu0 %v5289
        %v9190 = vpop.f32.mrb[0].mxu0
        %v9191 = vadd.f32 %v9030, %v9190
        %v9192 = vpop.f32.mrb[0].mxu0
        %v9193 = vpop.f32.mrb[0].mxu0
        %v9194 = vadd.f32 %v9033, %v9193
        %v9195 = vpop.f32.mrb[0].mxu0
        %9196 = vmatprep.mubr.bf16.mxu0 %v5302
        %9197 = vmatmul.mubr.bf16.gmra.mrb[0].mxu0 %v5301
        %v9198 = vpop.f32.mrb[0].mxu0
        %v9199 = vadd.f32 %v9038, %v9198
        %v9200 = vpop.f32.mrb[0].mxu0
        %v9201 = vpop.f32.mrb[0].mxu0
        %v9202 = vadd.f32 %v9041, %v9201
        %v9203 = vpop.f32.mrb[0].mxu0
        %9204 = vdwg.mxu0
        %9205 = vmatprep.subr.bf16.mxu0 0
        %9206 = vmatpush1.bf16.msra.mxu0 %v6908
        %9207 = vmatprep.subr.bf16.mxu0 0
        %9208 = vmatpush1.bf16.msra.mxu0 %v6911
        %9209 = vmatprep.subr.bf16.mxu0 0
        %9210 = vmatpush1.bf16.msra.mxu0 %v6914
        %9211 = vmatprep.subr.bf16.mxu0 0
        %9212 = vmatpush1.bf16.msra.mxu0 %v6917
        %9213 = vmatprep.subr.bf16.mxu0 0
        %9214 = vmatpush1.bf16.msra.mxu0 %v6920
        %9215 = vmatprep.subr.bf16.mxu0 0
        %9216 = vmatpush1.bf16.msra.mxu0 %v6923
        %9217 = vmatprep.subr.bf16.mxu0 0
        %9218 = vmatpush1.bf16.msra.mxu0 %v6926
        %9219 = vmatprep.subr.bf16.mxu0 0
        %9220 = vmatpush1.bf16.msra.mxu0 %v6929
        %9221 = vmatprep.subr.bf16.mxu0 0
        %9222 = vmatpush1.bf16.msra.mxu0 %v6932
        %9223 = vmatprep.subr.bf16.mxu0 0
        %9224 = vmatpush1.bf16.msra.mxu0 %v6935
        %9225 = vmatprep.subr.bf16.mxu0 0
        %9226 = vmatpush1.bf16.msra.mxu0 %v6938
        %9227 = vmatprep.subr.bf16.mxu0 0
        %9228 = vmatpush1.bf16.msra.mxu0 %v6941
        %9229 = vmatprep.subr.bf16.mxu0 0
        %9230 = vmatpush1.bf16.msra.mxu0 %v6944
        %9231 = vmatprep.subr.bf16.mxu0 0
        %9232 = vmatpush1.bf16.msra.mxu0 %v6947
        %9233 = vmatprep.subr.bf16.mxu0 0
        %9234 = vmatpush1.bf16.msra.mxu0 %v6950
        %9235 = vmatprep.subr.bf16.mxu0 0
        %9236 = vmatpush1.bf16.msra.mxu0 %v6953
        %9237 = vmatprep.mubr.bf16.mxu0 %v5124
        %9238 = vmatmul.mubr.bf16.gmra.mrb[0].mxu0 %v5123
        %v9239 = vpop.f32.mrb[0].mxu0
        %v9240 = vadd.f32 %v9079, %v9239
        %v9241 = vpop.f32.mrb[0].mxu0
        %v9242 = vpop.f32.mrb[0].mxu0
        %v9243 = vadd.f32 %v9082, %v9242
        %v9244 = vpop.f32.mrb[0].mxu0
        %9245 = vmatprep.mubr.bf16.mxu0 %v5136
        %9246 = vmatmul.mubr.bf16.gmra.mrb[0].mxu0 %v5135
        %v9247 = vpop.f32.mrb[0].mxu0
        %v9248 = vadd.f32 %v9087, %v9247
        %v9249 = vpop.f32.mrb[0].mxu0
        %v9250 = vpop.f32.mrb[0].mxu0
        %v9251 = vadd.f32 %v9090, %v9250
        %v9252 = vpop.f32.mrb[0].mxu0
        %9253 = vmatprep.mubr.bf16.mxu0 %v5148
        %9254 = vmatmul.mubr.bf16.gmra.mrb[0].mxu0 %v5147
        %v9255 = vpop.f32.mrb[0].mxu0
        %v9256 = vadd.f32 %v9095, %v9255
        %v9257 = vpop.f32.mrb[0].mxu0
        %v9258 = vpop.f32.mrb[0].mxu0
        %v9259 = vadd.f32 %v9098, %v9258
        %v9260 = vpop.f32.mrb[0].mxu0
        %9261 = vmatprep.mubr.bf16.mxu0 %v5160
        %9262 = vmatmul.mubr.bf16.gmra.mrb[0].mxu0 %v5159
        %v9263 = vpop.f32.mrb[0].mxu0
        %v9264 = vadd.f32 %v9103, %v9263
        %v9265 = vpop.f32.mrb[0].mxu0
        %v9266 = vpop.f32.mrb[0].mxu0
        %v9267 = vadd.f32 %v9106, %v9266
        %v9268 = vpop.f32.mrb[0].mxu0
        %9269 = vmatprep.mubr.bf16.mxu0 %v5172
        %9270 = vmatmul.mubr.bf16.gmra.mrb[0].mxu0 %v5171
        %v9271 = vpop.f32.mrb[0].mxu0
        %v9272 = vadd.f32 %v9111, %v9271
        %v9273 = vpop.f32.mrb[0].mxu0
        %v9274 = vpop.f32.mrb[0].mxu0
        %v9275 = vadd.f32 %v9114, %v9274
        %v9276 = vpop.f32.mrb[0].mxu0
        %9277 = vmatprep.mubr.bf16.mxu0 %v5184
        %9278 = vmatmul.mubr.bf16.gmra.mrb[0].mxu0 %v5183
        %v9279 = vpop.f32.mrb[0].mxu0
        %v9280 = vadd.f32 %v9119, %v9279
        %v9281 = vpop.f32.mrb[0].mxu0
        %v9282 = vpop.f32.mrb[0].mxu0
        %v9283 = vadd.f32 %v9122, %v9282
        %v9284 = vpop.f32.mrb[0].mxu0
        %9285 = vmatprep.mubr.bf16.mxu0 %v5196
        %9286 = vmatmul.mubr.bf16.gmra.mrb[0].mxu0 %v5195
        %v9287 = vpop.f32.mrb[0].mxu0
        %v9288 = vadd.f32 %v9127, %v9287
        %v9289 = vpop.f32.mrb[0].mxu0
        %v9290 = vpop.f32.mrb[0].mxu0
        %v9291 = vadd.f32 %v9130, %v9290
        %v9292 = vpop.f32.mrb[0].mxu0
        %9293 = vmatprep.mubr.bf16.mxu0 %v5208
        %9294 = vmatmul.mubr.bf16.gmra.mrb[0].mxu0 %v5207
        %v9295 = vpop.f32.mrb[0].mxu0
        %v9296 = vadd.f32 %v9135, %v9295
        %v9297 = vpop.f32.mrb[0].mxu0
        %v9298 = vpop.f32.mrb[0].mxu0
        %v9299 = vadd.f32 %v9138, %v9298
        %v9300 = vpop.f32.mrb[0].mxu0
        %9301 = vmatprep.mubr.bf16.mxu0 %v5220
        %9302 = vmatmul.mubr.bf16.gmra.mrb[0].mxu0 %v5219
        %v9303 = vpop.f32.mrb[0].mxu0
        %v9304 = vadd.f32 %v9143, %v9303
        %v9305 = vpop.f32.mrb[0].mxu0
        %v9306 = vpop.f32.mrb[0].mxu0
        %v9307 = vadd.f32 %v9146, %v9306
        %v9308 = vpop.f32.mrb[0].mxu0
        %9309 = vmatprep.mubr.bf16.mxu0 %v5232
        %9310 = vmatmul.mubr.bf16.gmra.mrb[0].mxu0 %v5231
        %v9311 = vpop.f32.mrb[0].mxu0
        %v9312 = vadd.f32 %v9151, %v9311
        %v9313 = vpop.f32.mrb[0].mxu0
        %v9314 = vpop.f32.mrb[0].mxu0
        %v9315 = vadd.f32 %v9154, %v9314
        %v9316 = vpop.f32.mrb[0].mxu0
        %9317 = vmatprep.mubr.bf16.mxu0 %v5244
        %9318 = vmatmul.mubr.bf16.gmra.mrb[0].mxu0 %v5243
        %v9319 = vpop.f32.mrb[0].mxu0
        %v9320 = vadd.f32 %v9159, %v9319
        %v9321 = vpop.f32.mrb[0].mxu0
        %v9322 = vpop.f32.mrb[0].mxu0
        %v9323 = vadd.f32 %v9162, %v9322
        %v9324 = vpop.f32.mrb[0].mxu0
        %9325 = vmatprep.mubr.bf16.mxu0 %v5256
        %9326 = vmatmul.mubr.bf16.gmra.mrb[0].mxu0 %v5255
        %v9327 = vpop.f32.mrb[0].mxu0
        %v9328 = vadd.f32 %v9167, %v9327
        %v9329 = vpop.f32.mrb[0].mxu0
        %v9330 = vpop.f32.mrb[0].mxu0
        %v9331 = vadd.f32 %v9170, %v9330
        %v9332 = vpop.f32.mrb[0].mxu0
        %9333 = vmatprep.mubr.bf16.mxu0 %v5268
        %9334 = vmatmul.mubr.bf16.gmra.mrb[0].mxu0 %v5267
        %v9335 = vpop.f32.mrb[0].mxu0
        %v9336 = vadd.f32 %v9175, %v9335
        %v9337 = vpop.f32.mrb[0].mxu0
        %v9338 = vpop.f32.mrb[0].mxu0
        %v9339 = vadd.f32 %v9178, %v9338
        %v9340 = vpop.f32.mrb[0].mxu0
        %9341 = vmatprep.mubr.bf16.mxu0 %v5280
        %9342 = vmatmul.mubr.bf16.gmra.mrb[0].mxu0 %v5279
        %v9343 = vpop.f32.mrb[0].mxu0
        %v9344 = vadd.f32 %v9183, %v9343
        %v9345 = vpop.f32.mrb[0].mxu0
        %v9346 = vpop.f32.mrb[0].mxu0
        %v9347 = vadd.f32 %v9186, %v9346
        %v9348 = vpop.f32.mrb[0].mxu0
        %9349 = vmatprep.mubr.bf16.mxu0 %v5292
        %9350 = vmatmul.mubr.bf16.gmra.mrb[0].mxu0 %v5291
        %v9351 = vpop.f32.mrb[0].mxu0
        %v9352 = vadd.f32 %v9191, %v9351
        %v9353 = vpop.f32.mrb[0].mxu0
        %v9354 = vpop.f32.mrb[0].mxu0
        %v9355 = vadd.f32 %v9194, %v9354
        %v9356 = vpop.f32.mrb[0].mxu0
        %9357 = vmatprep.mubr.bf16.mxu0 %v5304
        %9358 = vmatmul.mubr.bf16.gmra.mrb[0].mxu0 %v5303
        %v9359 = vpop.f32.mrb[0].mxu0
        %v9360 = vadd.f32 %v9199, %v9359
        %v9361 = vpop.f32.mrb[0].mxu0
        %v9362 = vpop.f32.mrb[0].mxu0
        %v9363 = vadd.f32 %v9202, %v9362
        %v9364 = vpop.f32.mrb[0].mxu0
        %9365 = vdwg.mxu0
        %9366 = vst [vmem:[%s297] sm:$0xff] %v8242
        %9367 = vst [vmem:[%s297 + $0x8] sm:$0xff] %v8244
        %9368 = vst [vmem:[%s297 + $0x10] sm:$0xff] %v9240
        %9369 = vst [vmem:[%s297 + $0x18] sm:$0xff] %v8246
        %9370 = vst [vmem:[%s297 + $0x20] sm:$0xff] %v8248
        %9371 = vst [vmem:[%s297 + $0x28] sm:$0xff] %v9243
        %9372 = vst [vmem:[%s297 + $0x30] sm:$0xff] %v8252
        %9373 = vst [vmem:[%s297 + $0x38] sm:$0xff] %v8254
        %9374 = vst [vmem:[%s297 + $0x40] sm:$0xff] %v9248
        %9375 = vst [vmem:[%s297 + $0x48] sm:$0xff] %v8256
        %9376 = vst [vmem:[%s297 + $0x50] sm:$0xff] %v8258
        %9377 = vst [vmem:[%s297 + $0x58] sm:$0xff] %v9251
        %9378 = vst [vmem:[%s297 + $0x60] sm:$0xff] %v8262
        %9379 = vst [vmem:[%s297 + $0x68] sm:$0xff] %v8264
        %9380 = vst [vmem:[%s297 + $0x70] sm:$0xff] %v9256
        %9381 = vst [vmem:[%s297 + $0x78] sm:$0xff] %v8266
        %9382 = vst [vmem:[%s297 + $0x80] sm:$0xff] %v8268
        %9383 = vst [vmem:[%s297 + $0x88] sm:$0xff] %v9259
        %9384 = vst [vmem:[%s297 + $0x90] sm:$0xff] %v8272
        %9385 = vst [vmem:[%s297 + $0x98] sm:$0xff] %v8274
        %9386 = vst [vmem:[%s297 + $0xa0] sm:$0xff] %v9264
        %9387 = vst [vmem:[%s297 + $0xa8] sm:$0xff] %v8276
        %9388 = vst [vmem:[%s297 + $0xb0] sm:$0xff] %v8278
        %9389 = vst [vmem:[%s297 + $0xb8] sm:$0xff] %v9267
        %9390 = vst [vmem:[%s297 + $0xc0] sm:$0xff] %v8282
        %9391 = vst [vmem:[%s297 + $0xc8] sm:$0xff] %v8284
        %9392 = vst [vmem:[%s297 + $0xd0] sm:$0xff] %v9272
        %9393 = vst [vmem:[%s297 + $0xd8] sm:$0xff] %v8286
        %9394 = vst [vmem:[%s297 + $0xe0] sm:$0xff] %v8288
        %9395 = vst [vmem:[%s297 + $0xe8] sm:$0xff] %v9275
        %9396 = vst [vmem:[%s297 + $0xf0] sm:$0xff] %v8292
        %9397 = vst [vmem:[%s297 + $0xf8] sm:$0xff] %v8294
        %9398 = vst [vmem:[%s297 + $0x100] sm:$0xff] %v9280
        %9399 = vst [vmem:[%s297 + $0x108] sm:$0xff] %v8296
        %9400 = vst [vmem:[%s297 + $0x110] sm:$0xff] %v8298
        %9401 = vst [vmem:[%s297 + $0x118] sm:$0xff] %v9283
        %9402 = vst [vmem:[%s297 + $0x120] sm:$0xff] %v8302
        %9403 = vst [vmem:[%s297 + $0x128] sm:$0xff] %v8304
        %9404 = vst [vmem:[%s297 + $0x130] sm:$0xff] %v9288
        %9405 = vst [vmem:[%s297 + $0x138] sm:$0xff] %v8306
        %9406 = vst [vmem:[%s297 + $0x140] sm:$0xff] %v8308
        %9407 = vst [vmem:[%s297 + $0x148] sm:$0xff] %v9291
        %9408 = vst [vmem:[%s297 + $0x150] sm:$0xff] %v8312
        %9409 = vst [vmem:[%s297 + $0x158] sm:$0xff] %v8314
        %9410 = vst [vmem:[%s297 + $0x160] sm:$0xff] %v9296
        %9411 = vst [vmem:[%s297 + $0x168] sm:$0xff] %v8316
        %9412 = vst [vmem:[%s297 + $0x170] sm:$0xff] %v8318
        %9413 = vst [vmem:[%s297 + $0x178] sm:$0xff] %v9299
        %9414 = vst [vmem:[%s297 + $0x180] sm:$0xff] %v8322
        %9415 = vst [vmem:[%s297 + $0x188] sm:$0xff] %v8324
        %9416 = vst [vmem:[%s297 + $0x190] sm:$0xff] %v9304
        %9417 = vst [vmem:[%s297 + $0x198] sm:$0xff] %v8326
        %9418 = vst [vmem:[%s297 + $0x1a0] sm:$0xff] %v8328
        %9419 = vst [vmem:[%s297 + $0x1a8] sm:$0xff] %v9307
        %9420 = vst [vmem:[%s297 + $0x1b0] sm:$0xff] %v8332
        %9421 = vst [vmem:[%s297 + $0x1b8] sm:$0xff] %v8334
        %9422 = vst [vmem:[%s297 + $0x1c0] sm:$0xff] %v9312
        %9423 = vst [vmem:[%s297 + $0x1c8] sm:$0xff] %v8336
        %9424 = vst [vmem:[%s297 + $0x1d0] sm:$0xff] %v8338
        %9425 = vst [vmem:[%s297 + $0x1d8] sm:$0xff] %v9315
        %9426 = vst [vmem:[%s297 + $0x1e0] sm:$0xff] %v8342
        %9427 = vst [vmem:[%s297 + $0x1e8] sm:$0xff] %v8344
        %9428 = vst [vmem:[%s297 + $0x1f0] sm:$0xff] %v9320
        %9429 = vst [vmem:[%s297 + $0x1f8] sm:$0xff] %v8346
        %9430 = vst [vmem:[%s297 + $0x200] sm:$0xff] %v8348
        %9431 = vst [vmem:[%s297 + $0x208] sm:$0xff] %v9323
        %9432 = vst [vmem:[%s297 + $0x210] sm:$0xff] %v8352
        %9433 = vst [vmem:[%s297 + $0x218] sm:$0xff] %v8354
        %9434 = vst [vmem:[%s297 + $0x220] sm:$0xff] %v9328
        %9435 = vst [vmem:[%s297 + $0x228] sm:$0xff] %v8356
        %9436 = vst [vmem:[%s297 + $0x230] sm:$0xff] %v8358
        %9437 = vst [vmem:[%s297 + $0x238] sm:$0xff] %v9331
        %9438 = vst [vmem:[%s297 + $0x240] sm:$0xff] %v8362
        %9439 = vst [vmem:[%s297 + $0x248] sm:$0xff] %v8364
        %9440 = vst [vmem:[%s297 + $0x250] sm:$0xff] %v9336
        %9441 = vst [vmem:[%s297 + $0x258] sm:$0xff] %v8366
        %9442 = vst [vmem:[%s297 + $0x260] sm:$0xff] %v8368
        %9443 = vst [vmem:[%s297 + $0x268] sm:$0xff] %v9339
        %9444 = vst [vmem:[%s297 + $0x270] sm:$0xff] %v8372
        %9445 = vst [vmem:[%s297 + $0x278] sm:$0xff] %v8374
        %9446 = vst [vmem:[%s297 + $0x280] sm:$0xff] %v9344
        %9447 = vst [vmem:[%s297 + $0x288] sm:$0xff] %v8376
        %9448 = vst [vmem:[%s297 + $0x290] sm:$0xff] %v8378
        %9449 = vst [vmem:[%s297 + $0x298] sm:$0xff] %v9347
        %9450 = vst [vmem:[%s297 + $0x2a0] sm:$0xff] %v8382
        %9451 = vst [vmem:[%s297 + $0x2a8] sm:$0xff] %v8384
        %9452 = vst [vmem:[%s297 + $0x2b0] sm:$0xff] %v9352
        %9453 = vst [vmem:[%s297 + $0x2b8] sm:$0xff] %v8386
        %9454 = vst [vmem:[%s297 + $0x2c0] sm:$0xff] %v8388
        %9455 = vst [vmem:[%s297 + $0x2c8] sm:$0xff] %v9355
        %9456 = vst [vmem:[%s297 + $0x2d0] sm:$0xff] %v8392
        %9457 = vst [vmem:[%s297 + $0x2d8] sm:$0xff] %v8394
        %9458 = vst [vmem:[%s297 + $0x2e0] sm:$0xff] %v9360
        %9459 = vst [vmem:[%s297 + $0x2e8] sm:$0xff] %v8396
        %9460 = vst [vmem:[%s297 + $0x2f0] sm:$0xff] %v8398
        %9461 = vst [vmem:[%s297 + $0x2f8] sm:$0xff] %v9363
        %s9462 = sand.u32 %s142, 1
        %s9463 = scalar_lea.sflag [#allocation4], %s9462
        %s9464 = sand.u32 %s142, 1
        %s9465 = smul.addr %s9464, 768
        %s9466 = scalar_lea.vmem [#allocation11], %s9465
        // Predicated region
        $region61: #{tpu_custom_call.1} parent=39 // pred_check
          %p9467 = pneg %p152
        $region62: #{tpu_custom_call.1} parent=39 // pred_check_branch
          %9469 = sbr.rel (%p9467) target = $region64
        $region63: #{tpu_custom_call.1} parent=39 // pred_region
          %s9470 = smul.u32 32, %s24
          %s9472 = ssub.s32 12288, 12288
          %9473 = vsyncadd %s9463, %s9472
          %s9474 = smul.addr %s9470, 3
          %s9475 = smul.addr %s9474, 128
          %s9476 = scalar_lea.hbm %s5, %s9475
          %s9477 = sshll.u32 %s9466, 4
          %s9478 = int_to_ptr.vmem [resolvable:$true] %s9477
          %9483 = dma.vmem_to_hbm [thread:$0]  %s9478, 12288, %s9476, %s9463, 384, 384, 24
        $region64: #{tpu_custom_call.1} parent=39 // pred_fallthru
          _
      $region40: #{tpu_custom_call.1} parent=5 // pred_fallthru
        _
      %p9484 = scmp.le.s32.totalorder 2, %s19
      // Predicated region
      $region65: #{tpu_custom_call.1} parent=5 // pred_check
        %p9485 = pneg %p9484
      $region66: #{tpu_custom_call.1} parent=5 // pred_check_branch
        %9487 = sbr.rel (%p9485) target = $region68
      $region67: #{tpu_custom_call.1} parent=5 // pred_region
        %s9488 = ssub.s32 %s19, 2
        // Predicated region
        $region69: #{tpu_custom_call.1} parent=67 // pred_check
          %p9489 = pneg %p158
        $region70: #{tpu_custom_call.1} parent=67 // pred_check_branch
          %9491 = sbr.rel (%p9489) target = $region72
        $region71: #{tpu_custom_call.1} parent=67 // pred_region
          %s9492 = sand.u32 %s143, 1
          %s9493 = scalar_lea.sflag [#allocation4], %s9492
          %s9494 = sand.u32 %s143, 1
          %s9495 = smul.addr %s9494, 768
          %s9496 = scalar_lea.vmem [#allocation11], %s9495
          %9497 = dma.done %s9493, 12288
        $region72: #{tpu_custom_call.1} parent=67 // pred_fallthru
          _
      $region68: #{tpu_custom_call.1} parent=5 // pred_fallthru
        _
    $region6: #{tpu_custom_call.1} parent=1 // loop_footer
      %s23 = sadd.s32 1, %s19
    $region7: #{tpu_custom_call.1} parent=1 // loop_footer_branch
      %18 = sbr.rel target = $region3
    $region8: #{tpu_custom_call.1} parent=1 // loop_exit
      _
    %9498 = vsyncpa [#allocation3], 1
    %s9499 = scalar_lea.sflag [#allocation3], 1
    %9500 = vsyncpa %s9499, 1
    %9501 = vsyncpa [#allocation6], 1
    %9502 = vsyncpa [#allocation9], 1
    %9503 = vsyncpa [#allocation4], 1
    %s9504 = scalar_lea.sflag [#allocation4], 1
    %9505 = vsyncpa %s9504, 1

</llo_original>
